<compile_context>
chip_gen: v6e
topology: v6e:2x2x1
jax: 0.10.0
libtpu: 0.0.40
codegen_flags: <defaults>
</compile_context>

<pallas_src>
import jax
import jax.numpy as jnp
from jax.experimental import pallas as pl
from jax.experimental.pallas import tpu as pltpu

NUM_CLASSES = 345
NUM_CLASSES_PAD = 384          # 3 * 128 -> lane-dense output tile
IN_FEATURES = 2048
HIDDEN = 1024
K_TILE = 512                   # layer-1 reduction split -> grid of 4 steps


def _classifier_kernel(
    x_ref,      # (B, K_TILE)        bf16
    w1_ref,     # (K_TILE, HIDDEN)   bf16  (BN1 scale folded in)
    t1_ref,     # (1, HIDDEN)        f32   (linear bias + BN1 shift)
    w2_ref,     # (HIDDEN, HIDDEN)   bf16  (BN2 scale folded in)
    t2_ref,     # (1, HIDDEN)        f32   (linear bias + BN2 shift)
    w3_ref,     # (HIDDEN, NUM_CLASSES_PAD) bf16
    b3_ref,     # (1, NUM_CLASSES_PAD)      f32
    out_ref,    # (B, NUM_CLASSES_PAD)      f32
    acc_ref,    # (B, HIDDEN) f32 scratch accumulator for layer 1
):
    k = pl.program_id(0)

    @pl.when(k == 0)
    def _():
        acc_ref[...] = jnp.zeros_like(acc_ref)

    # ---- Linear(2048 -> 1024): partial K accumulation on the MXU ------------
    acc_ref[...] += jnp.dot(x_ref[...], w1_ref[...],
                            preferred_element_type=jnp.float32)

    @pl.when(k == pl.num_programs(0) - 1)
    def _():
        # BN1 shift (+ folded bias) + ReLU
        h = jnp.maximum(acc_ref[...] + t1_ref[...], 0.0)

        # ---- Linear(1024 -> 1024) + BN2 shift + ReLU -------------------------
        h = jnp.dot(h.astype(jnp.bfloat16), w2_ref[...],
                    preferred_element_type=jnp.float32)
        h = jnp.maximum(h + t2_ref[...], 0.0)

        # ---- Dropout (eval mode => identity) + Linear(1024 -> 384 padded) ----
        o = jnp.dot(h.astype(jnp.bfloat16), w3_ref[...],
                    preferred_element_type=jnp.float32)
        out_ref[...] = (o + b3_ref[...]).astype(out_ref.dtype)


def class_classifier_forward(x, params):
    """x: (B, 2048) float32.  params: dict of weights (see init_params)."""
    B = x.shape[0]
    eps = 1e-5

    # Fold BatchNorm1d (eval mode) into the preceding Linear:
    #   y = gamma*(Wx + b - mean)/sqrt(var+eps) + beta
    #     = x @ (W^T * scale) + (b*scale + beta - mean*scale)
    s1 = params["bn1_gamma"] / jnp.sqrt(params["bn1_var"] + eps)
    t1 = params["b1"] * s1 + params["bn1_beta"] - params["bn1_mean"] * s1
    s2 = params["bn2_gamma"] / jnp.sqrt(params["bn2_var"] + eps)
    t2 = params["b2"] * s2 + params["bn2_beta"] - params["bn2_mean"] * s2

    # PyTorch Linear weight is (out, in); transpose so the kernel does x @ W.
    # Cast matmul operands to bf16 (MXU takes bf16 natively, f32 accumulate).
    w1 = (params["w1"].T * s1[None, :]).astype(jnp.bfloat16)      # (2048, 1024)
    w2 = (params["w2"].T * s2[None, :]).astype(jnp.bfloat16)      # (1024, 1024)

    # Pad the 345-class head to 384 lanes (3*128) for lane-dense stores.
    w3 = jnp.zeros((HIDDEN, NUM_CLASSES_PAD), jnp.bfloat16)
    w3 = w3.at[:, :NUM_CLASSES].set(params["w3"].T.astype(jnp.bfloat16))
    b3 = jnp.zeros((1, NUM_CLASSES_PAD), jnp.float32)
    b3 = b3.at[:, :NUM_CLASSES].set(params["b3"])

    t1 = t1.reshape(1, -1).astype(jnp.float32)
    t2 = t2.reshape(1, -1).astype(jnp.float32)
    xb = x.astype(jnp.bfloat16)

    n_k = IN_FEATURES // K_TILE  # 4 grid steps over layer-1 reduction

    out_padded = pl.pallas_call(
        _classifier_kernel,
        out_shape=jax.ShapeDtypeStruct((B, NUM_CLASSES_PAD), jnp.float32),
        grid_spec=pltpu.PrefetchScalarGridSpec(
            num_scalar_prefetch=0,
            grid=(n_k,),
            in_specs=[
                pl.BlockSpec((B, K_TILE), lambda k: (0, k)),           # x chunk
                pl.BlockSpec((K_TILE, HIDDEN), lambda k: (k, 0)),      # w1 chunk
                pl.BlockSpec((1, HIDDEN), lambda k: (0, 0)),           # t1
                pl.BlockSpec((HIDDEN, HIDDEN), lambda k: (0, 0)),      # w2
                pl.BlockSpec((1, HIDDEN), lambda k: (0, 0)),           # t2
                pl.BlockSpec((HIDDEN, NUM_CLASSES_PAD), lambda k: (0, 0)),  # w3
                pl.BlockSpec((1, NUM_CLASSES_PAD), lambda k: (0, 0)),  # b3
            ],
            out_specs=pl.BlockSpec((B, NUM_CLASSES_PAD), lambda k: (0, 0)),
            scratch_shapes=[pltpu.VMEM((B, HIDDEN), jnp.float32)],
        ),
        compiler_params=pltpu.CompilerParams(
            dimension_semantics=("arbitrary",),  # reduction axis carries accumulator
        ),
    )(xb, w1, t1, w2, t2, w3, b3)

    return out_padded[:, :NUM_CLASSES]


def init_params(key):
    """Deterministic synthetic parameters matching the PyTorch module shapes."""
    ks = jax.random.split(key, 8)

    def linear_init(kw, kb, fan_in, fan_out):
        bound = 1.0 / jnp.sqrt(fan_in)
        w = jax.random.uniform(kw, (fan_out, fan_in), jnp.float32, -bound, bound)
        b = jax.random.uniform(kb, (fan_out,), jnp.float32, -bound, bound)
        return w, b

    w1, b1 = linear_init(ks[0], ks[1], IN_FEATURES, HIDDEN)
    w2, b2 = linear_init(ks[2], ks[3], HIDDEN, HIDDEN)
    w3, b3 = linear_init(ks[4], ks[5], HIDDEN, NUM_CLASSES)

    # BatchNorm1d parameters / running stats (slightly randomized but deterministic).
    bn1_gamma = 1.0 + 0.1 * jax.random.normal(ks[6], (HIDDEN,), jnp.float32)
    bn1_beta = 0.05 * jax.random.normal(ks[7], (HIDDEN,), jnp.float32)
    bn1_mean = jnp.zeros((HIDDEN,), jnp.float32)
    bn1_var = jnp.ones((HIDDEN,), jnp.float32)

    k2 = jax.random.split(jax.random.fold_in(key, 123), 2)
    bn2_gamma = 1.0 + 0.1 * jax.random.normal(k2[0], (HIDDEN,), jnp.float32)
    bn2_beta = 0.05 * jax.random.normal(k2[1], (HIDDEN,), jnp.float32)
    bn2_mean = jnp.zeros((HIDDEN,), jnp.float32)
    bn2_var = jnp.ones((HIDDEN,), jnp.float32)

    return dict(
        w1=w1, b1=b1, w2=w2, b2=b2, w3=w3, b3=b3,
        bn1_gamma=bn1_gamma, bn1_beta=bn1_beta, bn1_mean=bn1_mean, bn1_var=bn1_var,
        bn2_gamma=bn2_gamma, bn2_beta=bn2_beta, bn2_mean=bn2_mean, bn2_var=bn2_var,
    )


def _reference(x, params):
    """Plain-JAX f32 reference of the same (eval-mode) forward."""
    def bn(h, g, b, m, v, eps=1e-5):
        return g * (h - m) / jnp.sqrt(v + eps) + b

    h = x @ params["w1"].T + params["b1"]
    h = jnp.maximum(bn(h, params["bn1_gamma"], params["bn1_beta"],
                       params["bn1_mean"], params["bn1_var"]), 0.0)
    h = h @ params["w2"].T + params["b2"]
    h = jnp.maximum(bn(h, params["bn2_gamma"], params["bn2_beta"],
                       params["bn2_mean"], params["bn2_var"]), 0.0)
    return h @ params["w3"].T + params["b3"]


if __name__ == "__main__":
    key = jax.random.PRNGKey(0)
    k_params, k_x = jax.random.split(key)

    B = 8  # small batch; sublane-aligned
    x = jax.random.normal(k_x, (B, IN_FEATURES), jnp.float32)
    params = init_params(k_params)

    out = class_classifier_forward(x, params)
    out = jax.block_until_ready(out)

    ref = _reference(x, params)
    assert out.shape == (B, NUM_CLASSES), out.shape
    # bf16 weights/activations on the MXU (f32 accumulate) -> small numerical drift
    # vs. the pure-f32 reference; tolerance comfortably covers it.
    assert jnp.allclose(out, ref, atol=5e-2, rtol=5e-2), float(
        jnp.max(jnp.abs(out - ref)))

    print("KERNEL_OK")
</pallas_src>

<mosaic_0001>
module attributes {stable_mosaic.version = 11 : i64} {
  func.func @_classifier_kernel(%arg0: i32, %arg1: memref<8x512xbf16, #tpu.memory_space<vmem>>, %arg2: memref<512x1024xbf16, #tpu.memory_space<vmem>>, %arg3: memref<1x1024xf32, #tpu.memory_space<vmem>>, %arg4: memref<1024x1024xbf16, #tpu.memory_space<vmem>>, %arg5: memref<1x1024xf32, #tpu.memory_space<vmem>>, %arg6: memref<1024x384xbf16, #tpu.memory_space<vmem>>, %arg7: memref<1x384xf32, #tpu.memory_space<vmem>>, %arg8: memref<8x384xf32, #tpu.memory_space<vmem>>, %arg9: memref<8x1024xf32, #tpu.memory_space<vmem>>) attributes {dimension_semantics = [#tpu.dimension_semantics<arbitrary>], iteration_bounds = array<i64: 4>, scalar_prefetch = 0 : i64, scratch_operands = 1 : i64, tpu.core_type = #tpu.core_type<tc>, window_params = [{transform_indices = @transform_0, window_bounds = array<i64: 8, 512>}, {transform_indices = @transform_1, window_bounds = array<i64: 512, 1024>}, {pipeline_mode = #tpu.pipeline_mode<synchronous>, transform_indices = @transform_2, window_bounds = array<i64: 1, 1024>}, {pipeline_mode = #tpu.pipeline_mode<synchronous>, transform_indices = @transform_3, window_bounds = array<i64: 1024, 1024>}, {pipeline_mode = #tpu.pipeline_mode<synchronous>, transform_indices = @transform_4, window_bounds = array<i64: 1, 1024>}, {pipeline_mode = #tpu.pipeline_mode<synchronous>, transform_indices = @transform_5, window_bounds = array<i64: 1024, 384>}, {pipeline_mode = #tpu.pipeline_mode<synchronous>, transform_indices = @transform_6, window_bounds = array<i64: 1, 384>}, {pipeline_mode = #tpu.pipeline_mode<synchronous>, transform_indices = @transform_7, window_bounds = array<i64: 8, 384>}]} {
    %c0_i32 = arith.constant 0 : i32
    %0 = arith.cmpi eq, %arg0, %c0_i32 : i32
    %1 = arith.extui %0 : i1 to i32
    %c0_i32_0 = arith.constant 0 : i32
    %2 = arith.cmpi ne, %1, %c0_i32_0 : i32
    scf.if %2 {
      %cst_9 = arith.constant 0.000000e+00 : f32
      %12 = vector.broadcast %cst_9 : f32 to vector<8x1024xf32>
      %c0_10 = arith.constant 0 : index
      %c0_11 = arith.constant 0 : index
      %13 = vector.load %arg9[%c0_10, %c0_11] : memref<8x1024xf32, #tpu.memory_space<vmem>>, vector<8x1024xf32>
      tpu.vector_store %arg9[%c0_10, %c0_11], %12 {strides = array<i32>} : memref<8x1024xf32, #tpu.memory_space<vmem>>, vector<8x1024xf32>,
    } else {
    }
    %c0 = arith.constant 0 : index
    %c0_1 = arith.constant 0 : index
    %3 = vector.load %arg9[%c0, %c0_1] : memref<8x1024xf32, #tpu.memory_space<vmem>>, vector<8x1024xf32>
    %c0_2 = arith.constant 0 : index
    %c0_3 = arith.constant 0 : index
    %4 = vector.load %arg1[%c0_2, %c0_3] : memref<8x512xbf16, #tpu.memory_space<vmem>>, vector<8x512xbf16>
    %c0_4 = arith.constant 0 : index
    %c0_5 = arith.constant 0 : index
    %5 = vector.load %arg2[%c0_4, %c0_5] : memref<512x1024xbf16, #tpu.memory_space<vmem>>, vector<512x1024xbf16>
    %cst = arith.constant dense<0.000000e+00> : vector<8x1024xf32>
    %6 = tpu.matmul %4, %5, %cst {dimension_numbers = #tpu.dot_dimension_numbers<[1], [0], [0], [1], [0, 0, 1, 1], [], []>} : vector<8x512xbf16>, vector<512x1024xbf16>, vector<8x1024xf32> -> vector<8x1024xf32>
    %7 = arith.addf %3, %6 : vector<8x1024xf32>
    %c0_6 = arith.constant 0 : index
    %c0_7 = arith.constant 0 : index
    %8 = vector.load %arg9[%c0_6, %c0_7] : memref<8x1024xf32, #tpu.memory_space<vmem>>, vector<8x1024xf32>
    tpu.vector_store %arg9[%c0_6, %c0_7], %7 {strides = array<i32>} : memref<8x1024xf32, #tpu.memory_space<vmem>>, vector<8x1024xf32>,
    %c3_i32 = arith.constant 3 : i32
    %9 = arith.cmpi eq, %arg0, %c3_i32 : i32
    %10 = arith.extui %9 : i1 to i32
    %c0_i32_8 = arith.constant 0 : i32
    %11 = arith.cmpi ne, %10, %c0_i32_8 : i32
    scf.if %11 {
      %c0_9 = arith.constant 0 : index
      %c0_10 = arith.constant 0 : index
      %12 = vector.load %arg9[%c0_9, %c0_10] : memref<8x1024xf32, #tpu.memory_space<vmem>>, vector<8x1024xf32>
      %c0_11 = arith.constant 0 : index
      %c0_12 = arith.constant 0 : index
      %13 = vector.load %arg3[%c0_11, %c0_12] : memref<1x1024xf32, #tpu.memory_space<vmem>>, vector<1x1024xf32>
      %14 = vector.broadcast %13 : vector<1x1024xf32> to vector<8x1024xf32>
      %15 = arith.addf %12, %14 : vector<8x1024xf32>
      %cst_13 = arith.constant 0.000000e+00 : f32
      %16 = vector.broadcast %cst_13 : f32 to vector<8x1024xf32>
      %17 = arith.maximumf %15, %16 : vector<8x1024xf32>
      %18 = arith.truncf %17 : vector<8x1024xf32> to vector<8x1024xbf16>
      %c0_14 = arith.constant 0 : index
      %c0_15 = arith.constant 0 : index
      %19 = vector.load %arg4[%c0_14, %c0_15] : memref<1024x1024xbf16, #tpu.memory_space<vmem>>, vector<1024x1024xbf16>
      %cst_16 = arith.constant dense<0.000000e+00> : vector<8x1024xf32>
      %20 = tpu.matmul %18, %19, %cst_16 {dimension_numbers = #tpu.dot_dimension_numbers<[1], [0], [0], [1], [0, 0, 1, 1], [], []>} : vector<8x1024xbf16>, vector<1024x1024xbf16>, vector<8x1024xf32> -> vector<8x1024xf32>
      %c0_17 = arith.constant 0 : index
      %c0_18 = arith.constant 0 : index
      %21 = vector.load %arg5[%c0_17, %c0_18] : memref<1x1024xf32, #tpu.memory_space<vmem>>, vector<1x1024xf32>
      %22 = vector.broadcast %21 : vector<1x1024xf32> to vector<8x1024xf32>
      %23 = arith.addf %20, %22 : vector<8x1024xf32>
      %cst_19 = arith.constant 0.000000e+00 : f32
      %24 = vector.broadcast %cst_19 : f32 to vector<8x1024xf32>
      %25 = arith.maximumf %23, %24 : vector<8x1024xf32>
      %26 = arith.truncf %25 : vector<8x1024xf32> to vector<8x1024xbf16>
      %c0_20 = arith.constant 0 : index
      %c0_21 = arith.constant 0 : index
      %27 = vector.load %arg6[%c0_20, %c0_21] : memref<1024x384xbf16, #tpu.memory_space<vmem>>, vector<1024x384xbf16>
      %cst_22 = arith.constant dense<0.000000e+00> : vector<8x384xf32>
      %28 = tpu.matmul %26, %27, %cst_22 {dimension_numbers = #tpu.dot_dimension_numbers<[1], [0], [0], [1], [0, 0, 1, 1], [], []>} : vector<8x1024xbf16>, vector<1024x384xbf16>, vector<8x384xf32> -> vector<8x384xf32>
      %c0_23 = arith.constant 0 : index
      %c0_24 = arith.constant 0 : index
      %29 = vector.load %arg7[%c0_23, %c0_24] : memref<1x384xf32, #tpu.memory_space<vmem>>, vector<1x384xf32>
      %30 = vector.broadcast %29 : vector<1x384xf32> to vector<8x384xf32>
      %31 = arith.addf %28, %30 : vector<8x384xf32>
      %c0_25 = arith.constant 0 : index
      %c0_26 = arith.constant 0 : index
      %32 = vector.load %arg8[%c0_25, %c0_26] : memref<8x384xf32, #tpu.memory_space<vmem>>, vector<8x384xf32>
      tpu.vector_store %arg8[%c0_25, %c0_26], %31 {strides = array<i32>} : memref<8x384xf32, #tpu.memory_space<vmem>>, vector<8x384xf32>,
    } else {
    }
    return
  }
  func.func @transform_0(%arg0: i32) -> (i32, i32) {
    %c0_i32 = arith.constant 0 : i32
    %c0_i32_0 = arith.constant 0 : i32
    return %c0_i32, %arg0 : i32, i32
  }
  func.func @transform_1(%arg0: i32) -> (i32, i32) {
    %c0_i32 = arith.constant 0 : i32
    %c0_i32_0 = arith.constant 0 : i32
    return %arg0, %c0_i32 : i32, i32
  }
  func.func @transform_2(%arg0: i32) -> (i32, i32) {
    %c0_i32 = arith.constant 0 : i32
    %c0_i32_0 = arith.constant 0 : i32
    %c0_i32_1 = arith.constant 0 : i32
    return %c0_i32, %c0_i32_0 : i32, i32
  }
  func.func @transform_3(%arg0: i32) -> (i32, i32) {
    %c0_i32 = arith.constant 0 : i32
    %c0_i32_0 = arith.constant 0 : i32
    %c0_i32_1 = arith.constant 0 : i32
    return %c0_i32, %c0_i32_0 : i32, i32
  }
  func.func @transform_4(%arg0: i32) -> (i32, i32) {
    %c0_i32 = arith.constant 0 : i32
    %c0_i32_0 = arith.constant 0 : i32
    %c0_i32_1 = arith.constant 0 : i32
    return %c0_i32, %c0_i32_0 : i32, i32
  }
  func.func @transform_5(%arg0: i32) -> (i32, i32) {
    %c0_i32 = arith.constant 0 : i32
    %c0_i32_0 = arith.constant 0 : i32
    %c0_i32_1 = arith.constant 0 : i32
    return %c0_i32, %c0_i32_0 : i32, i32
  }
  func.func @transform_6(%arg0: i32) -> (i32, i32) {
    %c0_i32 = arith.constant 0 : i32
    %c0_i32_0 = arith.constant 0 : i32
    %c0_i32_1 = arith.constant 0 : i32
    return %c0_i32, %c0_i32_0 : i32, i32
  }
  func.func @transform_7(%arg0: i32) -> (i32, i32) {
    %c0_i32 = arith.constant 0 : i32
    %c0_i32_0 = arith.constant 0 : i32
    %c0_i32_1 = arith.constant 0 : i32
    return %c0_i32, %c0_i32_0 : i32, i32
  }
}

</mosaic_0001>

<llo_original>
// kernel: tpu_custom_call.1
$region0: #{tpu_custom_call.1}
  #allocation0 [shape = 'u32[]', space=smem, size = 0x4, offset = 0x4, fixed_abs, tag = 'smem constant byte address 0x4 - core index']
  #allocation1 [shape = 'u32[144,128]{1,0:T(1,128)}', space=vmem, size = 0x12000, scoped, tag = 'internal scratch']
  #allocation2 [shape = 'f32[8,1024]{1,0:T(8,128)}', space=vmem, size = 0x8000, scoped, tag = 'scratch operand']
  %s0 = inlined_call_operand.hbm [shape: bf16[8,2048], index: 0, kind: input, shape index: {}]
  %s1 = inlined_call_operand.hbm [shape: bf16[2048,1024], index: 1, kind: input, shape index: {}]
  %s2 = inlined_call_operand.hbm [shape: f32[1,1024], index: 2, kind: input, shape index: {}]
  %s3 = inlined_call_operand.hbm [shape: bf16[1024,1024], index: 3, kind: input, shape index: {}]
  %s4 = inlined_call_operand.hbm [shape: f32[1,1024], index: 4, kind: input, shape index: {}]
  %s5 = inlined_call_operand.hbm [shape: bf16[1024,384], index: 5, kind: input, shape index: {}]
  %s6 = inlined_call_operand.hbm [shape: f32[1,384], index: 6, kind: input, shape index: {}]
  %s7 = inlined_call_operand.hbm [shape: f32[8,384], index: 7, kind: output, shape index: {}]
  %s8 = sld [smem:[#allocation0]]
  $region97: #{tpu_custom_call.1} parent=0
    _
  %s10 = ssub.s32 1, %s8
  %s11 = scalar_select 0, %s10, %s8
  $region1: #{tpu_custom_call.1} parent=0
    #allocation3 [shape = 'u8[16384]{0}', space=vmem, size = 0x4000, scoped, tag = 'input window, operand 0']
    #allocation4 [shape = 's32[2]{0}', space=sflag, size = 0x8, scoped, tag = 'scoped memory for tpu_custom_call.1']
    #allocation5 [shape = 's32[2]{0}', space=sflag, size = 0x8, scoped, tag = 'scoped memory for tpu_custom_call.1']
    #allocation6 [shape = 'u8[2097152]{0}', space=vmem, size = 0x200000, scoped, tag = 'input window, operand 1']
    #allocation7 [shape = 's32[2]{0}', space=sflag, size = 0x8, scoped, tag = 'scoped memory for tpu_custom_call.1']
    #allocation8 [shape = 'u8[4096]{0}', space=vmem, size = 0x1000, scoped, tag = 'input window, operand 2, single buffered']
    #allocation9 [shape = 'u8[2097152]{0}', space=vmem, size = 0x200000, scoped, tag = 'input window, operand 3, single buffered']
    #allocation10 [shape = 's32[1]{0}', space=sflag, size = 0x4, scoped, tag = 'scoped memory for tpu_custom_call.1']
    #allocation11 [shape = 'u8[4096]{0}', space=vmem, size = 0x1000, scoped, tag = 'input window, operand 4, single buffered']
    #allocation12 [shape = 'u8[786432]{0}', space=vmem, size = 0xc0000, scoped, tag = 'input window, operand 5, single buffered']
    #allocation13 [shape = 's32[1]{0}', space=sflag, size = 0x4, scoped, tag = 'scoped memory for tpu_custom_call.1']
    #allocation14 [shape = 'u8[1536]{0}', space=vmem, size = 0x800, scoped, tag = 'input window, operand 6, single buffered']
    #allocation15 [shape = 'u8[12288]{0}', space=vmem, size = 0x3000, scoped, tag = 'output window, operand 0, single buffered']
    %12 = vsyncpa [#allocation4], 0
    %s13 = scalar_lea.sflag [#allocation4], 1
    %14 = vsyncpa %s13, 0
    %15 = vsyncpa [#allocation7], 0
    %s16 = scalar_lea.sflag [#allocation7], 1
    %17 = vsyncpa %s16, 0
    %18 = vsyncpa [#allocation10], 0
    %19 = vsyncpa [#allocation13], 0
    %20 = vsyncpa [#allocation5], 0
    loop: start=0, step=1, limit=6
    $region2: #{tpu_custom_call.1} parent=1 // loop_pre_header
      _
    $region3: #{tpu_custom_call.1} parent=1 // loop_header
      %s22 = sphi 0, %s26
      %p23 = scmp.ge.s32.totalorder %s22, 6
      %s32 = sphi 0, %s34
      %s35 = sphi 0, %s32
      %s36 = sphi 0, %s35
      %s52 = sphi 0, %s36
      %s58 = sphi 0, %s60
      %s61 = sphi 0, %s58
      %s62 = sphi 0, %s61
      %s78 = sphi 0, %s62
      %s82 = sphi 0, %s82
      %s84 = sphi 0, %s82
      %s85 = sphi 0, %s84
      %s99 = sphi 0, %s85
      %s103 = sphi 0, %s103
      %s105 = sphi 0, %s103
      %s106 = sphi 0, %s105
      %s120 = sphi 0, %s106
      %s124 = sphi 0, %s124
      %s126 = sphi 0, %s124
      %s127 = sphi 0, %s126
      %s141 = sphi 0, %s127
      %s145 = sphi 0, %s145
      %s147 = sphi 0, %s145
      %s148 = sphi 0, %s147
      %s162 = sphi 0, %s148
      %s166 = sphi 0, %s166
      %s168 = sphi 0, %s166
      %s169 = sphi 0, %s168
      %s183 = sphi 0, %s169
      %s187 = sphi 0, %s187
      %s189 = sphi 0, %s187
      %s190 = sphi 0, %s189
      %s204 = sphi 0, %s190
    $region4: #{tpu_custom_call.1} parent=1 // loop_header_branch
      %25 = sbr.rel (%p23) target = $region8
    $region5: #{tpu_custom_call.1} parent=1 // loop_body
      %s27 = ssub.s32 %s22, 1
      %s28 = ssub.s32 %s22, 2
      %s29 = sadd.s32 %s22, 1
      %s30 = ssub.s32 %s22, %s29
      %p31 = scmp.eq.s32.totalorder %s30, 0
      %s33 = sadd.s32 %s32, 1
      %s34 = scalar_select %p31, %s32, %s33
      %p37 = pneg %p31
      %p38 = scmp.eq.s32.totalorder %s22, 3
      %p39 = por %p37, %p38
      %p40 = scmp.ne.s32.totalorder %s32, %s35
      %p41 = scmp.eq.s32.totalorder %s22, 0
      %p42 = por %p40, %p41
      %p43 = scmp.ne.s32.totalorder %s32, %s35
      %p44 = scmp.eq.s32.totalorder %s27, 3
      %p45 = por %p43, %p44
      %p46 = scmp.ne.s32.totalorder %s35, %s36
      %p47 = scmp.eq.s32.totalorder %s27, 0
      %p48 = por %p46, %p47
      %p49 = scmp.ne.s32.totalorder %s35, %s36
      %p50 = scmp.eq.s32.totalorder %s28, 3
      %p51 = por %p49, %p50
      %p53 = scmp.ne.s32.totalorder %s36, %s52
      %p54 = scmp.eq.s32.totalorder %s28, 0
      %p55 = por %p53, %p54
      %s56 = ssub.s32 %s22, %s29
      %p57 = scmp.eq.s32.totalorder %s56, 0
      %s59 = sadd.s32 %s58, 1
      %s60 = scalar_select %p57, %s58, %s59
      %p63 = pneg %p57
      %p64 = scmp.eq.s32.totalorder %s22, 3
      %p65 = por %p63, %p64
      %p66 = scmp.ne.s32.totalorder %s58, %s61
      %p67 = scmp.eq.s32.totalorder %s22, 0
      %p68 = por %p66, %p67
      %p69 = scmp.ne.s32.totalorder %s58, %s61
      %p70 = scmp.eq.s32.totalorder %s27, 3
      %p71 = por %p69, %p70
      %p72 = scmp.ne.s32.totalorder %s61, %s62
      %p73 = scmp.eq.s32.totalorder %s27, 0
      %p74 = por %p72, %p73
      %p75 = scmp.ne.s32.totalorder %s61, %s62
      %p76 = scmp.eq.s32.totalorder %s28, 3
      %p77 = por %p75, %p76
      %p79 = scmp.ne.s32.totalorder %s62, %s78
      %p80 = scmp.eq.s32.totalorder %s28, 0
      %p81 = por %p79, %p80
      %s83 = sadd.s32 %s82, 1
      %p86 = scmp.eq.s32.totalorder %s22, 3
      %p87 = scmp.ne.s32.totalorder %s82, %s84
      %p88 = scmp.eq.s32.totalorder %s22, 0
      %p89 = por %p87, %p88
      %p90 = scmp.ne.s32.totalorder %s82, %s84
      %p91 = scmp.eq.s32.totalorder %s27, 3
      %p92 = por %p90, %p91
      %p93 = scmp.ne.s32.totalorder %s84, %s85
      %p94 = scmp.eq.s32.totalorder %s27, 0
      %p95 = por %p93, %p94
      %p96 = scmp.ne.s32.totalorder %s84, %s85
      %p97 = scmp.eq.s32.totalorder %s28, 3
      %p98 = por %p96, %p97
      %p100 = scmp.ne.s32.totalorder %s85, %s99
      %p101 = scmp.eq.s32.totalorder %s28, 0
      %p102 = por %p100, %p101
      %s104 = sadd.s32 %s103, 1
      %p107 = scmp.eq.s32.totalorder %s22, 3
      %p108 = scmp.ne.s32.totalorder %s103, %s105
      %p109 = scmp.eq.s32.totalorder %s22, 0
      %p110 = por %p108, %p109
      %p111 = scmp.ne.s32.totalorder %s103, %s105
      %p112 = scmp.eq.s32.totalorder %s27, 3
      %p113 = por %p111, %p112
      %p114 = scmp.ne.s32.totalorder %s105, %s106
      %p115 = scmp.eq.s32.totalorder %s27, 0
      %p116 = por %p114, %p115
      %p117 = scmp.ne.s32.totalorder %s105, %s106
      %p118 = scmp.eq.s32.totalorder %s28, 3
      %p119 = por %p117, %p118
      %p121 = scmp.ne.s32.totalorder %s106, %s120
      %p122 = scmp.eq.s32.totalorder %s28, 0
      %p123 = por %p121, %p122
      %s125 = sadd.s32 %s124, 1
      %p128 = scmp.eq.s32.totalorder %s22, 3
      %p129 = scmp.ne.s32.totalorder %s124, %s126
      %p130 = scmp.eq.s32.totalorder %s22, 0
      %p131 = por %p129, %p130
      %p132 = scmp.ne.s32.totalorder %s124, %s126
      %p133 = scmp.eq.s32.totalorder %s27, 3
      %p134 = por %p132, %p133
      %p135 = scmp.ne.s32.totalorder %s126, %s127
      %p136 = scmp.eq.s32.totalorder %s27, 0
      %p137 = por %p135, %p136
      %p138 = scmp.ne.s32.totalorder %s126, %s127
      %p139 = scmp.eq.s32.totalorder %s28, 3
      %p140 = por %p138, %p139
      %p142 = scmp.ne.s32.totalorder %s127, %s141
      %p143 = scmp.eq.s32.totalorder %s28, 0
      %p144 = por %p142, %p143
      %s146 = sadd.s32 %s145, 1
      %p149 = scmp.eq.s32.totalorder %s22, 3
      %p150 = scmp.ne.s32.totalorder %s145, %s147
      %p151 = scmp.eq.s32.totalorder %s22, 0
      %p152 = por %p150, %p151
      %p153 = scmp.ne.s32.totalorder %s145, %s147
      %p154 = scmp.eq.s32.totalorder %s27, 3
      %p155 = por %p153, %p154
      %p156 = scmp.ne.s32.totalorder %s147, %s148
      %p157 = scmp.eq.s32.totalorder %s27, 0
      %p158 = por %p156, %p157
      %p159 = scmp.ne.s32.totalorder %s147, %s148
      %p160 = scmp.eq.s32.totalorder %s28, 3
      %p161 = por %p159, %p160
      %p163 = scmp.ne.s32.totalorder %s148, %s162
      %p164 = scmp.eq.s32.totalorder %s28, 0
      %p165 = por %p163, %p164
      %s167 = sadd.s32 %s166, 1
      %p170 = scmp.eq.s32.totalorder %s22, 3
      %p171 = scmp.ne.s32.totalorder %s166, %s168
      %p172 = scmp.eq.s32.totalorder %s22, 0
      %p173 = por %p171, %p172
      %p174 = scmp.ne.s32.totalorder %s166, %s168
      %p175 = scmp.eq.s32.totalorder %s27, 3
      %p176 = por %p174, %p175
      %p177 = scmp.ne.s32.totalorder %s168, %s169
      %p178 = scmp.eq.s32.totalorder %s27, 0
      %p179 = por %p177, %p178
      %p180 = scmp.ne.s32.totalorder %s168, %s169
      %p181 = scmp.eq.s32.totalorder %s28, 3
      %p182 = por %p180, %p181
      %p184 = scmp.ne.s32.totalorder %s169, %s183
      %p185 = scmp.eq.s32.totalorder %s28, 0
      %p186 = por %p184, %p185
      %s188 = sadd.s32 %s187, 1
      %p191 = scmp.eq.s32.totalorder %s22, 3
      %p192 = scmp.ne.s32.totalorder %s187, %s189
      %p193 = scmp.eq.s32.totalorder %s22, 0
      %p194 = por %p192, %p193
      %p195 = scmp.ne.s32.totalorder %s187, %s189
      %p196 = scmp.eq.s32.totalorder %s27, 3
      %p197 = por %p195, %p196
      %p198 = scmp.ne.s32.totalorder %s189, %s190
      %p199 = scmp.eq.s32.totalorder %s27, 0
      %p200 = por %p198, %p199
      %p201 = scmp.ne.s32.totalorder %s189, %s190
      %p202 = scmp.eq.s32.totalorder %s28, 3
      %p203 = por %p201, %p202
      %p205 = scmp.ne.s32.totalorder %s190, %s204
      %p206 = scmp.eq.s32.totalorder %s28, 0
      %p207 = por %p205, %p206
      %p208 = scmp.le.s32.totalorder 1, %s22
      %p209 = scmp.lt.s32.totalorder %s22, 5
      %p210 = pnand %p208, %p209
      %p211 = pneg %p210
      // Predicated region
      $region9: #{tpu_custom_call.1} parent=5 // pred_check
        _
      $region10: #{tpu_custom_call.1} parent=5 // pred_check_branch
        %213 = sbr.rel (%p210) target = $region12
      $region11: #{tpu_custom_call.1} parent=5 // pred_region
        %s214 = ssub.s32 %s22, 1
        // Predicated region
        $region13: #{tpu_custom_call.1} parent=11 // pred_check
          %p215 = pneg %p95
        $region14: #{tpu_custom_call.1} parent=11 // pred_check_branch
          %217 = sbr.rel (%p215) target = $region16
        $region15: #{tpu_custom_call.1} parent=11 // pred_region
          %s219 = ssub.s32 128, 128
          %220 = vsyncadd [#allocation7], %s219
          %s222 = sshll.u32 [#allocation8], 4
          %s223 = int_to_ptr.vmem [resolvable:$true] %s222
          %225 = dma.hbm_to_vmem [thread:$0]  %s2, 128, %s223, [#allocation7]
        $region16: #{tpu_custom_call.1} parent=11 // pred_fallthru
          _
        // Predicated region
        $region17: #{tpu_custom_call.1} parent=11 // pred_check
          %p226 = pneg %p116
        $region18: #{tpu_custom_call.1} parent=11 // pred_check_branch
          %228 = sbr.rel (%p226) target = $region20
        $region19: #{tpu_custom_call.1} parent=11 // pred_region
          %s230 = ssub.s32 65536, 65536
          %231 = vsyncadd [#allocation10], %s230
          %s232 = sshll.u32 [#allocation9], 4
          %s233 = int_to_ptr.vmem [resolvable:$true] %s232
          %238 = dma.hbm_to_vmem [thread:$0]  %s3, 65536, %s233, [#allocation10], 512, 512, 32
        $region20: #{tpu_custom_call.1} parent=11 // pred_fallthru
          _
        // Predicated region
        $region21: #{tpu_custom_call.1} parent=11 // pred_check
          %p239 = pneg %p137
        $region22: #{tpu_custom_call.1} parent=11 // pred_check_branch
          %241 = sbr.rel (%p239) target = $region24
        $region23: #{tpu_custom_call.1} parent=11 // pred_region
          %s243 = ssub.s32 128, 128
          %244 = vsyncadd [#allocation10], %s243
          %s246 = sshll.u32 [#allocation11], 4
          %s247 = int_to_ptr.vmem [resolvable:$true] %s246
          %249 = dma.hbm_to_vmem [thread:$0]  %s4, 128, %s247, [#allocation10]
        $region24: #{tpu_custom_call.1} parent=11 // pred_fallthru
          _
        // Predicated region
        $region25: #{tpu_custom_call.1} parent=11 // pred_check
          %p250 = pneg %p158
        $region26: #{tpu_custom_call.1} parent=11 // pred_check_branch
          %252 = sbr.rel (%p250) target = $region28
        $region27: #{tpu_custom_call.1} parent=11 // pred_region
          %s254 = ssub.s32 24576, 24576
          %255 = vsyncadd [#allocation13], %s254
          %s256 = sshll.u32 [#allocation12], 4
          %s257 = int_to_ptr.vmem [resolvable:$true] %s256
          %262 = dma.hbm_to_vmem [thread:$0]  %s5, 24576, %s257, [#allocation13], 192, 192, 12
        $region28: #{tpu_custom_call.1} parent=11 // pred_fallthru
          _
        // Predicated region
        $region29: #{tpu_custom_call.1} parent=11 // pred_check
          %p263 = pneg %p179
        $region30: #{tpu_custom_call.1} parent=11 // pred_check_branch
          %265 = sbr.rel (%p263) target = $region32
        $region31: #{tpu_custom_call.1} parent=11 // pred_region
          %s267 = ssub.s32 48, 48
          %268 = vsyncadd [#allocation13], %s267
          %s270 = sshll.u32 [#allocation14], 4
          %s271 = int_to_ptr.vmem [resolvable:$true] %s270
          %273 = dma.hbm_to_vmem [thread:$0]  %s6, 48, %s271, [#allocation13]
        $region32: #{tpu_custom_call.1} parent=11 // pred_fallthru
          _
      $region12: #{tpu_custom_call.1} parent=5 // pred_fallthru
        _
      %p274 = scmp.lt.s32.totalorder %s22, 4
      // Predicated region
      $region33: #{tpu_custom_call.1} parent=5 // pred_check
        %p275 = pneg %p274
      $region34: #{tpu_custom_call.1} parent=5 // pred_check_branch
        %277 = sbr.rel (%p275) target = $region36
      $region35: #{tpu_custom_call.1} parent=5 // pred_region
        // Predicated region
        $region37: #{tpu_custom_call.1} parent=35 // pred_check
          %p278 = pneg %p42
        $region38: #{tpu_custom_call.1} parent=35 // pred_check_branch
          %280 = sbr.rel (%p278) target = $region40
        $region39: #{tpu_custom_call.1} parent=35 // pred_region
          %s281 = sand.u32 %s32, 1
          %s282 = scalar_lea.sflag [#allocation4], %s281
          %s283 = sand.u32 %s32, 1
          %s284 = smul.addr %s283, 16
          %s285 = scalar_lea.vmem [#allocation3], %s284
          %s286 = smul.u32 4, %s22
          %s288 = ssub.s32 256, 256
          %289 = vsyncadd %s282, %s288
          %s290 = smul.addr %s286, 64
          %s291 = scalar_lea.hbm %s0, %s290
          %s293 = sshll.u32 %s285, 4
          %s294 = int_to_ptr.vmem [resolvable:$true] %s293
          %296 = dma.hbm_to_vmem [thread:$0]  %s291, 256, %s294, %s282
        $region40: #{tpu_custom_call.1} parent=35 // pred_fallthru
          _
        // Predicated region
        $region41: #{tpu_custom_call.1} parent=35 // pred_check
          %p297 = pneg %p68
        $region42: #{tpu_custom_call.1} parent=35 // pred_check_branch
          %299 = sbr.rel (%p297) target = $region44
        $region43: #{tpu_custom_call.1} parent=35 // pred_region
          %s300 = sand.u32 %s22, 1
          %s301 = scalar_lea.sflag [#allocation7], %s300
          %s302 = sand.u32 %s58, 1
          %s303 = smul.addr %s302, 2048
          %s304 = scalar_lea.vmem [#allocation6], %s303
          %s305 = smul.u32 64, %s22
          %s307 = ssub.s32 32768, 32768
          %308 = vsyncadd %s301, %s307
          %s309 = smul.addr %s305, 8
          %s310 = smul.addr %s309, 64
          %s311 = scalar_lea.hbm %s1, %s310
          %s312 = sshll.u32 %s304, 4
          %s313 = int_to_ptr.vmem [resolvable:$true] %s312
          %318 = dma.hbm_to_vmem [thread:$0]  %s311, 32768, %s313, %s301, 512, 512, 32
        $region44: #{tpu_custom_call.1} parent=35 // pred_fallthru
          _
      $region36: #{tpu_custom_call.1} parent=5 // pred_fallthru
        _
      %p319 = scmp.le.s32.totalorder 1, %s22
      %p320 = scmp.lt.s32.totalorder %s22, 5
      %p321 = pnand %p319, %p320
      %p322 = pneg %p321
      // Predicated region
      $region45: #{tpu_custom_call.1} parent=5 // pred_check
        _
      $region46: #{tpu_custom_call.1} parent=5 // pred_check_branch
        %324 = sbr.rel (%p321) target = $region48
      $region47: #{tpu_custom_call.1} parent=5 // pred_region
        %s325 = ssub.s32 %s22, 1
        %s326 = sand.u32 %s35, 1
        %s327 = scalar_lea.sflag [#allocation4], %s326
        %s328 = sand.u32 %s35, 1
        %s329 = smul.addr %s328, 16
        %s330 = scalar_lea.vmem [#allocation3], %s329
        // Predicated region
        $region49: #{tpu_custom_call.1} parent=47 // pred_check
          %p331 = pneg %p48
        $region50: #{tpu_custom_call.1} parent=47 // pred_check_branch
          %333 = sbr.rel (%p331) target = $region52
        $region51: #{tpu_custom_call.1} parent=47 // pred_region
          %334 = dma.done %s327, 256
        $region52: #{tpu_custom_call.1} parent=47 // pred_fallthru
          _
        %s335 = sand.u32 %s27, 1
        %s336 = scalar_lea.sflag [#allocation7], %s335
        %s337 = sand.u32 %s61, 1
        %s338 = smul.addr %s337, 2048
        %s339 = scalar_lea.vmem [#allocation6], %s338
        // Predicated region
        $region53: #{tpu_custom_call.1} parent=47 // pred_check
          %p340 = pneg %p74
        $region54: #{tpu_custom_call.1} parent=47 // pred_check_branch
          %342 = sbr.rel (%p340) target = $region56
        $region55: #{tpu_custom_call.1} parent=47 // pred_region
          %343 = dma.done %s336, 32768
        $region56: #{tpu_custom_call.1} parent=47 // pred_fallthru
          _
        // Predicated region
        $region57: #{tpu_custom_call.1} parent=47 // pred_check
          %p344 = pneg %p95
        $region58: #{tpu_custom_call.1} parent=47 // pred_check_branch
          %346 = sbr.rel (%p344) target = $region60
        $region59: #{tpu_custom_call.1} parent=47 // pred_region
          %347 = dma.done [#allocation7], 128
        $region60: #{tpu_custom_call.1} parent=47 // pred_fallthru
          _
        // Predicated region
        $region61: #{tpu_custom_call.1} parent=47 // pred_check
          %p348 = pneg %p116
        $region62: #{tpu_custom_call.1} parent=47 // pred_check_branch
          %350 = sbr.rel (%p348) target = $region64
        $region63: #{tpu_custom_call.1} parent=47 // pred_region
          %351 = dma.done [#allocation10], 65536
        $region64: #{tpu_custom_call.1} parent=47 // pred_fallthru
          _
        // Predicated region
        $region65: #{tpu_custom_call.1} parent=47 // pred_check
          %p352 = pneg %p137
        $region66: #{tpu_custom_call.1} parent=47 // pred_check_branch
          %354 = sbr.rel (%p352) target = $region68
        $region67: #{tpu_custom_call.1} parent=47 // pred_region
          %355 = dma.done [#allocation10], 128
        $region68: #{tpu_custom_call.1} parent=47 // pred_fallthru
          _
        // Predicated region
        $region69: #{tpu_custom_call.1} parent=47 // pred_check
          %p356 = pneg %p158
        $region70: #{tpu_custom_call.1} parent=47 // pred_check_branch
          %358 = sbr.rel (%p356) target = $region72
        $region71: #{tpu_custom_call.1} parent=47 // pred_region
          %359 = dma.done [#allocation13], 24576
        $region72: #{tpu_custom_call.1} parent=47 // pred_fallthru
          _
        // Predicated region
        $region73: #{tpu_custom_call.1} parent=47 // pred_check
          %p360 = pneg %p179
        $region74: #{tpu_custom_call.1} parent=47 // pred_check_branch
          %362 = sbr.rel (%p360) target = $region76
        $region75: #{tpu_custom_call.1} parent=47 // pred_region
          %363 = dma.done [#allocation13], 48
        $region76: #{tpu_custom_call.1} parent=47 // pred_fallthru
          _
        %s364 = sand.u32 %s35, 1
        %s365 = scalar_lea.sflag [#allocation4], %s364
        %s366 = sand.u32 %s35, 1
        %s367 = smul.addr %s366, 16
        %s368 = scalar_lea.vmem [#allocation3], %s367
        %p369 = pneg %p48
        %p370 = pneg %p45
        %s371 = sand.u32 %s27, 1
        %s372 = scalar_lea.sflag [#allocation7], %s371
        %s373 = sand.u32 %s61, 1
        %s374 = smul.addr %s373, 2048
        %s375 = scalar_lea.vmem [#allocation6], %s374
        %p376 = pneg %p74
        %p377 = pneg %p71
        %p378 = pneg %p95
        %p379 = pneg %p92
        %p380 = pneg %p116
        %p381 = pneg %p113
        %p382 = pneg %p137
        %p383 = pneg %p134
        %p384 = pneg %p158
        %p385 = pneg %p155
        %p386 = pneg %p179
        %p387 = pneg %p176
        %p388 = pneg %p200
        %p389 = pneg %p197
        %s390 = smul.u32 4, %s27
        %s391 = smul.u32 64, %s27
        %p393 = scmp.eq.s32.totalorder %s27, 0
        // Predicated region
        $region77: #{tpu_custom_call.1} parent=47 // pred_check
          %p394 = pneg %p393
        $region78: #{tpu_custom_call.1} parent=47 // pred_check_branch
          %396 = sbr.rel (%p394) target = $region80
        $region79: #{tpu_custom_call.1} parent=47 // pred_region
          %397 = vst [vmem:[#allocation2] sm:$0xff] 0.0
          %398 = vst [vmem:[#allocation2 + $0x8] sm:$0xff] 0.0
          %399 = vst [vmem:[#allocation2 + $0x10] sm:$0xff] 0.0
          %400 = vst [vmem:[#allocation2 + $0x18] sm:$0xff] 0.0
          %401 = vst [vmem:[#allocation2 + $0x20] sm:$0xff] 0.0
          %402 = vst [vmem:[#allocation2 + $0x28] sm:$0xff] 0.0
          %403 = vst [vmem:[#allocation2 + $0x30] sm:$0xff] 0.0
          %404 = vst [vmem:[#allocation2 + $0x38] sm:$0xff] 0.0
        $region80: #{tpu_custom_call.1} parent=47 // pred_fallthru
          _
        %v405 = vld [vmem:[#allocation2] sm:$0xff]
        %v406 = vld [vmem:[#allocation2 + $0x8] sm:$0xff]
        %v407 = vld [vmem:[#allocation2 + $0x10] sm:$0xff]
        %v408 = vld [vmem:[#allocation2 + $0x18] sm:$0xff]
        %v409 = vld [vmem:[#allocation2 + $0x20] sm:$0xff]
        %v410 = vld [vmem:[#allocation2 + $0x28] sm:$0xff]
        %v411 = vld [vmem:[#allocation2 + $0x30] sm:$0xff]
        %v412 = vld [vmem:[#allocation2 + $0x38] sm:$0xff]
        %v413 = vld [vmem:[%s330] sm:$0xff]
        %v414 = vld [vmem:[%s330 + $0x8] sm:$0xff]
        %v415 = vld [vmem:[%s339] sm:$0xff]
        %v416 = vld [vmem:[%s339 + $0x8] sm:$0xff]
        %v417 = vld [vmem:[%s339 + $0x10] sm:$0xff]
        %v418 = vld [vmem:[%s339 + $0x18] sm:$0xff]
        %v419 = vld [vmem:[%s339 + $0x20] sm:$0xff]
        %v420 = vld [vmem:[%s339 + $0x28] sm:$0xff]
        %v421 = vld [vmem:[%s339 + $0x30] sm:$0xff]
        %v422 = vld [vmem:[%s339 + $0x38] sm:$0xff]
        %v423 = vld [vmem:[%s339 + $0x40] sm:$0xff]
        %v424 = vld [vmem:[%s339 + $0x48] sm:$0xff]
        %v425 = vld [vmem:[%s339 + $0x50] sm:$0xff]
        %v426 = vld [vmem:[%s339 + $0x58] sm:$0xff]
        %v427 = vld [vmem:[%s339 + $0x60] sm:$0xff]
        %v428 = vld [vmem:[%s339 + $0x68] sm:$0xff]
        %v429 = vld [vmem:[%s339 + $0x70] sm:$0xff]
        %v430 = vld [vmem:[%s339 + $0x78] sm:$0xff]
        %v431 = vld [vmem:[%s339 + $0x80] sm:$0xff]
        %v432 = vld [vmem:[%s339 + $0x88] sm:$0xff]
        %v433 = vld [vmem:[%s339 + $0x90] sm:$0xff]
        %v434 = vld [vmem:[%s339 + $0x98] sm:$0xff]
        %v435 = vld [vmem:[%s339 + $0xa0] sm:$0xff]
        %v436 = vld [vmem:[%s339 + $0xa8] sm:$0xff]
        %v437 = vld [vmem:[%s339 + $0xb0] sm:$0xff]
        %v438 = vld [vmem:[%s339 + $0xb8] sm:$0xff]
        %v439 = vld [vmem:[%s339 + $0xc0] sm:$0xff]
        %v440 = vld [vmem:[%s339 + $0xc8] sm:$0xff]
        %v441 = vld [vmem:[%s339 + $0xd0] sm:$0xff]
        %v442 = vld [vmem:[%s339 + $0xd8] sm:$0xff]
        %v443 = vld [vmem:[%s339 + $0xe0] sm:$0xff]
        %v444 = vld [vmem:[%s339 + $0xe8] sm:$0xff]
        %v445 = vld [vmem:[%s339 + $0xf0] sm:$0xff]
        %v446 = vld [vmem:[%s339 + $0xf8] sm:$0xff]
        %v447 = vld [vmem:[%s339 + $0x100] sm:$0xff]
        %v448 = vld [vmem:[%s339 + $0x108] sm:$0xff]
        %v449 = vld [vmem:[%s339 + $0x110] sm:$0xff]
        %v450 = vld [vmem:[%s339 + $0x118] sm:$0xff]
        %v451 = vld [vmem:[%s339 + $0x120] sm:$0xff]
        %v452 = vld [vmem:[%s339 + $0x128] sm:$0xff]
        %v453 = vld [vmem:[%s339 + $0x130] sm:$0xff]
        %v454 = vld [vmem:[%s339 + $0x138] sm:$0xff]
        %v455 = vld [vmem:[%s339 + $0x140] sm:$0xff]
        %v456 = vld [vmem:[%s339 + $0x148] sm:$0xff]
        %v457 = vld [vmem:[%s339 + $0x150] sm:$0xff]
        %v458 = vld [vmem:[%s339 + $0x158] sm:$0xff]
        %v459 = vld [vmem:[%s339 + $0x160] sm:$0xff]
        %v460 = vld [vmem:[%s339 + $0x168] sm:$0xff]
        %v461 = vld [vmem:[%s339 + $0x170] sm:$0xff]
        %v462 = vld [vmem:[%s339 + $0x178] sm:$0xff]
        %v463 = vld [vmem:[%s339 + $0x180] sm:$0xff]
        %v464 = vld [vmem:[%s339 + $0x188] sm:$0xff]
        %v465 = vld [vmem:[%s339 + $0x190] sm:$0xff]
        %v466 = vld [vmem:[%s339 + $0x198] sm:$0xff]
        %v467 = vld [vmem:[%s339 + $0x1a0] sm:$0xff]
        %v468 = vld [vmem:[%s339 + $0x1a8] sm:$0xff]
        %v469 = vld [vmem:[%s339 + $0x1b0] sm:$0xff]
        %v470 = vld [vmem:[%s339 + $0x1b8] sm:$0xff]
        %v471 = vld [vmem:[%s339 + $0x1c0] sm:$0xff]
        %v472 = vld [vmem:[%s339 + $0x1c8] sm:$0xff]
        %v473 = vld [vmem:[%s339 + $0x1d0] sm:$0xff]
        %v474 = vld [vmem:[%s339 + $0x1d8] sm:$0xff]
        %v475 = vld [vmem:[%s339 + $0x1e0] sm:$0xff]
        %v476 = vld [vmem:[%s339 + $0x1e8] sm:$0xff]
        %v477 = vld [vmem:[%s339 + $0x1f0] sm:$0xff]
        %v478 = vld [vmem:[%s339 + $0x1f8] sm:$0xff]
        %v479 = vld [vmem:[%s339 + $0x200] sm:$0xff]
        %v480 = vld [vmem:[%s339 + $0x208] sm:$0xff]
        %v481 = vld [vmem:[%s339 + $0x210] sm:$0xff]
        %v482 = vld [vmem:[%s339 + $0x218] sm:$0xff]
        %v483 = vld [vmem:[%s339 + $0x220] sm:$0xff]
        %v484 = vld [vmem:[%s339 + $0x228] sm:$0xff]
        %v485 = vld [vmem:[%s339 + $0x230] sm:$0xff]
        %v486 = vld [vmem:[%s339 + $0x238] sm:$0xff]
        %v487 = vld [vmem:[%s339 + $0x240] sm:$0xff]
        %v488 = vld [vmem:[%s339 + $0x248] sm:$0xff]
        %v489 = vld [vmem:[%s339 + $0x250] sm:$0xff]
        %v490 = vld [vmem:[%s339 + $0x258] sm:$0xff]
        %v491 = vld [vmem:[%s339 + $0x260] sm:$0xff]
        %v492 = vld [vmem:[%s339 + $0x268] sm:$0xff]
        %v493 = vld [vmem:[%s339 + $0x270] sm:$0xff]
        %v494 = vld [vmem:[%s339 + $0x278] sm:$0xff]
        %v495 = vld [vmem:[%s339 + $0x280] sm:$0xff]
        %v496 = vld [vmem:[%s339 + $0x288] sm:$0xff]
        %v497 = vld [vmem:[%s339 + $0x290] sm:$0xff]
        %v498 = vld [vmem:[%s339 + $0x298] sm:$0xff]
        %v499 = vld [vmem:[%s339 + $0x2a0] sm:$0xff]
        %v500 = vld [vmem:[%s339 + $0x2a8] sm:$0xff]
        %v501 = vld [vmem:[%s339 + $0x2b0] sm:$0xff]
        %v502 = vld [vmem:[%s339 + $0x2b8] sm:$0xff]
        %v503 = vld [vmem:[%s339 + $0x2c0] sm:$0xff]
        %v504 = vld [vmem:[%s339 + $0x2c8] sm:$0xff]
        %v505 = vld [vmem:[%s339 + $0x2d0] sm:$0xff]
        %v506 = vld [vmem:[%s339 + $0x2d8] sm:$0xff]
        %v507 = vld [vmem:[%s339 + $0x2e0] sm:$0xff]
        %v508 = vld [vmem:[%s339 + $0x2e8] sm:$0xff]
        %v509 = vld [vmem:[%s339 + $0x2f0] sm:$0xff]
        %v510 = vld [vmem:[%s339 + $0x2f8] sm:$0xff]
        %v511 = vld [vmem:[%s339 + $0x300] sm:$0xff]
        %v512 = vld [vmem:[%s339 + $0x308] sm:$0xff]
        %v513 = vld [vmem:[%s339 + $0x310] sm:$0xff]
        %v514 = vld [vmem:[%s339 + $0x318] sm:$0xff]
        %v515 = vld [vmem:[%s339 + $0x320] sm:$0xff]
        %v516 = vld [vmem:[%s339 + $0x328] sm:$0xff]
        %v517 = vld [vmem:[%s339 + $0x330] sm:$0xff]
        %v518 = vld [vmem:[%s339 + $0x338] sm:$0xff]
        %v519 = vld [vmem:[%s339 + $0x340] sm:$0xff]
        %v520 = vld [vmem:[%s339 + $0x348] sm:$0xff]
        %v521 = vld [vmem:[%s339 + $0x350] sm:$0xff]
        %v522 = vld [vmem:[%s339 + $0x358] sm:$0xff]
        %v523 = vld [vmem:[%s339 + $0x360] sm:$0xff]
        %v524 = vld [vmem:[%s339 + $0x368] sm:$0xff]
        %v525 = vld [vmem:[%s339 + $0x370] sm:$0xff]
        %v526 = vld [vmem:[%s339 + $0x378] sm:$0xff]
        %v527 = vld [vmem:[%s339 + $0x380] sm:$0xff]
        %v528 = vld [vmem:[%s339 + $0x388] sm:$0xff]
        %v529 = vld [vmem:[%s339 + $0x390] sm:$0xff]
        %v530 = vld [vmem:[%s339 + $0x398] sm:$0xff]
        %v531 = vld [vmem:[%s339 + $0x3a0] sm:$0xff]
        %v532 = vld [vmem:[%s339 + $0x3a8] sm:$0xff]
        %v533 = vld [vmem:[%s339 + $0x3b0] sm:$0xff]
        %v534 = vld [vmem:[%s339 + $0x3b8] sm:$0xff]
        %v535 = vld [vmem:[%s339 + $0x3c0] sm:$0xff]
        %v536 = vld [vmem:[%s339 + $0x3c8] sm:$0xff]
        %v537 = vld [vmem:[%s339 + $0x3d0] sm:$0xff]
        %v538 = vld [vmem:[%s339 + $0x3d8] sm:$0xff]
        %v539 = vld [vmem:[%s339 + $0x3e0] sm:$0xff]
        %v540 = vld [vmem:[%s339 + $0x3e8] sm:$0xff]
        %v541 = vld [vmem:[%s339 + $0x3f0] sm:$0xff]
        %v542 = vld [vmem:[%s339 + $0x3f8] sm:$0xff]
        %v543 = vld [vmem:[%s339 + $0x400] sm:$0xff]
        %v544 = vld [vmem:[%s339 + $0x408] sm:$0xff]
        %v545 = vld [vmem:[%s339 + $0x410] sm:$0xff]
        %v546 = vld [vmem:[%s339 + $0x418] sm:$0xff]
        %v547 = vld [vmem:[%s339 + $0x420] sm:$0xff]
        %v548 = vld [vmem:[%s339 + $0x428] sm:$0xff]
        %v549 = vld [vmem:[%s339 + $0x430] sm:$0xff]
        %v550 = vld [vmem:[%s339 + $0x438] sm:$0xff]
        %v551 = vld [vmem:[%s339 + $0x440] sm:$0xff]
        %v552 = vld [vmem:[%s339 + $0x448] sm:$0xff]
        %v553 = vld [vmem:[%s339 + $0x450] sm:$0xff]
        %v554 = vld [vmem:[%s339 + $0x458] sm:$0xff]
        %v555 = vld [vmem:[%s339 + $0x460] sm:$0xff]
        %v556 = vld [vmem:[%s339 + $0x468] sm:$0xff]
        %v557 = vld [vmem:[%s339 + $0x470] sm:$0xff]
        %v558 = vld [vmem:[%s339 + $0x478] sm:$0xff]
        %v559 = vld [vmem:[%s339 + $0x480] sm:$0xff]
        %v560 = vld [vmem:[%s339 + $0x488] sm:$0xff]
        %v561 = vld [vmem:[%s339 + $0x490] sm:$0xff]
        %v562 = vld [vmem:[%s339 + $0x498] sm:$0xff]
        %v563 = vld [vmem:[%s339 + $0x4a0] sm:$0xff]
        %v564 = vld [vmem:[%s339 + $0x4a8] sm:$0xff]
        %v565 = vld [vmem:[%s339 + $0x4b0] sm:$0xff]
        %v566 = vld [vmem:[%s339 + $0x4b8] sm:$0xff]
        %v567 = vld [vmem:[%s339 + $0x4c0] sm:$0xff]
        %v568 = vld [vmem:[%s339 + $0x4c8] sm:$0xff]
        %v569 = vld [vmem:[%s339 + $0x4d0] sm:$0xff]
        %v570 = vld [vmem:[%s339 + $0x4d8] sm:$0xff]
        %v571 = vld [vmem:[%s339 + $0x4e0] sm:$0xff]
        %v572 = vld [vmem:[%s339 + $0x4e8] sm:$0xff]
        %v573 = vld [vmem:[%s339 + $0x4f0] sm:$0xff]
        %v574 = vld [vmem:[%s339 + $0x4f8] sm:$0xff]
        %v575 = vld [vmem:[%s339 + $0x500] sm:$0xff]
        %v576 = vld [vmem:[%s339 + $0x508] sm:$0xff]
        %v577 = vld [vmem:[%s339 + $0x510] sm:$0xff]
        %v578 = vld [vmem:[%s339 + $0x518] sm:$0xff]
        %v579 = vld [vmem:[%s339 + $0x520] sm:$0xff]
        %v580 = vld [vmem:[%s339 + $0x528] sm:$0xff]
        %v581 = vld [vmem:[%s339 + $0x530] sm:$0xff]
        %v582 = vld [vmem:[%s339 + $0x538] sm:$0xff]
        %v583 = vld [vmem:[%s339 + $0x540] sm:$0xff]
        %v584 = vld [vmem:[%s339 + $0x548] sm:$0xff]
        %v585 = vld [vmem:[%s339 + $0x550] sm:$0xff]
        %v586 = vld [vmem:[%s339 + $0x558] sm:$0xff]
        %v587 = vld [vmem:[%s339 + $0x560] sm:$0xff]
        %v588 = vld [vmem:[%s339 + $0x568] sm:$0xff]
        %v589 = vld [vmem:[%s339 + $0x570] sm:$0xff]
        %v590 = vld [vmem:[%s339 + $0x578] sm:$0xff]
        %v591 = vld [vmem:[%s339 + $0x580] sm:$0xff]
        %v592 = vld [vmem:[%s339 + $0x588] sm:$0xff]
        %v593 = vld [vmem:[%s339 + $0x590] sm:$0xff]
        %v594 = vld [vmem:[%s339 + $0x598] sm:$0xff]
        %v595 = vld [vmem:[%s339 + $0x5a0] sm:$0xff]
        %v596 = vld [vmem:[%s339 + $0x5a8] sm:$0xff]
        %v597 = vld [vmem:[%s339 + $0x5b0] sm:$0xff]
        %v598 = vld [vmem:[%s339 + $0x5b8] sm:$0xff]
        %v599 = vld [vmem:[%s339 + $0x5c0] sm:$0xff]
        %v600 = vld [vmem:[%s339 + $0x5c8] sm:$0xff]
        %v601 = vld [vmem:[%s339 + $0x5d0] sm:$0xff]
        %v602 = vld [vmem:[%s339 + $0x5d8] sm:$0xff]
        %v603 = vld [vmem:[%s339 + $0x5e0] sm:$0xff]
        %v604 = vld [vmem:[%s339 + $0x5e8] sm:$0xff]
        %v605 = vld [vmem:[%s339 + $0x5f0] sm:$0xff]
        %v606 = vld [vmem:[%s339 + $0x5f8] sm:$0xff]
        %v607 = vld [vmem:[%s339 + $0x600] sm:$0xff]
        %v608 = vld [vmem:[%s339 + $0x608] sm:$0xff]
        %v609 = vld [vmem:[%s339 + $0x610] sm:$0xff]
        %v610 = vld [vmem:[%s339 + $0x618] sm:$0xff]
        %v611 = vld [vmem:[%s339 + $0x620] sm:$0xff]
        %v612 = vld [vmem:[%s339 + $0x628] sm:$0xff]
        %v613 = vld [vmem:[%s339 + $0x630] sm:$0xff]
        %v614 = vld [vmem:[%s339 + $0x638] sm:$0xff]
        %v615 = vld [vmem:[%s339 + $0x640] sm:$0xff]
        %v616 = vld [vmem:[%s339 + $0x648] sm:$0xff]
        %v617 = vld [vmem:[%s339 + $0x650] sm:$0xff]
        %v618 = vld [vmem:[%s339 + $0x658] sm:$0xff]
        %v619 = vld [vmem:[%s339 + $0x660] sm:$0xff]
        %v620 = vld [vmem:[%s339 + $0x668] sm:$0xff]
        %v621 = vld [vmem:[%s339 + $0x670] sm:$0xff]
        %v622 = vld [vmem:[%s339 + $0x678] sm:$0xff]
        %v623 = vld [vmem:[%s339 + $0x680] sm:$0xff]
        %v624 = vld [vmem:[%s339 + $0x688] sm:$0xff]
        %v625 = vld [vmem:[%s339 + $0x690] sm:$0xff]
        %v626 = vld [vmem:[%s339 + $0x698] sm:$0xff]
        %v627 = vld [vmem:[%s339 + $0x6a0] sm:$0xff]
        %v628 = vld [vmem:[%s339 + $0x6a8] sm:$0xff]
        %v629 = vld [vmem:[%s339 + $0x6b0] sm:$0xff]
        %v630 = vld [vmem:[%s339 + $0x6b8] sm:$0xff]
        %v631 = vld [vmem:[%s339 + $0x6c0] sm:$0xff]
        %v632 = vld [vmem:[%s339 + $0x6c8] sm:$0xff]
        %v633 = vld [vmem:[%s339 + $0x6d0] sm:$0xff]
        %v634 = vld [vmem:[%s339 + $0x6d8] sm:$0xff]
        %v635 = vld [vmem:[%s339 + $0x6e0] sm:$0xff]
        %v636 = vld [vmem:[%s339 + $0x6e8] sm:$0xff]
        %v637 = vld [vmem:[%s339 + $0x6f0] sm:$0xff]
        %v638 = vld [vmem:[%s339 + $0x6f8] sm:$0xff]
        %v639 = vld [vmem:[%s339 + $0x700] sm:$0xff]
        %v640 = vld [vmem:[%s339 + $0x708] sm:$0xff]
        %v641 = vld [vmem:[%s339 + $0x710] sm:$0xff]
        %v642 = vld [vmem:[%s339 + $0x718] sm:$0xff]
        %v643 = vld [vmem:[%s339 + $0x720] sm:$0xff]
        %v644 = vld [vmem:[%s339 + $0x728] sm:$0xff]
        %v645 = vld [vmem:[%s339 + $0x730] sm:$0xff]
        %v646 = vld [vmem:[%s339 + $0x738] sm:$0xff]
        %v647 = vld [vmem:[%s339 + $0x740] sm:$0xff]
        %v648 = vld [vmem:[%s339 + $0x748] sm:$0xff]
        %v649 = vld [vmem:[%s339 + $0x750] sm:$0xff]
        %v650 = vld [vmem:[%s339 + $0x758] sm:$0xff]
        %v651 = vld [vmem:[%s339 + $0x760] sm:$0xff]
        %v652 = vld [vmem:[%s339 + $0x768] sm:$0xff]
        %v653 = vld [vmem:[%s339 + $0x770] sm:$0xff]
        %v654 = vld [vmem:[%s339 + $0x778] sm:$0xff]
        %v655 = vld [vmem:[%s339 + $0x780] sm:$0xff]
        %v656 = vld [vmem:[%s339 + $0x788] sm:$0xff]
        %v657 = vld [vmem:[%s339 + $0x790] sm:$0xff]
        %v658 = vld [vmem:[%s339 + $0x798] sm:$0xff]
        %v659 = vld [vmem:[%s339 + $0x7a0] sm:$0xff]
        %v660 = vld [vmem:[%s339 + $0x7a8] sm:$0xff]
        %v661 = vld [vmem:[%s339 + $0x7b0] sm:$0xff]
        %v662 = vld [vmem:[%s339 + $0x7b8] sm:$0xff]
        %v663 = vld [vmem:[%s339 + $0x7c0] sm:$0xff]
        %v664 = vld [vmem:[%s339 + $0x7c8] sm:$0xff]
        %v665 = vld [vmem:[%s339 + $0x7d0] sm:$0xff]
        %v666 = vld [vmem:[%s339 + $0x7d8] sm:$0xff]
        %v667 = vld [vmem:[%s339 + $0x7e0] sm:$0xff]
        %v668 = vld [vmem:[%s339 + $0x7e8] sm:$0xff]
        %v669 = vld [vmem:[%s339 + $0x7f0] sm:$0xff]
        %v670 = vld [vmem:[%s339 + $0x7f8] sm:$0xff]
        %v673 = vunpack.c.l.b16 %v413
        %v674 = vunpack.c.h.b16 %v413
        %v675 = vunpack.c.l.b16 %v414
        %v676 = vunpack.c.h.b16 %v414
        %v677 = vpack.c.b16 %v673, %v673
        %v678 = vpack.c.b16 %v674, %v674
        %v679 = vpack.c.b16 %v675, %v675
        %v680 = vpack.c.b16 %v676, %v676
        %v941 = vunpack.c.l.b16 %v415
        %v942 = vunpack.c.h.b16 %v415
        %v943 = vunpack.c.l.b16 %v416
        %v944 = vunpack.c.h.b16 %v416
        %v945 = vunpack.c.l.b16 %v417
        %v946 = vunpack.c.h.b16 %v417
        %v947 = vunpack.c.l.b16 %v418
        %v948 = vunpack.c.h.b16 %v418
        %v949 = vunpack.c.l.b16 %v419
        %v950 = vunpack.c.h.b16 %v419
        %v951 = vunpack.c.l.b16 %v420
        %v952 = vunpack.c.h.b16 %v420
        %v953 = vunpack.c.l.b16 %v421
        %v954 = vunpack.c.h.b16 %v421
        %v955 = vunpack.c.l.b16 %v422
        %v956 = vunpack.c.h.b16 %v422
        %v957 = vunpack.c.l.b16 %v423
        %v958 = vunpack.c.h.b16 %v423
        %v959 = vunpack.c.l.b16 %v424
        %v960 = vunpack.c.h.b16 %v424
        %v961 = vunpack.c.l.b16 %v425
        %v962 = vunpack.c.h.b16 %v425
        %v963 = vunpack.c.l.b16 %v426
        %v964 = vunpack.c.h.b16 %v426
        %v965 = vunpack.c.l.b16 %v427
        %v966 = vunpack.c.h.b16 %v427
        %v967 = vunpack.c.l.b16 %v428
        %v968 = vunpack.c.h.b16 %v428
        %v969 = vunpack.c.l.b16 %v429
        %v970 = vunpack.c.h.b16 %v429
        %v971 = vunpack.c.l.b16 %v430
        %v972 = vunpack.c.h.b16 %v430
        %v973 = vunpack.c.l.b16 %v431
        %v974 = vunpack.c.h.b16 %v431
        %v975 = vunpack.c.l.b16 %v432
        %v976 = vunpack.c.h.b16 %v432
        %v977 = vunpack.c.l.b16 %v433
        %v978 = vunpack.c.h.b16 %v433
        %v979 = vunpack.c.l.b16 %v434
        %v980 = vunpack.c.h.b16 %v434
        %v981 = vunpack.c.l.b16 %v435
        %v982 = vunpack.c.h.b16 %v435
        %v983 = vunpack.c.l.b16 %v436
        %v984 = vunpack.c.h.b16 %v436
        %v985 = vunpack.c.l.b16 %v437
        %v986 = vunpack.c.h.b16 %v437
        %v987 = vunpack.c.l.b16 %v438
        %v988 = vunpack.c.h.b16 %v438
        %v989 = vunpack.c.l.b16 %v439
        %v990 = vunpack.c.h.b16 %v439
        %v991 = vunpack.c.l.b16 %v440
        %v992 = vunpack.c.h.b16 %v440
        %v993 = vunpack.c.l.b16 %v441
        %v994 = vunpack.c.h.b16 %v441
        %v995 = vunpack.c.l.b16 %v442
        %v996 = vunpack.c.h.b16 %v442
        %v997 = vunpack.c.l.b16 %v443
        %v998 = vunpack.c.h.b16 %v443
        %v999 = vunpack.c.l.b16 %v444
        %v1000 = vunpack.c.h.b16 %v444
        %v1001 = vunpack.c.l.b16 %v445
        %v1002 = vunpack.c.h.b16 %v445
        %v1003 = vunpack.c.l.b16 %v446
        %v1004 = vunpack.c.h.b16 %v446
        %v1005 = vunpack.c.l.b16 %v447
        %v1006 = vunpack.c.h.b16 %v447
        %v1007 = vunpack.c.l.b16 %v448
        %v1008 = vunpack.c.h.b16 %v448
        %v1009 = vunpack.c.l.b16 %v449
        %v1010 = vunpack.c.h.b16 %v449
        %v1011 = vunpack.c.l.b16 %v450
        %v1012 = vunpack.c.h.b16 %v450
        %v1013 = vunpack.c.l.b16 %v451
        %v1014 = vunpack.c.h.b16 %v451
        %v1015 = vunpack.c.l.b16 %v452
        %v1016 = vunpack.c.h.b16 %v452
        %v1017 = vunpack.c.l.b16 %v453
        %v1018 = vunpack.c.h.b16 %v453
        %v1019 = vunpack.c.l.b16 %v454
        %v1020 = vunpack.c.h.b16 %v454
        %v1021 = vunpack.c.l.b16 %v455
        %v1022 = vunpack.c.h.b16 %v455
        %v1023 = vunpack.c.l.b16 %v456
        %v1024 = vunpack.c.h.b16 %v456
        %v1025 = vunpack.c.l.b16 %v457
        %v1026 = vunpack.c.h.b16 %v457
        %v1027 = vunpack.c.l.b16 %v458
        %v1028 = vunpack.c.h.b16 %v458
        %v1029 = vunpack.c.l.b16 %v459
        %v1030 = vunpack.c.h.b16 %v459
        %v1031 = vunpack.c.l.b16 %v460
        %v1032 = vunpack.c.h.b16 %v460
        %v1033 = vunpack.c.l.b16 %v461
        %v1034 = vunpack.c.h.b16 %v461
        %v1035 = vunpack.c.l.b16 %v462
        %v1036 = vunpack.c.h.b16 %v462
        %v1037 = vunpack.c.l.b16 %v463
        %v1038 = vunpack.c.h.b16 %v463
        %v1039 = vunpack.c.l.b16 %v464
        %v1040 = vunpack.c.h.b16 %v464
        %v1041 = vunpack.c.l.b16 %v465
        %v1042 = vunpack.c.h.b16 %v465
        %v1043 = vunpack.c.l.b16 %v466
        %v1044 = vunpack.c.h.b16 %v466
        %v1045 = vunpack.c.l.b16 %v467
        %v1046 = vunpack.c.h.b16 %v467
        %v1047 = vunpack.c.l.b16 %v468
        %v1048 = vunpack.c.h.b16 %v468
        %v1049 = vunpack.c.l.b16 %v469
        %v1050 = vunpack.c.h.b16 %v469
        %v1051 = vunpack.c.l.b16 %v470
        %v1052 = vunpack.c.h.b16 %v470
        %v1053 = vunpack.c.l.b16 %v471
        %v1054 = vunpack.c.h.b16 %v471
        %v1055 = vunpack.c.l.b16 %v472
        %v1056 = vunpack.c.h.b16 %v472
        %v1057 = vunpack.c.l.b16 %v473
        %v1058 = vunpack.c.h.b16 %v473
        %v1059 = vunpack.c.l.b16 %v474
        %v1060 = vunpack.c.h.b16 %v474
        %v1061 = vunpack.c.l.b16 %v475
        %v1062 = vunpack.c.h.b16 %v475
        %v1063 = vunpack.c.l.b16 %v476
        %v1064 = vunpack.c.h.b16 %v476
        %v1065 = vunpack.c.l.b16 %v477
        %v1066 = vunpack.c.h.b16 %v477
        %v1067 = vunpack.c.l.b16 %v478
        %v1068 = vunpack.c.h.b16 %v478
        %v1069 = vunpack.c.l.b16 %v479
        %v1070 = vunpack.c.h.b16 %v479
        %v1071 = vunpack.c.l.b16 %v480
        %v1072 = vunpack.c.h.b16 %v480
        %v1073 = vunpack.c.l.b16 %v481
        %v1074 = vunpack.c.h.b16 %v481
        %v1075 = vunpack.c.l.b16 %v482
        %v1076 = vunpack.c.h.b16 %v482
        %v1077 = vunpack.c.l.b16 %v483
        %v1078 = vunpack.c.h.b16 %v483
        %v1079 = vunpack.c.l.b16 %v484
        %v1080 = vunpack.c.h.b16 %v484
        %v1081 = vunpack.c.l.b16 %v485
        %v1082 = vunpack.c.h.b16 %v485
        %v1083 = vunpack.c.l.b16 %v486
        %v1084 = vunpack.c.h.b16 %v486
        %v1085 = vunpack.c.l.b16 %v487
        %v1086 = vunpack.c.h.b16 %v487
        %v1087 = vunpack.c.l.b16 %v488
        %v1088 = vunpack.c.h.b16 %v488
        %v1089 = vunpack.c.l.b16 %v489
        %v1090 = vunpack.c.h.b16 %v489
        %v1091 = vunpack.c.l.b16 %v490
        %v1092 = vunpack.c.h.b16 %v490
        %v1093 = vunpack.c.l.b16 %v491
        %v1094 = vunpack.c.h.b16 %v491
        %v1095 = vunpack.c.l.b16 %v492
        %v1096 = vunpack.c.h.b16 %v492
        %v1097 = vunpack.c.l.b16 %v493
        %v1098 = vunpack.c.h.b16 %v493
        %v1099 = vunpack.c.l.b16 %v494
        %v1100 = vunpack.c.h.b16 %v494
        %v1101 = vunpack.c.l.b16 %v495
        %v1102 = vunpack.c.h.b16 %v495
        %v1103 = vunpack.c.l.b16 %v496
        %v1104 = vunpack.c.h.b16 %v496
        %v1105 = vunpack.c.l.b16 %v497
        %v1106 = vunpack.c.h.b16 %v497
        %v1107 = vunpack.c.l.b16 %v498
        %v1108 = vunpack.c.h.b16 %v498
        %v1109 = vunpack.c.l.b16 %v499
        %v1110 = vunpack.c.h.b16 %v499
        %v1111 = vunpack.c.l.b16 %v500
        %v1112 = vunpack.c.h.b16 %v500
        %v1113 = vunpack.c.l.b16 %v501
        %v1114 = vunpack.c.h.b16 %v501
        %v1115 = vunpack.c.l.b16 %v502
        %v1116 = vunpack.c.h.b16 %v502
        %v1117 = vunpack.c.l.b16 %v503
        %v1118 = vunpack.c.h.b16 %v503
        %v1119 = vunpack.c.l.b16 %v504
        %v1120 = vunpack.c.h.b16 %v504
        %v1121 = vunpack.c.l.b16 %v505
        %v1122 = vunpack.c.h.b16 %v505
        %v1123 = vunpack.c.l.b16 %v506
        %v1124 = vunpack.c.h.b16 %v506
        %v1125 = vunpack.c.l.b16 %v507
        %v1126 = vunpack.c.h.b16 %v507
        %v1127 = vunpack.c.l.b16 %v508
        %v1128 = vunpack.c.h.b16 %v508
        %v1129 = vunpack.c.l.b16 %v509
        %v1130 = vunpack.c.h.b16 %v509
        %v1131 = vunpack.c.l.b16 %v510
        %v1132 = vunpack.c.h.b16 %v510
        %v1133 = vunpack.c.l.b16 %v511
        %v1134 = vunpack.c.h.b16 %v511
        %v1135 = vunpack.c.l.b16 %v512
        %v1136 = vunpack.c.h.b16 %v512
        %v1137 = vunpack.c.l.b16 %v513
        %v1138 = vunpack.c.h.b16 %v513
        %v1139 = vunpack.c.l.b16 %v514
        %v1140 = vunpack.c.h.b16 %v514
        %v1141 = vunpack.c.l.b16 %v515
        %v1142 = vunpack.c.h.b16 %v515
        %v1143 = vunpack.c.l.b16 %v516
        %v1144 = vunpack.c.h.b16 %v516
        %v1145 = vunpack.c.l.b16 %v517
        %v1146 = vunpack.c.h.b16 %v517
        %v1147 = vunpack.c.l.b16 %v518
        %v1148 = vunpack.c.h.b16 %v518
        %v1149 = vunpack.c.l.b16 %v519
        %v1150 = vunpack.c.h.b16 %v519
        %v1151 = vunpack.c.l.b16 %v520
        %v1152 = vunpack.c.h.b16 %v520
        %v1153 = vunpack.c.l.b16 %v521
        %v1154 = vunpack.c.h.b16 %v521
        %v1155 = vunpack.c.l.b16 %v522
        %v1156 = vunpack.c.h.b16 %v522
        %v1157 = vunpack.c.l.b16 %v523
        %v1158 = vunpack.c.h.b16 %v523
        %v1159 = vunpack.c.l.b16 %v524
        %v1160 = vunpack.c.h.b16 %v524
        %v1161 = vunpack.c.l.b16 %v525
        %v1162 = vunpack.c.h.b16 %v525
        %v1163 = vunpack.c.l.b16 %v526
        %v1164 = vunpack.c.h.b16 %v526
        %v1165 = vunpack.c.l.b16 %v527
        %v1166 = vunpack.c.h.b16 %v527
        %v1167 = vunpack.c.l.b16 %v528
        %v1168 = vunpack.c.h.b16 %v528
        %v1169 = vunpack.c.l.b16 %v529
        %v1170 = vunpack.c.h.b16 %v529
        %v1171 = vunpack.c.l.b16 %v530
        %v1172 = vunpack.c.h.b16 %v530
        %v1173 = vunpack.c.l.b16 %v531
        %v1174 = vunpack.c.h.b16 %v531
        %v1175 = vunpack.c.l.b16 %v532
        %v1176 = vunpack.c.h.b16 %v532
        %v1177 = vunpack.c.l.b16 %v533
        %v1178 = vunpack.c.h.b16 %v533
        %v1179 = vunpack.c.l.b16 %v534
        %v1180 = vunpack.c.h.b16 %v534
        %v1181 = vunpack.c.l.b16 %v535
        %v1182 = vunpack.c.h.b16 %v535
        %v1183 = vunpack.c.l.b16 %v536
        %v1184 = vunpack.c.h.b16 %v536
        %v1185 = vunpack.c.l.b16 %v537
        %v1186 = vunpack.c.h.b16 %v537
        %v1187 = vunpack.c.l.b16 %v538
        %v1188 = vunpack.c.h.b16 %v538
        %v1189 = vunpack.c.l.b16 %v539
        %v1190 = vunpack.c.h.b16 %v539
        %v1191 = vunpack.c.l.b16 %v540
        %v1192 = vunpack.c.h.b16 %v540
        %v1193 = vunpack.c.l.b16 %v541
        %v1194 = vunpack.c.h.b16 %v541
        %v1195 = vunpack.c.l.b16 %v542
        %v1196 = vunpack.c.h.b16 %v542
        %v1197 = vunpack.c.l.b16 %v543
        %v1198 = vunpack.c.h.b16 %v543
        %v1199 = vunpack.c.l.b16 %v544
        %v1200 = vunpack.c.h.b16 %v544
        %v1201 = vunpack.c.l.b16 %v545
        %v1202 = vunpack.c.h.b16 %v545
        %v1203 = vunpack.c.l.b16 %v546
        %v1204 = vunpack.c.h.b16 %v546
        %v1205 = vunpack.c.l.b16 %v547
        %v1206 = vunpack.c.h.b16 %v547
        %v1207 = vunpack.c.l.b16 %v548
        %v1208 = vunpack.c.h.b16 %v548
        %v1209 = vunpack.c.l.b16 %v549
        %v1210 = vunpack.c.h.b16 %v549
        %v1211 = vunpack.c.l.b16 %v550
        %v1212 = vunpack.c.h.b16 %v550
        %v1213 = vunpack.c.l.b16 %v551
        %v1214 = vunpack.c.h.b16 %v551
        %v1215 = vunpack.c.l.b16 %v552
        %v1216 = vunpack.c.h.b16 %v552
        %v1217 = vunpack.c.l.b16 %v553
        %v1218 = vunpack.c.h.b16 %v553
        %v1219 = vunpack.c.l.b16 %v554
        %v1220 = vunpack.c.h.b16 %v554
        %v1221 = vunpack.c.l.b16 %v555
        %v1222 = vunpack.c.h.b16 %v555
        %v1223 = vunpack.c.l.b16 %v556
        %v1224 = vunpack.c.h.b16 %v556
        %v1225 = vunpack.c.l.b16 %v557
        %v1226 = vunpack.c.h.b16 %v557
        %v1227 = vunpack.c.l.b16 %v558
        %v1228 = vunpack.c.h.b16 %v558
        %v1229 = vunpack.c.l.b16 %v559
        %v1230 = vunpack.c.h.b16 %v559
        %v1231 = vunpack.c.l.b16 %v560
        %v1232 = vunpack.c.h.b16 %v560
        %v1233 = vunpack.c.l.b16 %v561
        %v1234 = vunpack.c.h.b16 %v561
        %v1235 = vunpack.c.l.b16 %v562
        %v1236 = vunpack.c.h.b16 %v562
        %v1237 = vunpack.c.l.b16 %v563
        %v1238 = vunpack.c.h.b16 %v563
        %v1239 = vunpack.c.l.b16 %v564
        %v1240 = vunpack.c.h.b16 %v564
        %v1241 = vunpack.c.l.b16 %v565
        %v1242 = vunpack.c.h.b16 %v565
        %v1243 = vunpack.c.l.b16 %v566
        %v1244 = vunpack.c.h.b16 %v566
        %v1245 = vunpack.c.l.b16 %v567
        %v1246 = vunpack.c.h.b16 %v567
        %v1247 = vunpack.c.l.b16 %v568
        %v1248 = vunpack.c.h.b16 %v568
        %v1249 = vunpack.c.l.b16 %v569
        %v1250 = vunpack.c.h.b16 %v569
        %v1251 = vunpack.c.l.b16 %v570
        %v1252 = vunpack.c.h.b16 %v570
        %v1253 = vunpack.c.l.b16 %v571
        %v1254 = vunpack.c.h.b16 %v571
        %v1255 = vunpack.c.l.b16 %v572
        %v1256 = vunpack.c.h.b16 %v572
        %v1257 = vunpack.c.l.b16 %v573
        %v1258 = vunpack.c.h.b16 %v573
        %v1259 = vunpack.c.l.b16 %v574
        %v1260 = vunpack.c.h.b16 %v574
        %v1261 = vunpack.c.l.b16 %v575
        %v1262 = vunpack.c.h.b16 %v575
        %v1263 = vunpack.c.l.b16 %v576
        %v1264 = vunpack.c.h.b16 %v576
        %v1265 = vunpack.c.l.b16 %v577
        %v1266 = vunpack.c.h.b16 %v577
        %v1267 = vunpack.c.l.b16 %v578
        %v1268 = vunpack.c.h.b16 %v578
        %v1269 = vunpack.c.l.b16 %v579
        %v1270 = vunpack.c.h.b16 %v579
        %v1271 = vunpack.c.l.b16 %v580
        %v1272 = vunpack.c.h.b16 %v580
        %v1273 = vunpack.c.l.b16 %v581
        %v1274 = vunpack.c.h.b16 %v581
        %v1275 = vunpack.c.l.b16 %v582
        %v1276 = vunpack.c.h.b16 %v582
        %v1277 = vunpack.c.l.b16 %v583
        %v1278 = vunpack.c.h.b16 %v583
        %v1279 = vunpack.c.l.b16 %v584
        %v1280 = vunpack.c.h.b16 %v584
        %v1281 = vunpack.c.l.b16 %v585
        %v1282 = vunpack.c.h.b16 %v585
        %v1283 = vunpack.c.l.b16 %v586
        %v1284 = vunpack.c.h.b16 %v586
        %v1285 = vunpack.c.l.b16 %v587
        %v1286 = vunpack.c.h.b16 %v587
        %v1287 = vunpack.c.l.b16 %v588
        %v1288 = vunpack.c.h.b16 %v588
        %v1289 = vunpack.c.l.b16 %v589
        %v1290 = vunpack.c.h.b16 %v589
        %v1291 = vunpack.c.l.b16 %v590
        %v1292 = vunpack.c.h.b16 %v590
        %v1293 = vunpack.c.l.b16 %v591
        %v1294 = vunpack.c.h.b16 %v591
        %v1295 = vunpack.c.l.b16 %v592
        %v1296 = vunpack.c.h.b16 %v592
        %v1297 = vunpack.c.l.b16 %v593
        %v1298 = vunpack.c.h.b16 %v593
        %v1299 = vunpack.c.l.b16 %v594
        %v1300 = vunpack.c.h.b16 %v594
        %v1301 = vunpack.c.l.b16 %v595
        %v1302 = vunpack.c.h.b16 %v595
        %v1303 = vunpack.c.l.b16 %v596
        %v1304 = vunpack.c.h.b16 %v596
        %v1305 = vunpack.c.l.b16 %v597
        %v1306 = vunpack.c.h.b16 %v597
        %v1307 = vunpack.c.l.b16 %v598
        %v1308 = vunpack.c.h.b16 %v598
        %v1309 = vunpack.c.l.b16 %v599
        %v1310 = vunpack.c.h.b16 %v599
        %v1311 = vunpack.c.l.b16 %v600
        %v1312 = vunpack.c.h.b16 %v600
        %v1313 = vunpack.c.l.b16 %v601
        %v1314 = vunpack.c.h.b16 %v601
        %v1315 = vunpack.c.l.b16 %v602
        %v1316 = vunpack.c.h.b16 %v602
        %v1317 = vunpack.c.l.b16 %v603
        %v1318 = vunpack.c.h.b16 %v603
        %v1319 = vunpack.c.l.b16 %v604
        %v1320 = vunpack.c.h.b16 %v604
        %v1321 = vunpack.c.l.b16 %v605
        %v1322 = vunpack.c.h.b16 %v605
        %v1323 = vunpack.c.l.b16 %v606
        %v1324 = vunpack.c.h.b16 %v606
        %v1325 = vunpack.c.l.b16 %v607
        %v1326 = vunpack.c.h.b16 %v607
        %v1327 = vunpack.c.l.b16 %v608
        %v1328 = vunpack.c.h.b16 %v608
        %v1329 = vunpack.c.l.b16 %v609
        %v1330 = vunpack.c.h.b16 %v609
        %v1331 = vunpack.c.l.b16 %v610
        %v1332 = vunpack.c.h.b16 %v610
        %v1333 = vunpack.c.l.b16 %v611
        %v1334 = vunpack.c.h.b16 %v611
        %v1335 = vunpack.c.l.b16 %v612
        %v1336 = vunpack.c.h.b16 %v612
        %v1337 = vunpack.c.l.b16 %v613
        %v1338 = vunpack.c.h.b16 %v613
        %v1339 = vunpack.c.l.b16 %v614
        %v1340 = vunpack.c.h.b16 %v614
        %v1341 = vunpack.c.l.b16 %v615
        %v1342 = vunpack.c.h.b16 %v615
        %v1343 = vunpack.c.l.b16 %v616
        %v1344 = vunpack.c.h.b16 %v616
        %v1345 = vunpack.c.l.b16 %v617
        %v1346 = vunpack.c.h.b16 %v617
        %v1347 = vunpack.c.l.b16 %v618
        %v1348 = vunpack.c.h.b16 %v618
        %v1349 = vunpack.c.l.b16 %v619
        %v1350 = vunpack.c.h.b16 %v619
        %v1351 = vunpack.c.l.b16 %v620
        %v1352 = vunpack.c.h.b16 %v620
        %v1353 = vunpack.c.l.b16 %v621
        %v1354 = vunpack.c.h.b16 %v621
        %v1355 = vunpack.c.l.b16 %v622
        %v1356 = vunpack.c.h.b16 %v622
        %v1357 = vunpack.c.l.b16 %v623
        %v1358 = vunpack.c.h.b16 %v623
        %v1359 = vunpack.c.l.b16 %v624
        %v1360 = vunpack.c.h.b16 %v624
        %v1361 = vunpack.c.l.b16 %v625
        %v1362 = vunpack.c.h.b16 %v625
        %v1363 = vunpack.c.l.b16 %v626
        %v1364 = vunpack.c.h.b16 %v626
        %v1365 = vunpack.c.l.b16 %v627
        %v1366 = vunpack.c.h.b16 %v627
        %v1367 = vunpack.c.l.b16 %v628
        %v1368 = vunpack.c.h.b16 %v628
        %v1369 = vunpack.c.l.b16 %v629
        %v1370 = vunpack.c.h.b16 %v629
        %v1371 = vunpack.c.l.b16 %v630
        %v1372 = vunpack.c.h.b16 %v630
        %v1373 = vunpack.c.l.b16 %v631
        %v1374 = vunpack.c.h.b16 %v631
        %v1375 = vunpack.c.l.b16 %v632
        %v1376 = vunpack.c.h.b16 %v632
        %v1377 = vunpack.c.l.b16 %v633
        %v1378 = vunpack.c.h.b16 %v633
        %v1379 = vunpack.c.l.b16 %v634
        %v1380 = vunpack.c.h.b16 %v634
        %v1381 = vunpack.c.l.b16 %v635
        %v1382 = vunpack.c.h.b16 %v635
        %v1383 = vunpack.c.l.b16 %v636
        %v1384 = vunpack.c.h.b16 %v636
        %v1385 = vunpack.c.l.b16 %v637
        %v1386 = vunpack.c.h.b16 %v637
        %v1387 = vunpack.c.l.b16 %v638
        %v1388 = vunpack.c.h.b16 %v638
        %v1389 = vunpack.c.l.b16 %v639
        %v1390 = vunpack.c.h.b16 %v639
        %v1391 = vunpack.c.l.b16 %v640
        %v1392 = vunpack.c.h.b16 %v640
        %v1393 = vunpack.c.l.b16 %v641
        %v1394 = vunpack.c.h.b16 %v641
        %v1395 = vunpack.c.l.b16 %v642
        %v1396 = vunpack.c.h.b16 %v642
        %v1397 = vunpack.c.l.b16 %v643
        %v1398 = vunpack.c.h.b16 %v643
        %v1399 = vunpack.c.l.b16 %v644
        %v1400 = vunpack.c.h.b16 %v644
        %v1401 = vunpack.c.l.b16 %v645
        %v1402 = vunpack.c.h.b16 %v645
        %v1403 = vunpack.c.l.b16 %v646
        %v1404 = vunpack.c.h.b16 %v646
        %v1405 = vunpack.c.l.b16 %v647
        %v1406 = vunpack.c.h.b16 %v647
        %v1407 = vunpack.c.l.b16 %v648
        %v1408 = vunpack.c.h.b16 %v648
        %v1409 = vunpack.c.l.b16 %v649
        %v1410 = vunpack.c.h.b16 %v649
        %v1411 = vunpack.c.l.b16 %v650
        %v1412 = vunpack.c.h.b16 %v650
        %v1413 = vunpack.c.l.b16 %v651
        %v1414 = vunpack.c.h.b16 %v651
        %v1415 = vunpack.c.l.b16 %v652
        %v1416 = vunpack.c.h.b16 %v652
        %v1417 = vunpack.c.l.b16 %v653
        %v1418 = vunpack.c.h.b16 %v653
        %v1419 = vunpack.c.l.b16 %v654
        %v1420 = vunpack.c.h.b16 %v654
        %v1421 = vunpack.c.l.b16 %v655
        %v1422 = vunpack.c.h.b16 %v655
        %v1423 = vunpack.c.l.b16 %v656
        %v1424 = vunpack.c.h.b16 %v656
        %v1425 = vunpack.c.l.b16 %v657
        %v1426 = vunpack.c.h.b16 %v657
        %v1427 = vunpack.c.l.b16 %v658
        %v1428 = vunpack.c.h.b16 %v658
        %v1429 = vunpack.c.l.b16 %v659
        %v1430 = vunpack.c.h.b16 %v659
        %v1431 = vunpack.c.l.b16 %v660
        %v1432 = vunpack.c.h.b16 %v660
        %v1433 = vunpack.c.l.b16 %v661
        %v1434 = vunpack.c.h.b16 %v661
        %v1435 = vunpack.c.l.b16 %v662
        %v1436 = vunpack.c.h.b16 %v662
        %v1437 = vunpack.c.l.b16 %v663
        %v1438 = vunpack.c.h.b16 %v663
        %v1439 = vunpack.c.l.b16 %v664
        %v1440 = vunpack.c.h.b16 %v664
        %v1441 = vunpack.c.l.b16 %v665
        %v1442 = vunpack.c.h.b16 %v665
        %v1443 = vunpack.c.l.b16 %v666
        %v1444 = vunpack.c.h.b16 %v666
        %v1445 = vunpack.c.l.b16 %v667
        %v1446 = vunpack.c.h.b16 %v667
        %v1447 = vunpack.c.l.b16 %v668
        %v1448 = vunpack.c.h.b16 %v668
        %v1449 = vunpack.c.l.b16 %v669
        %v1450 = vunpack.c.h.b16 %v669
        %v1451 = vunpack.c.l.b16 %v670
        %v1452 = vunpack.c.h.b16 %v670
        %v1453 = vpack.c.b16 %v949, %v941
        %v1454 = vpack.c.b16 %v950, %v942
        %v1455 = vpack.c.b16 %v951, %v943
        %v1456 = vpack.c.b16 %v952, %v944
        %v1457 = vpack.c.b16 %v953, %v945
        %v1458 = vpack.c.b16 %v954, %v946
        %v1459 = vpack.c.b16 %v955, %v947
        %v1460 = vpack.c.b16 %v956, %v948
        %v1461 = vpack.c.b16 %v965, %v957
        %v1462 = vpack.c.b16 %v966, %v958
        %v1463 = vpack.c.b16 %v967, %v959
        %v1464 = vpack.c.b16 %v968, %v960
        %v1465 = vpack.c.b16 %v969, %v961
        %v1466 = vpack.c.b16 %v970, %v962
        %v1467 = vpack.c.b16 %v971, %v963
        %v1468 = vpack.c.b16 %v972, %v964
        %v1469 = vpack.c.b16 %v981, %v973
        %v1470 = vpack.c.b16 %v982, %v974
        %v1471 = vpack.c.b16 %v983, %v975
        %v1472 = vpack.c.b16 %v984, %v976
        %v1473 = vpack.c.b16 %v985, %v977
        %v1474 = vpack.c.b16 %v986, %v978
        %v1475 = vpack.c.b16 %v987, %v979
        %v1476 = vpack.c.b16 %v988, %v980
        %v1477 = vpack.c.b16 %v997, %v989
        %v1478 = vpack.c.b16 %v998, %v990
        %v1479 = vpack.c.b16 %v999, %v991
        %v1480 = vpack.c.b16 %v1000, %v992
        %v1481 = vpack.c.b16 %v1001, %v993
        %v1482 = vpack.c.b16 %v1002, %v994
        %v1483 = vpack.c.b16 %v1003, %v995
        %v1484 = vpack.c.b16 %v1004, %v996
        %v1485 = vpack.c.b16 %v1013, %v1005
        %v1486 = vpack.c.b16 %v1014, %v1006
        %v1487 = vpack.c.b16 %v1015, %v1007
        %v1488 = vpack.c.b16 %v1016, %v1008
        %v1489 = vpack.c.b16 %v1017, %v1009
        %v1490 = vpack.c.b16 %v1018, %v1010
        %v1491 = vpack.c.b16 %v1019, %v1011
        %v1492 = vpack.c.b16 %v1020, %v1012
        %v1493 = vpack.c.b16 %v1029, %v1021
        %v1494 = vpack.c.b16 %v1030, %v1022
        %v1495 = vpack.c.b16 %v1031, %v1023
        %v1496 = vpack.c.b16 %v1032, %v1024
        %v1497 = vpack.c.b16 %v1033, %v1025
        %v1498 = vpack.c.b16 %v1034, %v1026
        %v1499 = vpack.c.b16 %v1035, %v1027
        %v1500 = vpack.c.b16 %v1036, %v1028
        %v1501 = vpack.c.b16 %v1045, %v1037
        %v1502 = vpack.c.b16 %v1046, %v1038
        %v1503 = vpack.c.b16 %v1047, %v1039
        %v1504 = vpack.c.b16 %v1048, %v1040
        %v1505 = vpack.c.b16 %v1049, %v1041
        %v1506 = vpack.c.b16 %v1050, %v1042
        %v1507 = vpack.c.b16 %v1051, %v1043
        %v1508 = vpack.c.b16 %v1052, %v1044
        %v1509 = vpack.c.b16 %v1061, %v1053
        %v1510 = vpack.c.b16 %v1062, %v1054
        %v1511 = vpack.c.b16 %v1063, %v1055
        %v1512 = vpack.c.b16 %v1064, %v1056
        %v1513 = vpack.c.b16 %v1065, %v1057
        %v1514 = vpack.c.b16 %v1066, %v1058
        %v1515 = vpack.c.b16 %v1067, %v1059
        %v1516 = vpack.c.b16 %v1068, %v1060
        %v1517 = vpack.c.b16 %v1077, %v1069
        %v1518 = vpack.c.b16 %v1078, %v1070
        %v1519 = vpack.c.b16 %v1079, %v1071
        %v1520 = vpack.c.b16 %v1080, %v1072
        %v1521 = vpack.c.b16 %v1081, %v1073
        %v1522 = vpack.c.b16 %v1082, %v1074
        %v1523 = vpack.c.b16 %v1083, %v1075
        %v1524 = vpack.c.b16 %v1084, %v1076
        %v1525 = vpack.c.b16 %v1093, %v1085
        %v1526 = vpack.c.b16 %v1094, %v1086
        %v1527 = vpack.c.b16 %v1095, %v1087
        %v1528 = vpack.c.b16 %v1096, %v1088
        %v1529 = vpack.c.b16 %v1097, %v1089
        %v1530 = vpack.c.b16 %v1098, %v1090
        %v1531 = vpack.c.b16 %v1099, %v1091
        %v1532 = vpack.c.b16 %v1100, %v1092
        %v1533 = vpack.c.b16 %v1109, %v1101
        %v1534 = vpack.c.b16 %v1110, %v1102
        %v1535 = vpack.c.b16 %v1111, %v1103
        %v1536 = vpack.c.b16 %v1112, %v1104
        %v1537 = vpack.c.b16 %v1113, %v1105
        %v1538 = vpack.c.b16 %v1114, %v1106
        %v1539 = vpack.c.b16 %v1115, %v1107
        %v1540 = vpack.c.b16 %v1116, %v1108
        %v1541 = vpack.c.b16 %v1125, %v1117
        %v1542 = vpack.c.b16 %v1126, %v1118
        %v1543 = vpack.c.b16 %v1127, %v1119
        %v1544 = vpack.c.b16 %v1128, %v1120
        %v1545 = vpack.c.b16 %v1129, %v1121
        %v1546 = vpack.c.b16 %v1130, %v1122
        %v1547 = vpack.c.b16 %v1131, %v1123
        %v1548 = vpack.c.b16 %v1132, %v1124
        %v1549 = vpack.c.b16 %v1141, %v1133
        %v1550 = vpack.c.b16 %v1142, %v1134
        %v1551 = vpack.c.b16 %v1143, %v1135
        %v1552 = vpack.c.b16 %v1144, %v1136
        %v1553 = vpack.c.b16 %v1145, %v1137
        %v1554 = vpack.c.b16 %v1146, %v1138
        %v1555 = vpack.c.b16 %v1147, %v1139
        %v1556 = vpack.c.b16 %v1148, %v1140
        %v1557 = vpack.c.b16 %v1157, %v1149
        %v1558 = vpack.c.b16 %v1158, %v1150
        %v1559 = vpack.c.b16 %v1159, %v1151
        %v1560 = vpack.c.b16 %v1160, %v1152
        %v1561 = vpack.c.b16 %v1161, %v1153
        %v1562 = vpack.c.b16 %v1162, %v1154
        %v1563 = vpack.c.b16 %v1163, %v1155
        %v1564 = vpack.c.b16 %v1164, %v1156
        %v1565 = vpack.c.b16 %v1173, %v1165
        %v1566 = vpack.c.b16 %v1174, %v1166
        %v1567 = vpack.c.b16 %v1175, %v1167
        %v1568 = vpack.c.b16 %v1176, %v1168
        %v1569 = vpack.c.b16 %v1177, %v1169
        %v1570 = vpack.c.b16 %v1178, %v1170
        %v1571 = vpack.c.b16 %v1179, %v1171
        %v1572 = vpack.c.b16 %v1180, %v1172
        %v1573 = vpack.c.b16 %v1189, %v1181
        %v1574 = vpack.c.b16 %v1190, %v1182
        %v1575 = vpack.c.b16 %v1191, %v1183
        %v1576 = vpack.c.b16 %v1192, %v1184
        %v1577 = vpack.c.b16 %v1193, %v1185
        %v1578 = vpack.c.b16 %v1194, %v1186
        %v1579 = vpack.c.b16 %v1195, %v1187
        %v1580 = vpack.c.b16 %v1196, %v1188
        %v1581 = vpack.c.b16 %v1205, %v1197
        %v1582 = vpack.c.b16 %v1206, %v1198
        %v1583 = vpack.c.b16 %v1207, %v1199
        %v1584 = vpack.c.b16 %v1208, %v1200
        %v1585 = vpack.c.b16 %v1209, %v1201
        %v1586 = vpack.c.b16 %v1210, %v1202
        %v1587 = vpack.c.b16 %v1211, %v1203
        %v1588 = vpack.c.b16 %v1212, %v1204
        %v1589 = vpack.c.b16 %v1221, %v1213
        %v1590 = vpack.c.b16 %v1222, %v1214
        %v1591 = vpack.c.b16 %v1223, %v1215
        %v1592 = vpack.c.b16 %v1224, %v1216
        %v1593 = vpack.c.b16 %v1225, %v1217
        %v1594 = vpack.c.b16 %v1226, %v1218
        %v1595 = vpack.c.b16 %v1227, %v1219
        %v1596 = vpack.c.b16 %v1228, %v1220
        %v1597 = vpack.c.b16 %v1237, %v1229
        %v1598 = vpack.c.b16 %v1238, %v1230
        %v1599 = vpack.c.b16 %v1239, %v1231
        %v1600 = vpack.c.b16 %v1240, %v1232
        %v1601 = vpack.c.b16 %v1241, %v1233
        %v1602 = vpack.c.b16 %v1242, %v1234
        %v1603 = vpack.c.b16 %v1243, %v1235
        %v1604 = vpack.c.b16 %v1244, %v1236
        %v1605 = vpack.c.b16 %v1253, %v1245
        %v1606 = vpack.c.b16 %v1254, %v1246
        %v1607 = vpack.c.b16 %v1255, %v1247
        %v1608 = vpack.c.b16 %v1256, %v1248
        %v1609 = vpack.c.b16 %v1257, %v1249
        %v1610 = vpack.c.b16 %v1258, %v1250
        %v1611 = vpack.c.b16 %v1259, %v1251
        %v1612 = vpack.c.b16 %v1260, %v1252
        %v1613 = vpack.c.b16 %v1269, %v1261
        %v1614 = vpack.c.b16 %v1270, %v1262
        %v1615 = vpack.c.b16 %v1271, %v1263
        %v1616 = vpack.c.b16 %v1272, %v1264
        %v1617 = vpack.c.b16 %v1273, %v1265
        %v1618 = vpack.c.b16 %v1274, %v1266
        %v1619 = vpack.c.b16 %v1275, %v1267
        %v1620 = vpack.c.b16 %v1276, %v1268
        %v1621 = vpack.c.b16 %v1285, %v1277
        %v1622 = vpack.c.b16 %v1286, %v1278
        %v1623 = vpack.c.b16 %v1287, %v1279
        %v1624 = vpack.c.b16 %v1288, %v1280
        %v1625 = vpack.c.b16 %v1289, %v1281
        %v1626 = vpack.c.b16 %v1290, %v1282
        %v1627 = vpack.c.b16 %v1291, %v1283
        %v1628 = vpack.c.b16 %v1292, %v1284
        %v1629 = vpack.c.b16 %v1301, %v1293
        %v1630 = vpack.c.b16 %v1302, %v1294
        %v1631 = vpack.c.b16 %v1303, %v1295
        %v1632 = vpack.c.b16 %v1304, %v1296
        %v1633 = vpack.c.b16 %v1305, %v1297
        %v1634 = vpack.c.b16 %v1306, %v1298
        %v1635 = vpack.c.b16 %v1307, %v1299
        %v1636 = vpack.c.b16 %v1308, %v1300
        %v1637 = vpack.c.b16 %v1317, %v1309
        %v1638 = vpack.c.b16 %v1318, %v1310
        %v1639 = vpack.c.b16 %v1319, %v1311
        %v1640 = vpack.c.b16 %v1320, %v1312
        %v1641 = vpack.c.b16 %v1321, %v1313
        %v1642 = vpack.c.b16 %v1322, %v1314
        %v1643 = vpack.c.b16 %v1323, %v1315
        %v1644 = vpack.c.b16 %v1324, %v1316
        %v1645 = vpack.c.b16 %v1333, %v1325
        %v1646 = vpack.c.b16 %v1334, %v1326
        %v1647 = vpack.c.b16 %v1335, %v1327
        %v1648 = vpack.c.b16 %v1336, %v1328
        %v1649 = vpack.c.b16 %v1337, %v1329
        %v1650 = vpack.c.b16 %v1338, %v1330
        %v1651 = vpack.c.b16 %v1339, %v1331
        %v1652 = vpack.c.b16 %v1340, %v1332
        %v1653 = vpack.c.b16 %v1349, %v1341
        %v1654 = vpack.c.b16 %v1350, %v1342
        %v1655 = vpack.c.b16 %v1351, %v1343
        %v1656 = vpack.c.b16 %v1352, %v1344
        %v1657 = vpack.c.b16 %v1353, %v1345
        %v1658 = vpack.c.b16 %v1354, %v1346
        %v1659 = vpack.c.b16 %v1355, %v1347
        %v1660 = vpack.c.b16 %v1356, %v1348
        %v1661 = vpack.c.b16 %v1365, %v1357
        %v1662 = vpack.c.b16 %v1366, %v1358
        %v1663 = vpack.c.b16 %v1367, %v1359
        %v1664 = vpack.c.b16 %v1368, %v1360
        %v1665 = vpack.c.b16 %v1369, %v1361
        %v1666 = vpack.c.b16 %v1370, %v1362
        %v1667 = vpack.c.b16 %v1371, %v1363
        %v1668 = vpack.c.b16 %v1372, %v1364
        %v1669 = vpack.c.b16 %v1381, %v1373
        %v1670 = vpack.c.b16 %v1382, %v1374
        %v1671 = vpack.c.b16 %v1383, %v1375
        %v1672 = vpack.c.b16 %v1384, %v1376
        %v1673 = vpack.c.b16 %v1385, %v1377
        %v1674 = vpack.c.b16 %v1386, %v1378
        %v1675 = vpack.c.b16 %v1387, %v1379
        %v1676 = vpack.c.b16 %v1388, %v1380
        %v1677 = vpack.c.b16 %v1397, %v1389
        %v1678 = vpack.c.b16 %v1398, %v1390
        %v1679 = vpack.c.b16 %v1399, %v1391
        %v1680 = vpack.c.b16 %v1400, %v1392
        %v1681 = vpack.c.b16 %v1401, %v1393
        %v1682 = vpack.c.b16 %v1402, %v1394
        %v1683 = vpack.c.b16 %v1403, %v1395
        %v1684 = vpack.c.b16 %v1404, %v1396
        %v1685 = vpack.c.b16 %v1413, %v1405
        %v1686 = vpack.c.b16 %v1414, %v1406
        %v1687 = vpack.c.b16 %v1415, %v1407
        %v1688 = vpack.c.b16 %v1416, %v1408
        %v1689 = vpack.c.b16 %v1417, %v1409
        %v1690 = vpack.c.b16 %v1418, %v1410
        %v1691 = vpack.c.b16 %v1419, %v1411
        %v1692 = vpack.c.b16 %v1420, %v1412
        %v1693 = vpack.c.b16 %v1429, %v1421
        %v1694 = vpack.c.b16 %v1430, %v1422
        %v1695 = vpack.c.b16 %v1431, %v1423
        %v1696 = vpack.c.b16 %v1432, %v1424
        %v1697 = vpack.c.b16 %v1433, %v1425
        %v1698 = vpack.c.b16 %v1434, %v1426
        %v1699 = vpack.c.b16 %v1435, %v1427
        %v1700 = vpack.c.b16 %v1436, %v1428
        %v1701 = vpack.c.b16 %v1445, %v1437
        %v1702 = vpack.c.b16 %v1446, %v1438
        %v1703 = vpack.c.b16 %v1447, %v1439
        %v1704 = vpack.c.b16 %v1448, %v1440
        %v1705 = vpack.c.b16 %v1449, %v1441
        %v1706 = vpack.c.b16 %v1450, %v1442
        %v1707 = vpack.c.b16 %v1451, %v1443
        %v1708 = vpack.c.b16 %v1452, %v1444
        %1965 = vmatprep.subr.bf16.mxu0 %v1510
        %1966 = vmatpush1.bf16.msra.mxu0 %v1509
        %1967 = vmatprep.subr.bf16.mxu0 %v1502
        %1968 = vmatpush1.bf16.msra.mxu0 %v1501
        %1969 = vmatprep.subr.bf16.mxu0 %v1494
        %1970 = vmatpush1.bf16.msra.mxu0 %v1493
        %1971 = vmatprep.subr.bf16.mxu0 %v1486
        %1972 = vmatpush1.bf16.msra.mxu0 %v1485
        %1973 = vmatprep.subr.bf16.mxu0 %v1478
        %1974 = vmatpush1.bf16.msra.mxu0 %v1477
        %1975 = vmatprep.subr.bf16.mxu0 %v1470
        %1976 = vmatpush1.bf16.msra.mxu0 %v1469
        %1977 = vmatprep.subr.bf16.mxu0 %v1462
        %1978 = vmatpush1.bf16.msra.mxu0 %v1461
        %1979 = vmatprep.subr.bf16.mxu0 %v1454
        %1980 = vmatpush1.bf16.msra.mxu0 %v1453
        %1981 = vmatprep.subr.bf16.mxu0 %v1574
        %1982 = vmatpush2.bf16.msra.mxu0 %v1573
        %1983 = vmatprep.subr.bf16.mxu0 %v1566
        %1984 = vmatpush2.bf16.msra.mxu0 %v1565
        %1985 = vmatprep.subr.bf16.mxu0 %v1558
        %1986 = vmatpush2.bf16.msra.mxu0 %v1557
        %1987 = vmatprep.subr.bf16.mxu0 %v1550
        %1988 = vmatpush2.bf16.msra.mxu0 %v1549
        %1989 = vmatprep.subr.bf16.mxu0 %v1542
        %1990 = vmatpush2.bf16.msra.mxu0 %v1541
        %1991 = vmatprep.subr.bf16.mxu0 %v1534
        %1992 = vmatpush2.bf16.msra.mxu0 %v1533
        %1993 = vmatprep.subr.bf16.mxu0 %v1526
        %1994 = vmatpush2.bf16.msra.mxu0 %v1525
        %1995 = vmatprep.subr.bf16.mxu0 %v1518
        %1996 = vmatpush2.bf16.msra.mxu0 %v1517
        %1997 = vmatprep.mubr.bf16.mxu0 %v678
        %1998 = vmatmul.mubr.bf16.gmra.mxu0 %v677
        %v1999 = vpop.f32.mrf.mxu0
        %v2000 = vadd.f32 0.0, %v1999
        %v2001 = vpop.f32.mrf.mxu0
        %v2002 = vadd.f32 0.0, %v2001
        %v2003 = vpop.f32.mrf.mxu0
        %v2004 = vpop.f32.mrf.mxu0
        %2005 = vdwg.mxu0
        %2006 = vmatprep.subr.bf16.mxu0 %v1638
        %2007 = vmatpush1.bf16.msra.mxu0 %v1637
        %2008 = vmatprep.subr.bf16.mxu0 %v1630
        %2009 = vmatpush1.bf16.msra.mxu0 %v1629
        %2010 = vmatprep.subr.bf16.mxu0 %v1622
        %2011 = vmatpush1.bf16.msra.mxu0 %v1621
        %2012 = vmatprep.subr.bf16.mxu0 %v1614
        %2013 = vmatpush1.bf16.msra.mxu0 %v1613
        %2014 = vmatprep.subr.bf16.mxu0 %v1606
        %2015 = vmatpush1.bf16.msra.mxu0 %v1605
        %2016 = vmatprep.subr.bf16.mxu0 %v1598
        %2017 = vmatpush1.bf16.msra.mxu0 %v1597
        %2018 = vmatprep.subr.bf16.mxu0 %v1590
        %2019 = vmatpush1.bf16.msra.mxu0 %v1589
        %2020 = vmatprep.subr.bf16.mxu0 %v1582
        %2021 = vmatpush1.bf16.msra.mxu0 %v1581
        %2022 = vmatprep.subr.bf16.mxu0 %v1702
        %2023 = vmatpush2.bf16.msra.mxu0 %v1701
        %2024 = vmatprep.subr.bf16.mxu0 %v1694
        %2025 = vmatpush2.bf16.msra.mxu0 %v1693
        %2026 = vmatprep.subr.bf16.mxu0 %v1686
        %2027 = vmatpush2.bf16.msra.mxu0 %v1685
        %2028 = vmatprep.subr.bf16.mxu0 %v1678
        %2029 = vmatpush2.bf16.msra.mxu0 %v1677
        %2030 = vmatprep.subr.bf16.mxu0 %v1670
        %2031 = vmatpush2.bf16.msra.mxu0 %v1669
        %2032 = vmatprep.subr.bf16.mxu0 %v1662
        %2033 = vmatpush2.bf16.msra.mxu0 %v1661
        %2034 = vmatprep.subr.bf16.mxu0 %v1654
        %2035 = vmatpush2.bf16.msra.mxu0 %v1653
        %2036 = vmatprep.subr.bf16.mxu0 %v1646
        %2037 = vmatpush2.bf16.msra.mxu0 %v1645
        %2038 = vmatprep.mubr.bf16.mxu0 %v680
        %2039 = vmatmul.mubr.bf16.gmra.mxu0 %v679
        %v2040 = vpop.f32.mrf.mxu0
        %v2041 = vadd.f32 %v2000, %v2040
        %v2042 = vpop.f32.mrf.mxu0
        %v2043 = vadd.f32 %v2002, %v2042
        %v2044 = vpop.f32.mrf.mxu0
        %v2045 = vpop.f32.mrf.mxu0
        %2046 = vdwg.mxu0
        %2047 = vmatprep.subr.bf16.mxu0 %v1512
        %2048 = vmatpush1.bf16.msra.mxu0 %v1511
        %2049 = vmatprep.subr.bf16.mxu0 %v1504
        %2050 = vmatpush1.bf16.msra.mxu0 %v1503
        %2051 = vmatprep.subr.bf16.mxu0 %v1496
        %2052 = vmatpush1.bf16.msra.mxu0 %v1495
        %2053 = vmatprep.subr.bf16.mxu0 %v1488
        %2054 = vmatpush1.bf16.msra.mxu0 %v1487
        %2055 = vmatprep.subr.bf16.mxu0 %v1480
        %2056 = vmatpush1.bf16.msra.mxu0 %v1479
        %2057 = vmatprep.subr.bf16.mxu0 %v1472
        %2058 = vmatpush1.bf16.msra.mxu0 %v1471
        %2059 = vmatprep.subr.bf16.mxu0 %v1464
        %2060 = vmatpush1.bf16.msra.mxu0 %v1463
        %2061 = vmatprep.subr.bf16.mxu0 %v1456
        %2062 = vmatpush1.bf16.msra.mxu0 %v1455
        %2063 = vmatprep.subr.bf16.mxu0 %v1576
        %2064 = vmatpush2.bf16.msra.mxu0 %v1575
        %2065 = vmatprep.subr.bf16.mxu0 %v1568
        %2066 = vmatpush2.bf16.msra.mxu0 %v1567
        %2067 = vmatprep.subr.bf16.mxu0 %v1560
        %2068 = vmatpush2.bf16.msra.mxu0 %v1559
        %2069 = vmatprep.subr.bf16.mxu0 %v1552
        %2070 = vmatpush2.bf16.msra.mxu0 %v1551
        %2071 = vmatprep.subr.bf16.mxu0 %v1544
        %2072 = vmatpush2.bf16.msra.mxu0 %v1543
        %2073 = vmatprep.subr.bf16.mxu0 %v1536
        %2074 = vmatpush2.bf16.msra.mxu0 %v1535
        %2075 = vmatprep.subr.bf16.mxu0 %v1528
        %2076 = vmatpush2.bf16.msra.mxu0 %v1527
        %2077 = vmatprep.subr.bf16.mxu0 %v1520
        %2078 = vmatpush2.bf16.msra.mxu0 %v1519
        %2079 = vmatprep.mubr.bf16.mxu0 %v678
        %2080 = vmatmul.mubr.bf16.gmra.mxu0 %v677
        %v2081 = vpop.f32.mrf.mxu0
        %v2082 = vadd.f32 0.0, %v2081
        %v2083 = vpop.f32.mrf.mxu0
        %v2084 = vadd.f32 0.0, %v2083
        %v2085 = vpop.f32.mrf.mxu0
        %v2086 = vpop.f32.mrf.mxu0
        %2087 = vdwg.mxu0
        %2088 = vmatprep.subr.bf16.mxu0 %v1640
        %2089 = vmatpush1.bf16.msra.mxu0 %v1639
        %2090 = vmatprep.subr.bf16.mxu0 %v1632
        %2091 = vmatpush1.bf16.msra.mxu0 %v1631
        %2092 = vmatprep.subr.bf16.mxu0 %v1624
        %2093 = vmatpush1.bf16.msra.mxu0 %v1623
        %2094 = vmatprep.subr.bf16.mxu0 %v1616
        %2095 = vmatpush1.bf16.msra.mxu0 %v1615
        %2096 = vmatprep.subr.bf16.mxu0 %v1608
        %2097 = vmatpush1.bf16.msra.mxu0 %v1607
        %2098 = vmatprep.subr.bf16.mxu0 %v1600
        %2099 = vmatpush1.bf16.msra.mxu0 %v1599
        %2100 = vmatprep.subr.bf16.mxu0 %v1592
        %2101 = vmatpush1.bf16.msra.mxu0 %v1591
        %2102 = vmatprep.subr.bf16.mxu0 %v1584
        %2103 = vmatpush1.bf16.msra.mxu0 %v1583
        %2104 = vmatprep.subr.bf16.mxu0 %v1704
        %2105 = vmatpush2.bf16.msra.mxu0 %v1703
        %2106 = vmatprep.subr.bf16.mxu0 %v1696
        %2107 = vmatpush2.bf16.msra.mxu0 %v1695
        %2108 = vmatprep.subr.bf16.mxu0 %v1688
        %2109 = vmatpush2.bf16.msra.mxu0 %v1687
        %2110 = vmatprep.subr.bf16.mxu0 %v1680
        %2111 = vmatpush2.bf16.msra.mxu0 %v1679
        %2112 = vmatprep.subr.bf16.mxu0 %v1672
        %2113 = vmatpush2.bf16.msra.mxu0 %v1671
        %2114 = vmatprep.subr.bf16.mxu0 %v1664
        %2115 = vmatpush2.bf16.msra.mxu0 %v1663
        %2116 = vmatprep.subr.bf16.mxu0 %v1656
        %2117 = vmatpush2.bf16.msra.mxu0 %v1655
        %2118 = vmatprep.subr.bf16.mxu0 %v1648
        %2119 = vmatpush2.bf16.msra.mxu0 %v1647
        %2120 = vmatprep.mubr.bf16.mxu0 %v680
        %2121 = vmatmul.mubr.bf16.gmra.mxu0 %v679
        %v2122 = vpop.f32.mrf.mxu0
        %v2123 = vadd.f32 %v2082, %v2122
        %v2124 = vpop.f32.mrf.mxu0
        %v2125 = vadd.f32 %v2084, %v2124
        %v2126 = vpop.f32.mrf.mxu0
        %v2127 = vpop.f32.mrf.mxu0
        %2128 = vdwg.mxu0
        %2129 = vmatprep.subr.bf16.mxu0 %v1514
        %2130 = vmatpush1.bf16.msra.mxu0 %v1513
        %2131 = vmatprep.subr.bf16.mxu0 %v1506
        %2132 = vmatpush1.bf16.msra.mxu0 %v1505
        %2133 = vmatprep.subr.bf16.mxu0 %v1498
        %2134 = vmatpush1.bf16.msra.mxu0 %v1497
        %2135 = vmatprep.subr.bf16.mxu0 %v1490
        %2136 = vmatpush1.bf16.msra.mxu0 %v1489
        %2137 = vmatprep.subr.bf16.mxu0 %v1482
        %2138 = vmatpush1.bf16.msra.mxu0 %v1481
        %2139 = vmatprep.subr.bf16.mxu0 %v1474
        %2140 = vmatpush1.bf16.msra.mxu0 %v1473
        %2141 = vmatprep.subr.bf16.mxu0 %v1466
        %2142 = vmatpush1.bf16.msra.mxu0 %v1465
        %2143 = vmatprep.subr.bf16.mxu0 %v1458
        %2144 = vmatpush1.bf16.msra.mxu0 %v1457
        %2145 = vmatprep.subr.bf16.mxu0 %v1578
        %2146 = vmatpush2.bf16.msra.mxu0 %v1577
        %2147 = vmatprep.subr.bf16.mxu0 %v1570
        %2148 = vmatpush2.bf16.msra.mxu0 %v1569
        %2149 = vmatprep.subr.bf16.mxu0 %v1562
        %2150 = vmatpush2.bf16.msra.mxu0 %v1561
        %2151 = vmatprep.subr.bf16.mxu0 %v1554
        %2152 = vmatpush2.bf16.msra.mxu0 %v1553
        %2153 = vmatprep.subr.bf16.mxu0 %v1546
        %2154 = vmatpush2.bf16.msra.mxu0 %v1545
        %2155 = vmatprep.subr.bf16.mxu0 %v1538
        %2156 = vmatpush2.bf16.msra.mxu0 %v1537
        %2157 = vmatprep.subr.bf16.mxu0 %v1530
        %2158 = vmatpush2.bf16.msra.mxu0 %v1529
        %2159 = vmatprep.subr.bf16.mxu0 %v1522
        %2160 = vmatpush2.bf16.msra.mxu0 %v1521
        %2161 = vmatprep.mubr.bf16.mxu0 %v678
        %2162 = vmatmul.mubr.bf16.gmra.mxu0 %v677
        %v2163 = vpop.f32.mrf.mxu0
        %v2164 = vadd.f32 0.0, %v2163
        %v2165 = vpop.f32.mrf.mxu0
        %v2166 = vadd.f32 0.0, %v2165
        %v2167 = vpop.f32.mrf.mxu0
        %v2168 = vpop.f32.mrf.mxu0
        %2169 = vdwg.mxu0
        %2170 = vmatprep.subr.bf16.mxu0 %v1642
        %2171 = vmatpush1.bf16.msra.mxu0 %v1641
        %2172 = vmatprep.subr.bf16.mxu0 %v1634
        %2173 = vmatpush1.bf16.msra.mxu0 %v1633
        %2174 = vmatprep.subr.bf16.mxu0 %v1626
        %2175 = vmatpush1.bf16.msra.mxu0 %v1625
        %2176 = vmatprep.subr.bf16.mxu0 %v1618
        %2177 = vmatpush1.bf16.msra.mxu0 %v1617
        %2178 = vmatprep.subr.bf16.mxu0 %v1610
        %2179 = vmatpush1.bf16.msra.mxu0 %v1609
        %2180 = vmatprep.subr.bf16.mxu0 %v1602
        %2181 = vmatpush1.bf16.msra.mxu0 %v1601
        %2182 = vmatprep.subr.bf16.mxu0 %v1594
        %2183 = vmatpush1.bf16.msra.mxu0 %v1593
        %2184 = vmatprep.subr.bf16.mxu0 %v1586
        %2185 = vmatpush1.bf16.msra.mxu0 %v1585
        %2186 = vmatprep.subr.bf16.mxu0 %v1706
        %2187 = vmatpush2.bf16.msra.mxu0 %v1705
        %2188 = vmatprep.subr.bf16.mxu0 %v1698
        %2189 = vmatpush2.bf16.msra.mxu0 %v1697
        %2190 = vmatprep.subr.bf16.mxu0 %v1690
        %2191 = vmatpush2.bf16.msra.mxu0 %v1689
        %2192 = vmatprep.subr.bf16.mxu0 %v1682
        %2193 = vmatpush2.bf16.msra.mxu0 %v1681
        %2194 = vmatprep.subr.bf16.mxu0 %v1674
        %2195 = vmatpush2.bf16.msra.mxu0 %v1673
        %2196 = vmatprep.subr.bf16.mxu0 %v1666
        %2197 = vmatpush2.bf16.msra.mxu0 %v1665
        %2198 = vmatprep.subr.bf16.mxu0 %v1658
        %2199 = vmatpush2.bf16.msra.mxu0 %v1657
        %2200 = vmatprep.subr.bf16.mxu0 %v1650
        %2201 = vmatpush2.bf16.msra.mxu0 %v1649
        %2202 = vmatprep.mubr.bf16.mxu0 %v680
        %2203 = vmatmul.mubr.bf16.gmra.mxu0 %v679
        %v2204 = vpop.f32.mrf.mxu0
        %v2205 = vadd.f32 %v2164, %v2204
        %v2206 = vpop.f32.mrf.mxu0
        %v2207 = vadd.f32 %v2166, %v2206
        %v2208 = vpop.f32.mrf.mxu0
        %v2209 = vpop.f32.mrf.mxu0
        %2210 = vdwg.mxu0
        %2211 = vmatprep.subr.bf16.mxu0 %v1516
        %2212 = vmatpush1.bf16.msra.mxu0 %v1515
        %2213 = vmatprep.subr.bf16.mxu0 %v1508
        %2214 = vmatpush1.bf16.msra.mxu0 %v1507
        %2215 = vmatprep.subr.bf16.mxu0 %v1500
        %2216 = vmatpush1.bf16.msra.mxu0 %v1499
        %2217 = vmatprep.subr.bf16.mxu0 %v1492
        %2218 = vmatpush1.bf16.msra.mxu0 %v1491
        %2219 = vmatprep.subr.bf16.mxu0 %v1484
        %2220 = vmatpush1.bf16.msra.mxu0 %v1483
        %2221 = vmatprep.subr.bf16.mxu0 %v1476
        %2222 = vmatpush1.bf16.msra.mxu0 %v1475
        %2223 = vmatprep.subr.bf16.mxu0 %v1468
        %2224 = vmatpush1.bf16.msra.mxu0 %v1467
        %2225 = vmatprep.subr.bf16.mxu0 %v1460
        %2226 = vmatpush1.bf16.msra.mxu0 %v1459
        %2227 = vmatprep.subr.bf16.mxu0 %v1580
        %2228 = vmatpush2.bf16.msra.mxu0 %v1579
        %2229 = vmatprep.subr.bf16.mxu0 %v1572
        %2230 = vmatpush2.bf16.msra.mxu0 %v1571
        %2231 = vmatprep.subr.bf16.mxu0 %v1564
        %2232 = vmatpush2.bf16.msra.mxu0 %v1563
        %2233 = vmatprep.subr.bf16.mxu0 %v1556
        %2234 = vmatpush2.bf16.msra.mxu0 %v1555
        %2235 = vmatprep.subr.bf16.mxu0 %v1548
        %2236 = vmatpush2.bf16.msra.mxu0 %v1547
        %2237 = vmatprep.subr.bf16.mxu0 %v1540
        %2238 = vmatpush2.bf16.msra.mxu0 %v1539
        %2239 = vmatprep.subr.bf16.mxu0 %v1532
        %2240 = vmatpush2.bf16.msra.mxu0 %v1531
        %2241 = vmatprep.subr.bf16.mxu0 %v1524
        %2242 = vmatpush2.bf16.msra.mxu0 %v1523
        %2243 = vmatprep.mubr.bf16.mxu0 %v678
        %2244 = vmatmul.mubr.bf16.gmra.mxu0 %v677
        %v2245 = vpop.f32.mrf.mxu0
        %v2246 = vadd.f32 0.0, %v2245
        %v2247 = vpop.f32.mrf.mxu0
        %v2248 = vadd.f32 0.0, %v2247
        %v2249 = vpop.f32.mrf.mxu0
        %v2250 = vpop.f32.mrf.mxu0
        %2251 = vdwg.mxu0
        %2252 = vmatprep.subr.bf16.mxu0 %v1644
        %2253 = vmatpush1.bf16.msra.mxu0 %v1643
        %2254 = vmatprep.subr.bf16.mxu0 %v1636
        %2255 = vmatpush1.bf16.msra.mxu0 %v1635
        %2256 = vmatprep.subr.bf16.mxu0 %v1628
        %2257 = vmatpush1.bf16.msra.mxu0 %v1627
        %2258 = vmatprep.subr.bf16.mxu0 %v1620
        %2259 = vmatpush1.bf16.msra.mxu0 %v1619
        %2260 = vmatprep.subr.bf16.mxu0 %v1612
        %2261 = vmatpush1.bf16.msra.mxu0 %v1611
        %2262 = vmatprep.subr.bf16.mxu0 %v1604
        %2263 = vmatpush1.bf16.msra.mxu0 %v1603
        %2264 = vmatprep.subr.bf16.mxu0 %v1596
        %2265 = vmatpush1.bf16.msra.mxu0 %v1595
        %2266 = vmatprep.subr.bf16.mxu0 %v1588
        %2267 = vmatpush1.bf16.msra.mxu0 %v1587
        %2268 = vmatprep.subr.bf16.mxu0 %v1708
        %2269 = vmatpush2.bf16.msra.mxu0 %v1707
        %2270 = vmatprep.subr.bf16.mxu0 %v1700
        %2271 = vmatpush2.bf16.msra.mxu0 %v1699
        %2272 = vmatprep.subr.bf16.mxu0 %v1692
        %2273 = vmatpush2.bf16.msra.mxu0 %v1691
        %2274 = vmatprep.subr.bf16.mxu0 %v1684
        %2275 = vmatpush2.bf16.msra.mxu0 %v1683
        %2276 = vmatprep.subr.bf16.mxu0 %v1676
        %2277 = vmatpush2.bf16.msra.mxu0 %v1675
        %2278 = vmatprep.subr.bf16.mxu0 %v1668
        %2279 = vmatpush2.bf16.msra.mxu0 %v1667
        %2280 = vmatprep.subr.bf16.mxu0 %v1660
        %2281 = vmatpush2.bf16.msra.mxu0 %v1659
        %2282 = vmatprep.subr.bf16.mxu0 %v1652
        %2283 = vmatpush2.bf16.msra.mxu0 %v1651
        %2284 = vmatprep.mubr.bf16.mxu0 %v680
        %2285 = vmatmul.mubr.bf16.gmra.mxu0 %v679
        %v2286 = vpop.f32.mrf.mxu0
        %v2287 = vadd.f32 %v2246, %v2286
        %v2288 = vpop.f32.mrf.mxu0
        %v2289 = vadd.f32 %v2248, %v2288
        %v2290 = vpop.f32.mrf.mxu0
        %v2291 = vpop.f32.mrf.mxu0
        %2292 = vdwg.mxu0
        %v2293 = vadd.f32 %v405, %v2041
        %v2294 = vadd.f32 %v406, %v2043
        %v2295 = vadd.f32 %v407, %v2123
        %v2296 = vadd.f32 %v408, %v2125
        %v2297 = vadd.f32 %v409, %v2205
        %v2298 = vadd.f32 %v410, %v2207
        %v2299 = vadd.f32 %v411, %v2287
        %v2300 = vadd.f32 %v412, %v2289
        %2301 = vst [vmem:[#allocation2] sm:$0xff] %v2293
        %2302 = vst [vmem:[#allocation2 + $0x8] sm:$0xff] %v2294
        %2303 = vst [vmem:[#allocation2 + $0x10] sm:$0xff] %v2295
        %2304 = vst [vmem:[#allocation2 + $0x18] sm:$0xff] %v2296
        %2305 = vst [vmem:[#allocation2 + $0x20] sm:$0xff] %v2297
        %2306 = vst [vmem:[#allocation2 + $0x28] sm:$0xff] %v2298
        %2307 = vst [vmem:[#allocation2 + $0x30] sm:$0xff] %v2299
        %2308 = vst [vmem:[#allocation2 + $0x38] sm:$0xff] %v2300
        %p2309 = scmp.eq.s32.totalorder %s27, 3
        // Predicated region
        $region81: #{tpu_custom_call.1} parent=47 // pred_check
          %p2310 = pneg %p2309
        $region82: #{tpu_custom_call.1} parent=47 // pred_check_branch
          %2312 = sbr.rel (%p2310) target = $region84
        $region83: #{tpu_custom_call.1} parent=47 // pred_region
          %v2313 = vld [vmem:[#allocation2] sm:$0xff]
          %v2314 = vld [vmem:[#allocation2 + $0x8] sm:$0xff]
          %v2315 = vld [vmem:[#allocation2 + $0x10] sm:$0xff]
          %v2316 = vld [vmem:[#allocation2 + $0x18] sm:$0xff]
          %v2317 = vld [vmem:[#allocation2 + $0x20] sm:$0xff]
          %v2318 = vld [vmem:[#allocation2 + $0x28] sm:$0xff]
          %v2319 = vld [vmem:[#allocation2 + $0x30] sm:$0xff]
          %v2320 = vld [vmem:[#allocation2 + $0x38] sm:$0xff]
          %v2321 = vld [vmem:[#allocation8] sm:$0xff]
          %v2323 = vlaneseq
          %v2324 = vshrl.u32 %v2323, 7
          %v2325 = vsub.s32 0, %v2324
          %v2326 = vrot.slane %v2321, %v2325
          %v2327 = vlaneseq
          %v2328 = vshrl.u32 %v2327, 7
          %v2329 = vsub.s32 1, %v2328
          %v2330 = vrot.slane %v2321, %v2329
          %v2331 = vlaneseq
          %v2332 = vshrl.u32 %v2331, 7
          %v2333 = vsub.s32 2, %v2332
          %v2334 = vrot.slane %v2321, %v2333
          %v2335 = vlaneseq
          %v2336 = vshrl.u32 %v2335, 7
          %v2337 = vsub.s32 3, %v2336
          %v2338 = vrot.slane %v2321, %v2337
          %v2339 = vlaneseq
          %v2340 = vshrl.u32 %v2339, 7
          %v2341 = vsub.s32 4, %v2340
          %v2342 = vrot.slane %v2321, %v2341
          %v2343 = vlaneseq
          %v2344 = vshrl.u32 %v2343, 7
          %v2345 = vsub.s32 5, %v2344
          %v2346 = vrot.slane %v2321, %v2345
          %v2347 = vlaneseq
          %v2348 = vshrl.u32 %v2347, 7
          %v2349 = vsub.s32 6, %v2348
          %v2350 = vrot.slane %v2321, %v2349
          %v2351 = vlaneseq
          %v2352 = vshrl.u32 %v2351, 7
          %v2353 = vsub.s32 7, %v2352
          %v2354 = vrot.slane %v2321, %v2353
          %v2363 = vadd.f32 %v2313, %v2326
          %v2364 = vadd.f32 %v2314, %v2330
          %v2365 = vadd.f32 %v2315, %v2334
          %v2366 = vadd.f32 %v2316, %v2338
          %v2367 = vadd.f32 %v2317, %v2342
          %v2368 = vadd.f32 %v2318, %v2346
          %v2369 = vadd.f32 %v2319, %v2350
          %v2370 = vadd.f32 %v2320, %v2354
          %v2371 = vmax.f32 %v2363, 0.0
          %v2372 = vmax.f32 %v2364, 0.0
          %v2373 = vmax.f32 %v2365, 0.0
          %v2374 = vmax.f32 %v2366, 0.0
          %v2375 = vmax.f32 %v2367, 0.0
          %v2376 = vmax.f32 %v2368, 0.0
          %v2377 = vmax.f32 %v2369, 0.0
          %v2378 = vmax.f32 %v2370, 0.0
          %v2379 = vpack.c.bf16 %v2371, %v2371
          %v2380 = vpack.c.bf16 %v2372, %v2372
          %v2381 = vpack.c.bf16 %v2373, %v2373
          %v2382 = vpack.c.bf16 %v2374, %v2374
          %v2383 = vpack.c.bf16 %v2375, %v2375
          %v2384 = vpack.c.bf16 %v2376, %v2376
          %v2385 = vpack.c.bf16 %v2377, %v2377
          %v2386 = vpack.c.bf16 %v2378, %v2378
          %v2387 = vld [vmem:[#allocation9] sm:$0xff]
          %v2388 = vld [vmem:[#allocation9 + $0x8] sm:$0xff]
          %v2389 = vld [vmem:[#allocation9 + $0x10] sm:$0xff]
          %v2390 = vld [vmem:[#allocation9 + $0x18] sm:$0xff]
          %v2391 = vld [vmem:[#allocation9 + $0x20] sm:$0xff]
          %v2392 = vld [vmem:[#allocation9 + $0x28] sm:$0xff]
          %v2393 = vld [vmem:[#allocation9 + $0x30] sm:$0xff]
          %v2394 = vld [vmem:[#allocation9 + $0x38] sm:$0xff]
          %v2395 = vld [vmem:[#allocation9 + $0x40] sm:$0xff]
          %v2396 = vld [vmem:[#allocation9 + $0x48] sm:$0xff]
          %v2397 = vld [vmem:[#allocation9 + $0x50] sm:$0xff]
          %v2398 = vld [vmem:[#allocation9 + $0x58] sm:$0xff]
          %v2399 = vld [vmem:[#allocation9 + $0x60] sm:$0xff]
          %v2400 = vld [vmem:[#allocation9 + $0x68] sm:$0xff]
          %v2401 = vld [vmem:[#allocation9 + $0x70] sm:$0xff]
          %v2402 = vld [vmem:[#allocation9 + $0x78] sm:$0xff]
          %v2403 = vld [vmem:[#allocation9 + $0x80] sm:$0xff]
          %v2404 = vld [vmem:[#allocation9 + $0x88] sm:$0xff]
          %v2405 = vld [vmem:[#allocation9 + $0x90] sm:$0xff]
          %v2406 = vld [vmem:[#allocation9 + $0x98] sm:$0xff]
          %v2407 = vld [vmem:[#allocation9 + $0xa0] sm:$0xff]
          %v2408 = vld [vmem:[#allocation9 + $0xa8] sm:$0xff]
          %v2409 = vld [vmem:[#allocation9 + $0xb0] sm:$0xff]
          %v2410 = vld [vmem:[#allocation9 + $0xb8] sm:$0xff]
          %v2411 = vld [vmem:[#allocation9 + $0xc0] sm:$0xff]
          %v2412 = vld [vmem:[#allocation9 + $0xc8] sm:$0xff]
          %v2413 = vld [vmem:[#allocation9 + $0xd0] sm:$0xff]
          %v2414 = vld [vmem:[#allocation9 + $0xd8] sm:$0xff]
          %v2415 = vld [vmem:[#allocation9 + $0xe0] sm:$0xff]
          %v2416 = vld [vmem:[#allocation9 + $0xe8] sm:$0xff]
          %v2417 = vld [vmem:[#allocation9 + $0xf0] sm:$0xff]
          %v2418 = vld [vmem:[#allocation9 + $0xf8] sm:$0xff]
          %v2419 = vld [vmem:[#allocation9 + $0x100] sm:$0xff]
          %v2420 = vld [vmem:[#allocation9 + $0x108] sm:$0xff]
          %v2421 = vld [vmem:[#allocation9 + $0x110] sm:$0xff]
          %v2422 = vld [vmem:[#allocation9 + $0x118] sm:$0xff]
          %v2423 = vld [vmem:[#allocation9 + $0x120] sm:$0xff]
          %v2424 = vld [vmem:[#allocation9 + $0x128] sm:$0xff]
          %v2425 = vld [vmem:[#allocation9 + $0x130] sm:$0xff]
          %v2426 = vld [vmem:[#allocation9 + $0x138] sm:$0xff]
          %v2427 = vld [vmem:[#allocation9 + $0x140] sm:$0xff]
          %v2428 = vld [vmem:[#allocation9 + $0x148] sm:$0xff]
          %v2429 = vld [vmem:[#allocation9 + $0x150] sm:$0xff]
          %v2430 = vld [vmem:[#allocation9 + $0x158] sm:$0xff]
          %v2431 = vld [vmem:[#allocation9 + $0x160] sm:$0xff]
          %v2432 = vld [vmem:[#allocation9 + $0x168] sm:$0xff]
          %v2433 = vld [vmem:[#allocation9 + $0x170] sm:$0xff]
          %v2434 = vld [vmem:[#allocation9 + $0x178] sm:$0xff]
          %v2435 = vld [vmem:[#allocation9 + $0x180] sm:$0xff]
          %v2436 = vld [vmem:[#allocation9 + $0x188] sm:$0xff]
          %v2437 = vld [vmem:[#allocation9 + $0x190] sm:$0xff]
          %v2438 = vld [vmem:[#allocation9 + $0x198] sm:$0xff]
          %v2439 = vld [vmem:[#allocation9 + $0x1a0] sm:$0xff]
          %v2440 = vld [vmem:[#allocation9 + $0x1a8] sm:$0xff]
          %v2441 = vld [vmem:[#allocation9 + $0x1b0] sm:$0xff]
          %v2442 = vld [vmem:[#allocation9 + $0x1b8] sm:$0xff]
          %v2443 = vld [vmem:[#allocation9 + $0x1c0] sm:$0xff]
          %v2444 = vld [vmem:[#allocation9 + $0x1c8] sm:$0xff]
          %v2445 = vld [vmem:[#allocation9 + $0x1d0] sm:$0xff]
          %v2446 = vld [vmem:[#allocation9 + $0x1d8] sm:$0xff]
          %v2447 = vld [vmem:[#allocation9 + $0x1e0] sm:$0xff]
          %v2448 = vld [vmem:[#allocation9 + $0x1e8] sm:$0xff]
          %v2449 = vld [vmem:[#allocation9 + $0x1f0] sm:$0xff]
          %v2450 = vld [vmem:[#allocation9 + $0x1f8] sm:$0xff]
          %v2451 = vld [vmem:[#allocation9 + $0x200] sm:$0xff]
          %v2452 = vld [vmem:[#allocation9 + $0x208] sm:$0xff]
          %v2453 = vld [vmem:[#allocation9 + $0x210] sm:$0xff]
          %v2454 = vld [vmem:[#allocation9 + $0x218] sm:$0xff]
          %v2455 = vld [vmem:[#allocation9 + $0x220] sm:$0xff]
          %v2456 = vld [vmem:[#allocation9 + $0x228] sm:$0xff]
          %v2457 = vld [vmem:[#allocation9 + $0x230] sm:$0xff]
          %v2458 = vld [vmem:[#allocation9 + $0x238] sm:$0xff]
          %v2459 = vld [vmem:[#allocation9 + $0x240] sm:$0xff]
          %v2460 = vld [vmem:[#allocation9 + $0x248] sm:$0xff]
          %v2461 = vld [vmem:[#allocation9 + $0x250] sm:$0xff]
          %v2462 = vld [vmem:[#allocation9 + $0x258] sm:$0xff]
          %v2463 = vld [vmem:[#allocation9 + $0x260] sm:$0xff]
          %v2464 = vld [vmem:[#allocation9 + $0x268] sm:$0xff]
          %v2465 = vld [vmem:[#allocation9 + $0x270] sm:$0xff]
          %v2466 = vld [vmem:[#allocation9 + $0x278] sm:$0xff]
          %v2467 = vld [vmem:[#allocation9 + $0x280] sm:$0xff]
          %v2468 = vld [vmem:[#allocation9 + $0x288] sm:$0xff]
          %v2469 = vld [vmem:[#allocation9 + $0x290] sm:$0xff]
          %v2470 = vld [vmem:[#allocation9 + $0x298] sm:$0xff]
          %v2471 = vld [vmem:[#allocation9 + $0x2a0] sm:$0xff]
          %v2472 = vld [vmem:[#allocation9 + $0x2a8] sm:$0xff]
          %v2473 = vld [vmem:[#allocation9 + $0x2b0] sm:$0xff]
          %v2474 = vld [vmem:[#allocation9 + $0x2b8] sm:$0xff]
          %v2475 = vld [vmem:[#allocation9 + $0x2c0] sm:$0xff]
          %v2476 = vld [vmem:[#allocation9 + $0x2c8] sm:$0xff]
          %v2477 = vld [vmem:[#allocation9 + $0x2d0] sm:$0xff]
          %v2478 = vld [vmem:[#allocation9 + $0x2d8] sm:$0xff]
          %v2479 = vld [vmem:[#allocation9 + $0x2e0] sm:$0xff]
          %v2480 = vld [vmem:[#allocation9 + $0x2e8] sm:$0xff]
          %v2481 = vld [vmem:[#allocation9 + $0x2f0] sm:$0xff]
          %v2482 = vld [vmem:[#allocation9 + $0x2f8] sm:$0xff]
          %v2483 = vld [vmem:[#allocation9 + $0x300] sm:$0xff]
          %v2484 = vld [vmem:[#allocation9 + $0x308] sm:$0xff]
          %v2485 = vld [vmem:[#allocation9 + $0x310] sm:$0xff]
          %v2486 = vld [vmem:[#allocation9 + $0x318] sm:$0xff]
          %v2487 = vld [vmem:[#allocation9 + $0x320] sm:$0xff]
          %v2488 = vld [vmem:[#allocation9 + $0x328] sm:$0xff]
          %v2489 = vld [vmem:[#allocation9 + $0x330] sm:$0xff]
          %v2490 = vld [vmem:[#allocation9 + $0x338] sm:$0xff]
          %v2491 = vld [vmem:[#allocation9 + $0x340] sm:$0xff]
          %v2492 = vld [vmem:[#allocation9 + $0x348] sm:$0xff]
          %v2493 = vld [vmem:[#allocation9 + $0x350] sm:$0xff]
          %v2494 = vld [vmem:[#allocation9 + $0x358] sm:$0xff]
          %v2495 = vld [vmem:[#allocation9 + $0x360] sm:$0xff]
          %v2496 = vld [vmem:[#allocation9 + $0x368] sm:$0xff]
          %v2497 = vld [vmem:[#allocation9 + $0x370] sm:$0xff]
          %v2498 = vld [vmem:[#allocation9 + $0x378] sm:$0xff]
          %v2499 = vld [vmem:[#allocation9 + $0x380] sm:$0xff]
          %v2500 = vld [vmem:[#allocation9 + $0x388] sm:$0xff]
          %v2501 = vld [vmem:[#allocation9 + $0x390] sm:$0xff]
          %v2502 = vld [vmem:[#allocation9 + $0x398] sm:$0xff]
          %v2503 = vld [vmem:[#allocation9 + $0x3a0] sm:$0xff]
          %v2504 = vld [vmem:[#allocation9 + $0x3a8] sm:$0xff]
          %v2505 = vld [vmem:[#allocation9 + $0x3b0] sm:$0xff]
          %v2506 = vld [vmem:[#allocation9 + $0x3b8] sm:$0xff]
          %v2507 = vld [vmem:[#allocation9 + $0x3c0] sm:$0xff]
          %v2508 = vld [vmem:[#allocation9 + $0x3c8] sm:$0xff]
          %v2509 = vld [vmem:[#allocation9 + $0x3d0] sm:$0xff]
          %v2510 = vld [vmem:[#allocation9 + $0x3d8] sm:$0xff]
          %v2511 = vld [vmem:[#allocation9 + $0x3e0] sm:$0xff]
          %v2512 = vld [vmem:[#allocation9 + $0x3e8] sm:$0xff]
          %v2513 = vld [vmem:[#allocation9 + $0x3f0] sm:$0xff]
          %v2514 = vld [vmem:[#allocation9 + $0x3f8] sm:$0xff]
          %v2515 = vld [vmem:[#allocation9 + $0x400] sm:$0xff]
          %v2516 = vld [vmem:[#allocation9 + $0x408] sm:$0xff]
          %v2517 = vld [vmem:[#allocation9 + $0x410] sm:$0xff]
          %v2518 = vld [vmem:[#allocation9 + $0x418] sm:$0xff]
          %v2519 = vld [vmem:[#allocation9 + $0x420] sm:$0xff]
          %v2520 = vld [vmem:[#allocation9 + $0x428] sm:$0xff]
          %v2521 = vld [vmem:[#allocation9 + $0x430] sm:$0xff]
          %v2522 = vld [vmem:[#allocation9 + $0x438] sm:$0xff]
          %v2523 = vld [vmem:[#allocation9 + $0x440] sm:$0xff]
          %v2524 = vld [vmem:[#allocation9 + $0x448] sm:$0xff]
          %v2525 = vld [vmem:[#allocation9 + $0x450] sm:$0xff]
          %v2526 = vld [vmem:[#allocation9 + $0x458] sm:$0xff]
          %v2527 = vld [vmem:[#allocation9 + $0x460] sm:$0xff]
          %v2528 = vld [vmem:[#allocation9 + $0x468] sm:$0xff]
          %v2529 = vld [vmem:[#allocation9 + $0x470] sm:$0xff]
          %v2530 = vld [vmem:[#allocation9 + $0x478] sm:$0xff]
          %v2531 = vld [vmem:[#allocation9 + $0x480] sm:$0xff]
          %v2532 = vld [vmem:[#allocation9 + $0x488] sm:$0xff]
          %v2533 = vld [vmem:[#allocation9 + $0x490] sm:$0xff]
          %v2534 = vld [vmem:[#allocation9 + $0x498] sm:$0xff]
          %v2535 = vld [vmem:[#allocation9 + $0x4a0] sm:$0xff]
          %v2536 = vld [vmem:[#allocation9 + $0x4a8] sm:$0xff]
          %v2537 = vld [vmem:[#allocation9 + $0x4b0] sm:$0xff]
          %v2538 = vld [vmem:[#allocation9 + $0x4b8] sm:$0xff]
          %v2539 = vld [vmem:[#allocation9 + $0x4c0] sm:$0xff]
          %v2540 = vld [vmem:[#allocation9 + $0x4c8] sm:$0xff]
          %v2541 = vld [vmem:[#allocation9 + $0x4d0] sm:$0xff]
          %v2542 = vld [vmem:[#allocation9 + $0x4d8] sm:$0xff]
          %v2543 = vld [vmem:[#allocation9 + $0x4e0] sm:$0xff]
          %v2544 = vld [vmem:[#allocation9 + $0x4e8] sm:$0xff]
          %v2545 = vld [vmem:[#allocation9 + $0x4f0] sm:$0xff]
          %v2546 = vld [vmem:[#allocation9 + $0x4f8] sm:$0xff]
          %v2547 = vld [vmem:[#allocation9 + $0x500] sm:$0xff]
          %v2548 = vld [vmem:[#allocation9 + $0x508] sm:$0xff]
          %v2549 = vld [vmem:[#allocation9 + $0x510] sm:$0xff]
          %v2550 = vld [vmem:[#allocation9 + $0x518] sm:$0xff]
          %v2551 = vld [vmem:[#allocation9 + $0x520] sm:$0xff]
          %v2552 = vld [vmem:[#allocation9 + $0x528] sm:$0xff]
          %v2553 = vld [vmem:[#allocation9 + $0x530] sm:$0xff]
          %v2554 = vld [vmem:[#allocation9 + $0x538] sm:$0xff]
          %v2555 = vld [vmem:[#allocation9 + $0x540] sm:$0xff]
          %v2556 = vld [vmem:[#allocation9 + $0x548] sm:$0xff]
          %v2557 = vld [vmem:[#allocation9 + $0x550] sm:$0xff]
          %v2558 = vld [vmem:[#allocation9 + $0x558] sm:$0xff]
          %v2559 = vld [vmem:[#allocation9 + $0x560] sm:$0xff]
          %v2560 = vld [vmem:[#allocation9 + $0x568] sm:$0xff]
          %v2561 = vld [vmem:[#allocation9 + $0x570] sm:$0xff]
          %v2562 = vld [vmem:[#allocation9 + $0x578] sm:$0xff]
          %v2563 = vld [vmem:[#allocation9 + $0x580] sm:$0xff]
          %v2564 = vld [vmem:[#allocation9 + $0x588] sm:$0xff]
          %v2565 = vld [vmem:[#allocation9 + $0x590] sm:$0xff]
          %v2566 = vld [vmem:[#allocation9 + $0x598] sm:$0xff]
          %v2567 = vld [vmem:[#allocation9 + $0x5a0] sm:$0xff]
          %v2568 = vld [vmem:[#allocation9 + $0x5a8] sm:$0xff]
          %v2569 = vld [vmem:[#allocation9 + $0x5b0] sm:$0xff]
          %v2570 = vld [vmem:[#allocation9 + $0x5b8] sm:$0xff]
          %v2571 = vld [vmem:[#allocation9 + $0x5c0] sm:$0xff]
          %v2572 = vld [vmem:[#allocation9 + $0x5c8] sm:$0xff]
          %v2573 = vld [vmem:[#allocation9 + $0x5d0] sm:$0xff]
          %v2574 = vld [vmem:[#allocation9 + $0x5d8] sm:$0xff]
          %v2575 = vld [vmem:[#allocation9 + $0x5e0] sm:$0xff]
          %v2576 = vld [vmem:[#allocation9 + $0x5e8] sm:$0xff]
          %v2577 = vld [vmem:[#allocation9 + $0x5f0] sm:$0xff]
          %v2578 = vld [vmem:[#allocation9 + $0x5f8] sm:$0xff]
          %v2579 = vld [vmem:[#allocation9 + $0x600] sm:$0xff]
          %v2580 = vld [vmem:[#allocation9 + $0x608] sm:$0xff]
          %v2581 = vld [vmem:[#allocation9 + $0x610] sm:$0xff]
          %v2582 = vld [vmem:[#allocation9 + $0x618] sm:$0xff]
          %v2583 = vld [vmem:[#allocation9 + $0x620] sm:$0xff]
          %v2584 = vld [vmem:[#allocation9 + $0x628] sm:$0xff]
          %v2585 = vld [vmem:[#allocation9 + $0x630] sm:$0xff]
          %v2586 = vld [vmem:[#allocation9 + $0x638] sm:$0xff]
          %v2587 = vld [vmem:[#allocation9 + $0x640] sm:$0xff]
          %v2588 = vld [vmem:[#allocation9 + $0x648] sm:$0xff]
          %v2589 = vld [vmem:[#allocation9 + $0x650] sm:$0xff]
          %v2590 = vld [vmem:[#allocation9 + $0x658] sm:$0xff]
          %v2591 = vld [vmem:[#allocation9 + $0x660] sm:$0xff]
          %v2592 = vld [vmem:[#allocation9 + $0x668] sm:$0xff]
          %v2593 = vld [vmem:[#allocation9 + $0x670] sm:$0xff]
          %v2594 = vld [vmem:[#allocation9 + $0x678] sm:$0xff]
          %v2595 = vld [vmem:[#allocation9 + $0x680] sm:$0xff]
          %v2596 = vld [vmem:[#allocation9 + $0x688] sm:$0xff]
          %v2597 = vld [vmem:[#allocation9 + $0x690] sm:$0xff]
          %v2598 = vld [vmem:[#allocation9 + $0x698] sm:$0xff]
          %v2599 = vld [vmem:[#allocation9 + $0x6a0] sm:$0xff]
          %v2600 = vld [vmem:[#allocation9 + $0x6a8] sm:$0xff]
          %v2601 = vld [vmem:[#allocation9 + $0x6b0] sm:$0xff]
          %v2602 = vld [vmem:[#allocation9 + $0x6b8] sm:$0xff]
          %v2603 = vld [vmem:[#allocation9 + $0x6c0] sm:$0xff]
          %v2604 = vld [vmem:[#allocation9 + $0x6c8] sm:$0xff]
          %v2605 = vld [vmem:[#allocation9 + $0x6d0] sm:$0xff]
          %v2606 = vld [vmem:[#allocation9 + $0x6d8] sm:$0xff]
          %v2607 = vld [vmem:[#allocation9 + $0x6e0] sm:$0xff]
          %v2608 = vld [vmem:[#allocation9 + $0x6e8] sm:$0xff]
          %v2609 = vld [vmem:[#allocation9 + $0x6f0] sm:$0xff]
          %v2610 = vld [vmem:[#allocation9 + $0x6f8] sm:$0xff]
          %v2611 = vld [vmem:[#allocation9 + $0x700] sm:$0xff]
          %v2612 = vld [vmem:[#allocation9 + $0x708] sm:$0xff]
          %v2613 = vld [vmem:[#allocation9 + $0x710] sm:$0xff]
          %v2614 = vld [vmem:[#allocation9 + $0x718] sm:$0xff]
          %v2615 = vld [vmem:[#allocation9 + $0x720] sm:$0xff]
          %v2616 = vld [vmem:[#allocation9 + $0x728] sm:$0xff]
          %v2617 = vld [vmem:[#allocation9 + $0x730] sm:$0xff]
          %v2618 = vld [vmem:[#allocation9 + $0x738] sm:$0xff]
          %v2619 = vld [vmem:[#allocation9 + $0x740] sm:$0xff]
          %v2620 = vld [vmem:[#allocation9 + $0x748] sm:$0xff]
          %v2621 = vld [vmem:[#allocation9 + $0x750] sm:$0xff]
          %v2622 = vld [vmem:[#allocation9 + $0x758] sm:$0xff]
          %v2623 = vld [vmem:[#allocation9 + $0x760] sm:$0xff]
          %v2624 = vld [vmem:[#allocation9 + $0x768] sm:$0xff]
          %v2625 = vld [vmem:[#allocation9 + $0x770] sm:$0xff]
          %v2626 = vld [vmem:[#allocation9 + $0x778] sm:$0xff]
          %v2627 = vld [vmem:[#allocation9 + $0x780] sm:$0xff]
          %v2628 = vld [vmem:[#allocation9 + $0x788] sm:$0xff]
          %v2629 = vld [vmem:[#allocation9 + $0x790] sm:$0xff]
          %v2630 = vld [vmem:[#allocation9 + $0x798] sm:$0xff]
          %v2631 = vld [vmem:[#allocation9 + $0x7a0] sm:$0xff]
          %v2632 = vld [vmem:[#allocation9 + $0x7a8] sm:$0xff]
          %v2633 = vld [vmem:[#allocation9 + $0x7b0] sm:$0xff]
          %v2634 = vld [vmem:[#allocation9 + $0x7b8] sm:$0xff]
          %v2635 = vld [vmem:[#allocation9 + $0x7c0] sm:$0xff]
          %v2636 = vld [vmem:[#allocation9 + $0x7c8] sm:$0xff]
          %v2637 = vld [vmem:[#allocation9 + $0x7d0] sm:$0xff]
          %v2638 = vld [vmem:[#allocation9 + $0x7d8] sm:$0xff]
          %v2639 = vld [vmem:[#allocation9 + $0x7e0] sm:$0xff]
          %v2640 = vld [vmem:[#allocation9 + $0x7e8] sm:$0xff]
          %v2641 = vld [vmem:[#allocation9 + $0x7f0] sm:$0xff]
          %v2642 = vld [vmem:[#allocation9 + $0x7f8] sm:$0xff]
          %v2643 = vld [vmem:[#allocation9 + $0x800] sm:$0xff]
          %v2644 = vld [vmem:[#allocation9 + $0x808] sm:$0xff]
          %v2645 = vld [vmem:[#allocation9 + $0x810] sm:$0xff]
          %v2646 = vld [vmem:[#allocation9 + $0x818] sm:$0xff]
          %v2647 = vld [vmem:[#allocation9 + $0x820] sm:$0xff]
          %v2648 = vld [vmem:[#allocation9 + $0x828] sm:$0xff]
          %v2649 = vld [vmem:[#allocation9 + $0x830] sm:$0xff]
          %v2650 = vld [vmem:[#allocation9 + $0x838] sm:$0xff]
          %v2651 = vld [vmem:[#allocation9 + $0x840] sm:$0xff]
          %v2652 = vld [vmem:[#allocation9 + $0x848] sm:$0xff]
          %v2653 = vld [vmem:[#allocation9 + $0x850] sm:$0xff]
          %v2654 = vld [vmem:[#allocation9 + $0x858] sm:$0xff]
          %v2655 = vld [vmem:[#allocation9 + $0x860] sm:$0xff]
          %v2656 = vld [vmem:[#allocation9 + $0x868] sm:$0xff]
          %v2657 = vld [vmem:[#allocation9 + $0x870] sm:$0xff]
          %v2658 = vld [vmem:[#allocation9 + $0x878] sm:$0xff]
          %v2659 = vld [vmem:[#allocation9 + $0x880] sm:$0xff]
          %v2660 = vld [vmem:[#allocation9 + $0x888] sm:$0xff]
          %v2661 = vld [vmem:[#allocation9 + $0x890] sm:$0xff]
          %v2662 = vld [vmem:[#allocation9 + $0x898] sm:$0xff]
          %v2663 = vld [vmem:[#allocation9 + $0x8a0] sm:$0xff]
          %v2664 = vld [vmem:[#allocation9 + $0x8a8] sm:$0xff]
          %v2665 = vld [vmem:[#allocation9 + $0x8b0] sm:$0xff]
          %v2666 = vld [vmem:[#allocation9 + $0x8b8] sm:$0xff]
          %v2667 = vld [vmem:[#allocation9 + $0x8c0] sm:$0xff]
          %v2668 = vld [vmem:[#allocation9 + $0x8c8] sm:$0xff]
          %v2669 = vld [vmem:[#allocation9 + $0x8d0] sm:$0xff]
          %v2670 = vld [vmem:[#allocation9 + $0x8d8] sm:$0xff]
          %v2671 = vld [vmem:[#allocation9 + $0x8e0] sm:$0xff]
          %v2672 = vld [vmem:[#allocation9 + $0x8e8] sm:$0xff]
          %v2673 = vld [vmem:[#allocation9 + $0x8f0] sm:$0xff]
          %v2674 = vld [vmem:[#allocation9 + $0x8f8] sm:$0xff]
          %v2675 = vld [vmem:[#allocation9 + $0x900] sm:$0xff]
          %v2676 = vld [vmem:[#allocation9 + $0x908] sm:$0xff]
          %v2677 = vld [vmem:[#allocation9 + $0x910] sm:$0xff]
          %v2678 = vld [vmem:[#allocation9 + $0x918] sm:$0xff]
          %v2679 = vld [vmem:[#allocation9 + $0x920] sm:$0xff]
          %v2680 = vld [vmem:[#allocation9 + $0x928] sm:$0xff]
          %v2681 = vld [vmem:[#allocation9 + $0x930] sm:$0xff]
          %v2682 = vld [vmem:[#allocation9 + $0x938] sm:$0xff]
          %v2683 = vld [vmem:[#allocation9 + $0x940] sm:$0xff]
          %v2684 = vld [vmem:[#allocation9 + $0x948] sm:$0xff]
          %v2685 = vld [vmem:[#allocation9 + $0x950] sm:$0xff]
          %v2686 = vld [vmem:[#allocation9 + $0x958] sm:$0xff]
          %v2687 = vld [vmem:[#allocation9 + $0x960] sm:$0xff]
          %v2688 = vld [vmem:[#allocation9 + $0x968] sm:$0xff]
          %v2689 = vld [vmem:[#allocation9 + $0x970] sm:$0xff]
          %v2690 = vld [vmem:[#allocation9 + $0x978] sm:$0xff]
          %v2691 = vld [vmem:[#allocation9 + $0x980] sm:$0xff]
          %v2692 = vld [vmem:[#allocation9 + $0x988] sm:$0xff]
          %v2693 = vld [vmem:[#allocation9 + $0x990] sm:$0xff]
          %v2694 = vld [vmem:[#allocation9 + $0x998] sm:$0xff]
          %v2695 = vld [vmem:[#allocation9 + $0x9a0] sm:$0xff]
          %v2696 = vld [vmem:[#allocation9 + $0x9a8] sm:$0xff]
          %v2697 = vld [vmem:[#allocation9 + $0x9b0] sm:$0xff]
          %v2698 = vld [vmem:[#allocation9 + $0x9b8] sm:$0xff]
          %v2699 = vld [vmem:[#allocation9 + $0x9c0] sm:$0xff]
          %v2700 = vld [vmem:[#allocation9 + $0x9c8] sm:$0xff]
          %v2701 = vld [vmem:[#allocation9 + $0x9d0] sm:$0xff]
          %v2702 = vld [vmem:[#allocation9 + $0x9d8] sm:$0xff]
          %v2703 = vld [vmem:[#allocation9 + $0x9e0] sm:$0xff]
          %v2704 = vld [vmem:[#allocation9 + $0x9e8] sm:$0xff]
          %v2705 = vld [vmem:[#allocation9 + $0x9f0] sm:$0xff]
          %v2706 = vld [vmem:[#allocation9 + $0x9f8] sm:$0xff]
          %v2707 = vld [vmem:[#allocation9 + $0xa00] sm:$0xff]
          %v2708 = vld [vmem:[#allocation9 + $0xa08] sm:$0xff]
          %v2709 = vld [vmem:[#allocation9 + $0xa10] sm:$0xff]
          %v2710 = vld [vmem:[#allocation9 + $0xa18] sm:$0xff]
          %v2711 = vld [vmem:[#allocation9 + $0xa20] sm:$0xff]
          %v2712 = vld [vmem:[#allocation9 + $0xa28] sm:$0xff]
          %v2713 = vld [vmem:[#allocation9 + $0xa30] sm:$0xff]
          %v2714 = vld [vmem:[#allocation9 + $0xa38] sm:$0xff]
          %v2715 = vld [vmem:[#allocation9 + $0xa40] sm:$0xff]
          %v2716 = vld [vmem:[#allocation9 + $0xa48] sm:$0xff]
          %v2717 = vld [vmem:[#allocation9 + $0xa50] sm:$0xff]
          %v2718 = vld [vmem:[#allocation9 + $0xa58] sm:$0xff]
          %v2719 = vld [vmem:[#allocation9 + $0xa60] sm:$0xff]
          %v2720 = vld [vmem:[#allocation9 + $0xa68] sm:$0xff]
          %v2721 = vld [vmem:[#allocation9 + $0xa70] sm:$0xff]
          %v2722 = vld [vmem:[#allocation9 + $0xa78] sm:$0xff]
          %v2723 = vld [vmem:[#allocation9 + $0xa80] sm:$0xff]
          %v2724 = vld [vmem:[#allocation9 + $0xa88] sm:$0xff]
          %v2725 = vld [vmem:[#allocation9 + $0xa90] sm:$0xff]
          %v2726 = vld [vmem:[#allocation9 + $0xa98] sm:$0xff]
          %v2727 = vld [vmem:[#allocation9 + $0xaa0] sm:$0xff]
          %v2728 = vld [vmem:[#allocation9 + $0xaa8] sm:$0xff]
          %v2729 = vld [vmem:[#allocation9 + $0xab0] sm:$0xff]
          %v2730 = vld [vmem:[#allocation9 + $0xab8] sm:$0xff]
          %v2731 = vld [vmem:[#allocation9 + $0xac0] sm:$0xff]
          %v2732 = vld [vmem:[#allocation9 + $0xac8] sm:$0xff]
          %v2733 = vld [vmem:[#allocation9 + $0xad0] sm:$0xff]
          %v2734 = vld [vmem:[#allocation9 + $0xad8] sm:$0xff]
          %v2735 = vld [vmem:[#allocation9 + $0xae0] sm:$0xff]
          %v2736 = vld [vmem:[#allocation9 + $0xae8] sm:$0xff]
          %v2737 = vld [vmem:[#allocation9 + $0xaf0] sm:$0xff]
          %v2738 = vld [vmem:[#allocation9 + $0xaf8] sm:$0xff]
          %v2739 = vld [vmem:[#allocation9 + $0xb00] sm:$0xff]
          %v2740 = vld [vmem:[#allocation9 + $0xb08] sm:$0xff]
          %v2741 = vld [vmem:[#allocation9 + $0xb10] sm:$0xff]
          %v2742 = vld [vmem:[#allocation9 + $0xb18] sm:$0xff]
          %v2743 = vld [vmem:[#allocation9 + $0xb20] sm:$0xff]
          %v2744 = vld [vmem:[#allocation9 + $0xb28] sm:$0xff]
          %v2745 = vld [vmem:[#allocation9 + $0xb30] sm:$0xff]
          %v2746 = vld [vmem:[#allocation9 + $0xb38] sm:$0xff]
          %v2747 = vld [vmem:[#allocation9 + $0xb40] sm:$0xff]
          %v2748 = vld [vmem:[#allocation9 + $0xb48] sm:$0xff]
          %v2749 = vld [vmem:[#allocation9 + $0xb50] sm:$0xff]
          %v2750 = vld [vmem:[#allocation9 + $0xb58] sm:$0xff]
          %v2751 = vld [vmem:[#allocation9 + $0xb60] sm:$0xff]
          %v2752 = vld [vmem:[#allocation9 + $0xb68] sm:$0xff]
          %v2753 = vld [vmem:[#allocation9 + $0xb70] sm:$0xff]
          %v2754 = vld [vmem:[#allocation9 + $0xb78] sm:$0xff]
          %v2755 = vld [vmem:[#allocation9 + $0xb80] sm:$0xff]
          %v2756 = vld [vmem:[#allocation9 + $0xb88] sm:$0xff]
          %v2757 = vld [vmem:[#allocation9 + $0xb90] sm:$0xff]
          %v2758 = vld [vmem:[#allocation9 + $0xb98] sm:$0xff]
          %v2759 = vld [vmem:[#allocation9 + $0xba0] sm:$0xff]
          %v2760 = vld [vmem:[#allocation9 + $0xba8] sm:$0xff]
          %v2761 = vld [vmem:[#allocation9 + $0xbb0] sm:$0xff]
          %v2762 = vld [vmem:[#allocation9 + $0xbb8] sm:$0xff]
          %v2763 = vld [vmem:[#allocation9 + $0xbc0] sm:$0xff]
          %v2764 = vld [vmem:[#allocation9 + $0xbc8] sm:$0xff]
          %v2765 = vld [vmem:[#allocation9 + $0xbd0] sm:$0xff]
          %v2766 = vld [vmem:[#allocation9 + $0xbd8] sm:$0xff]
          %v2767 = vld [vmem:[#allocation9 + $0xbe0] sm:$0xff]
          %v2768 = vld [vmem:[#allocation9 + $0xbe8] sm:$0xff]
          %v2769 = vld [vmem:[#allocation9 + $0xbf0] sm:$0xff]
          %v2770 = vld [vmem:[#allocation9 + $0xbf8] sm:$0xff]
          %v2771 = vld [vmem:[#allocation9 + $0xc00] sm:$0xff]
          %v2772 = vld [vmem:[#allocation9 + $0xc08] sm:$0xff]
          %v2773 = vld [vmem:[#allocation9 + $0xc10] sm:$0xff]
          %v2774 = vld [vmem:[#allocation9 + $0xc18] sm:$0xff]
          %v2775 = vld [vmem:[#allocation9 + $0xc20] sm:$0xff]
          %v2776 = vld [vmem:[#allocation9 + $0xc28] sm:$0xff]
          %v2777 = vld [vmem:[#allocation9 + $0xc30] sm:$0xff]
          %v2778 = vld [vmem:[#allocation9 + $0xc38] sm:$0xff]
          %v2779 = vld [vmem:[#allocation9 + $0xc40] sm:$0xff]
          %v2780 = vld [vmem:[#allocation9 + $0xc48] sm:$0xff]
          %v2781 = vld [vmem:[#allocation9 + $0xc50] sm:$0xff]
          %v2782 = vld [vmem:[#allocation9 + $0xc58] sm:$0xff]
          %v2783 = vld [vmem:[#allocation9 + $0xc60] sm:$0xff]
          %v2784 = vld [vmem:[#allocation9 + $0xc68] sm:$0xff]
          %v2785 = vld [vmem:[#allocation9 + $0xc70] sm:$0xff]
          %v2786 = vld [vmem:[#allocation9 + $0xc78] sm:$0xff]
          %v2787 = vld [vmem:[#allocation9 + $0xc80] sm:$0xff]
          %v2788 = vld [vmem:[#allocation9 + $0xc88] sm:$0xff]
          %v2789 = vld [vmem:[#allocation9 + $0xc90] sm:$0xff]
          %v2790 = vld [vmem:[#allocation9 + $0xc98] sm:$0xff]
          %v2791 = vld [vmem:[#allocation9 + $0xca0] sm:$0xff]
          %v2792 = vld [vmem:[#allocation9 + $0xca8] sm:$0xff]
          %v2793 = vld [vmem:[#allocation9 + $0xcb0] sm:$0xff]
          %v2794 = vld [vmem:[#allocation9 + $0xcb8] sm:$0xff]
          %v2795 = vld [vmem:[#allocation9 + $0xcc0] sm:$0xff]
          %v2796 = vld [vmem:[#allocation9 + $0xcc8] sm:$0xff]
          %v2797 = vld [vmem:[#allocation9 + $0xcd0] sm:$0xff]
          %v2798 = vld [vmem:[#allocation9 + $0xcd8] sm:$0xff]
          %v2799 = vld [vmem:[#allocation9 + $0xce0] sm:$0xff]
          %v2800 = vld [vmem:[#allocation9 + $0xce8] sm:$0xff]
          %v2801 = vld [vmem:[#allocation9 + $0xcf0] sm:$0xff]
          %v2802 = vld [vmem:[#allocation9 + $0xcf8] sm:$0xff]
          %v2803 = vld [vmem:[#allocation9 + $0xd00] sm:$0xff]
          %v2804 = vld [vmem:[#allocation9 + $0xd08] sm:$0xff]
          %v2805 = vld [vmem:[#allocation9 + $0xd10] sm:$0xff]
          %v2806 = vld [vmem:[#allocation9 + $0xd18] sm:$0xff]
          %v2807 = vld [vmem:[#allocation9 + $0xd20] sm:$0xff]
          %v2808 = vld [vmem:[#allocation9 + $0xd28] sm:$0xff]
          %v2809 = vld [vmem:[#allocation9 + $0xd30] sm:$0xff]
          %v2810 = vld [vmem:[#allocation9 + $0xd38] sm:$0xff]
          %v2811 = vld [vmem:[#allocation9 + $0xd40] sm:$0xff]
          %v2812 = vld [vmem:[#allocation9 + $0xd48] sm:$0xff]
          %v2813 = vld [vmem:[#allocation9 + $0xd50] sm:$0xff]
          %v2814 = vld [vmem:[#allocation9 + $0xd58] sm:$0xff]
          %v2815 = vld [vmem:[#allocation9 + $0xd60] sm:$0xff]
          %v2816 = vld [vmem:[#allocation9 + $0xd68] sm:$0xff]
          %v2817 = vld [vmem:[#allocation9 + $0xd70] sm:$0xff]
          %v2818 = vld [vmem:[#allocation9 + $0xd78] sm:$0xff]
          %v2819 = vld [vmem:[#allocation9 + $0xd80] sm:$0xff]
          %v2820 = vld [vmem:[#allocation9 + $0xd88] sm:$0xff]
          %v2821 = vld [vmem:[#allocation9 + $0xd90] sm:$0xff]
          %v2822 = vld [vmem:[#allocation9 + $0xd98] sm:$0xff]
          %v2823 = vld [vmem:[#allocation9 + $0xda0] sm:$0xff]
          %v2824 = vld [vmem:[#allocation9 + $0xda8] sm:$0xff]
          %v2825 = vld [vmem:[#allocation9 + $0xdb0] sm:$0xff]
          %v2826 = vld [vmem:[#allocation9 + $0xdb8] sm:$0xff]
          %v2827 = vld [vmem:[#allocation9 + $0xdc0] sm:$0xff]
          %v2828 = vld [vmem:[#allocation9 + $0xdc8] sm:$0xff]
          %v2829 = vld [vmem:[#allocation9 + $0xdd0] sm:$0xff]
          %v2830 = vld [vmem:[#allocation9 + $0xdd8] sm:$0xff]
          %v2831 = vld [vmem:[#allocation9 + $0xde0] sm:$0xff]
          %v2832 = vld [vmem:[#allocation9 + $0xde8] sm:$0xff]
          %v2833 = vld [vmem:[#allocation9 + $0xdf0] sm:$0xff]
          %v2834 = vld [vmem:[#allocation9 + $0xdf8] sm:$0xff]
          %v2835 = vld [vmem:[#allocation9 + $0xe00] sm:$0xff]
          %v2836 = vld [vmem:[#allocation9 + $0xe08] sm:$0xff]
          %v2837 = vld [vmem:[#allocation9 + $0xe10] sm:$0xff]
          %v2838 = vld [vmem:[#allocation9 + $0xe18] sm:$0xff]
          %v2839 = vld [vmem:[#allocation9 + $0xe20] sm:$0xff]
          %v2840 = vld [vmem:[#allocation9 + $0xe28] sm:$0xff]
          %v2841 = vld [vmem:[#allocation9 + $0xe30] sm:$0xff]
          %v2842 = vld [vmem:[#allocation9 + $0xe38] sm:$0xff]
          %v2843 = vld [vmem:[#allocation9 + $0xe40] sm:$0xff]
          %v2844 = vld [vmem:[#allocation9 + $0xe48] sm:$0xff]
          %v2845 = vld [vmem:[#allocation9 + $0xe50] sm:$0xff]
          %v2846 = vld [vmem:[#allocation9 + $0xe58] sm:$0xff]
          %v2847 = vld [vmem:[#allocation9 + $0xe60] sm:$0xff]
          %v2848 = vld [vmem:[#allocation9 + $0xe68] sm:$0xff]
          %v2849 = vld [vmem:[#allocation9 + $0xe70] sm:$0xff]
          %v2850 = vld [vmem:[#allocation9 + $0xe78] sm:$0xff]
          %v2851 = vld [vmem:[#allocation9 + $0xe80] sm:$0xff]
          %v2852 = vld [vmem:[#allocation9 + $0xe88] sm:$0xff]
          %v2853 = vld [vmem:[#allocation9 + $0xe90] sm:$0xff]
          %v2854 = vld [vmem:[#allocation9 + $0xe98] sm:$0xff]
          %v2855 = vld [vmem:[#allocation9 + $0xea0] sm:$0xff]
          %v2856 = vld [vmem:[#allocation9 + $0xea8] sm:$0xff]
          %v2857 = vld [vmem:[#allocation9 + $0xeb0] sm:$0xff]
          %v2858 = vld [vmem:[#allocation9 + $0xeb8] sm:$0xff]
          %v2859 = vld [vmem:[#allocation9 + $0xec0] sm:$0xff]
          %v2860 = vld [vmem:[#allocation9 + $0xec8] sm:$0xff]
          %v2861 = vld [vmem:[#allocation9 + $0xed0] sm:$0xff]
          %v2862 = vld [vmem:[#allocation9 + $0xed8] sm:$0xff]
          %v2863 = vld [vmem:[#allocation9 + $0xee0] sm:$0xff]
          %v2864 = vld [vmem:[#allocation9 + $0xee8] sm:$0xff]
          %v2865 = vld [vmem:[#allocation9 + $0xef0] sm:$0xff]
          %v2866 = vld [vmem:[#allocation9 + $0xef8] sm:$0xff]
          %v2867 = vld [vmem:[#allocation9 + $0xf00] sm:$0xff]
          %v2868 = vld [vmem:[#allocation9 + $0xf08] sm:$0xff]
          %v2869 = vld [vmem:[#allocation9 + $0xf10] sm:$0xff]
          %v2870 = vld [vmem:[#allocation9 + $0xf18] sm:$0xff]
          %v2871 = vld [vmem:[#allocation9 + $0xf20] sm:$0xff]
          %v2872 = vld [vmem:[#allocation9 + $0xf28] sm:$0xff]
          %v2873 = vld [vmem:[#allocation9 + $0xf30] sm:$0xff]
          %v2874 = vld [vmem:[#allocation9 + $0xf38] sm:$0xff]
          %v2875 = vld [vmem:[#allocation9 + $0xf40] sm:$0xff]
          %v2876 = vld [vmem:[#allocation9 + $0xf48] sm:$0xff]
          %v2877 = vld [vmem:[#allocation9 + $0xf50] sm:$0xff]
          %v2878 = vld [vmem:[#allocation9 + $0xf58] sm:$0xff]
          %v2879 = vld [vmem:[#allocation9 + $0xf60] sm:$0xff]
          %v2880 = vld [vmem:[#allocation9 + $0xf68] sm:$0xff]
          %v2881 = vld [vmem:[#allocation9 + $0xf70] sm:$0xff]
          %v2882 = vld [vmem:[#allocation9 + $0xf78] sm:$0xff]
          %v2883 = vld [vmem:[#allocation9 + $0xf80] sm:$0xff]
          %v2884 = vld [vmem:[#allocation9 + $0xf88] sm:$0xff]
          %v2885 = vld [vmem:[#allocation9 + $0xf90] sm:$0xff]
          %v2886 = vld [vmem:[#allocation9 + $0xf98] sm:$0xff]
          %v2887 = vld [vmem:[#allocation9 + $0xfa0] sm:$0xff]
          %v2888 = vld [vmem:[#allocation9 + $0xfa8] sm:$0xff]
          %v2889 = vld [vmem:[#allocation9 + $0xfb0] sm:$0xff]
          %v2890 = vld [vmem:[#allocation9 + $0xfb8] sm:$0xff]
          %v2891 = vld [vmem:[#allocation9 + $0xfc0] sm:$0xff]
          %v2892 = vld [vmem:[#allocation9 + $0xfc8] sm:$0xff]
          %v2893 = vld [vmem:[#allocation9 + $0xfd0] sm:$0xff]
          %v2894 = vld [vmem:[#allocation9 + $0xfd8] sm:$0xff]
          %v2895 = vld [vmem:[#allocation9 + $0xfe0] sm:$0xff]
          %v2896 = vld [vmem:[#allocation9 + $0xfe8] sm:$0xff]
          %v2897 = vld [vmem:[#allocation9 + $0xff0] sm:$0xff]
          %v2898 = vld [vmem:[#allocation9 + $0xff8] sm:$0xff]
          %v2899 = vld [vmem:[#allocation11] sm:$0xff]
          %v2901 = vlaneseq
          %v2902 = vshrl.u32 %v2901, 7
          %v2903 = vsub.s32 0, %v2902
          %v2904 = vrot.slane %v2899, %v2903
          %v2905 = vlaneseq
          %v2906 = vshrl.u32 %v2905, 7
          %v2907 = vsub.s32 1, %v2906
          %v2908 = vrot.slane %v2899, %v2907
          %v2909 = vlaneseq
          %v2910 = vshrl.u32 %v2909, 7
          %v2911 = vsub.s32 2, %v2910
          %v2912 = vrot.slane %v2899, %v2911
          %v2913 = vlaneseq
          %v2914 = vshrl.u32 %v2913, 7
          %v2915 = vsub.s32 3, %v2914
          %v2916 = vrot.slane %v2899, %v2915
          %v2917 = vlaneseq
          %v2918 = vshrl.u32 %v2917, 7
          %v2919 = vsub.s32 4, %v2918
          %v2920 = vrot.slane %v2899, %v2919
          %v2921 = vlaneseq
          %v2922 = vshrl.u32 %v2921, 7
          %v2923 = vsub.s32 5, %v2922
          %v2924 = vrot.slane %v2899, %v2923
          %v2925 = vlaneseq
          %v2926 = vshrl.u32 %v2925, 7
          %v2927 = vsub.s32 6, %v2926
          %v2928 = vrot.slane %v2899, %v2927
          %v2929 = vlaneseq
          %v2930 = vshrl.u32 %v2929, 7
          %v2931 = vsub.s32 7, %v2930
          %v2932 = vrot.slane %v2899, %v2931
          %v3453 = vunpack.c.l.b16 %v2387
          %v3454 = vunpack.c.h.b16 %v2387
          %v3455 = vunpack.c.l.b16 %v2388
          %v3456 = vunpack.c.h.b16 %v2388
          %v3457 = vunpack.c.l.b16 %v2389
          %v3458 = vunpack.c.h.b16 %v2389
          %v3459 = vunpack.c.l.b16 %v2390
          %v3460 = vunpack.c.h.b16 %v2390
          %v3461 = vunpack.c.l.b16 %v2391
          %v3462 = vunpack.c.h.b16 %v2391
          %v3463 = vunpack.c.l.b16 %v2392
          %v3464 = vunpack.c.h.b16 %v2392
          %v3465 = vunpack.c.l.b16 %v2393
          %v3466 = vunpack.c.h.b16 %v2393
          %v3467 = vunpack.c.l.b16 %v2394
          %v3468 = vunpack.c.h.b16 %v2394
          %v3469 = vunpack.c.l.b16 %v2395
          %v3470 = vunpack.c.h.b16 %v2395
          %v3471 = vunpack.c.l.b16 %v2396
          %v3472 = vunpack.c.h.b16 %v2396
          %v3473 = vunpack.c.l.b16 %v2397
          %v3474 = vunpack.c.h.b16 %v2397
          %v3475 = vunpack.c.l.b16 %v2398
          %v3476 = vunpack.c.h.b16 %v2398
          %v3477 = vunpack.c.l.b16 %v2399
          %v3478 = vunpack.c.h.b16 %v2399
          %v3479 = vunpack.c.l.b16 %v2400
          %v3480 = vunpack.c.h.b16 %v2400
          %v3481 = vunpack.c.l.b16 %v2401
          %v3482 = vunpack.c.h.b16 %v2401
          %v3483 = vunpack.c.l.b16 %v2402
          %v3484 = vunpack.c.h.b16 %v2402
          %v3485 = vunpack.c.l.b16 %v2403
          %v3486 = vunpack.c.h.b16 %v2403
          %v3487 = vunpack.c.l.b16 %v2404
          %v3488 = vunpack.c.h.b16 %v2404
          %v3489 = vunpack.c.l.b16 %v2405
          %v3490 = vunpack.c.h.b16 %v2405
          %v3491 = vunpack.c.l.b16 %v2406
          %v3492 = vunpack.c.h.b16 %v2406
          %v3493 = vunpack.c.l.b16 %v2407
          %v3494 = vunpack.c.h.b16 %v2407
          %v3495 = vunpack.c.l.b16 %v2408
          %v3496 = vunpack.c.h.b16 %v2408
          %v3497 = vunpack.c.l.b16 %v2409
          %v3498 = vunpack.c.h.b16 %v2409
          %v3499 = vunpack.c.l.b16 %v2410
          %v3500 = vunpack.c.h.b16 %v2410
          %v3501 = vunpack.c.l.b16 %v2411
          %v3502 = vunpack.c.h.b16 %v2411
          %v3503 = vunpack.c.l.b16 %v2412
          %v3504 = vunpack.c.h.b16 %v2412
          %v3505 = vunpack.c.l.b16 %v2413
          %v3506 = vunpack.c.h.b16 %v2413
          %v3507 = vunpack.c.l.b16 %v2414
          %v3508 = vunpack.c.h.b16 %v2414
          %v3509 = vunpack.c.l.b16 %v2415
          %v3510 = vunpack.c.h.b16 %v2415
          %v3511 = vunpack.c.l.b16 %v2416
          %v3512 = vunpack.c.h.b16 %v2416
          %v3513 = vunpack.c.l.b16 %v2417
          %v3514 = vunpack.c.h.b16 %v2417
          %v3515 = vunpack.c.l.b16 %v2418
          %v3516 = vunpack.c.h.b16 %v2418
          %v3517 = vunpack.c.l.b16 %v2419
          %v3518 = vunpack.c.h.b16 %v2419
          %v3519 = vunpack.c.l.b16 %v2420
          %v3520 = vunpack.c.h.b16 %v2420
          %v3521 = vunpack.c.l.b16 %v2421
          %v3522 = vunpack.c.h.b16 %v2421
          %v3523 = vunpack.c.l.b16 %v2422
          %v3524 = vunpack.c.h.b16 %v2422
          %v3525 = vunpack.c.l.b16 %v2423
          %v3526 = vunpack.c.h.b16 %v2423
          %v3527 = vunpack.c.l.b16 %v2424
          %v3528 = vunpack.c.h.b16 %v2424
          %v3529 = vunpack.c.l.b16 %v2425
          %v3530 = vunpack.c.h.b16 %v2425
          %v3531 = vunpack.c.l.b16 %v2426
          %v3532 = vunpack.c.h.b16 %v2426
          %v3533 = vunpack.c.l.b16 %v2427
          %v3534 = vunpack.c.h.b16 %v2427
          %v3535 = vunpack.c.l.b16 %v2428
          %v3536 = vunpack.c.h.b16 %v2428
          %v3537 = vunpack.c.l.b16 %v2429
          %v3538 = vunpack.c.h.b16 %v2429
          %v3539 = vunpack.c.l.b16 %v2430
          %v3540 = vunpack.c.h.b16 %v2430
          %v3541 = vunpack.c.l.b16 %v2431
          %v3542 = vunpack.c.h.b16 %v2431
          %v3543 = vunpack.c.l.b16 %v2432
          %v3544 = vunpack.c.h.b16 %v2432
          %v3545 = vunpack.c.l.b16 %v2433
          %v3546 = vunpack.c.h.b16 %v2433
          %v3547 = vunpack.c.l.b16 %v2434
          %v3548 = vunpack.c.h.b16 %v2434
          %v3549 = vunpack.c.l.b16 %v2435
          %v3550 = vunpack.c.h.b16 %v2435
          %v3551 = vunpack.c.l.b16 %v2436
          %v3552 = vunpack.c.h.b16 %v2436
          %v3553 = vunpack.c.l.b16 %v2437
          %v3554 = vunpack.c.h.b16 %v2437
          %v3555 = vunpack.c.l.b16 %v2438
          %v3556 = vunpack.c.h.b16 %v2438
          %v3557 = vunpack.c.l.b16 %v2439
          %v3558 = vunpack.c.h.b16 %v2439
          %v3559 = vunpack.c.l.b16 %v2440
          %v3560 = vunpack.c.h.b16 %v2440
          %v3561 = vunpack.c.l.b16 %v2441
          %v3562 = vunpack.c.h.b16 %v2441
          %v3563 = vunpack.c.l.b16 %v2442
          %v3564 = vunpack.c.h.b16 %v2442
          %v3565 = vunpack.c.l.b16 %v2443
          %v3566 = vunpack.c.h.b16 %v2443
          %v3567 = vunpack.c.l.b16 %v2444
          %v3568 = vunpack.c.h.b16 %v2444
          %v3569 = vunpack.c.l.b16 %v2445
          %v3570 = vunpack.c.h.b16 %v2445
          %v3571 = vunpack.c.l.b16 %v2446
          %v3572 = vunpack.c.h.b16 %v2446
          %v3573 = vunpack.c.l.b16 %v2447
          %v3574 = vunpack.c.h.b16 %v2447
          %v3575 = vunpack.c.l.b16 %v2448
          %v3576 = vunpack.c.h.b16 %v2448
          %v3577 = vunpack.c.l.b16 %v2449
          %v3578 = vunpack.c.h.b16 %v2449
          %v3579 = vunpack.c.l.b16 %v2450
          %v3580 = vunpack.c.h.b16 %v2450
          %v3581 = vunpack.c.l.b16 %v2451
          %v3582 = vunpack.c.h.b16 %v2451
          %v3583 = vunpack.c.l.b16 %v2452
          %v3584 = vunpack.c.h.b16 %v2452
          %v3585 = vunpack.c.l.b16 %v2453
          %v3586 = vunpack.c.h.b16 %v2453
          %v3587 = vunpack.c.l.b16 %v2454
          %v3588 = vunpack.c.h.b16 %v2454
          %v3589 = vunpack.c.l.b16 %v2455
          %v3590 = vunpack.c.h.b16 %v2455
          %v3591 = vunpack.c.l.b16 %v2456
          %v3592 = vunpack.c.h.b16 %v2456
          %v3593 = vunpack.c.l.b16 %v2457
          %v3594 = vunpack.c.h.b16 %v2457
          %v3595 = vunpack.c.l.b16 %v2458
          %v3596 = vunpack.c.h.b16 %v2458
          %v3597 = vunpack.c.l.b16 %v2459
          %v3598 = vunpack.c.h.b16 %v2459
          %v3599 = vunpack.c.l.b16 %v2460
          %v3600 = vunpack.c.h.b16 %v2460
          %v3601 = vunpack.c.l.b16 %v2461
          %v3602 = vunpack.c.h.b16 %v2461
          %v3603 = vunpack.c.l.b16 %v2462
          %v3604 = vunpack.c.h.b16 %v2462
          %v3605 = vunpack.c.l.b16 %v2463
          %v3606 = vunpack.c.h.b16 %v2463
          %v3607 = vunpack.c.l.b16 %v2464
          %v3608 = vunpack.c.h.b16 %v2464
          %v3609 = vunpack.c.l.b16 %v2465
          %v3610 = vunpack.c.h.b16 %v2465
          %v3611 = vunpack.c.l.b16 %v2466
          %v3612 = vunpack.c.h.b16 %v2466
          %v3613 = vunpack.c.l.b16 %v2467
          %v3614 = vunpack.c.h.b16 %v2467
          %v3615 = vunpack.c.l.b16 %v2468
          %v3616 = vunpack.c.h.b16 %v2468
          %v3617 = vunpack.c.l.b16 %v2469
          %v3618 = vunpack.c.h.b16 %v2469
          %v3619 = vunpack.c.l.b16 %v2470
          %v3620 = vunpack.c.h.b16 %v2470
          %v3621 = vunpack.c.l.b16 %v2471
          %v3622 = vunpack.c.h.b16 %v2471
          %v3623 = vunpack.c.l.b16 %v2472
          %v3624 = vunpack.c.h.b16 %v2472
          %v3625 = vunpack.c.l.b16 %v2473
          %v3626 = vunpack.c.h.b16 %v2473
          %v3627 = vunpack.c.l.b16 %v2474
          %v3628 = vunpack.c.h.b16 %v2474
          %v3629 = vunpack.c.l.b16 %v2475
          %v3630 = vunpack.c.h.b16 %v2475
          %v3631 = vunpack.c.l.b16 %v2476
          %v3632 = vunpack.c.h.b16 %v2476
          %v3633 = vunpack.c.l.b16 %v2477
          %v3634 = vunpack.c.h.b16 %v2477
          %v3635 = vunpack.c.l.b16 %v2478
          %v3636 = vunpack.c.h.b16 %v2478
          %v3637 = vunpack.c.l.b16 %v2479
          %v3638 = vunpack.c.h.b16 %v2479
          %v3639 = vunpack.c.l.b16 %v2480
          %v3640 = vunpack.c.h.b16 %v2480
          %v3641 = vunpack.c.l.b16 %v2481
          %v3642 = vunpack.c.h.b16 %v2481
          %v3643 = vunpack.c.l.b16 %v2482
          %v3644 = vunpack.c.h.b16 %v2482
          %v3645 = vunpack.c.l.b16 %v2483
          %v3646 = vunpack.c.h.b16 %v2483
          %v3647 = vunpack.c.l.b16 %v2484
          %v3648 = vunpack.c.h.b16 %v2484
          %v3649 = vunpack.c.l.b16 %v2485
          %v3650 = vunpack.c.h.b16 %v2485
          %v3651 = vunpack.c.l.b16 %v2486
          %v3652 = vunpack.c.h.b16 %v2486
          %v3653 = vunpack.c.l.b16 %v2487
          %v3654 = vunpack.c.h.b16 %v2487
          %v3655 = vunpack.c.l.b16 %v2488
          %v3656 = vunpack.c.h.b16 %v2488
          %v3657 = vunpack.c.l.b16 %v2489
          %v3658 = vunpack.c.h.b16 %v2489
          %v3659 = vunpack.c.l.b16 %v2490
          %v3660 = vunpack.c.h.b16 %v2490
          %v3661 = vunpack.c.l.b16 %v2491
          %v3662 = vunpack.c.h.b16 %v2491
          %v3663 = vunpack.c.l.b16 %v2492
          %v3664 = vunpack.c.h.b16 %v2492
          %v3665 = vunpack.c.l.b16 %v2493
          %v3666 = vunpack.c.h.b16 %v2493
          %v3667 = vunpack.c.l.b16 %v2494
          %v3668 = vunpack.c.h.b16 %v2494
          %v3669 = vunpack.c.l.b16 %v2495
          %v3670 = vunpack.c.h.b16 %v2495
          %v3671 = vunpack.c.l.b16 %v2496
          %v3672 = vunpack.c.h.b16 %v2496
          %v3673 = vunpack.c.l.b16 %v2497
          %v3674 = vunpack.c.h.b16 %v2497
          %v3675 = vunpack.c.l.b16 %v2498
          %v3676 = vunpack.c.h.b16 %v2498
          %v3677 = vunpack.c.l.b16 %v2499
          %v3678 = vunpack.c.h.b16 %v2499
          %v3679 = vunpack.c.l.b16 %v2500
          %v3680 = vunpack.c.h.b16 %v2500
          %v3681 = vunpack.c.l.b16 %v2501
          %v3682 = vunpack.c.h.b16 %v2501
          %v3683 = vunpack.c.l.b16 %v2502
          %v3684 = vunpack.c.h.b16 %v2502
          %v3685 = vunpack.c.l.b16 %v2503
          %v3686 = vunpack.c.h.b16 %v2503
          %v3687 = vunpack.c.l.b16 %v2504
          %v3688 = vunpack.c.h.b16 %v2504
          %v3689 = vunpack.c.l.b16 %v2505
          %v3690 = vunpack.c.h.b16 %v2505
          %v3691 = vunpack.c.l.b16 %v2506
          %v3692 = vunpack.c.h.b16 %v2506
          %v3693 = vunpack.c.l.b16 %v2507
          %v3694 = vunpack.c.h.b16 %v2507
          %v3695 = vunpack.c.l.b16 %v2508
          %v3696 = vunpack.c.h.b16 %v2508
          %v3697 = vunpack.c.l.b16 %v2509
          %v3698 = vunpack.c.h.b16 %v2509
          %v3699 = vunpack.c.l.b16 %v2510
          %v3700 = vunpack.c.h.b16 %v2510
          %v3701 = vunpack.c.l.b16 %v2511
          %v3702 = vunpack.c.h.b16 %v2511
          %v3703 = vunpack.c.l.b16 %v2512
          %v3704 = vunpack.c.h.b16 %v2512
          %v3705 = vunpack.c.l.b16 %v2513
          %v3706 = vunpack.c.h.b16 %v2513
          %v3707 = vunpack.c.l.b16 %v2514
          %v3708 = vunpack.c.h.b16 %v2514
          %v3709 = vunpack.c.l.b16 %v2515
          %v3710 = vunpack.c.h.b16 %v2515
          %v3711 = vunpack.c.l.b16 %v2516
          %v3712 = vunpack.c.h.b16 %v2516
          %v3713 = vunpack.c.l.b16 %v2517
          %v3714 = vunpack.c.h.b16 %v2517
          %v3715 = vunpack.c.l.b16 %v2518
          %v3716 = vunpack.c.h.b16 %v2518
          %v3717 = vunpack.c.l.b16 %v2519
          %v3718 = vunpack.c.h.b16 %v2519
          %v3719 = vunpack.c.l.b16 %v2520
          %v3720 = vunpack.c.h.b16 %v2520
          %v3721 = vunpack.c.l.b16 %v2521
          %v3722 = vunpack.c.h.b16 %v2521
          %v3723 = vunpack.c.l.b16 %v2522
          %v3724 = vunpack.c.h.b16 %v2522
          %v3725 = vunpack.c.l.b16 %v2523
          %v3726 = vunpack.c.h.b16 %v2523
          %v3727 = vunpack.c.l.b16 %v2524
          %v3728 = vunpack.c.h.b16 %v2524
          %v3729 = vunpack.c.l.b16 %v2525
          %v3730 = vunpack.c.h.b16 %v2525
          %v3731 = vunpack.c.l.b16 %v2526
          %v3732 = vunpack.c.h.b16 %v2526
          %v3733 = vunpack.c.l.b16 %v2527
          %v3734 = vunpack.c.h.b16 %v2527
          %v3735 = vunpack.c.l.b16 %v2528
          %v3736 = vunpack.c.h.b16 %v2528
          %v3737 = vunpack.c.l.b16 %v2529
          %v3738 = vunpack.c.h.b16 %v2529
          %v3739 = vunpack.c.l.b16 %v2530
          %v3740 = vunpack.c.h.b16 %v2530
          %v3741 = vunpack.c.l.b16 %v2531
          %v3742 = vunpack.c.h.b16 %v2531
          %v3743 = vunpack.c.l.b16 %v2532
          %v3744 = vunpack.c.h.b16 %v2532
          %v3745 = vunpack.c.l.b16 %v2533
          %v3746 = vunpack.c.h.b16 %v2533
          %v3747 = vunpack.c.l.b16 %v2534
          %v3748 = vunpack.c.h.b16 %v2534
          %v3749 = vunpack.c.l.b16 %v2535
          %v3750 = vunpack.c.h.b16 %v2535
          %v3751 = vunpack.c.l.b16 %v2536
          %v3752 = vunpack.c.h.b16 %v2536
          %v3753 = vunpack.c.l.b16 %v2537
          %v3754 = vunpack.c.h.b16 %v2537
          %v3755 = vunpack.c.l.b16 %v2538
          %v3756 = vunpack.c.h.b16 %v2538
          %v3757 = vunpack.c.l.b16 %v2539
          %v3758 = vunpack.c.h.b16 %v2539
          %v3759 = vunpack.c.l.b16 %v2540
          %v3760 = vunpack.c.h.b16 %v2540
          %v3761 = vunpack.c.l.b16 %v2541
          %v3762 = vunpack.c.h.b16 %v2541
          %v3763 = vunpack.c.l.b16 %v2542
          %v3764 = vunpack.c.h.b16 %v2542
          %v3765 = vunpack.c.l.b16 %v2543
          %v3766 = vunpack.c.h.b16 %v2543
          %v3767 = vunpack.c.l.b16 %v2544
          %v3768 = vunpack.c.h.b16 %v2544
          %v3769 = vunpack.c.l.b16 %v2545
          %v3770 = vunpack.c.h.b16 %v2545
          %v3771 = vunpack.c.l.b16 %v2546
          %v3772 = vunpack.c.h.b16 %v2546
          %v3773 = vunpack.c.l.b16 %v2547
          %v3774 = vunpack.c.h.b16 %v2547
          %v3775 = vunpack.c.l.b16 %v2548
          %v3776 = vunpack.c.h.b16 %v2548
          %v3777 = vunpack.c.l.b16 %v2549
          %v3778 = vunpack.c.h.b16 %v2549
          %v3779 = vunpack.c.l.b16 %v2550
          %v3780 = vunpack.c.h.b16 %v2550
          %v3781 = vunpack.c.l.b16 %v2551
          %v3782 = vunpack.c.h.b16 %v2551
          %v3783 = vunpack.c.l.b16 %v2552
          %v3784 = vunpack.c.h.b16 %v2552
          %v3785 = vunpack.c.l.b16 %v2553
          %v3786 = vunpack.c.h.b16 %v2553
          %v3787 = vunpack.c.l.b16 %v2554
          %v3788 = vunpack.c.h.b16 %v2554
          %v3789 = vunpack.c.l.b16 %v2555
          %v3790 = vunpack.c.h.b16 %v2555
          %v3791 = vunpack.c.l.b16 %v2556
          %v3792 = vunpack.c.h.b16 %v2556
          %v3793 = vunpack.c.l.b16 %v2557
          %v3794 = vunpack.c.h.b16 %v2557
          %v3795 = vunpack.c.l.b16 %v2558
          %v3796 = vunpack.c.h.b16 %v2558
          %v3797 = vunpack.c.l.b16 %v2559
          %v3798 = vunpack.c.h.b16 %v2559
          %v3799 = vunpack.c.l.b16 %v2560
          %v3800 = vunpack.c.h.b16 %v2560
          %v3801 = vunpack.c.l.b16 %v2561
          %v3802 = vunpack.c.h.b16 %v2561
          %v3803 = vunpack.c.l.b16 %v2562
          %v3804 = vunpack.c.h.b16 %v2562
          %v3805 = vunpack.c.l.b16 %v2563
          %v3806 = vunpack.c.h.b16 %v2563
          %v3807 = vunpack.c.l.b16 %v2564
          %v3808 = vunpack.c.h.b16 %v2564
          %v3809 = vunpack.c.l.b16 %v2565
          %v3810 = vunpack.c.h.b16 %v2565
          %v3811 = vunpack.c.l.b16 %v2566
          %v3812 = vunpack.c.h.b16 %v2566
          %v3813 = vunpack.c.l.b16 %v2567
          %v3814 = vunpack.c.h.b16 %v2567
          %v3815 = vunpack.c.l.b16 %v2568
          %v3816 = vunpack.c.h.b16 %v2568
          %v3817 = vunpack.c.l.b16 %v2569
          %v3818 = vunpack.c.h.b16 %v2569
          %v3819 = vunpack.c.l.b16 %v2570
          %v3820 = vunpack.c.h.b16 %v2570
          %v3821 = vunpack.c.l.b16 %v2571
          %v3822 = vunpack.c.h.b16 %v2571
          %v3823 = vunpack.c.l.b16 %v2572
          %v3824 = vunpack.c.h.b16 %v2572
          %v3825 = vunpack.c.l.b16 %v2573
          %v3826 = vunpack.c.h.b16 %v2573
          %v3827 = vunpack.c.l.b16 %v2574
          %v3828 = vunpack.c.h.b16 %v2574
          %v3829 = vunpack.c.l.b16 %v2575
          %v3830 = vunpack.c.h.b16 %v2575
          %v3831 = vunpack.c.l.b16 %v2576
          %v3832 = vunpack.c.h.b16 %v2576
          %v3833 = vunpack.c.l.b16 %v2577
          %v3834 = vunpack.c.h.b16 %v2577
          %v3835 = vunpack.c.l.b16 %v2578
          %v3836 = vunpack.c.h.b16 %v2578
          %v3837 = vunpack.c.l.b16 %v2579
          %v3838 = vunpack.c.h.b16 %v2579
          %v3839 = vunpack.c.l.b16 %v2580
          %v3840 = vunpack.c.h.b16 %v2580
          %v3841 = vunpack.c.l.b16 %v2581
          %v3842 = vunpack.c.h.b16 %v2581
          %v3843 = vunpack.c.l.b16 %v2582
          %v3844 = vunpack.c.h.b16 %v2582
          %v3845 = vunpack.c.l.b16 %v2583
          %v3846 = vunpack.c.h.b16 %v2583
          %v3847 = vunpack.c.l.b16 %v2584
          %v3848 = vunpack.c.h.b16 %v2584
          %v3849 = vunpack.c.l.b16 %v2585
          %v3850 = vunpack.c.h.b16 %v2585
          %v3851 = vunpack.c.l.b16 %v2586
          %v3852 = vunpack.c.h.b16 %v2586
          %v3853 = vunpack.c.l.b16 %v2587
          %v3854 = vunpack.c.h.b16 %v2587
          %v3855 = vunpack.c.l.b16 %v2588
          %v3856 = vunpack.c.h.b16 %v2588
          %v3857 = vunpack.c.l.b16 %v2589
          %v3858 = vunpack.c.h.b16 %v2589
          %v3859 = vunpack.c.l.b16 %v2590
          %v3860 = vunpack.c.h.b16 %v2590
          %v3861 = vunpack.c.l.b16 %v2591
          %v3862 = vunpack.c.h.b16 %v2591
          %v3863 = vunpack.c.l.b16 %v2592
          %v3864 = vunpack.c.h.b16 %v2592
          %v3865 = vunpack.c.l.b16 %v2593
          %v3866 = vunpack.c.h.b16 %v2593
          %v3867 = vunpack.c.l.b16 %v2594
          %v3868 = vunpack.c.h.b16 %v2594
          %v3869 = vunpack.c.l.b16 %v2595
          %v3870 = vunpack.c.h.b16 %v2595
          %v3871 = vunpack.c.l.b16 %v2596
          %v3872 = vunpack.c.h.b16 %v2596
          %v3873 = vunpack.c.l.b16 %v2597
          %v3874 = vunpack.c.h.b16 %v2597
          %v3875 = vunpack.c.l.b16 %v2598
          %v3876 = vunpack.c.h.b16 %v2598
          %v3877 = vunpack.c.l.b16 %v2599
          %v3878 = vunpack.c.h.b16 %v2599
          %v3879 = vunpack.c.l.b16 %v2600
          %v3880 = vunpack.c.h.b16 %v2600
          %v3881 = vunpack.c.l.b16 %v2601
          %v3882 = vunpack.c.h.b16 %v2601
          %v3883 = vunpack.c.l.b16 %v2602
          %v3884 = vunpack.c.h.b16 %v2602
          %v3885 = vunpack.c.l.b16 %v2603
          %v3886 = vunpack.c.h.b16 %v2603
          %v3887 = vunpack.c.l.b16 %v2604
          %v3888 = vunpack.c.h.b16 %v2604
          %v3889 = vunpack.c.l.b16 %v2605
          %v3890 = vunpack.c.h.b16 %v2605
          %v3891 = vunpack.c.l.b16 %v2606
          %v3892 = vunpack.c.h.b16 %v2606
          %v3893 = vunpack.c.l.b16 %v2607
          %v3894 = vunpack.c.h.b16 %v2607
          %v3895 = vunpack.c.l.b16 %v2608
          %v3896 = vunpack.c.h.b16 %v2608
          %v3897 = vunpack.c.l.b16 %v2609
          %v3898 = vunpack.c.h.b16 %v2609
          %v3899 = vunpack.c.l.b16 %v2610
          %v3900 = vunpack.c.h.b16 %v2610
          %v3901 = vunpack.c.l.b16 %v2611
          %v3902 = vunpack.c.h.b16 %v2611
          %v3903 = vunpack.c.l.b16 %v2612
          %v3904 = vunpack.c.h.b16 %v2612
          %v3905 = vunpack.c.l.b16 %v2613
          %v3906 = vunpack.c.h.b16 %v2613
          %v3907 = vunpack.c.l.b16 %v2614
          %v3908 = vunpack.c.h.b16 %v2614
          %v3909 = vunpack.c.l.b16 %v2615
          %v3910 = vunpack.c.h.b16 %v2615
          %v3911 = vunpack.c.l.b16 %v2616
          %v3912 = vunpack.c.h.b16 %v2616
          %v3913 = vunpack.c.l.b16 %v2617
          %v3914 = vunpack.c.h.b16 %v2617
          %v3915 = vunpack.c.l.b16 %v2618
          %v3916 = vunpack.c.h.b16 %v2618
          %v3917 = vunpack.c.l.b16 %v2619
          %v3918 = vunpack.c.h.b16 %v2619
          %v3919 = vunpack.c.l.b16 %v2620
          %v3920 = vunpack.c.h.b16 %v2620
          %v3921 = vunpack.c.l.b16 %v2621
          %v3922 = vunpack.c.h.b16 %v2621
          %v3923 = vunpack.c.l.b16 %v2622
          %v3924 = vunpack.c.h.b16 %v2622
          %v3925 = vunpack.c.l.b16 %v2623
          %v3926 = vunpack.c.h.b16 %v2623
          %v3927 = vunpack.c.l.b16 %v2624
          %v3928 = vunpack.c.h.b16 %v2624
          %v3929 = vunpack.c.l.b16 %v2625
          %v3930 = vunpack.c.h.b16 %v2625
          %v3931 = vunpack.c.l.b16 %v2626
          %v3932 = vunpack.c.h.b16 %v2626
          %v3933 = vunpack.c.l.b16 %v2627
          %v3934 = vunpack.c.h.b16 %v2627
          %v3935 = vunpack.c.l.b16 %v2628
          %v3936 = vunpack.c.h.b16 %v2628
          %v3937 = vunpack.c.l.b16 %v2629
          %v3938 = vunpack.c.h.b16 %v2629
          %v3939 = vunpack.c.l.b16 %v2630
          %v3940 = vunpack.c.h.b16 %v2630
          %v3941 = vunpack.c.l.b16 %v2631
          %v3942 = vunpack.c.h.b16 %v2631
          %v3943 = vunpack.c.l.b16 %v2632
          %v3944 = vunpack.c.h.b16 %v2632
          %v3945 = vunpack.c.l.b16 %v2633
          %v3946 = vunpack.c.h.b16 %v2633
          %v3947 = vunpack.c.l.b16 %v2634
          %v3948 = vunpack.c.h.b16 %v2634
          %v3949 = vunpack.c.l.b16 %v2635
          %v3950 = vunpack.c.h.b16 %v2635
          %v3951 = vunpack.c.l.b16 %v2636
          %v3952 = vunpack.c.h.b16 %v2636
          %v3953 = vunpack.c.l.b16 %v2637
          %v3954 = vunpack.c.h.b16 %v2637
          %v3955 = vunpack.c.l.b16 %v2638
          %v3956 = vunpack.c.h.b16 %v2638
          %v3957 = vunpack.c.l.b16 %v2639
          %v3958 = vunpack.c.h.b16 %v2639
          %v3959 = vunpack.c.l.b16 %v2640
          %v3960 = vunpack.c.h.b16 %v2640
          %v3961 = vunpack.c.l.b16 %v2641
          %v3962 = vunpack.c.h.b16 %v2641
          %v3963 = vunpack.c.l.b16 %v2642
          %v3964 = vunpack.c.h.b16 %v2642
          %v3965 = vunpack.c.l.b16 %v2643
          %v3966 = vunpack.c.h.b16 %v2643
          %v3967 = vunpack.c.l.b16 %v2644
          %v3968 = vunpack.c.h.b16 %v2644
          %v3969 = vunpack.c.l.b16 %v2645
          %v3970 = vunpack.c.h.b16 %v2645
          %v3971 = vunpack.c.l.b16 %v2646
          %v3972 = vunpack.c.h.b16 %v2646
          %v3973 = vunpack.c.l.b16 %v2647
          %v3974 = vunpack.c.h.b16 %v2647
          %v3975 = vunpack.c.l.b16 %v2648
          %v3976 = vunpack.c.h.b16 %v2648
          %v3977 = vunpack.c.l.b16 %v2649
          %v3978 = vunpack.c.h.b16 %v2649
          %v3979 = vunpack.c.l.b16 %v2650
          %v3980 = vunpack.c.h.b16 %v2650
          %v3981 = vunpack.c.l.b16 %v2651
          %v3982 = vunpack.c.h.b16 %v2651
          %v3983 = vunpack.c.l.b16 %v2652
          %v3984 = vunpack.c.h.b16 %v2652
          %v3985 = vunpack.c.l.b16 %v2653
          %v3986 = vunpack.c.h.b16 %v2653
          %v3987 = vunpack.c.l.b16 %v2654
          %v3988 = vunpack.c.h.b16 %v2654
          %v3989 = vunpack.c.l.b16 %v2655
          %v3990 = vunpack.c.h.b16 %v2655
          %v3991 = vunpack.c.l.b16 %v2656
          %v3992 = vunpack.c.h.b16 %v2656
          %v3993 = vunpack.c.l.b16 %v2657
          %v3994 = vunpack.c.h.b16 %v2657
          %v3995 = vunpack.c.l.b16 %v2658
          %v3996 = vunpack.c.h.b16 %v2658
          %v3997 = vunpack.c.l.b16 %v2659
          %v3998 = vunpack.c.h.b16 %v2659
          %v3999 = vunpack.c.l.b16 %v2660
          %v4000 = vunpack.c.h.b16 %v2660
          %v4001 = vunpack.c.l.b16 %v2661
          %v4002 = vunpack.c.h.b16 %v2661
          %v4003 = vunpack.c.l.b16 %v2662
          %v4004 = vunpack.c.h.b16 %v2662
          %v4005 = vunpack.c.l.b16 %v2663
          %v4006 = vunpack.c.h.b16 %v2663
          %v4007 = vunpack.c.l.b16 %v2664
          %v4008 = vunpack.c.h.b16 %v2664
          %v4009 = vunpack.c.l.b16 %v2665
          %v4010 = vunpack.c.h.b16 %v2665
          %v4011 = vunpack.c.l.b16 %v2666
          %v4012 = vunpack.c.h.b16 %v2666
          %v4013 = vunpack.c.l.b16 %v2667
          %v4014 = vunpack.c.h.b16 %v2667
          %v4015 = vunpack.c.l.b16 %v2668
          %v4016 = vunpack.c.h.b16 %v2668
          %v4017 = vunpack.c.l.b16 %v2669
          %v4018 = vunpack.c.h.b16 %v2669
          %v4019 = vunpack.c.l.b16 %v2670
          %v4020 = vunpack.c.h.b16 %v2670
          %v4021 = vunpack.c.l.b16 %v2671
          %v4022 = vunpack.c.h.b16 %v2671
          %v4023 = vunpack.c.l.b16 %v2672
          %v4024 = vunpack.c.h.b16 %v2672
          %v4025 = vunpack.c.l.b16 %v2673
          %v4026 = vunpack.c.h.b16 %v2673
          %v4027 = vunpack.c.l.b16 %v2674
          %v4028 = vunpack.c.h.b16 %v2674
          %v4029 = vunpack.c.l.b16 %v2675
          %v4030 = vunpack.c.h.b16 %v2675
          %v4031 = vunpack.c.l.b16 %v2676
          %v4032 = vunpack.c.h.b16 %v2676
          %v4033 = vunpack.c.l.b16 %v2677
          %v4034 = vunpack.c.h.b16 %v2677
          %v4035 = vunpack.c.l.b16 %v2678
          %v4036 = vunpack.c.h.b16 %v2678
          %v4037 = vunpack.c.l.b16 %v2679
          %v4038 = vunpack.c.h.b16 %v2679
          %v4039 = vunpack.c.l.b16 %v2680
          %v4040 = vunpack.c.h.b16 %v2680
          %v4041 = vunpack.c.l.b16 %v2681
          %v4042 = vunpack.c.h.b16 %v2681
          %v4043 = vunpack.c.l.b16 %v2682
          %v4044 = vunpack.c.h.b16 %v2682
          %v4045 = vunpack.c.l.b16 %v2683
          %v4046 = vunpack.c.h.b16 %v2683
          %v4047 = vunpack.c.l.b16 %v2684
          %v4048 = vunpack.c.h.b16 %v2684
          %v4049 = vunpack.c.l.b16 %v2685
          %v4050 = vunpack.c.h.b16 %v2685
          %v4051 = vunpack.c.l.b16 %v2686
          %v4052 = vunpack.c.h.b16 %v2686
          %v4053 = vunpack.c.l.b16 %v2687
          %v4054 = vunpack.c.h.b16 %v2687
          %v4055 = vunpack.c.l.b16 %v2688
          %v4056 = vunpack.c.h.b16 %v2688
          %v4057 = vunpack.c.l.b16 %v2689
          %v4058 = vunpack.c.h.b16 %v2689
          %v4059 = vunpack.c.l.b16 %v2690
          %v4060 = vunpack.c.h.b16 %v2690
          %v4061 = vunpack.c.l.b16 %v2691
          %v4062 = vunpack.c.h.b16 %v2691
          %v4063 = vunpack.c.l.b16 %v2692
          %v4064 = vunpack.c.h.b16 %v2692
          %v4065 = vunpack.c.l.b16 %v2693
          %v4066 = vunpack.c.h.b16 %v2693
          %v4067 = vunpack.c.l.b16 %v2694
          %v4068 = vunpack.c.h.b16 %v2694
          %v4069 = vunpack.c.l.b16 %v2695
          %v4070 = vunpack.c.h.b16 %v2695
          %v4071 = vunpack.c.l.b16 %v2696
          %v4072 = vunpack.c.h.b16 %v2696
          %v4073 = vunpack.c.l.b16 %v2697
          %v4074 = vunpack.c.h.b16 %v2697
          %v4075 = vunpack.c.l.b16 %v2698
          %v4076 = vunpack.c.h.b16 %v2698
          %v4077 = vunpack.c.l.b16 %v2699
          %v4078 = vunpack.c.h.b16 %v2699
          %v4079 = vunpack.c.l.b16 %v2700
          %v4080 = vunpack.c.h.b16 %v2700
          %v4081 = vunpack.c.l.b16 %v2701
          %v4082 = vunpack.c.h.b16 %v2701
          %v4083 = vunpack.c.l.b16 %v2702
          %v4084 = vunpack.c.h.b16 %v2702
          %v4085 = vunpack.c.l.b16 %v2703
          %v4086 = vunpack.c.h.b16 %v2703
          %v4087 = vunpack.c.l.b16 %v2704
          %v4088 = vunpack.c.h.b16 %v2704
          %v4089 = vunpack.c.l.b16 %v2705
          %v4090 = vunpack.c.h.b16 %v2705
          %v4091 = vunpack.c.l.b16 %v2706
          %v4092 = vunpack.c.h.b16 %v2706
          %v4093 = vunpack.c.l.b16 %v2707
          %v4094 = vunpack.c.h.b16 %v2707
          %v4095 = vunpack.c.l.b16 %v2708
          %v4096 = vunpack.c.h.b16 %v2708
          %v4097 = vunpack.c.l.b16 %v2709
          %v4098 = vunpack.c.h.b16 %v2709
          %v4099 = vunpack.c.l.b16 %v2710
          %v4100 = vunpack.c.h.b16 %v2710
          %v4101 = vunpack.c.l.b16 %v2711
          %v4102 = vunpack.c.h.b16 %v2711
          %v4103 = vunpack.c.l.b16 %v2712
          %v4104 = vunpack.c.h.b16 %v2712
          %v4105 = vunpack.c.l.b16 %v2713
          %v4106 = vunpack.c.h.b16 %v2713
          %v4107 = vunpack.c.l.b16 %v2714
          %v4108 = vunpack.c.h.b16 %v2714
          %v4109 = vunpack.c.l.b16 %v2715
          %v4110 = vunpack.c.h.b16 %v2715
          %v4111 = vunpack.c.l.b16 %v2716
          %v4112 = vunpack.c.h.b16 %v2716
          %v4113 = vunpack.c.l.b16 %v2717
          %v4114 = vunpack.c.h.b16 %v2717
          %v4115 = vunpack.c.l.b16 %v2718
          %v4116 = vunpack.c.h.b16 %v2718
          %v4117 = vunpack.c.l.b16 %v2719
          %v4118 = vunpack.c.h.b16 %v2719
          %v4119 = vunpack.c.l.b16 %v2720
          %v4120 = vunpack.c.h.b16 %v2720
          %v4121 = vunpack.c.l.b16 %v2721
          %v4122 = vunpack.c.h.b16 %v2721
          %v4123 = vunpack.c.l.b16 %v2722
          %v4124 = vunpack.c.h.b16 %v2722
          %v4125 = vunpack.c.l.b16 %v2723
          %v4126 = vunpack.c.h.b16 %v2723
          %v4127 = vunpack.c.l.b16 %v2724
          %v4128 = vunpack.c.h.b16 %v2724
          %v4129 = vunpack.c.l.b16 %v2725
          %v4130 = vunpack.c.h.b16 %v2725
          %v4131 = vunpack.c.l.b16 %v2726
          %v4132 = vunpack.c.h.b16 %v2726
          %v4133 = vunpack.c.l.b16 %v2727
          %v4134 = vunpack.c.h.b16 %v2727
          %v4135 = vunpack.c.l.b16 %v2728
          %v4136 = vunpack.c.h.b16 %v2728
          %v4137 = vunpack.c.l.b16 %v2729
          %v4138 = vunpack.c.h.b16 %v2729
          %v4139 = vunpack.c.l.b16 %v2730
          %v4140 = vunpack.c.h.b16 %v2730
          %v4141 = vunpack.c.l.b16 %v2731
          %v4142 = vunpack.c.h.b16 %v2731
          %v4143 = vunpack.c.l.b16 %v2732
          %v4144 = vunpack.c.h.b16 %v2732
          %v4145 = vunpack.c.l.b16 %v2733
          %v4146 = vunpack.c.h.b16 %v2733
          %v4147 = vunpack.c.l.b16 %v2734
          %v4148 = vunpack.c.h.b16 %v2734
          %v4149 = vunpack.c.l.b16 %v2735
          %v4150 = vunpack.c.h.b16 %v2735
          %v4151 = vunpack.c.l.b16 %v2736
          %v4152 = vunpack.c.h.b16 %v2736
          %v4153 = vunpack.c.l.b16 %v2737
          %v4154 = vunpack.c.h.b16 %v2737
          %v4155 = vunpack.c.l.b16 %v2738
          %v4156 = vunpack.c.h.b16 %v2738
          %v4157 = vunpack.c.l.b16 %v2739
          %v4158 = vunpack.c.h.b16 %v2739
          %v4159 = vunpack.c.l.b16 %v2740
          %v4160 = vunpack.c.h.b16 %v2740
          %v4161 = vunpack.c.l.b16 %v2741
          %v4162 = vunpack.c.h.b16 %v2741
          %v4163 = vunpack.c.l.b16 %v2742
          %v4164 = vunpack.c.h.b16 %v2742
          %v4165 = vunpack.c.l.b16 %v2743
          %v4166 = vunpack.c.h.b16 %v2743
          %v4167 = vunpack.c.l.b16 %v2744
          %v4168 = vunpack.c.h.b16 %v2744
          %v4169 = vunpack.c.l.b16 %v2745
          %v4170 = vunpack.c.h.b16 %v2745
          %v4171 = vunpack.c.l.b16 %v2746
          %v4172 = vunpack.c.h.b16 %v2746
          %v4173 = vunpack.c.l.b16 %v2747
          %v4174 = vunpack.c.h.b16 %v2747
          %v4175 = vunpack.c.l.b16 %v2748
          %v4176 = vunpack.c.h.b16 %v2748
          %v4177 = vunpack.c.l.b16 %v2749
          %v4178 = vunpack.c.h.b16 %v2749
          %v4179 = vunpack.c.l.b16 %v2750
          %v4180 = vunpack.c.h.b16 %v2750
          %v4181 = vunpack.c.l.b16 %v2751
          %v4182 = vunpack.c.h.b16 %v2751
          %v4183 = vunpack.c.l.b16 %v2752
          %v4184 = vunpack.c.h.b16 %v2752
          %v4185 = vunpack.c.l.b16 %v2753
          %v4186 = vunpack.c.h.b16 %v2753
          %v4187 = vunpack.c.l.b16 %v2754
          %v4188 = vunpack.c.h.b16 %v2754
          %v4189 = vunpack.c.l.b16 %v2755
          %v4190 = vunpack.c.h.b16 %v2755
          %v4191 = vunpack.c.l.b16 %v2756
          %v4192 = vunpack.c.h.b16 %v2756
          %v4193 = vunpack.c.l.b16 %v2757
          %v4194 = vunpack.c.h.b16 %v2757
          %v4195 = vunpack.c.l.b16 %v2758
          %v4196 = vunpack.c.h.b16 %v2758
          %v4197 = vunpack.c.l.b16 %v2759
          %v4198 = vunpack.c.h.b16 %v2759
          %v4199 = vunpack.c.l.b16 %v2760
          %v4200 = vunpack.c.h.b16 %v2760
          %v4201 = vunpack.c.l.b16 %v2761
          %v4202 = vunpack.c.h.b16 %v2761
          %v4203 = vunpack.c.l.b16 %v2762
          %v4204 = vunpack.c.h.b16 %v2762
          %v4205 = vunpack.c.l.b16 %v2763
          %v4206 = vunpack.c.h.b16 %v2763
          %v4207 = vunpack.c.l.b16 %v2764
          %v4208 = vunpack.c.h.b16 %v2764
          %v4209 = vunpack.c.l.b16 %v2765
          %v4210 = vunpack.c.h.b16 %v2765
          %v4211 = vunpack.c.l.b16 %v2766
          %v4212 = vunpack.c.h.b16 %v2766
          %v4213 = vunpack.c.l.b16 %v2767
          %v4214 = vunpack.c.h.b16 %v2767
          %v4215 = vunpack.c.l.b16 %v2768
          %v4216 = vunpack.c.h.b16 %v2768
          %v4217 = vunpack.c.l.b16 %v2769
          %v4218 = vunpack.c.h.b16 %v2769
          %v4219 = vunpack.c.l.b16 %v2770
          %v4220 = vunpack.c.h.b16 %v2770
          %v4221 = vunpack.c.l.b16 %v2771
          %v4222 = vunpack.c.h.b16 %v2771
          %v4223 = vunpack.c.l.b16 %v2772
          %v4224 = vunpack.c.h.b16 %v2772
          %v4225 = vunpack.c.l.b16 %v2773
          %v4226 = vunpack.c.h.b16 %v2773
          %v4227 = vunpack.c.l.b16 %v2774
          %v4228 = vunpack.c.h.b16 %v2774
          %v4229 = vunpack.c.l.b16 %v2775
          %v4230 = vunpack.c.h.b16 %v2775
          %v4231 = vunpack.c.l.b16 %v2776
          %v4232 = vunpack.c.h.b16 %v2776
          %v4233 = vunpack.c.l.b16 %v2777
          %v4234 = vunpack.c.h.b16 %v2777
          %v4235 = vunpack.c.l.b16 %v2778
          %v4236 = vunpack.c.h.b16 %v2778
          %v4237 = vunpack.c.l.b16 %v2779
          %v4238 = vunpack.c.h.b16 %v2779
          %v4239 = vunpack.c.l.b16 %v2780
          %v4240 = vunpack.c.h.b16 %v2780
          %v4241 = vunpack.c.l.b16 %v2781
          %v4242 = vunpack.c.h.b16 %v2781
          %v4243 = vunpack.c.l.b16 %v2782
          %v4244 = vunpack.c.h.b16 %v2782
          %v4245 = vunpack.c.l.b16 %v2783
          %v4246 = vunpack.c.h.b16 %v2783
          %v4247 = vunpack.c.l.b16 %v2784
          %v4248 = vunpack.c.h.b16 %v2784
          %v4249 = vunpack.c.l.b16 %v2785
          %v4250 = vunpack.c.h.b16 %v2785
          %v4251 = vunpack.c.l.b16 %v2786
          %v4252 = vunpack.c.h.b16 %v2786
          %v4253 = vunpack.c.l.b16 %v2787
          %v4254 = vunpack.c.h.b16 %v2787
          %v4255 = vunpack.c.l.b16 %v2788
          %v4256 = vunpack.c.h.b16 %v2788
          %v4257 = vunpack.c.l.b16 %v2789
          %v4258 = vunpack.c.h.b16 %v2789
          %v4259 = vunpack.c.l.b16 %v2790
          %v4260 = vunpack.c.h.b16 %v2790
          %v4261 = vunpack.c.l.b16 %v2791
          %v4262 = vunpack.c.h.b16 %v2791
          %v4263 = vunpack.c.l.b16 %v2792
          %v4264 = vunpack.c.h.b16 %v2792
          %v4265 = vunpack.c.l.b16 %v2793
          %v4266 = vunpack.c.h.b16 %v2793
          %v4267 = vunpack.c.l.b16 %v2794
          %v4268 = vunpack.c.h.b16 %v2794
          %v4269 = vunpack.c.l.b16 %v2795
          %v4270 = vunpack.c.h.b16 %v2795
          %v4271 = vunpack.c.l.b16 %v2796
          %v4272 = vunpack.c.h.b16 %v2796
          %v4273 = vunpack.c.l.b16 %v2797
          %v4274 = vunpack.c.h.b16 %v2797
          %v4275 = vunpack.c.l.b16 %v2798
          %v4276 = vunpack.c.h.b16 %v2798
          %v4277 = vunpack.c.l.b16 %v2799
          %v4278 = vunpack.c.h.b16 %v2799
          %v4279 = vunpack.c.l.b16 %v2800
          %v4280 = vunpack.c.h.b16 %v2800
          %v4281 = vunpack.c.l.b16 %v2801
          %v4282 = vunpack.c.h.b16 %v2801
          %v4283 = vunpack.c.l.b16 %v2802
          %v4284 = vunpack.c.h.b16 %v2802
          %v4285 = vunpack.c.l.b16 %v2803
          %v4286 = vunpack.c.h.b16 %v2803
          %v4287 = vunpack.c.l.b16 %v2804
          %v4288 = vunpack.c.h.b16 %v2804
          %v4289 = vunpack.c.l.b16 %v2805
          %v4290 = vunpack.c.h.b16 %v2805
          %v4291 = vunpack.c.l.b16 %v2806
          %v4292 = vunpack.c.h.b16 %v2806
          %v4293 = vunpack.c.l.b16 %v2807
          %v4294 = vunpack.c.h.b16 %v2807
          %v4295 = vunpack.c.l.b16 %v2808
          %v4296 = vunpack.c.h.b16 %v2808
          %v4297 = vunpack.c.l.b16 %v2809
          %v4298 = vunpack.c.h.b16 %v2809
          %v4299 = vunpack.c.l.b16 %v2810
          %v4300 = vunpack.c.h.b16 %v2810
          %v4301 = vunpack.c.l.b16 %v2811
          %v4302 = vunpack.c.h.b16 %v2811
          %v4303 = vunpack.c.l.b16 %v2812
          %v4304 = vunpack.c.h.b16 %v2812
          %v4305 = vunpack.c.l.b16 %v2813
          %v4306 = vunpack.c.h.b16 %v2813
          %v4307 = vunpack.c.l.b16 %v2814
          %v4308 = vunpack.c.h.b16 %v2814
          %v4309 = vunpack.c.l.b16 %v2815
          %v4310 = vunpack.c.h.b16 %v2815
          %v4311 = vunpack.c.l.b16 %v2816
          %v4312 = vunpack.c.h.b16 %v2816
          %v4313 = vunpack.c.l.b16 %v2817
          %v4314 = vunpack.c.h.b16 %v2817
          %v4315 = vunpack.c.l.b16 %v2818
          %v4316 = vunpack.c.h.b16 %v2818
          %v4317 = vunpack.c.l.b16 %v2819
          %v4318 = vunpack.c.h.b16 %v2819
          %v4319 = vunpack.c.l.b16 %v2820
          %v4320 = vunpack.c.h.b16 %v2820
          %v4321 = vunpack.c.l.b16 %v2821
          %v4322 = vunpack.c.h.b16 %v2821
          %v4323 = vunpack.c.l.b16 %v2822
          %v4324 = vunpack.c.h.b16 %v2822
          %v4325 = vunpack.c.l.b16 %v2823
          %v4326 = vunpack.c.h.b16 %v2823
          %v4327 = vunpack.c.l.b16 %v2824
          %v4328 = vunpack.c.h.b16 %v2824
          %v4329 = vunpack.c.l.b16 %v2825
          %v4330 = vunpack.c.h.b16 %v2825
          %v4331 = vunpack.c.l.b16 %v2826
          %v4332 = vunpack.c.h.b16 %v2826
          %v4333 = vunpack.c.l.b16 %v2827
          %v4334 = vunpack.c.h.b16 %v2827
          %v4335 = vunpack.c.l.b16 %v2828
          %v4336 = vunpack.c.h.b16 %v2828
          %v4337 = vunpack.c.l.b16 %v2829
          %v4338 = vunpack.c.h.b16 %v2829
          %v4339 = vunpack.c.l.b16 %v2830
          %v4340 = vunpack.c.h.b16 %v2830
          %v4341 = vunpack.c.l.b16 %v2831
          %v4342 = vunpack.c.h.b16 %v2831
          %v4343 = vunpack.c.l.b16 %v2832
          %v4344 = vunpack.c.h.b16 %v2832
          %v4345 = vunpack.c.l.b16 %v2833
          %v4346 = vunpack.c.h.b16 %v2833
          %v4347 = vunpack.c.l.b16 %v2834
          %v4348 = vunpack.c.h.b16 %v2834
          %v4349 = vunpack.c.l.b16 %v2835
          %v4350 = vunpack.c.h.b16 %v2835
          %v4351 = vunpack.c.l.b16 %v2836
          %v4352 = vunpack.c.h.b16 %v2836
          %v4353 = vunpack.c.l.b16 %v2837
          %v4354 = vunpack.c.h.b16 %v2837
          %v4355 = vunpack.c.l.b16 %v2838
          %v4356 = vunpack.c.h.b16 %v2838
          %v4357 = vunpack.c.l.b16 %v2839
          %v4358 = vunpack.c.h.b16 %v2839
          %v4359 = vunpack.c.l.b16 %v2840
          %v4360 = vunpack.c.h.b16 %v2840
          %v4361 = vunpack.c.l.b16 %v2841
          %v4362 = vunpack.c.h.b16 %v2841
          %v4363 = vunpack.c.l.b16 %v2842
          %v4364 = vunpack.c.h.b16 %v2842
          %v4365 = vunpack.c.l.b16 %v2843
          %v4366 = vunpack.c.h.b16 %v2843
          %v4367 = vunpack.c.l.b16 %v2844
          %v4368 = vunpack.c.h.b16 %v2844
          %v4369 = vunpack.c.l.b16 %v2845
          %v4370 = vunpack.c.h.b16 %v2845
          %v4371 = vunpack.c.l.b16 %v2846
          %v4372 = vunpack.c.h.b16 %v2846
          %v4373 = vunpack.c.l.b16 %v2847
          %v4374 = vunpack.c.h.b16 %v2847
          %v4375 = vunpack.c.l.b16 %v2848
          %v4376 = vunpack.c.h.b16 %v2848
          %v4377 = vunpack.c.l.b16 %v2849
          %v4378 = vunpack.c.h.b16 %v2849
          %v4379 = vunpack.c.l.b16 %v2850
          %v4380 = vunpack.c.h.b16 %v2850
          %v4381 = vunpack.c.l.b16 %v2851
          %v4382 = vunpack.c.h.b16 %v2851
          %v4383 = vunpack.c.l.b16 %v2852
          %v4384 = vunpack.c.h.b16 %v2852
          %v4385 = vunpack.c.l.b16 %v2853
          %v4386 = vunpack.c.h.b16 %v2853
          %v4387 = vunpack.c.l.b16 %v2854
          %v4388 = vunpack.c.h.b16 %v2854
          %v4389 = vunpack.c.l.b16 %v2855
          %v4390 = vunpack.c.h.b16 %v2855
          %v4391 = vunpack.c.l.b16 %v2856
          %v4392 = vunpack.c.h.b16 %v2856
          %v4393 = vunpack.c.l.b16 %v2857
          %v4394 = vunpack.c.h.b16 %v2857
          %v4395 = vunpack.c.l.b16 %v2858
          %v4396 = vunpack.c.h.b16 %v2858
          %v4397 = vunpack.c.l.b16 %v2859
          %v4398 = vunpack.c.h.b16 %v2859
          %v4399 = vunpack.c.l.b16 %v2860
          %v4400 = vunpack.c.h.b16 %v2860
          %v4401 = vunpack.c.l.b16 %v2861
          %v4402 = vunpack.c.h.b16 %v2861
          %v4403 = vunpack.c.l.b16 %v2862
          %v4404 = vunpack.c.h.b16 %v2862
          %v4405 = vunpack.c.l.b16 %v2863
          %v4406 = vunpack.c.h.b16 %v2863
          %v4407 = vunpack.c.l.b16 %v2864
          %v4408 = vunpack.c.h.b16 %v2864
          %v4409 = vunpack.c.l.b16 %v2865
          %v4410 = vunpack.c.h.b16 %v2865
          %v4411 = vunpack.c.l.b16 %v2866
          %v4412 = vunpack.c.h.b16 %v2866
          %v4413 = vunpack.c.l.b16 %v2867
          %v4414 = vunpack.c.h.b16 %v2867
          %v4415 = vunpack.c.l.b16 %v2868
          %v4416 = vunpack.c.h.b16 %v2868
          %v4417 = vunpack.c.l.b16 %v2869
          %v4418 = vunpack.c.h.b16 %v2869
          %v4419 = vunpack.c.l.b16 %v2870
          %v4420 = vunpack.c.h.b16 %v2870
          %v4421 = vunpack.c.l.b16 %v2871
          %v4422 = vunpack.c.h.b16 %v2871
          %v4423 = vunpack.c.l.b16 %v2872
          %v4424 = vunpack.c.h.b16 %v2872
          %v4425 = vunpack.c.l.b16 %v2873
          %v4426 = vunpack.c.h.b16 %v2873
          %v4427 = vunpack.c.l.b16 %v2874
          %v4428 = vunpack.c.h.b16 %v2874
          %v4429 = vunpack.c.l.b16 %v2875
          %v4430 = vunpack.c.h.b16 %v2875
          %v4431 = vunpack.c.l.b16 %v2876
          %v4432 = vunpack.c.h.b16 %v2876
          %v4433 = vunpack.c.l.b16 %v2877
          %v4434 = vunpack.c.h.b16 %v2877
          %v4435 = vunpack.c.l.b16 %v2878
          %v4436 = vunpack.c.h.b16 %v2878
          %v4437 = vunpack.c.l.b16 %v2879
          %v4438 = vunpack.c.h.b16 %v2879
          %v4439 = vunpack.c.l.b16 %v2880
          %v4440 = vunpack.c.h.b16 %v2880
          %v4441 = vunpack.c.l.b16 %v2881
          %v4442 = vunpack.c.h.b16 %v2881
          %v4443 = vunpack.c.l.b16 %v2882
          %v4444 = vunpack.c.h.b16 %v2882
          %v4445 = vunpack.c.l.b16 %v2883
          %v4446 = vunpack.c.h.b16 %v2883
          %v4447 = vunpack.c.l.b16 %v2884
          %v4448 = vunpack.c.h.b16 %v2884
          %v4449 = vunpack.c.l.b16 %v2885
          %v4450 = vunpack.c.h.b16 %v2885
          %v4451 = vunpack.c.l.b16 %v2886
          %v4452 = vunpack.c.h.b16 %v2886
          %v4453 = vunpack.c.l.b16 %v2887
          %v4454 = vunpack.c.h.b16 %v2887
          %v4455 = vunpack.c.l.b16 %v2888
          %v4456 = vunpack.c.h.b16 %v2888
          %v4457 = vunpack.c.l.b16 %v2889
          %v4458 = vunpack.c.h.b16 %v2889
          %v4459 = vunpack.c.l.b16 %v2890
          %v4460 = vunpack.c.h.b16 %v2890
          %v4461 = vunpack.c.l.b16 %v2891
          %v4462 = vunpack.c.h.b16 %v2891
          %v4463 = vunpack.c.l.b16 %v2892
          %v4464 = vunpack.c.h.b16 %v2892
          %v4465 = vunpack.c.l.b16 %v2893
          %v4466 = vunpack.c.h.b16 %v2893
          %v4467 = vunpack.c.l.b16 %v2894
          %v4468 = vunpack.c.h.b16 %v2894
          %v4469 = vunpack.c.l.b16 %v2895
          %v4470 = vunpack.c.h.b16 %v2895
          %v4471 = vunpack.c.l.b16 %v2896
          %v4472 = vunpack.c.h.b16 %v2896
          %v4473 = vunpack.c.l.b16 %v2897
          %v4474 = vunpack.c.h.b16 %v2897
          %v4475 = vunpack.c.l.b16 %v2898
          %v4476 = vunpack.c.h.b16 %v2898
          %v4477 = vpack.c.b16 %v3461, %v3453
          %v4478 = vpack.c.b16 %v3462, %v3454
          %v4479 = vpack.c.b16 %v3463, %v3455
          %v4480 = vpack.c.b16 %v3464, %v3456
          %v4481 = vpack.c.b16 %v3465, %v3457
          %v4482 = vpack.c.b16 %v3466, %v3458
          %v4483 = vpack.c.b16 %v3467, %v3459
          %v4484 = vpack.c.b16 %v3468, %v3460
          %v4485 = vpack.c.b16 %v3477, %v3469
          %v4486 = vpack.c.b16 %v3478, %v3470
          %v4487 = vpack.c.b16 %v3479, %v3471
          %v4488 = vpack.c.b16 %v3480, %v3472
          %v4489 = vpack.c.b16 %v3481, %v3473
          %v4490 = vpack.c.b16 %v3482, %v3474
          %v4491 = vpack.c.b16 %v3483, %v3475
          %v4492 = vpack.c.b16 %v3484, %v3476
          %v4493 = vpack.c.b16 %v3493, %v3485
          %v4494 = vpack.c.b16 %v3494, %v3486
          %v4495 = vpack.c.b16 %v3495, %v3487
          %v4496 = vpack.c.b16 %v3496, %v3488
          %v4497 = vpack.c.b16 %v3497, %v3489
          %v4498 = vpack.c.b16 %v3498, %v3490
          %v4499 = vpack.c.b16 %v3499, %v3491
          %v4500 = vpack.c.b16 %v3500, %v3492
          %v4501 = vpack.c.b16 %v3509, %v3501
          %v4502 = vpack.c.b16 %v3510, %v3502
          %v4503 = vpack.c.b16 %v3511, %v3503
          %v4504 = vpack.c.b16 %v3512, %v3504
          %v4505 = vpack.c.b16 %v3513, %v3505
          %v4506 = vpack.c.b16 %v3514, %v3506
          %v4507 = vpack.c.b16 %v3515, %v3507
          %v4508 = vpack.c.b16 %v3516, %v3508
          %v4509 = vpack.c.b16 %v3525, %v3517
          %v4510 = vpack.c.b16 %v3526, %v3518
          %v4511 = vpack.c.b16 %v3527, %v3519
          %v4512 = vpack.c.b16 %v3528, %v3520
          %v4513 = vpack.c.b16 %v3529, %v3521
          %v4514 = vpack.c.b16 %v3530, %v3522
          %v4515 = vpack.c.b16 %v3531, %v3523
          %v4516 = vpack.c.b16 %v3532, %v3524
          %v4517 = vpack.c.b16 %v3541, %v3533
          %v4518 = vpack.c.b16 %v3542, %v3534
          %v4519 = vpack.c.b16 %v3543, %v3535
          %v4520 = vpack.c.b16 %v3544, %v3536
          %v4521 = vpack.c.b16 %v3545, %v3537
          %v4522 = vpack.c.b16 %v3546, %v3538
          %v4523 = vpack.c.b16 %v3547, %v3539
          %v4524 = vpack.c.b16 %v3548, %v3540
          %v4525 = vpack.c.b16 %v3557, %v3549
          %v4526 = vpack.c.b16 %v3558, %v3550
          %v4527 = vpack.c.b16 %v3559, %v3551
          %v4528 = vpack.c.b16 %v3560, %v3552
          %v4529 = vpack.c.b16 %v3561, %v3553
          %v4530 = vpack.c.b16 %v3562, %v3554
          %v4531 = vpack.c.b16 %v3563, %v3555
          %v4532 = vpack.c.b16 %v3564, %v3556
          %v4533 = vpack.c.b16 %v3573, %v3565
          %v4534 = vpack.c.b16 %v3574, %v3566
          %v4535 = vpack.c.b16 %v3575, %v3567
          %v4536 = vpack.c.b16 %v3576, %v3568
          %v4537 = vpack.c.b16 %v3577, %v3569
          %v4538 = vpack.c.b16 %v3578, %v3570
          %v4539 = vpack.c.b16 %v3579, %v3571
          %v4540 = vpack.c.b16 %v3580, %v3572
          %v4541 = vpack.c.b16 %v3589, %v3581
          %v4542 = vpack.c.b16 %v3590, %v3582
          %v4543 = vpack.c.b16 %v3591, %v3583
          %v4544 = vpack.c.b16 %v3592, %v3584
          %v4545 = vpack.c.b16 %v3593, %v3585
          %v4546 = vpack.c.b16 %v3594, %v3586
          %v4547 = vpack.c.b16 %v3595, %v3587
          %v4548 = vpack.c.b16 %v3596, %v3588
          %v4549 = vpack.c.b16 %v3605, %v3597
          %v4550 = vpack.c.b16 %v3606, %v3598
          %v4551 = vpack.c.b16 %v3607, %v3599
          %v4552 = vpack.c.b16 %v3608, %v3600
          %v4553 = vpack.c.b16 %v3609, %v3601
          %v4554 = vpack.c.b16 %v3610, %v3602
          %v4555 = vpack.c.b16 %v3611, %v3603
          %v4556 = vpack.c.b16 %v3612, %v3604
          %v4557 = vpack.c.b16 %v3621, %v3613
          %v4558 = vpack.c.b16 %v3622, %v3614
          %v4559 = vpack.c.b16 %v3623, %v3615
          %v4560 = vpack.c.b16 %v3624, %v3616
          %v4561 = vpack.c.b16 %v3625, %v3617
          %v4562 = vpack.c.b16 %v3626, %v3618
          %v4563 = vpack.c.b16 %v3627, %v3619
          %v4564 = vpack.c.b16 %v3628, %v3620
          %v4565 = vpack.c.b16 %v3637, %v3629
          %v4566 = vpack.c.b16 %v3638, %v3630
          %v4567 = vpack.c.b16 %v3639, %v3631
          %v4568 = vpack.c.b16 %v3640, %v3632
          %v4569 = vpack.c.b16 %v3641, %v3633
          %v4570 = vpack.c.b16 %v3642, %v3634
          %v4571 = vpack.c.b16 %v3643, %v3635
          %v4572 = vpack.c.b16 %v3644, %v3636
          %v4573 = vpack.c.b16 %v3653, %v3645
          %v4574 = vpack.c.b16 %v3654, %v3646
          %v4575 = vpack.c.b16 %v3655, %v3647
          %v4576 = vpack.c.b16 %v3656, %v3648
          %v4577 = vpack.c.b16 %v3657, %v3649
          %v4578 = vpack.c.b16 %v3658, %v3650
          %v4579 = vpack.c.b16 %v3659, %v3651
          %v4580 = vpack.c.b16 %v3660, %v3652
          %v4581 = vpack.c.b16 %v3669, %v3661
          %v4582 = vpack.c.b16 %v3670, %v3662
          %v4583 = vpack.c.b16 %v3671, %v3663
          %v4584 = vpack.c.b16 %v3672, %v3664
          %v4585 = vpack.c.b16 %v3673, %v3665
          %v4586 = vpack.c.b16 %v3674, %v3666
          %v4587 = vpack.c.b16 %v3675, %v3667
          %v4588 = vpack.c.b16 %v3676, %v3668
          %v4589 = vpack.c.b16 %v3685, %v3677
          %v4590 = vpack.c.b16 %v3686, %v3678
          %v4591 = vpack.c.b16 %v3687, %v3679
          %v4592 = vpack.c.b16 %v3688, %v3680
          %v4593 = vpack.c.b16 %v3689, %v3681
          %v4594 = vpack.c.b16 %v3690, %v3682
          %v4595 = vpack.c.b16 %v3691, %v3683
          %v4596 = vpack.c.b16 %v3692, %v3684
          %v4597 = vpack.c.b16 %v3701, %v3693
          %v4598 = vpack.c.b16 %v3702, %v3694
          %v4599 = vpack.c.b16 %v3703, %v3695
          %v4600 = vpack.c.b16 %v3704, %v3696
          %v4601 = vpack.c.b16 %v3705, %v3697
          %v4602 = vpack.c.b16 %v3706, %v3698
          %v4603 = vpack.c.b16 %v3707, %v3699
          %v4604 = vpack.c.b16 %v3708, %v3700
          %v4605 = vpack.c.b16 %v3717, %v3709
          %v4606 = vpack.c.b16 %v3718, %v3710
          %v4607 = vpack.c.b16 %v3719, %v3711
          %v4608 = vpack.c.b16 %v3720, %v3712
          %v4609 = vpack.c.b16 %v3721, %v3713
          %v4610 = vpack.c.b16 %v3722, %v3714
          %v4611 = vpack.c.b16 %v3723, %v3715
          %v4612 = vpack.c.b16 %v3724, %v3716
          %v4613 = vpack.c.b16 %v3733, %v3725
          %v4614 = vpack.c.b16 %v3734, %v3726
          %v4615 = vpack.c.b16 %v3735, %v3727
          %v4616 = vpack.c.b16 %v3736, %v3728
          %v4617 = vpack.c.b16 %v3737, %v3729
          %v4618 = vpack.c.b16 %v3738, %v3730
          %v4619 = vpack.c.b16 %v3739, %v3731
          %v4620 = vpack.c.b16 %v3740, %v3732
          %v4621 = vpack.c.b16 %v3749, %v3741
          %v4622 = vpack.c.b16 %v3750, %v3742
          %v4623 = vpack.c.b16 %v3751, %v3743
          %v4624 = vpack.c.b16 %v3752, %v3744
          %v4625 = vpack.c.b16 %v3753, %v3745
          %v4626 = vpack.c.b16 %v3754, %v3746
          %v4627 = vpack.c.b16 %v3755, %v3747
          %v4628 = vpack.c.b16 %v3756, %v3748
          %v4629 = vpack.c.b16 %v3765, %v3757
          %v4630 = vpack.c.b16 %v3766, %v3758
          %v4631 = vpack.c.b16 %v3767, %v3759
          %v4632 = vpack.c.b16 %v3768, %v3760
          %v4633 = vpack.c.b16 %v3769, %v3761
          %v4634 = vpack.c.b16 %v3770, %v3762
          %v4635 = vpack.c.b16 %v3771, %v3763
          %v4636 = vpack.c.b16 %v3772, %v3764
          %v4637 = vpack.c.b16 %v3781, %v3773
          %v4638 = vpack.c.b16 %v3782, %v3774
          %v4639 = vpack.c.b16 %v3783, %v3775
          %v4640 = vpack.c.b16 %v3784, %v3776
          %v4641 = vpack.c.b16 %v3785, %v3777
          %v4642 = vpack.c.b16 %v3786, %v3778
          %v4643 = vpack.c.b16 %v3787, %v3779
          %v4644 = vpack.c.b16 %v3788, %v3780
          %v4645 = vpack.c.b16 %v3797, %v3789
          %v4646 = vpack.c.b16 %v3798, %v3790
          %v4647 = vpack.c.b16 %v3799, %v3791
          %v4648 = vpack.c.b16 %v3800, %v3792
          %v4649 = vpack.c.b16 %v3801, %v3793
          %v4650 = vpack.c.b16 %v3802, %v3794
          %v4651 = vpack.c.b16 %v3803, %v3795
          %v4652 = vpack.c.b16 %v3804, %v3796
          %v4653 = vpack.c.b16 %v3813, %v3805
          %v4654 = vpack.c.b16 %v3814, %v3806
          %v4655 = vpack.c.b16 %v3815, %v3807
          %v4656 = vpack.c.b16 %v3816, %v3808
          %v4657 = vpack.c.b16 %v3817, %v3809
          %v4658 = vpack.c.b16 %v3818, %v3810
          %v4659 = vpack.c.b16 %v3819, %v3811
          %v4660 = vpack.c.b16 %v3820, %v3812
          %v4661 = vpack.c.b16 %v3829, %v3821
          %v4662 = vpack.c.b16 %v3830, %v3822
          %v4663 = vpack.c.b16 %v3831, %v3823
          %v4664 = vpack.c.b16 %v3832, %v3824
          %v4665 = vpack.c.b16 %v3833, %v3825
          %v4666 = vpack.c.b16 %v3834, %v3826
          %v4667 = vpack.c.b16 %v3835, %v3827
          %v4668 = vpack.c.b16 %v3836, %v3828
          %v4669 = vpack.c.b16 %v3845, %v3837
          %v4670 = vpack.c.b16 %v3846, %v3838
          %v4671 = vpack.c.b16 %v3847, %v3839
          %v4672 = vpack.c.b16 %v3848, %v3840
          %v4673 = vpack.c.b16 %v3849, %v3841
          %v4674 = vpack.c.b16 %v3850, %v3842
          %v4675 = vpack.c.b16 %v3851, %v3843
          %v4676 = vpack.c.b16 %v3852, %v3844
          %v4677 = vpack.c.b16 %v3861, %v3853
          %v4678 = vpack.c.b16 %v3862, %v3854
          %v4679 = vpack.c.b16 %v3863, %v3855
          %v4680 = vpack.c.b16 %v3864, %v3856
          %v4681 = vpack.c.b16 %v3865, %v3857
          %v4682 = vpack.c.b16 %v3866, %v3858
          %v4683 = vpack.c.b16 %v3867, %v3859
          %v4684 = vpack.c.b16 %v3868, %v3860
          %v4685 = vpack.c.b16 %v3877, %v3869
          %v4686 = vpack.c.b16 %v3878, %v3870
          %v4687 = vpack.c.b16 %v3879, %v3871
          %v4688 = vpack.c.b16 %v3880, %v3872
          %v4689 = vpack.c.b16 %v3881, %v3873
          %v4690 = vpack.c.b16 %v3882, %v3874
          %v4691 = vpack.c.b16 %v3883, %v3875
          %v4692 = vpack.c.b16 %v3884, %v3876
          %v4693 = vpack.c.b16 %v3893, %v3885
          %v4694 = vpack.c.b16 %v3894, %v3886
          %v4695 = vpack.c.b16 %v3895, %v3887
          %v4696 = vpack.c.b16 %v3896, %v3888
          %v4697 = vpack.c.b16 %v3897, %v3889
          %v4698 = vpack.c.b16 %v3898, %v3890
          %v4699 = vpack.c.b16 %v3899, %v3891
          %v4700 = vpack.c.b16 %v3900, %v3892
          %v4701 = vpack.c.b16 %v3909, %v3901
          %v4702 = vpack.c.b16 %v3910, %v3902
          %v4703 = vpack.c.b16 %v3911, %v3903
          %v4704 = vpack.c.b16 %v3912, %v3904
          %v4705 = vpack.c.b16 %v3913, %v3905
          %v4706 = vpack.c.b16 %v3914, %v3906
          %v4707 = vpack.c.b16 %v3915, %v3907
          %v4708 = vpack.c.b16 %v3916, %v3908
          %v4709 = vpack.c.b16 %v3925, %v3917
          %v4710 = vpack.c.b16 %v3926, %v3918
          %v4711 = vpack.c.b16 %v3927, %v3919
          %v4712 = vpack.c.b16 %v3928, %v3920
          %v4713 = vpack.c.b16 %v3929, %v3921
          %v4714 = vpack.c.b16 %v3930, %v3922
          %v4715 = vpack.c.b16 %v3931, %v3923
          %v4716 = vpack.c.b16 %v3932, %v3924
          %v4717 = vpack.c.b16 %v3941, %v3933
          %v4718 = vpack.c.b16 %v3942, %v3934
          %v4719 = vpack.c.b16 %v3943, %v3935
          %v4720 = vpack.c.b16 %v3944, %v3936
          %v4721 = vpack.c.b16 %v3945, %v3937
          %v4722 = vpack.c.b16 %v3946, %v3938
          %v4723 = vpack.c.b16 %v3947, %v3939
          %v4724 = vpack.c.b16 %v3948, %v3940
          %v4725 = vpack.c.b16 %v3957, %v3949
          %v4726 = vpack.c.b16 %v3958, %v3950
          %v4727 = vpack.c.b16 %v3959, %v3951
          %v4728 = vpack.c.b16 %v3960, %v3952
          %v4729 = vpack.c.b16 %v3961, %v3953
          %v4730 = vpack.c.b16 %v3962, %v3954
          %v4731 = vpack.c.b16 %v3963, %v3955
          %v4732 = vpack.c.b16 %v3964, %v3956
          %v4733 = vpack.c.b16 %v3973, %v3965
          %v4734 = vpack.c.b16 %v3974, %v3966
          %v4735 = vpack.c.b16 %v3975, %v3967
          %v4736 = vpack.c.b16 %v3976, %v3968
          %v4737 = vpack.c.b16 %v3977, %v3969
          %v4738 = vpack.c.b16 %v3978, %v3970
          %v4739 = vpack.c.b16 %v3979, %v3971
          %v4740 = vpack.c.b16 %v3980, %v3972
          %v4741 = vpack.c.b16 %v3989, %v3981
          %v4742 = vpack.c.b16 %v3990, %v3982
          %v4743 = vpack.c.b16 %v3991, %v3983
          %v4744 = vpack.c.b16 %v3992, %v3984
          %v4745 = vpack.c.b16 %v3993, %v3985
          %v4746 = vpack.c.b16 %v3994, %v3986
          %v4747 = vpack.c.b16 %v3995, %v3987
          %v4748 = vpack.c.b16 %v3996, %v3988
          %v4749 = vpack.c.b16 %v4005, %v3997
          %v4750 = vpack.c.b16 %v4006, %v3998
          %v4751 = vpack.c.b16 %v4007, %v3999
          %v4752 = vpack.c.b16 %v4008, %v4000
          %v4753 = vpack.c.b16 %v4009, %v4001
          %v4754 = vpack.c.b16 %v4010, %v4002
          %v4755 = vpack.c.b16 %v4011, %v4003
          %v4756 = vpack.c.b16 %v4012, %v4004
          %v4757 = vpack.c.b16 %v4021, %v4013
          %v4758 = vpack.c.b16 %v4022, %v4014
          %v4759 = vpack.c.b16 %v4023, %v4015
          %v4760 = vpack.c.b16 %v4024, %v4016
          %v4761 = vpack.c.b16 %v4025, %v4017
          %v4762 = vpack.c.b16 %v4026, %v4018
          %v4763 = vpack.c.b16 %v4027, %v4019
          %v4764 = vpack.c.b16 %v4028, %v4020
          %v4765 = vpack.c.b16 %v4037, %v4029
          %v4766 = vpack.c.b16 %v4038, %v4030
          %v4767 = vpack.c.b16 %v4039, %v4031
          %v4768 = vpack.c.b16 %v4040, %v4032
          %v4769 = vpack.c.b16 %v4041, %v4033
          %v4770 = vpack.c.b16 %v4042, %v4034
          %v4771 = vpack.c.b16 %v4043, %v4035
          %v4772 = vpack.c.b16 %v4044, %v4036
          %v4773 = vpack.c.b16 %v4053, %v4045
          %v4774 = vpack.c.b16 %v4054, %v4046
          %v4775 = vpack.c.b16 %v4055, %v4047
          %v4776 = vpack.c.b16 %v4056, %v4048
          %v4777 = vpack.c.b16 %v4057, %v4049
          %v4778 = vpack.c.b16 %v4058, %v4050
          %v4779 = vpack.c.b16 %v4059, %v4051
          %v4780 = vpack.c.b16 %v4060, %v4052
          %v4781 = vpack.c.b16 %v4069, %v4061
          %v4782 = vpack.c.b16 %v4070, %v4062
          %v4783 = vpack.c.b16 %v4071, %v4063
          %v4784 = vpack.c.b16 %v4072, %v4064
          %v4785 = vpack.c.b16 %v4073, %v4065
          %v4786 = vpack.c.b16 %v4074, %v4066
          %v4787 = vpack.c.b16 %v4075, %v4067
          %v4788 = vpack.c.b16 %v4076, %v4068
          %v4789 = vpack.c.b16 %v4085, %v4077
          %v4790 = vpack.c.b16 %v4086, %v4078
          %v4791 = vpack.c.b16 %v4087, %v4079
          %v4792 = vpack.c.b16 %v4088, %v4080
          %v4793 = vpack.c.b16 %v4089, %v4081
          %v4794 = vpack.c.b16 %v4090, %v4082
          %v4795 = vpack.c.b16 %v4091, %v4083
          %v4796 = vpack.c.b16 %v4092, %v4084
          %v4797 = vpack.c.b16 %v4101, %v4093
          %v4798 = vpack.c.b16 %v4102, %v4094
          %v4799 = vpack.c.b16 %v4103, %v4095
          %v4800 = vpack.c.b16 %v4104, %v4096
          %v4801 = vpack.c.b16 %v4105, %v4097
          %v4802 = vpack.c.b16 %v4106, %v4098
          %v4803 = vpack.c.b16 %v4107, %v4099
          %v4804 = vpack.c.b16 %v4108, %v4100
          %v4805 = vpack.c.b16 %v4117, %v4109
          %v4806 = vpack.c.b16 %v4118, %v4110
          %v4807 = vpack.c.b16 %v4119, %v4111
          %v4808 = vpack.c.b16 %v4120, %v4112
          %v4809 = vpack.c.b16 %v4121, %v4113
          %v4810 = vpack.c.b16 %v4122, %v4114
          %v4811 = vpack.c.b16 %v4123, %v4115
          %v4812 = vpack.c.b16 %v4124, %v4116
          %v4813 = vpack.c.b16 %v4133, %v4125
          %v4814 = vpack.c.b16 %v4134, %v4126
          %v4815 = vpack.c.b16 %v4135, %v4127
          %v4816 = vpack.c.b16 %v4136, %v4128
          %v4817 = vpack.c.b16 %v4137, %v4129
          %v4818 = vpack.c.b16 %v4138, %v4130
          %v4819 = vpack.c.b16 %v4139, %v4131
          %v4820 = vpack.c.b16 %v4140, %v4132
          %v4821 = vpack.c.b16 %v4149, %v4141
          %v4822 = vpack.c.b16 %v4150, %v4142
          %v4823 = vpack.c.b16 %v4151, %v4143
          %v4824 = vpack.c.b16 %v4152, %v4144
          %v4825 = vpack.c.b16 %v4153, %v4145
          %v4826 = vpack.c.b16 %v4154, %v4146
          %v4827 = vpack.c.b16 %v4155, %v4147
          %v4828 = vpack.c.b16 %v4156, %v4148
          %v4829 = vpack.c.b16 %v4165, %v4157
          %v4830 = vpack.c.b16 %v4166, %v4158
          %v4831 = vpack.c.b16 %v4167, %v4159
          %v4832 = vpack.c.b16 %v4168, %v4160
          %v4833 = vpack.c.b16 %v4169, %v4161
          %v4834 = vpack.c.b16 %v4170, %v4162
          %v4835 = vpack.c.b16 %v4171, %v4163
          %v4836 = vpack.c.b16 %v4172, %v4164
          %v4837 = vpack.c.b16 %v4181, %v4173
          %v4838 = vpack.c.b16 %v4182, %v4174
          %v4839 = vpack.c.b16 %v4183, %v4175
          %v4840 = vpack.c.b16 %v4184, %v4176
          %v4841 = vpack.c.b16 %v4185, %v4177
          %v4842 = vpack.c.b16 %v4186, %v4178
          %v4843 = vpack.c.b16 %v4187, %v4179
          %v4844 = vpack.c.b16 %v4188, %v4180
          %v4845 = vpack.c.b16 %v4197, %v4189
          %v4846 = vpack.c.b16 %v4198, %v4190
          %v4847 = vpack.c.b16 %v4199, %v4191
          %v4848 = vpack.c.b16 %v4200, %v4192
          %v4849 = vpack.c.b16 %v4201, %v4193
          %v4850 = vpack.c.b16 %v4202, %v4194
          %v4851 = vpack.c.b16 %v4203, %v4195
          %v4852 = vpack.c.b16 %v4204, %v4196
          %v4853 = vpack.c.b16 %v4213, %v4205
          %v4854 = vpack.c.b16 %v4214, %v4206
          %v4855 = vpack.c.b16 %v4215, %v4207
          %v4856 = vpack.c.b16 %v4216, %v4208
          %v4857 = vpack.c.b16 %v4217, %v4209
          %v4858 = vpack.c.b16 %v4218, %v4210
          %v4859 = vpack.c.b16 %v4219, %v4211
          %v4860 = vpack.c.b16 %v4220, %v4212
          %v4861 = vpack.c.b16 %v4229, %v4221
          %v4862 = vpack.c.b16 %v4230, %v4222
          %v4863 = vpack.c.b16 %v4231, %v4223
          %v4864 = vpack.c.b16 %v4232, %v4224
          %v4865 = vpack.c.b16 %v4233, %v4225
          %v4866 = vpack.c.b16 %v4234, %v4226
          %v4867 = vpack.c.b16 %v4235, %v4227
          %v4868 = vpack.c.b16 %v4236, %v4228
          %v4869 = vpack.c.b16 %v4245, %v4237
          %v4870 = vpack.c.b16 %v4246, %v4238
          %v4871 = vpack.c.b16 %v4247, %v4239
          %v4872 = vpack.c.b16 %v4248, %v4240
          %v4873 = vpack.c.b16 %v4249, %v4241
          %v4874 = vpack.c.b16 %v4250, %v4242
          %v4875 = vpack.c.b16 %v4251, %v4243
          %v4876 = vpack.c.b16 %v4252, %v4244
          %v4877 = vpack.c.b16 %v4261, %v4253
          %v4878 = vpack.c.b16 %v4262, %v4254
          %v4879 = vpack.c.b16 %v4263, %v4255
          %v4880 = vpack.c.b16 %v4264, %v4256
          %v4881 = vpack.c.b16 %v4265, %v4257
          %v4882 = vpack.c.b16 %v4266, %v4258
          %v4883 = vpack.c.b16 %v4267, %v4259
          %v4884 = vpack.c.b16 %v4268, %v4260
          %v4885 = vpack.c.b16 %v4277, %v4269
          %v4886 = vpack.c.b16 %v4278, %v4270
          %v4887 = vpack.c.b16 %v4279, %v4271
          %v4888 = vpack.c.b16 %v4280, %v4272
          %v4889 = vpack.c.b16 %v4281, %v4273
          %v4890 = vpack.c.b16 %v4282, %v4274
          %v4891 = vpack.c.b16 %v4283, %v4275
          %v4892 = vpack.c.b16 %v4284, %v4276
          %v4893 = vpack.c.b16 %v4293, %v4285
          %v4894 = vpack.c.b16 %v4294, %v4286
          %v4895 = vpack.c.b16 %v4295, %v4287
          %v4896 = vpack.c.b16 %v4296, %v4288
          %v4897 = vpack.c.b16 %v4297, %v4289
          %v4898 = vpack.c.b16 %v4298, %v4290
          %v4899 = vpack.c.b16 %v4299, %v4291
          %v4900 = vpack.c.b16 %v4300, %v4292
          %v4901 = vpack.c.b16 %v4309, %v4301
          %v4902 = vpack.c.b16 %v4310, %v4302
          %v4903 = vpack.c.b16 %v4311, %v4303
          %v4904 = vpack.c.b16 %v4312, %v4304
          %v4905 = vpack.c.b16 %v4313, %v4305
          %v4906 = vpack.c.b16 %v4314, %v4306
          %v4907 = vpack.c.b16 %v4315, %v4307
          %v4908 = vpack.c.b16 %v4316, %v4308
          %v4909 = vpack.c.b16 %v4325, %v4317
          %v4910 = vpack.c.b16 %v4326, %v4318
          %v4911 = vpack.c.b16 %v4327, %v4319
          %v4912 = vpack.c.b16 %v4328, %v4320
          %v4913 = vpack.c.b16 %v4329, %v4321
          %v4914 = vpack.c.b16 %v4330, %v4322
          %v4915 = vpack.c.b16 %v4331, %v4323
          %v4916 = vpack.c.b16 %v4332, %v4324
          %v4917 = vpack.c.b16 %v4341, %v4333
          %v4918 = vpack.c.b16 %v4342, %v4334
          %v4919 = vpack.c.b16 %v4343, %v4335
          %v4920 = vpack.c.b16 %v4344, %v4336
          %v4921 = vpack.c.b16 %v4345, %v4337
          %v4922 = vpack.c.b16 %v4346, %v4338
          %v4923 = vpack.c.b16 %v4347, %v4339
          %v4924 = vpack.c.b16 %v4348, %v4340
          %v4925 = vpack.c.b16 %v4357, %v4349
          %v4926 = vpack.c.b16 %v4358, %v4350
          %v4927 = vpack.c.b16 %v4359, %v4351
          %v4928 = vpack.c.b16 %v4360, %v4352
          %v4929 = vpack.c.b16 %v4361, %v4353
          %v4930 = vpack.c.b16 %v4362, %v4354
          %v4931 = vpack.c.b16 %v4363, %v4355
          %v4932 = vpack.c.b16 %v4364, %v4356
          %v4933 = vpack.c.b16 %v4373, %v4365
          %v4934 = vpack.c.b16 %v4374, %v4366
          %v4935 = vpack.c.b16 %v4375, %v4367
          %v4936 = vpack.c.b16 %v4376, %v4368
          %v4937 = vpack.c.b16 %v4377, %v4369
          %v4938 = vpack.c.b16 %v4378, %v4370
          %v4939 = vpack.c.b16 %v4379, %v4371
          %v4940 = vpack.c.b16 %v4380, %v4372
          %v4941 = vpack.c.b16 %v4389, %v4381
          %v4942 = vpack.c.b16 %v4390, %v4382
          %v4943 = vpack.c.b16 %v4391, %v4383
          %v4944 = vpack.c.b16 %v4392, %v4384
          %v4945 = vpack.c.b16 %v4393, %v4385
          %v4946 = vpack.c.b16 %v4394, %v4386
          %v4947 = vpack.c.b16 %v4395, %v4387
          %v4948 = vpack.c.b16 %v4396, %v4388
          %v4949 = vpack.c.b16 %v4405, %v4397
          %v4950 = vpack.c.b16 %v4406, %v4398
          %v4951 = vpack.c.b16 %v4407, %v4399
          %v4952 = vpack.c.b16 %v4408, %v4400
          %v4953 = vpack.c.b16 %v4409, %v4401
          %v4954 = vpack.c.b16 %v4410, %v4402
          %v4955 = vpack.c.b16 %v4411, %v4403
          %v4956 = vpack.c.b16 %v4412, %v4404
          %v4957 = vpack.c.b16 %v4421, %v4413
          %v4958 = vpack.c.b16 %v4422, %v4414
          %v4959 = vpack.c.b16 %v4423, %v4415
          %v4960 = vpack.c.b16 %v4424, %v4416
          %v4961 = vpack.c.b16 %v4425, %v4417
          %v4962 = vpack.c.b16 %v4426, %v4418
          %v4963 = vpack.c.b16 %v4427, %v4419
          %v4964 = vpack.c.b16 %v4428, %v4420
          %v4965 = vpack.c.b16 %v4437, %v4429
          %v4966 = vpack.c.b16 %v4438, %v4430
          %v4967 = vpack.c.b16 %v4439, %v4431
          %v4968 = vpack.c.b16 %v4440, %v4432
          %v4969 = vpack.c.b16 %v4441, %v4433
          %v4970 = vpack.c.b16 %v4442, %v4434
          %v4971 = vpack.c.b16 %v4443, %v4435
          %v4972 = vpack.c.b16 %v4444, %v4436
          %v4973 = vpack.c.b16 %v4453, %v4445
          %v4974 = vpack.c.b16 %v4454, %v4446
          %v4975 = vpack.c.b16 %v4455, %v4447
          %v4976 = vpack.c.b16 %v4456, %v4448
          %v4977 = vpack.c.b16 %v4457, %v4449
          %v4978 = vpack.c.b16 %v4458, %v4450
          %v4979 = vpack.c.b16 %v4459, %v4451
          %v4980 = vpack.c.b16 %v4460, %v4452
          %v4981 = vpack.c.b16 %v4469, %v4461
          %v4982 = vpack.c.b16 %v4470, %v4462
          %v4983 = vpack.c.b16 %v4471, %v4463
          %v4984 = vpack.c.b16 %v4472, %v4464
          %v4985 = vpack.c.b16 %v4473, %v4465
          %v4986 = vpack.c.b16 %v4474, %v4466
          %v4987 = vpack.c.b16 %v4475, %v4467
          %v4988 = vpack.c.b16 %v4476, %v4468
          %5501 = vmatprep.subr.bf16.mxu0 %v4534
          %5502 = vmatpush1.bf16.msra.mxu0 %v4533
          %5503 = vmatprep.subr.bf16.mxu0 %v4526
          %5504 = vmatpush1.bf16.msra.mxu0 %v4525
          %5505 = vmatprep.subr.bf16.mxu0 %v4518
          %5506 = vmatpush1.bf16.msra.mxu0 %v4517
          %5507 = vmatprep.subr.bf16.mxu0 %v4510
          %5508 = vmatpush1.bf16.msra.mxu0 %v4509
          %5509 = vmatprep.subr.bf16.mxu0 %v4502
          %5510 = vmatpush1.bf16.msra.mxu0 %v4501
          %5511 = vmatprep.subr.bf16.mxu0 %v4494
          %5512 = vmatpush1.bf16.msra.mxu0 %v4493
          %5513 = vmatprep.subr.bf16.mxu0 %v4486
          %5514 = vmatpush1.bf16.msra.mxu0 %v4485
          %5515 = vmatprep.subr.bf16.mxu0 %v4478
          %5516 = vmatpush1.bf16.msra.mxu0 %v4477
          %5517 = vmatprep.subr.bf16.mxu0 %v4598
          %5518 = vmatpush2.bf16.msra.mxu0 %v4597
          %5519 = vmatprep.subr.bf16.mxu0 %v4590
          %5520 = vmatpush2.bf16.msra.mxu0 %v4589
          %5521 = vmatprep.subr.bf16.mxu0 %v4582
          %5522 = vmatpush2.bf16.msra.mxu0 %v4581
          %5523 = vmatprep.subr.bf16.mxu0 %v4574
          %5524 = vmatpush2.bf16.msra.mxu0 %v4573
          %5525 = vmatprep.subr.bf16.mxu0 %v4566
          %5526 = vmatpush2.bf16.msra.mxu0 %v4565
          %5527 = vmatprep.subr.bf16.mxu0 %v4558
          %5528 = vmatpush2.bf16.msra.mxu0 %v4557
          %5529 = vmatprep.subr.bf16.mxu0 %v4550
          %5530 = vmatpush2.bf16.msra.mxu0 %v4549
          %5531 = vmatprep.subr.bf16.mxu0 %v4542
          %5532 = vmatpush2.bf16.msra.mxu0 %v4541
          %5533 = vmatprep.mubr.bf16.mxu0 %v2380
          %5534 = vmatmul.mubr.bf16.gmra.mxu0 %v2379
          %v5535 = vpop.f32.mrf.mxu0
          %v5536 = vadd.f32 %v2904, %v5535
          %v5537 = vpop.f32.mrf.mxu0
          %v5538 = vadd.f32 %v2908, %v5537
          %v5539 = vpop.f32.mrf.mxu0
          %v5540 = vpop.f32.mrf.mxu0
          %5541 = vdwg.mxu0
          %5542 = vmatprep.subr.bf16.mxu0 %v4662
          %5543 = vmatpush1.bf16.msra.mxu0 %v4661
          %5544 = vmatprep.subr.bf16.mxu0 %v4654
          %5545 = vmatpush1.bf16.msra.mxu0 %v4653
          %5546 = vmatprep.subr.bf16.mxu0 %v4646
          %5547 = vmatpush1.bf16.msra.mxu0 %v4645
          %5548 = vmatprep.subr.bf16.mxu0 %v4638
          %5549 = vmatpush1.bf16.msra.mxu0 %v4637
          %5550 = vmatprep.subr.bf16.mxu0 %v4630
          %5551 = vmatpush1.bf16.msra.mxu0 %v4629
          %5552 = vmatprep.subr.bf16.mxu0 %v4622
          %5553 = vmatpush1.bf16.msra.mxu0 %v4621
          %5554 = vmatprep.subr.bf16.mxu0 %v4614
          %5555 = vmatpush1.bf16.msra.mxu0 %v4613
          %5556 = vmatprep.subr.bf16.mxu0 %v4606
          %5557 = vmatpush1.bf16.msra.mxu0 %v4605
          %5558 = vmatprep.subr.bf16.mxu0 %v4726
          %5559 = vmatpush2.bf16.msra.mxu0 %v4725
          %5560 = vmatprep.subr.bf16.mxu0 %v4718
          %5561 = vmatpush2.bf16.msra.mxu0 %v4717
          %5562 = vmatprep.subr.bf16.mxu0 %v4710
          %5563 = vmatpush2.bf16.msra.mxu0 %v4709
          %5564 = vmatprep.subr.bf16.mxu0 %v4702
          %5565 = vmatpush2.bf16.msra.mxu0 %v4701
          %5566 = vmatprep.subr.bf16.mxu0 %v4694
          %5567 = vmatpush2.bf16.msra.mxu0 %v4693
          %5568 = vmatprep.subr.bf16.mxu0 %v4686
          %5569 = vmatpush2.bf16.msra.mxu0 %v4685
          %5570 = vmatprep.subr.bf16.mxu0 %v4678
          %5571 = vmatpush2.bf16.msra.mxu0 %v4677
          %5572 = vmatprep.subr.bf16.mxu0 %v4670
          %5573 = vmatpush2.bf16.msra.mxu0 %v4669
          %5574 = vmatprep.mubr.bf16.mxu0 %v2382
          %5575 = vmatmul.mubr.bf16.gmra.mxu0 %v2381
          %v5576 = vpop.f32.mrf.mxu0
          %v5577 = vadd.f32 %v5536, %v5576
          %v5578 = vpop.f32.mrf.mxu0
          %v5579 = vadd.f32 %v5538, %v5578
          %v5580 = vpop.f32.mrf.mxu0
          %v5581 = vpop.f32.mrf.mxu0
          %5582 = vdwg.mxu0
          %5583 = vmatprep.subr.bf16.mxu0 %v4790
          %5584 = vmatpush1.bf16.msra.mxu0 %v4789
          %5585 = vmatprep.subr.bf16.mxu0 %v4782
          %5586 = vmatpush1.bf16.msra.mxu0 %v4781
          %5587 = vmatprep.subr.bf16.mxu0 %v4774
          %5588 = vmatpush1.bf16.msra.mxu0 %v4773
          %5589 = vmatprep.subr.bf16.mxu0 %v4766
          %5590 = vmatpush1.bf16.msra.mxu0 %v4765
          %5591 = vmatprep.subr.bf16.mxu0 %v4758
          %5592 = vmatpush1.bf16.msra.mxu0 %v4757
          %5593 = vmatprep.subr.bf16.mxu0 %v4750
          %5594 = vmatpush1.bf16.msra.mxu0 %v4749
          %5595 = vmatprep.subr.bf16.mxu0 %v4742
          %5596 = vmatpush1.bf16.msra.mxu0 %v4741
          %5597 = vmatprep.subr.bf16.mxu0 %v4734
          %5598 = vmatpush1.bf16.msra.mxu0 %v4733
          %5599 = vmatprep.subr.bf16.mxu0 %v4854
          %5600 = vmatpush2.bf16.msra.mxu0 %v4853
          %5601 = vmatprep.subr.bf16.mxu0 %v4846
          %5602 = vmatpush2.bf16.msra.mxu0 %v4845
          %5603 = vmatprep.subr.bf16.mxu0 %v4838
          %5604 = vmatpush2.bf16.msra.mxu0 %v4837
          %5605 = vmatprep.subr.bf16.mxu0 %v4830
          %5606 = vmatpush2.bf16.msra.mxu0 %v4829
          %5607 = vmatprep.subr.bf16.mxu0 %v4822
          %5608 = vmatpush2.bf16.msra.mxu0 %v4821
          %5609 = vmatprep.subr.bf16.mxu0 %v4814
          %5610 = vmatpush2.bf16.msra.mxu0 %v4813
          %5611 = vmatprep.subr.bf16.mxu0 %v4806
          %5612 = vmatpush2.bf16.msra.mxu0 %v4805
          %5613 = vmatprep.subr.bf16.mxu0 %v4798
          %5614 = vmatpush2.bf16.msra.mxu0 %v4797
          %5615 = vmatprep.mubr.bf16.mxu0 %v2384
          %5616 = vmatmul.mubr.bf16.gmra.mxu0 %v2383
          %v5617 = vpop.f32.mrf.mxu0
          %v5618 = vadd.f32 %v5577, %v5617
          %v5619 = vpop.f32.mrf.mxu0
          %v5620 = vadd.f32 %v5579, %v5619
          %v5621 = vpop.f32.mrf.mxu0
          %v5622 = vpop.f32.mrf.mxu0
          %5623 = vdwg.mxu0
          %5624 = vmatprep.subr.bf16.mxu0 %v4918
          %5625 = vmatpush1.bf16.msra.mxu0 %v4917
          %5626 = vmatprep.subr.bf16.mxu0 %v4910
          %5627 = vmatpush1.bf16.msra.mxu0 %v4909
          %5628 = vmatprep.subr.bf16.mxu0 %v4902
          %5629 = vmatpush1.bf16.msra.mxu0 %v4901
          %5630 = vmatprep.subr.bf16.mxu0 %v4894
          %5631 = vmatpush1.bf16.msra.mxu0 %v4893
          %5632 = vmatprep.subr.bf16.mxu0 %v4886
          %5633 = vmatpush1.bf16.msra.mxu0 %v4885
          %5634 = vmatprep.subr.bf16.mxu0 %v4878
          %5635 = vmatpush1.bf16.msra.mxu0 %v4877
          %5636 = vmatprep.subr.bf16.mxu0 %v4870
          %5637 = vmatpush1.bf16.msra.mxu0 %v4869
          %5638 = vmatprep.subr.bf16.mxu0 %v4862
          %5639 = vmatpush1.bf16.msra.mxu0 %v4861
          %5640 = vmatprep.subr.bf16.mxu0 %v4982
          %5641 = vmatpush2.bf16.msra.mxu0 %v4981
          %5642 = vmatprep.subr.bf16.mxu0 %v4974
          %5643 = vmatpush2.bf16.msra.mxu0 %v4973
          %5644 = vmatprep.subr.bf16.mxu0 %v4966
          %5645 = vmatpush2.bf16.msra.mxu0 %v4965
          %5646 = vmatprep.subr.bf16.mxu0 %v4958
          %5647 = vmatpush2.bf16.msra.mxu0 %v4957
          %5648 = vmatprep.subr.bf16.mxu0 %v4950
          %5649 = vmatpush2.bf16.msra.mxu0 %v4949
          %5650 = vmatprep.subr.bf16.mxu0 %v4942
          %5651 = vmatpush2.bf16.msra.mxu0 %v4941
          %5652 = vmatprep.subr.bf16.mxu0 %v4934
          %5653 = vmatpush2.bf16.msra.mxu0 %v4933
          %5654 = vmatprep.subr.bf16.mxu0 %v4926
          %5655 = vmatpush2.bf16.msra.mxu0 %v4925
          %5656 = vmatprep.mubr.bf16.mxu0 %v2386
          %5657 = vmatmul.mubr.bf16.gmra.mxu0 %v2385
          %v5658 = vpop.f32.mrf.mxu0
          %v5659 = vadd.f32 %v5618, %v5658
          %v5660 = vpop.f32.mrf.mxu0
          %v5661 = vadd.f32 %v5620, %v5660
          %v5662 = vpop.f32.mrf.mxu0
          %v5663 = vpop.f32.mrf.mxu0
          %5664 = vdwg.mxu0
          %5665 = vmatprep.subr.bf16.mxu0 %v4536
          %5666 = vmatpush1.bf16.msra.mxu0 %v4535
          %5667 = vmatprep.subr.bf16.mxu0 %v4528
          %5668 = vmatpush1.bf16.msra.mxu0 %v4527
          %5669 = vmatprep.subr.bf16.mxu0 %v4520
          %5670 = vmatpush1.bf16.msra.mxu0 %v4519
          %5671 = vmatprep.subr.bf16.mxu0 %v4512
          %5672 = vmatpush1.bf16.msra.mxu0 %v4511
          %5673 = vmatprep.subr.bf16.mxu0 %v4504
          %5674 = vmatpush1.bf16.msra.mxu0 %v4503
          %5675 = vmatprep.subr.bf16.mxu0 %v4496
          %5676 = vmatpush1.bf16.msra.mxu0 %v4495
          %5677 = vmatprep.subr.bf16.mxu0 %v4488
          %5678 = vmatpush1.bf16.msra.mxu0 %v4487
          %5679 = vmatprep.subr.bf16.mxu0 %v4480
          %5680 = vmatpush1.bf16.msra.mxu0 %v4479
          %5681 = vmatprep.subr.bf16.mxu0 %v4600
          %5682 = vmatpush2.bf16.msra.mxu0 %v4599
          %5683 = vmatprep.subr.bf16.mxu0 %v4592
          %5684 = vmatpush2.bf16.msra.mxu0 %v4591
          %5685 = vmatprep.subr.bf16.mxu0 %v4584
          %5686 = vmatpush2.bf16.msra.mxu0 %v4583
          %5687 = vmatprep.subr.bf16.mxu0 %v4576
          %5688 = vmatpush2.bf16.msra.mxu0 %v4575
          %5689 = vmatprep.subr.bf16.mxu0 %v4568
          %5690 = vmatpush2.bf16.msra.mxu0 %v4567
          %5691 = vmatprep.subr.bf16.mxu0 %v4560
          %5692 = vmatpush2.bf16.msra.mxu0 %v4559
          %5693 = vmatprep.subr.bf16.mxu0 %v4552
          %5694 = vmatpush2.bf16.msra.mxu0 %v4551
          %5695 = vmatprep.subr.bf16.mxu0 %v4544
          %5696 = vmatpush2.bf16.msra.mxu0 %v4543
          %5697 = vmatprep.mubr.bf16.mxu0 %v2380
          %5698 = vmatmul.mubr.bf16.gmra.mxu0 %v2379
          %v5699 = vpop.f32.mrf.mxu0
          %v5700 = vadd.f32 %v2912, %v5699
          %v5701 = vpop.f32.mrf.mxu0
          %v5702 = vadd.f32 %v2916, %v5701
          %v5703 = vpop.f32.mrf.mxu0
          %v5704 = vpop.f32.mrf.mxu0
          %5705 = vdwg.mxu0
          %5706 = vmatprep.subr.bf16.mxu0 %v4664
          %5707 = vmatpush1.bf16.msra.mxu0 %v4663
          %5708 = vmatprep.subr.bf16.mxu0 %v4656
          %5709 = vmatpush1.bf16.msra.mxu0 %v4655
          %5710 = vmatprep.subr.bf16.mxu0 %v4648
          %5711 = vmatpush1.bf16.msra.mxu0 %v4647
          %5712 = vmatprep.subr.bf16.mxu0 %v4640
          %5713 = vmatpush1.bf16.msra.mxu0 %v4639
          %5714 = vmatprep.subr.bf16.mxu0 %v4632
          %5715 = vmatpush1.bf16.msra.mxu0 %v4631
          %5716 = vmatprep.subr.bf16.mxu0 %v4624
          %5717 = vmatpush1.bf16.msra.mxu0 %v4623
          %5718 = vmatprep.subr.bf16.mxu0 %v4616
          %5719 = vmatpush1.bf16.msra.mxu0 %v4615
          %5720 = vmatprep.subr.bf16.mxu0 %v4608
          %5721 = vmatpush1.bf16.msra.mxu0 %v4607
          %5722 = vmatprep.subr.bf16.mxu0 %v4728
          %5723 = vmatpush2.bf16.msra.mxu0 %v4727
          %5724 = vmatprep.subr.bf16.mxu0 %v4720
          %5725 = vmatpush2.bf16.msra.mxu0 %v4719
          %5726 = vmatprep.subr.bf16.mxu0 %v4712
          %5727 = vmatpush2.bf16.msra.mxu0 %v4711
          %5728 = vmatprep.subr.bf16.mxu0 %v4704
          %5729 = vmatpush2.bf16.msra.mxu0 %v4703
          %5730 = vmatprep.subr.bf16.mxu0 %v4696
          %5731 = vmatpush2.bf16.msra.mxu0 %v4695
          %5732 = vmatprep.subr.bf16.mxu0 %v4688
          %5733 = vmatpush2.bf16.msra.mxu0 %v4687
          %5734 = vmatprep.subr.bf16.mxu0 %v4680
          %5735 = vmatpush2.bf16.msra.mxu0 %v4679
          %5736 = vmatprep.subr.bf16.mxu0 %v4672
          %5737 = vmatpush2.bf16.msra.mxu0 %v4671
          %5738 = vmatprep.mubr.bf16.mxu0 %v2382
          %5739 = vmatmul.mubr.bf16.gmra.mxu0 %v2381
          %v5740 = vpop.f32.mrf.mxu0
          %v5741 = vadd.f32 %v5700, %v5740
          %v5742 = vpop.f32.mrf.mxu0
          %v5743 = vadd.f32 %v5702, %v5742
          %v5744 = vpop.f32.mrf.mxu0
          %v5745 = vpop.f32.mrf.mxu0
          %5746 = vdwg.mxu0
          %5747 = vmatprep.subr.bf16.mxu0 %v4792
          %5748 = vmatpush1.bf16.msra.mxu0 %v4791
          %5749 = vmatprep.subr.bf16.mxu0 %v4784
          %5750 = vmatpush1.bf16.msra.mxu0 %v4783
          %5751 = vmatprep.subr.bf16.mxu0 %v4776
          %5752 = vmatpush1.bf16.msra.mxu0 %v4775
          %5753 = vmatprep.subr.bf16.mxu0 %v4768
          %5754 = vmatpush1.bf16.msra.mxu0 %v4767
          %5755 = vmatprep.subr.bf16.mxu0 %v4760
          %5756 = vmatpush1.bf16.msra.mxu0 %v4759
          %5757 = vmatprep.subr.bf16.mxu0 %v4752
          %5758 = vmatpush1.bf16.msra.mxu0 %v4751
          %5759 = vmatprep.subr.bf16.mxu0 %v4744
          %5760 = vmatpush1.bf16.msra.mxu0 %v4743
          %5761 = vmatprep.subr.bf16.mxu0 %v4736
          %5762 = vmatpush1.bf16.msra.mxu0 %v4735
          %5763 = vmatprep.subr.bf16.mxu0 %v4856
          %5764 = vmatpush2.bf16.msra.mxu0 %v4855
          %5765 = vmatprep.subr.bf16.mxu0 %v4848
          %5766 = vmatpush2.bf16.msra.mxu0 %v4847
          %5767 = vmatprep.subr.bf16.mxu0 %v4840
          %5768 = vmatpush2.bf16.msra.mxu0 %v4839
          %5769 = vmatprep.subr.bf16.mxu0 %v4832
          %5770 = vmatpush2.bf16.msra.mxu0 %v4831
          %5771 = vmatprep.subr.bf16.mxu0 %v4824
          %5772 = vmatpush2.bf16.msra.mxu0 %v4823
          %5773 = vmatprep.subr.bf16.mxu0 %v4816
          %5774 = vmatpush2.bf16.msra.mxu0 %v4815
          %5775 = vmatprep.subr.bf16.mxu0 %v4808
          %5776 = vmatpush2.bf16.msra.mxu0 %v4807
          %5777 = vmatprep.subr.bf16.mxu0 %v4800
          %5778 = vmatpush2.bf16.msra.mxu0 %v4799
          %5779 = vmatprep.mubr.bf16.mxu0 %v2384
          %5780 = vmatmul.mubr.bf16.gmra.mxu0 %v2383
          %v5781 = vpop.f32.mrf.mxu0
          %v5782 = vadd.f32 %v5741, %v5781
          %v5783 = vpop.f32.mrf.mxu0
          %v5784 = vadd.f32 %v5743, %v5783
          %v5785 = vpop.f32.mrf.mxu0
          %v5786 = vpop.f32.mrf.mxu0
          %5787 = vdwg.mxu0
          %5788 = vmatprep.subr.bf16.mxu0 %v4920
          %5789 = vmatpush1.bf16.msra.mxu0 %v4919
          %5790 = vmatprep.subr.bf16.mxu0 %v4912
          %5791 = vmatpush1.bf16.msra.mxu0 %v4911
          %5792 = vmatprep.subr.bf16.mxu0 %v4904
          %5793 = vmatpush1.bf16.msra.mxu0 %v4903
          %5794 = vmatprep.subr.bf16.mxu0 %v4896
          %5795 = vmatpush1.bf16.msra.mxu0 %v4895
          %5796 = vmatprep.subr.bf16.mxu0 %v4888
          %5797 = vmatpush1.bf16.msra.mxu0 %v4887
          %5798 = vmatprep.subr.bf16.mxu0 %v4880
          %5799 = vmatpush1.bf16.msra.mxu0 %v4879
          %5800 = vmatprep.subr.bf16.mxu0 %v4872
          %5801 = vmatpush1.bf16.msra.mxu0 %v4871
          %5802 = vmatprep.subr.bf16.mxu0 %v4864
          %5803 = vmatpush1.bf16.msra.mxu0 %v4863
          %5804 = vmatprep.subr.bf16.mxu0 %v4984
          %5805 = vmatpush2.bf16.msra.mxu0 %v4983
          %5806 = vmatprep.subr.bf16.mxu0 %v4976
          %5807 = vmatpush2.bf16.msra.mxu0 %v4975
          %5808 = vmatprep.subr.bf16.mxu0 %v4968
          %5809 = vmatpush2.bf16.msra.mxu0 %v4967
          %5810 = vmatprep.subr.bf16.mxu0 %v4960
          %5811 = vmatpush2.bf16.msra.mxu0 %v4959
          %5812 = vmatprep.subr.bf16.mxu0 %v4952
          %5813 = vmatpush2.bf16.msra.mxu0 %v4951
          %5814 = vmatprep.subr.bf16.mxu0 %v4944
          %5815 = vmatpush2.bf16.msra.mxu0 %v4943
          %5816 = vmatprep.subr.bf16.mxu0 %v4936
          %5817 = vmatpush2.bf16.msra.mxu0 %v4935
          %5818 = vmatprep.subr.bf16.mxu0 %v4928
          %5819 = vmatpush2.bf16.msra.mxu0 %v4927
          %5820 = vmatprep.mubr.bf16.mxu0 %v2386
          %5821 = vmatmul.mubr.bf16.gmra.mxu0 %v2385
          %v5822 = vpop.f32.mrf.mxu0
          %v5823 = vadd.f32 %v5782, %v5822
          %v5824 = vpop.f32.mrf.mxu0
          %v5825 = vadd.f32 %v5784, %v5824
          %v5826 = vpop.f32.mrf.mxu0
          %v5827 = vpop.f32.mrf.mxu0
          %5828 = vdwg.mxu0
          %5829 = vmatprep.subr.bf16.mxu0 %v4538
          %5830 = vmatpush1.bf16.msra.mxu0 %v4537
          %5831 = vmatprep.subr.bf16.mxu0 %v4530
          %5832 = vmatpush1.bf16.msra.mxu0 %v4529
          %5833 = vmatprep.subr.bf16.mxu0 %v4522
          %5834 = vmatpush1.bf16.msra.mxu0 %v4521
          %5835 = vmatprep.subr.bf16.mxu0 %v4514
          %5836 = vmatpush1.bf16.msra.mxu0 %v4513
          %5837 = vmatprep.subr.bf16.mxu0 %v4506
          %5838 = vmatpush1.bf16.msra.mxu0 %v4505
          %5839 = vmatprep.subr.bf16.mxu0 %v4498
          %5840 = vmatpush1.bf16.msra.mxu0 %v4497
          %5841 = vmatprep.subr.bf16.mxu0 %v4490
          %5842 = vmatpush1.bf16.msra.mxu0 %v4489
          %5843 = vmatprep.subr.bf16.mxu0 %v4482
          %5844 = vmatpush1.bf16.msra.mxu0 %v4481
          %5845 = vmatprep.subr.bf16.mxu0 %v4602
          %5846 = vmatpush2.bf16.msra.mxu0 %v4601
          %5847 = vmatprep.subr.bf16.mxu0 %v4594
          %5848 = vmatpush2.bf16.msra.mxu0 %v4593
          %5849 = vmatprep.subr.bf16.mxu0 %v4586
          %5850 = vmatpush2.bf16.msra.mxu0 %v4585
          %5851 = vmatprep.subr.bf16.mxu0 %v4578
          %5852 = vmatpush2.bf16.msra.mxu0 %v4577
          %5853 = vmatprep.subr.bf16.mxu0 %v4570
          %5854 = vmatpush2.bf16.msra.mxu0 %v4569
          %5855 = vmatprep.subr.bf16.mxu0 %v4562
          %5856 = vmatpush2.bf16.msra.mxu0 %v4561
          %5857 = vmatprep.subr.bf16.mxu0 %v4554
          %5858 = vmatpush2.bf16.msra.mxu0 %v4553
          %5859 = vmatprep.subr.bf16.mxu0 %v4546
          %5860 = vmatpush2.bf16.msra.mxu0 %v4545
          %5861 = vmatprep.mubr.bf16.mxu0 %v2380
          %5862 = vmatmul.mubr.bf16.gmra.mxu0 %v2379
          %v5863 = vpop.f32.mrf.mxu0
          %v5864 = vadd.f32 %v2920, %v5863
          %v5865 = vpop.f32.mrf.mxu0
          %v5866 = vadd.f32 %v2924, %v5865
          %v5867 = vpop.f32.mrf.mxu0
          %v5868 = vpop.f32.mrf.mxu0
          %5869 = vdwg.mxu0
          %5870 = vmatprep.subr.bf16.mxu0 %v4666
          %5871 = vmatpush1.bf16.msra.mxu0 %v4665
          %5872 = vmatprep.subr.bf16.mxu0 %v4658
          %5873 = vmatpush1.bf16.msra.mxu0 %v4657
          %5874 = vmatprep.subr.bf16.mxu0 %v4650
          %5875 = vmatpush1.bf16.msra.mxu0 %v4649
          %5876 = vmatprep.subr.bf16.mxu0 %v4642
          %5877 = vmatpush1.bf16.msra.mxu0 %v4641
          %5878 = vmatprep.subr.bf16.mxu0 %v4634
          %5879 = vmatpush1.bf16.msra.mxu0 %v4633
          %5880 = vmatprep.subr.bf16.mxu0 %v4626
          %5881 = vmatpush1.bf16.msra.mxu0 %v4625
          %5882 = vmatprep.subr.bf16.mxu0 %v4618
          %5883 = vmatpush1.bf16.msra.mxu0 %v4617
          %5884 = vmatprep.subr.bf16.mxu0 %v4610
          %5885 = vmatpush1.bf16.msra.mxu0 %v4609
          %5886 = vmatprep.subr.bf16.mxu0 %v4730
          %5887 = vmatpush2.bf16.msra.mxu0 %v4729
          %5888 = vmatprep.subr.bf16.mxu0 %v4722
          %5889 = vmatpush2.bf16.msra.mxu0 %v4721
          %5890 = vmatprep.subr.bf16.mxu0 %v4714
          %5891 = vmatpush2.bf16.msra.mxu0 %v4713
          %5892 = vmatprep.subr.bf16.mxu0 %v4706
          %5893 = vmatpush2.bf16.msra.mxu0 %v4705
          %5894 = vmatprep.subr.bf16.mxu0 %v4698
          %5895 = vmatpush2.bf16.msra.mxu0 %v4697
          %5896 = vmatprep.subr.bf16.mxu0 %v4690
          %5897 = vmatpush2.bf16.msra.mxu0 %v4689
          %5898 = vmatprep.subr.bf16.mxu0 %v4682
          %5899 = vmatpush2.bf16.msra.mxu0 %v4681
          %5900 = vmatprep.subr.bf16.mxu0 %v4674
          %5901 = vmatpush2.bf16.msra.mxu0 %v4673
          %5902 = vmatprep.mubr.bf16.mxu0 %v2382
          %5903 = vmatmul.mubr.bf16.gmra.mxu0 %v2381
          %v5904 = vpop.f32.mrf.mxu0
          %v5905 = vadd.f32 %v5864, %v5904
          %v5906 = vpop.f32.mrf.mxu0
          %v5907 = vadd.f32 %v5866, %v5906
          %v5908 = vpop.f32.mrf.mxu0
          %v5909 = vpop.f32.mrf.mxu0
          %5910 = vdwg.mxu0
          %5911 = vmatprep.subr.bf16.mxu0 %v4794
          %5912 = vmatpush1.bf16.msra.mxu0 %v4793
          %5913 = vmatprep.subr.bf16.mxu0 %v4786
          %5914 = vmatpush1.bf16.msra.mxu0 %v4785
          %5915 = vmatprep.subr.bf16.mxu0 %v4778
          %5916 = vmatpush1.bf16.msra.mxu0 %v4777
          %5917 = vmatprep.subr.bf16.mxu0 %v4770
          %5918 = vmatpush1.bf16.msra.mxu0 %v4769
          %5919 = vmatprep.subr.bf16.mxu0 %v4762
          %5920 = vmatpush1.bf16.msra.mxu0 %v4761
          %5921 = vmatprep.subr.bf16.mxu0 %v4754
          %5922 = vmatpush1.bf16.msra.mxu0 %v4753
          %5923 = vmatprep.subr.bf16.mxu0 %v4746
          %5924 = vmatpush1.bf16.msra.mxu0 %v4745
          %5925 = vmatprep.subr.bf16.mxu0 %v4738
          %5926 = vmatpush1.bf16.msra.mxu0 %v4737
          %5927 = vmatprep.subr.bf16.mxu0 %v4858
          %5928 = vmatpush2.bf16.msra.mxu0 %v4857
          %5929 = vmatprep.subr.bf16.mxu0 %v4850
          %5930 = vmatpush2.bf16.msra.mxu0 %v4849
          %5931 = vmatprep.subr.bf16.mxu0 %v4842
          %5932 = vmatpush2.bf16.msra.mxu0 %v4841
          %5933 = vmatprep.subr.bf16.mxu0 %v4834
          %5934 = vmatpush2.bf16.msra.mxu0 %v4833
          %5935 = vmatprep.subr.bf16.mxu0 %v4826
          %5936 = vmatpush2.bf16.msra.mxu0 %v4825
          %5937 = vmatprep.subr.bf16.mxu0 %v4818
          %5938 = vmatpush2.bf16.msra.mxu0 %v4817
          %5939 = vmatprep.subr.bf16.mxu0 %v4810
          %5940 = vmatpush2.bf16.msra.mxu0 %v4809
          %5941 = vmatprep.subr.bf16.mxu0 %v4802
          %5942 = vmatpush2.bf16.msra.mxu0 %v4801
          %5943 = vmatprep.mubr.bf16.mxu0 %v2384
          %5944 = vmatmul.mubr.bf16.gmra.mxu0 %v2383
          %v5945 = vpop.f32.mrf.mxu0
          %v5946 = vadd.f32 %v5905, %v5945
          %v5947 = vpop.f32.mrf.mxu0
          %v5948 = vadd.f32 %v5907, %v5947
          %v5949 = vpop.f32.mrf.mxu0
          %v5950 = vpop.f32.mrf.mxu0
          %5951 = vdwg.mxu0
          %5952 = vmatprep.subr.bf16.mxu0 %v4922
          %5953 = vmatpush1.bf16.msra.mxu0 %v4921
          %5954 = vmatprep.subr.bf16.mxu0 %v4914
          %5955 = vmatpush1.bf16.msra.mxu0 %v4913
          %5956 = vmatprep.subr.bf16.mxu0 %v4906
          %5957 = vmatpush1.bf16.msra.mxu0 %v4905
          %5958 = vmatprep.subr.bf16.mxu0 %v4898
          %5959 = vmatpush1.bf16.msra.mxu0 %v4897
          %5960 = vmatprep.subr.bf16.mxu0 %v4890
          %5961 = vmatpush1.bf16.msra.mxu0 %v4889
          %5962 = vmatprep.subr.bf16.mxu0 %v4882
          %5963 = vmatpush1.bf16.msra.mxu0 %v4881
          %5964 = vmatprep.subr.bf16.mxu0 %v4874
          %5965 = vmatpush1.bf16.msra.mxu0 %v4873
          %5966 = vmatprep.subr.bf16.mxu0 %v4866
          %5967 = vmatpush1.bf16.msra.mxu0 %v4865
          %5968 = vmatprep.subr.bf16.mxu0 %v4986
          %5969 = vmatpush2.bf16.msra.mxu0 %v4985
          %5970 = vmatprep.subr.bf16.mxu0 %v4978
          %5971 = vmatpush2.bf16.msra.mxu0 %v4977
          %5972 = vmatprep.subr.bf16.mxu0 %v4970
          %5973 = vmatpush2.bf16.msra.mxu0 %v4969
          %5974 = vmatprep.subr.bf16.mxu0 %v4962
          %5975 = vmatpush2.bf16.msra.mxu0 %v4961
          %5976 = vmatprep.subr.bf16.mxu0 %v4954
          %5977 = vmatpush2.bf16.msra.mxu0 %v4953
          %5978 = vmatprep.subr.bf16.mxu0 %v4946
          %5979 = vmatpush2.bf16.msra.mxu0 %v4945
          %5980 = vmatprep.subr.bf16.mxu0 %v4938
          %5981 = vmatpush2.bf16.msra.mxu0 %v4937
          %5982 = vmatprep.subr.bf16.mxu0 %v4930
          %5983 = vmatpush2.bf16.msra.mxu0 %v4929
          %5984 = vmatprep.mubr.bf16.mxu0 %v2386
          %5985 = vmatmul.mubr.bf16.gmra.mxu0 %v2385
          %v5986 = vpop.f32.mrf.mxu0
          %v5987 = vadd.f32 %v5946, %v5986
          %v5988 = vpop.f32.mrf.mxu0
          %v5989 = vadd.f32 %v5948, %v5988
          %v5990 = vpop.f32.mrf.mxu0
          %v5991 = vpop.f32.mrf.mxu0
          %5992 = vdwg.mxu0
          %5993 = vmatprep.subr.bf16.mxu0 %v4540
          %5994 = vmatpush1.bf16.msra.mxu0 %v4539
          %5995 = vmatprep.subr.bf16.mxu0 %v4532
          %5996 = vmatpush1.bf16.msra.mxu0 %v4531
          %5997 = vmatprep.subr.bf16.mxu0 %v4524
          %5998 = vmatpush1.bf16.msra.mxu0 %v4523
          %5999 = vmatprep.subr.bf16.mxu0 %v4516
          %6000 = vmatpush1.bf16.msra.mxu0 %v4515
          %6001 = vmatprep.subr.bf16.mxu0 %v4508
          %6002 = vmatpush1.bf16.msra.mxu0 %v4507
          %6003 = vmatprep.subr.bf16.mxu0 %v4500
          %6004 = vmatpush1.bf16.msra.mxu0 %v4499
          %6005 = vmatprep.subr.bf16.mxu0 %v4492
          %6006 = vmatpush1.bf16.msra.mxu0 %v4491
          %6007 = vmatprep.subr.bf16.mxu0 %v4484
          %6008 = vmatpush1.bf16.msra.mxu0 %v4483
          %6009 = vmatprep.subr.bf16.mxu0 %v4604
          %6010 = vmatpush2.bf16.msra.mxu0 %v4603
          %6011 = vmatprep.subr.bf16.mxu0 %v4596
          %6012 = vmatpush2.bf16.msra.mxu0 %v4595
          %6013 = vmatprep.subr.bf16.mxu0 %v4588
          %6014 = vmatpush2.bf16.msra.mxu0 %v4587
          %6015 = vmatprep.subr.bf16.mxu0 %v4580
          %6016 = vmatpush2.bf16.msra.mxu0 %v4579
          %6017 = vmatprep.subr.bf16.mxu0 %v4572
          %6018 = vmatpush2.bf16.msra.mxu0 %v4571
          %6019 = vmatprep.subr.bf16.mxu0 %v4564
          %6020 = vmatpush2.bf16.msra.mxu0 %v4563
          %6021 = vmatprep.subr.bf16.mxu0 %v4556
          %6022 = vmatpush2.bf16.msra.mxu0 %v4555
          %6023 = vmatprep.subr.bf16.mxu0 %v4548
          %6024 = vmatpush2.bf16.msra.mxu0 %v4547
          %6025 = vmatprep.mubr.bf16.mxu0 %v2380
          %6026 = vmatmul.mubr.bf16.gmra.mxu0 %v2379
          %v6027 = vpop.f32.mrf.mxu0
          %v6028 = vadd.f32 %v2928, %v6027
          %v6029 = vpop.f32.mrf.mxu0
          %v6030 = vadd.f32 %v2932, %v6029
          %v6031 = vpop.f32.mrf.mxu0
          %v6032 = vpop.f32.mrf.mxu0
          %6033 = vdwg.mxu0
          %6034 = vmatprep.subr.bf16.mxu0 %v4668
          %6035 = vmatpush1.bf16.msra.mxu0 %v4667
          %6036 = vmatprep.subr.bf16.mxu0 %v4660
          %6037 = vmatpush1.bf16.msra.mxu0 %v4659
          %6038 = vmatprep.subr.bf16.mxu0 %v4652
          %6039 = vmatpush1.bf16.msra.mxu0 %v4651
          %6040 = vmatprep.subr.bf16.mxu0 %v4644
          %6041 = vmatpush1.bf16.msra.mxu0 %v4643
          %6042 = vmatprep.subr.bf16.mxu0 %v4636
          %6043 = vmatpush1.bf16.msra.mxu0 %v4635
          %6044 = vmatprep.subr.bf16.mxu0 %v4628
          %6045 = vmatpush1.bf16.msra.mxu0 %v4627
          %6046 = vmatprep.subr.bf16.mxu0 %v4620
          %6047 = vmatpush1.bf16.msra.mxu0 %v4619
          %6048 = vmatprep.subr.bf16.mxu0 %v4612
          %6049 = vmatpush1.bf16.msra.mxu0 %v4611
          %6050 = vmatprep.subr.bf16.mxu0 %v4732
          %6051 = vmatpush2.bf16.msra.mxu0 %v4731
          %6052 = vmatprep.subr.bf16.mxu0 %v4724
          %6053 = vmatpush2.bf16.msra.mxu0 %v4723
          %6054 = vmatprep.subr.bf16.mxu0 %v4716
          %6055 = vmatpush2.bf16.msra.mxu0 %v4715
          %6056 = vmatprep.subr.bf16.mxu0 %v4708
          %6057 = vmatpush2.bf16.msra.mxu0 %v4707
          %6058 = vmatprep.subr.bf16.mxu0 %v4700
          %6059 = vmatpush2.bf16.msra.mxu0 %v4699
          %6060 = vmatprep.subr.bf16.mxu0 %v4692
          %6061 = vmatpush2.bf16.msra.mxu0 %v4691
          %6062 = vmatprep.subr.bf16.mxu0 %v4684
          %6063 = vmatpush2.bf16.msra.mxu0 %v4683
          %6064 = vmatprep.subr.bf16.mxu0 %v4676
          %6065 = vmatpush2.bf16.msra.mxu0 %v4675
          %6066 = vmatprep.mubr.bf16.mxu0 %v2382
          %6067 = vmatmul.mubr.bf16.gmra.mxu0 %v2381
          %v6068 = vpop.f32.mrf.mxu0
          %v6069 = vadd.f32 %v6028, %v6068
          %v6070 = vpop.f32.mrf.mxu0
          %v6071 = vadd.f32 %v6030, %v6070
          %v6072 = vpop.f32.mrf.mxu0
          %v6073 = vpop.f32.mrf.mxu0
          %6074 = vdwg.mxu0
          %6075 = vmatprep.subr.bf16.mxu0 %v4796
          %6076 = vmatpush1.bf16.msra.mxu0 %v4795
          %6077 = vmatprep.subr.bf16.mxu0 %v4788
          %6078 = vmatpush1.bf16.msra.mxu0 %v4787
          %6079 = vmatprep.subr.bf16.mxu0 %v4780
          %6080 = vmatpush1.bf16.msra.mxu0 %v4779
          %6081 = vmatprep.subr.bf16.mxu0 %v4772
          %6082 = vmatpush1.bf16.msra.mxu0 %v4771
          %6083 = vmatprep.subr.bf16.mxu0 %v4764
          %6084 = vmatpush1.bf16.msra.mxu0 %v4763
          %6085 = vmatprep.subr.bf16.mxu0 %v4756
          %6086 = vmatpush1.bf16.msra.mxu0 %v4755
          %6087 = vmatprep.subr.bf16.mxu0 %v4748
          %6088 = vmatpush1.bf16.msra.mxu0 %v4747
          %6089 = vmatprep.subr.bf16.mxu0 %v4740
          %6090 = vmatpush1.bf16.msra.mxu0 %v4739
          %6091 = vmatprep.subr.bf16.mxu0 %v4860
          %6092 = vmatpush2.bf16.msra.mxu0 %v4859
          %6093 = vmatprep.subr.bf16.mxu0 %v4852
          %6094 = vmatpush2.bf16.msra.mxu0 %v4851
          %6095 = vmatprep.subr.bf16.mxu0 %v4844
          %6096 = vmatpush2.bf16.msra.mxu0 %v4843
          %6097 = vmatprep.subr.bf16.mxu0 %v4836
          %6098 = vmatpush2.bf16.msra.mxu0 %v4835
          %6099 = vmatprep.subr.bf16.mxu0 %v4828
          %6100 = vmatpush2.bf16.msra.mxu0 %v4827
          %6101 = vmatprep.subr.bf16.mxu0 %v4820
          %6102 = vmatpush2.bf16.msra.mxu0 %v4819
          %6103 = vmatprep.subr.bf16.mxu0 %v4812
          %6104 = vmatpush2.bf16.msra.mxu0 %v4811
          %6105 = vmatprep.subr.bf16.mxu0 %v4804
          %6106 = vmatpush2.bf16.msra.mxu0 %v4803
          %6107 = vmatprep.mubr.bf16.mxu0 %v2384
          %6108 = vmatmul.mubr.bf16.gmra.mxu0 %v2383
          %v6109 = vpop.f32.mrf.mxu0
          %v6110 = vadd.f32 %v6069, %v6109
          %v6111 = vpop.f32.mrf.mxu0
          %v6112 = vadd.f32 %v6071, %v6111
          %v6113 = vpop.f32.mrf.mxu0
          %v6114 = vpop.f32.mrf.mxu0
          %6115 = vdwg.mxu0
          %6116 = vmatprep.subr.bf16.mxu0 %v4924
          %6117 = vmatpush1.bf16.msra.mxu0 %v4923
          %6118 = vmatprep.subr.bf16.mxu0 %v4916
          %6119 = vmatpush1.bf16.msra.mxu0 %v4915
          %6120 = vmatprep.subr.bf16.mxu0 %v4908
          %6121 = vmatpush1.bf16.msra.mxu0 %v4907
          %6122 = vmatprep.subr.bf16.mxu0 %v4900
          %6123 = vmatpush1.bf16.msra.mxu0 %v4899
          %6124 = vmatprep.subr.bf16.mxu0 %v4892
          %6125 = vmatpush1.bf16.msra.mxu0 %v4891
          %6126 = vmatprep.subr.bf16.mxu0 %v4884
          %6127 = vmatpush1.bf16.msra.mxu0 %v4883
          %6128 = vmatprep.subr.bf16.mxu0 %v4876
          %6129 = vmatpush1.bf16.msra.mxu0 %v4875
          %6130 = vmatprep.subr.bf16.mxu0 %v4868
          %6131 = vmatpush1.bf16.msra.mxu0 %v4867
          %6132 = vmatprep.subr.bf16.mxu0 %v4988
          %6133 = vmatpush2.bf16.msra.mxu0 %v4987
          %6134 = vmatprep.subr.bf16.mxu0 %v4980
          %6135 = vmatpush2.bf16.msra.mxu0 %v4979
          %6136 = vmatprep.subr.bf16.mxu0 %v4972
          %6137 = vmatpush2.bf16.msra.mxu0 %v4971
          %6138 = vmatprep.subr.bf16.mxu0 %v4964
          %6139 = vmatpush2.bf16.msra.mxu0 %v4963
          %6140 = vmatprep.subr.bf16.mxu0 %v4956
          %6141 = vmatpush2.bf16.msra.mxu0 %v4955
          %6142 = vmatprep.subr.bf16.mxu0 %v4948
          %6143 = vmatpush2.bf16.msra.mxu0 %v4947
          %6144 = vmatprep.subr.bf16.mxu0 %v4940
          %6145 = vmatpush2.bf16.msra.mxu0 %v4939
          %6146 = vmatprep.subr.bf16.mxu0 %v4932
          %6147 = vmatpush2.bf16.msra.mxu0 %v4931
          %6148 = vmatprep.mubr.bf16.mxu0 %v2386
          %6149 = vmatmul.mubr.bf16.gmra.mxu0 %v2385
          %v6150 = vpop.f32.mrf.mxu0
          %v6151 = vadd.f32 %v6110, %v6150
          %v6152 = vpop.f32.mrf.mxu0
          %v6153 = vadd.f32 %v6112, %v6152
          %v6154 = vpop.f32.mrf.mxu0
          %v6155 = vpop.f32.mrf.mxu0
          %6156 = vdwg.mxu0
          %v6157 = vmax.f32 %v5659, 0.0
          %v6158 = vmax.f32 %v5661, 0.0
          %v6159 = vmax.f32 %v5823, 0.0
          %v6160 = vmax.f32 %v5825, 0.0
          %v6161 = vmax.f32 %v5987, 0.0
          %v6162 = vmax.f32 %v5989, 0.0
          %v6163 = vmax.f32 %v6151, 0.0
          %v6164 = vmax.f32 %v6153, 0.0
          %v6165 = vpack.c.bf16 %v6157, %v6157
          %v6166 = vpack.c.bf16 %v6158, %v6158
          %v6167 = vpack.c.bf16 %v6159, %v6159
          %v6168 = vpack.c.bf16 %v6160, %v6160
          %v6169 = vpack.c.bf16 %v6161, %v6161
          %v6170 = vpack.c.bf16 %v6162, %v6162
          %v6171 = vpack.c.bf16 %v6163, %v6163
          %v6172 = vpack.c.bf16 %v6164, %v6164
          %v6173 = vld [vmem:[#allocation12] sm:$0xff]
          %v6174 = vld [vmem:[#allocation12 + $0x8] sm:$0xf]
          %v6175 = vld [vmem:[#allocation12 + $0xc] sm:$0xff]
          %v6176 = vld [vmem:[#allocation12 + $0x14] sm:$0xf]
          %v6177 = vld [vmem:[#allocation12 + $0x18] sm:$0xff]
          %v6178 = vld [vmem:[#allocation12 + $0x20] sm:$0xf]
          %v6179 = vld [vmem:[#allocation12 + $0x24] sm:$0xff]
          %v6180 = vld [vmem:[#allocation12 + $0x2c] sm:$0xf]
          %v6181 = vld [vmem:[#allocation12 + $0x30] sm:$0xff]
          %v6182 = vld [vmem:[#allocation12 + $0x38] sm:$0xf]
          %v6183 = vld [vmem:[#allocation12 + $0x3c] sm:$0xff]
          %v6184 = vld [vmem:[#allocation12 + $0x44] sm:$0xf]
          %v6185 = vld [vmem:[#allocation12 + $0x48] sm:$0xff]
          %v6186 = vld [vmem:[#allocation12 + $0x50] sm:$0xf]
          %v6187 = vld [vmem:[#allocation12 + $0x54] sm:$0xff]
          %v6188 = vld [vmem:[#allocation12 + $0x5c] sm:$0xf]
          %v6189 = vld [vmem:[#allocation12 + $0x60] sm:$0xff]
          %v6190 = vld [vmem:[#allocation12 + $0x68] sm:$0xf]
          %v6191 = vld [vmem:[#allocation12 + $0x6c] sm:$0xff]
          %v6192 = vld [vmem:[#allocation12 + $0x74] sm:$0xf]
          %v6193 = vld [vmem:[#allocation12 + $0x78] sm:$0xff]
          %v6194 = vld [vmem:[#allocation12 + $0x80] sm:$0xf]
          %v6195 = vld [vmem:[#allocation12 + $0x84] sm:$0xff]
          %v6196 = vld [vmem:[#allocation12 + $0x8c] sm:$0xf]
          %v6197 = vld [vmem:[#allocation12 + $0x90] sm:$0xff]
          %v6198 = vld [vmem:[#allocation12 + $0x98] sm:$0xf]
          %v6199 = vld [vmem:[#allocation12 + $0x9c] sm:$0xff]
          %v6200 = vld [vmem:[#allocation12 + $0xa4] sm:$0xf]
          %v6201 = vld [vmem:[#allocation12 + $0xa8] sm:$0xff]
          %v6202 = vld [vmem:[#allocation12 + $0xb0] sm:$0xf]
          %v6203 = vld [vmem:[#allocation12 + $0xb4] sm:$0xff]
          %v6204 = vld [vmem:[#allocation12 + $0xbc] sm:$0xf]
          %v6205 = vld [vmem:[#allocation12 + $0xc0] sm:$0xff]
          %v6206 = vld [vmem:[#allocation12 + $0xc8] sm:$0xf]
          %v6207 = vld [vmem:[#allocation12 + $0xcc] sm:$0xff]
          %v6208 = vld [vmem:[#allocation12 + $0xd4] sm:$0xf]
          %v6209 = vld [vmem:[#allocation12 + $0xd8] sm:$0xff]
          %v6210 = vld [vmem:[#allocation12 + $0xe0] sm:$0xf]
          %v6211 = vld [vmem:[#allocation12 + $0xe4] sm:$0xff]
          %v6212 = vld [vmem:[#allocation12 + $0xec] sm:$0xf]
          %v6213 = vld [vmem:[#allocation12 + $0xf0] sm:$0xff]
          %v6214 = vld [vmem:[#allocation12 + $0xf8] sm:$0xf]
          %v6215 = vld [vmem:[#allocation12 + $0xfc] sm:$0xff]
          %v6216 = vld [vmem:[#allocation12 + $0x104] sm:$0xf]
          %v6217 = vld [vmem:[#allocation12 + $0x108] sm:$0xff]
          %v6218 = vld [vmem:[#allocation12 + $0x110] sm:$0xf]
          %v6219 = vld [vmem:[#allocation12 + $0x114] sm:$0xff]
          %v6220 = vld [vmem:[#allocation12 + $0x11c] sm:$0xf]
          %v6221 = vld [vmem:[#allocation12 + $0x120] sm:$0xff]
          %v6222 = vld [vmem:[#allocation12 + $0x128] sm:$0xf]
          %v6223 = vld [vmem:[#allocation12 + $0x12c] sm:$0xff]
          %v6224 = vld [vmem:[#allocation12 + $0x134] sm:$0xf]
          %v6225 = vld [vmem:[#allocation12 + $0x138] sm:$0xff]
          %v6226 = vld [vmem:[#allocation12 + $0x140] sm:$0xf]
          %v6227 = vld [vmem:[#allocation12 + $0x144] sm:$0xff]
          %v6228 = vld [vmem:[#allocation12 + $0x14c] sm:$0xf]
          %v6229 = vld [vmem:[#allocation12 + $0x150] sm:$0xff]
          %v6230 = vld [vmem:[#allocation12 + $0x158] sm:$0xf]
          %v6231 = vld [vmem:[#allocation12 + $0x15c] sm:$0xff]
          %v6232 = vld [vmem:[#allocation12 + $0x164] sm:$0xf]
          %v6233 = vld [vmem:[#allocation12 + $0x168] sm:$0xff]
          %v6234 = vld [vmem:[#allocation12 + $0x170] sm:$0xf]
          %v6235 = vld [vmem:[#allocation12 + $0x174] sm:$0xff]
          %v6236 = vld [vmem:[#allocation12 + $0x17c] sm:$0xf]
          %v6237 = vld [vmem:[#allocation12 + $0x180] sm:$0xff]
          %v6238 = vld [vmem:[#allocation12 + $0x188] sm:$0xf]
          %v6239 = vld [vmem:[#allocation12 + $0x18c] sm:$0xff]
          %v6240 = vld [vmem:[#allocation12 + $0x194] sm:$0xf]
          %v6241 = vld [vmem:[#allocation12 + $0x198] sm:$0xff]
          %v6242 = vld [vmem:[#allocation12 + $0x1a0] sm:$0xf]
          %v6243 = vld [vmem:[#allocation12 + $0x1a4] sm:$0xff]
          %v6244 = vld [vmem:[#allocation12 + $0x1ac] sm:$0xf]
          %v6245 = vld [vmem:[#allocation12 + $0x1b0] sm:$0xff]
          %v6246 = vld [vmem:[#allocation12 + $0x1b8] sm:$0xf]
          %v6247 = vld [vmem:[#allocation12 + $0x1bc] sm:$0xff]
          %v6248 = vld [vmem:[#allocation12 + $0x1c4] sm:$0xf]
          %v6249 = vld [vmem:[#allocation12 + $0x1c8] sm:$0xff]
          %v6250 = vld [vmem:[#allocation12 + $0x1d0] sm:$0xf]
          %v6251 = vld [vmem:[#allocation12 + $0x1d4] sm:$0xff]
          %v6252 = vld [vmem:[#allocation12 + $0x1dc] sm:$0xf]
          %v6253 = vld [vmem:[#allocation12 + $0x1e0] sm:$0xff]
          %v6254 = vld [vmem:[#allocation12 + $0x1e8] sm:$0xf]
          %v6255 = vld [vmem:[#allocation12 + $0x1ec] sm:$0xff]
          %v6256 = vld [vmem:[#allocation12 + $0x1f4] sm:$0xf]
          %v6257 = vld [vmem:[#allocation12 + $0x1f8] sm:$0xff]
          %v6258 = vld [vmem:[#allocation12 + $0x200] sm:$0xf]
          %v6259 = vld [vmem:[#allocation12 + $0x204] sm:$0xff]
          %v6260 = vld [vmem:[#allocation12 + $0x20c] sm:$0xf]
          %v6261 = vld [vmem:[#allocation12 + $0x210] sm:$0xff]
          %v6262 = vld [vmem:[#allocation12 + $0x218] sm:$0xf]
          %v6263 = vld [vmem:[#allocation12 + $0x21c] sm:$0xff]
          %v6264 = vld [vmem:[#allocation12 + $0x224] sm:$0xf]
          %v6265 = vld [vmem:[#allocation12 + $0x228] sm:$0xff]
          %v6266 = vld [vmem:[#allocation12 + $0x230] sm:$0xf]
          %v6267 = vld [vmem:[#allocation12 + $0x234] sm:$0xff]
          %v6268 = vld [vmem:[#allocation12 + $0x23c] sm:$0xf]
          %v6269 = vld [vmem:[#allocation12 + $0x240] sm:$0xff]
          %v6270 = vld [vmem:[#allocation12 + $0x248] sm:$0xf]
          %v6271 = vld [vmem:[#allocation12 + $0x24c] sm:$0xff]
          %v6272 = vld [vmem:[#allocation12 + $0x254] sm:$0xf]
          %v6273 = vld [vmem:[#allocation12 + $0x258] sm:$0xff]
          %v6274 = vld [vmem:[#allocation12 + $0x260] sm:$0xf]
          %v6275 = vld [vmem:[#allocation12 + $0x264] sm:$0xff]
          %v6276 = vld [vmem:[#allocation12 + $0x26c] sm:$0xf]
          %v6277 = vld [vmem:[#allocation12 + $0x270] sm:$0xff]
          %v6278 = vld [vmem:[#allocation12 + $0x278] sm:$0xf]
          %v6279 = vld [vmem:[#allocation12 + $0x27c] sm:$0xff]
          %v6280 = vld [vmem:[#allocation12 + $0x284] sm:$0xf]
          %v6281 = vld [vmem:[#allocation12 + $0x288] sm:$0xff]
          %v6282 = vld [vmem:[#allocation12 + $0x290] sm:$0xf]
          %v6283 = vld [vmem:[#allocation12 + $0x294] sm:$0xff]
          %v6284 = vld [vmem:[#allocation12 + $0x29c] sm:$0xf]
          %v6285 = vld [vmem:[#allocation12 + $0x2a0] sm:$0xff]
          %v6286 = vld [vmem:[#allocation12 + $0x2a8] sm:$0xf]
          %v6287 = vld [vmem:[#allocation12 + $0x2ac] sm:$0xff]
          %v6288 = vld [vmem:[#allocation12 + $0x2b4] sm:$0xf]
          %v6289 = vld [vmem:[#allocation12 + $0x2b8] sm:$0xff]
          %v6290 = vld [vmem:[#allocation12 + $0x2c0] sm:$0xf]
          %v6291 = vld [vmem:[#allocation12 + $0x2c4] sm:$0xff]
          %v6292 = vld [vmem:[#allocation12 + $0x2cc] sm:$0xf]
          %v6293 = vld [vmem:[#allocation12 + $0x2d0] sm:$0xff]
          %v6294 = vld [vmem:[#allocation12 + $0x2d8] sm:$0xf]
          %v6295 = vld [vmem:[#allocation12 + $0x2dc] sm:$0xff]
          %v6296 = vld [vmem:[#allocation12 + $0x2e4] sm:$0xf]
          %v6297 = vld [vmem:[#allocation12 + $0x2e8] sm:$0xff]
          %v6298 = vld [vmem:[#allocation12 + $0x2f0] sm:$0xf]
          %v6299 = vld [vmem:[#allocation12 + $0x2f4] sm:$0xff]
          %v6300 = vld [vmem:[#allocation12 + $0x2fc] sm:$0xf]
          %v6301 = vld [vmem:[#allocation12 + $0x300] sm:$0xff]
          %v6302 = vld [vmem:[#allocation12 + $0x308] sm:$0xf]
          %v6303 = vld [vmem:[#allocation12 + $0x30c] sm:$0xff]
          %v6304 = vld [vmem:[#allocation12 + $0x314] sm:$0xf]
          %v6305 = vld [vmem:[#allocation12 + $0x318] sm:$0xff]
          %v6306 = vld [vmem:[#allocation12 + $0x320] sm:$0xf]
          %v6307 = vld [vmem:[#allocation12 + $0x324] sm:$0xff]
          %v6308 = vld [vmem:[#allocation12 + $0x32c] sm:$0xf]
          %v6309 = vld [vmem:[#allocation12 + $0x330] sm:$0xff]
          %v6310 = vld [vmem:[#allocation12 + $0x338] sm:$0xf]
          %v6311 = vld [vmem:[#allocation12 + $0x33c] sm:$0xff]
          %v6312 = vld [vmem:[#allocation12 + $0x344] sm:$0xf]
          %v6313 = vld [vmem:[#allocation12 + $0x348] sm:$0xff]
          %v6314 = vld [vmem:[#allocation12 + $0x350] sm:$0xf]
          %v6315 = vld [vmem:[#allocation12 + $0x354] sm:$0xff]
          %v6316 = vld [vmem:[#allocation12 + $0x35c] sm:$0xf]
          %v6317 = vld [vmem:[#allocation12 + $0x360] sm:$0xff]
          %v6318 = vld [vmem:[#allocation12 + $0x368] sm:$0xf]
          %v6319 = vld [vmem:[#allocation12 + $0x36c] sm:$0xff]
          %v6320 = vld [vmem:[#allocation12 + $0x374] sm:$0xf]
          %v6321 = vld [vmem:[#allocation12 + $0x378] sm:$0xff]
          %v6322 = vld [vmem:[#allocation12 + $0x380] sm:$0xf]
          %v6323 = vld [vmem:[#allocation12 + $0x384] sm:$0xff]
          %v6324 = vld [vmem:[#allocation12 + $0x38c] sm:$0xf]
          %v6325 = vld [vmem:[#allocation12 + $0x390] sm:$0xff]
          %v6326 = vld [vmem:[#allocation12 + $0x398] sm:$0xf]
          %v6327 = vld [vmem:[#allocation12 + $0x39c] sm:$0xff]
          %v6328 = vld [vmem:[#allocation12 + $0x3a4] sm:$0xf]
          %v6329 = vld [vmem:[#allocation12 + $0x3a8] sm:$0xff]
          %v6330 = vld [vmem:[#allocation12 + $0x3b0] sm:$0xf]
          %v6331 = vld [vmem:[#allocation12 + $0x3b4] sm:$0xff]
          %v6332 = vld [vmem:[#allocation12 + $0x3bc] sm:$0xf]
          %v6333 = vld [vmem:[#allocation12 + $0x3c0] sm:$0xff]
          %v6334 = vld [vmem:[#allocation12 + $0x3c8] sm:$0xf]
          %v6335 = vld [vmem:[#allocation12 + $0x3cc] sm:$0xff]
          %v6336 = vld [vmem:[#allocation12 + $0x3d4] sm:$0xf]
          %v6337 = vld [vmem:[#allocation12 + $0x3d8] sm:$0xff]
          %v6338 = vld [vmem:[#allocation12 + $0x3e0] sm:$0xf]
          %v6339 = vld [vmem:[#allocation12 + $0x3e4] sm:$0xff]
          %v6340 = vld [vmem:[#allocation12 + $0x3ec] sm:$0xf]
          %v6341 = vld [vmem:[#allocation12 + $0x3f0] sm:$0xff]
          %v6342 = vld [vmem:[#allocation12 + $0x3f8] sm:$0xf]
          %v6343 = vld [vmem:[#allocation12 + $0x3fc] sm:$0xff]
          %v6344 = vld [vmem:[#allocation12 + $0x404] sm:$0xf]
          %v6345 = vld [vmem:[#allocation12 + $0x408] sm:$0xff]
          %v6346 = vld [vmem:[#allocation12 + $0x410] sm:$0xf]
          %v6347 = vld [vmem:[#allocation12 + $0x414] sm:$0xff]
          %v6348 = vld [vmem:[#allocation12 + $0x41c] sm:$0xf]
          %v6349 = vld [vmem:[#allocation12 + $0x420] sm:$0xff]
          %v6350 = vld [vmem:[#allocation12 + $0x428] sm:$0xf]
          %v6351 = vld [vmem:[#allocation12 + $0x42c] sm:$0xff]
          %v6352 = vld [vmem:[#allocation12 + $0x434] sm:$0xf]
          %v6353 = vld [vmem:[#allocation12 + $0x438] sm:$0xff]
          %v6354 = vld [vmem:[#allocation12 + $0x440] sm:$0xf]
          %v6355 = vld [vmem:[#allocation12 + $0x444] sm:$0xff]
          %v6356 = vld [vmem:[#allocation12 + $0x44c] sm:$0xf]
          %v6357 = vld [vmem:[#allocation12 + $0x450] sm:$0xff]
          %v6358 = vld [vmem:[#allocation12 + $0x458] sm:$0xf]
          %v6359 = vld [vmem:[#allocation12 + $0x45c] sm:$0xff]
          %v6360 = vld [vmem:[#allocation12 + $0x464] sm:$0xf]
          %v6361 = vld [vmem:[#allocation12 + $0x468] sm:$0xff]
          %v6362 = vld [vmem:[#allocation12 + $0x470] sm:$0xf]
          %v6363 = vld [vmem:[#allocation12 + $0x474] sm:$0xff]
          %v6364 = vld [vmem:[#allocation12 + $0x47c] sm:$0xf]
          %v6365 = vld [vmem:[#allocation12 + $0x480] sm:$0xff]
          %v6366 = vld [vmem:[#allocation12 + $0x488] sm:$0xf]
          %v6367 = vld [vmem:[#allocation12 + $0x48c] sm:$0xff]
          %v6368 = vld [vmem:[#allocation12 + $0x494] sm:$0xf]
          %v6369 = vld [vmem:[#allocation12 + $0x498] sm:$0xff]
          %v6370 = vld [vmem:[#allocation12 + $0x4a0] sm:$0xf]
          %v6371 = vld [vmem:[#allocation12 + $0x4a4] sm:$0xff]
          %v6372 = vld [vmem:[#allocation12 + $0x4ac] sm:$0xf]
          %v6373 = vld [vmem:[#allocation12 + $0x4b0] sm:$0xff]
          %v6374 = vld [vmem:[#allocation12 + $0x4b8] sm:$0xf]
          %v6375 = vld [vmem:[#allocation12 + $0x4bc] sm:$0xff]
          %v6376 = vld [vmem:[#allocation12 + $0x4c4] sm:$0xf]
          %v6377 = vld [vmem:[#allocation12 + $0x4c8] sm:$0xff]
          %v6378 = vld [vmem:[#allocation12 + $0x4d0] sm:$0xf]
          %v6379 = vld [vmem:[#allocation12 + $0x4d4] sm:$0xff]
          %v6380 = vld [vmem:[#allocation12 + $0x4dc] sm:$0xf]
          %v6381 = vld [vmem:[#allocation12 + $0x4e0] sm:$0xff]
          %v6382 = vld [vmem:[#allocation12 + $0x4e8] sm:$0xf]
          %v6383 = vld [vmem:[#allocation12 + $0x4ec] sm:$0xff]
          %v6384 = vld [vmem:[#allocation12 + $0x4f4] sm:$0xf]
          %v6385 = vld [vmem:[#allocation12 + $0x4f8] sm:$0xff]
          %v6386 = vld [vmem:[#allocation12 + $0x500] sm:$0xf]
          %v6387 = vld [vmem:[#allocation12 + $0x504] sm:$0xff]
          %v6388 = vld [vmem:[#allocation12 + $0x50c] sm:$0xf]
          %v6389 = vld [vmem:[#allocation12 + $0x510] sm:$0xff]
          %v6390 = vld [vmem:[#allocation12 + $0x518] sm:$0xf]
          %v6391 = vld [vmem:[#allocation12 + $0x51c] sm:$0xff]
          %v6392 = vld [vmem:[#allocation12 + $0x524] sm:$0xf]
          %v6393 = vld [vmem:[#allocation12 + $0x528] sm:$0xff]
          %v6394 = vld [vmem:[#allocation12 + $0x530] sm:$0xf]
          %v6395 = vld [vmem:[#allocation12 + $0x534] sm:$0xff]
          %v6396 = vld [vmem:[#allocation12 + $0x53c] sm:$0xf]
          %v6397 = vld [vmem:[#allocation12 + $0x540] sm:$0xff]
          %v6398 = vld [vmem:[#allocation12 + $0x548] sm:$0xf]
          %v6399 = vld [vmem:[#allocation12 + $0x54c] sm:$0xff]
          %v6400 = vld [vmem:[#allocation12 + $0x554] sm:$0xf]
          %v6401 = vld [vmem:[#allocation12 + $0x558] sm:$0xff]
          %v6402 = vld [vmem:[#allocation12 + $0x560] sm:$0xf]
          %v6403 = vld [vmem:[#allocation12 + $0x564] sm:$0xff]
          %v6404 = vld [vmem:[#allocation12 + $0x56c] sm:$0xf]
          %v6405 = vld [vmem:[#allocation12 + $0x570] sm:$0xff]
          %v6406 = vld [vmem:[#allocation12 + $0x578] sm:$0xf]
          %v6407 = vld [vmem:[#allocation12 + $0x57c] sm:$0xff]
          %v6408 = vld [vmem:[#allocation12 + $0x584] sm:$0xf]
          %v6409 = vld [vmem:[#allocation12 + $0x588] sm:$0xff]
          %v6410 = vld [vmem:[#allocation12 + $0x590] sm:$0xf]
          %v6411 = vld [vmem:[#allocation12 + $0x594] sm:$0xff]
          %v6412 = vld [vmem:[#allocation12 + $0x59c] sm:$0xf]
          %v6413 = vld [vmem:[#allocation12 + $0x5a0] sm:$0xff]
          %v6414 = vld [vmem:[#allocation12 + $0x5a8] sm:$0xf]
          %v6415 = vld [vmem:[#allocation12 + $0x5ac] sm:$0xff]
          %v6416 = vld [vmem:[#allocation12 + $0x5b4] sm:$0xf]
          %v6417 = vld [vmem:[#allocation12 + $0x5b8] sm:$0xff]
          %v6418 = vld [vmem:[#allocation12 + $0x5c0] sm:$0xf]
          %v6419 = vld [vmem:[#allocation12 + $0x5c4] sm:$0xff]
          %v6420 = vld [vmem:[#allocation12 + $0x5cc] sm:$0xf]
          %v6421 = vld [vmem:[#allocation12 + $0x5d0] sm:$0xff]
          %v6422 = vld [vmem:[#allocation12 + $0x5d8] sm:$0xf]
          %v6423 = vld [vmem:[#allocation12 + $0x5dc] sm:$0xff]
          %v6424 = vld [vmem:[#allocation12 + $0x5e4] sm:$0xf]
          %v6425 = vld [vmem:[#allocation12 + $0x5e8] sm:$0xff]
          %v6426 = vld [vmem:[#allocation12 + $0x5f0] sm:$0xf]
          %v6427 = vld [vmem:[#allocation12 + $0x5f4] sm:$0xff]
          %v6428 = vld [vmem:[#allocation12 + $0x5fc] sm:$0xf]
          %v6429 = vld [vmem:[#allocation14] sm:$0x7]
          %v6431 = vlaneseq
          %v6432 = vshrl.u32 %v6431, 7
          %v6433 = vsub.s32 0, %v6432
          %v6434 = vrot.slane %v6429, %v6433
          %v6435 = vlaneseq
          %v6436 = vshrl.u32 %v6435, 7
          %v6437 = vsub.s32 1, %v6436
          %v6438 = vrot.slane %v6429, %v6437
          %v6439 = vlaneseq
          %v6440 = vshrl.u32 %v6439, 7
          %v6441 = vsub.s32 2, %v6440
          %v6442 = vrot.slane %v6429, %v6441
          %v6702 = vunpack.c.l.b16 %v6173
          %v6703 = vunpack.c.h.b16 %v6173
          %v6704 = vunpack.c.l.b16 %v6174
          %v6705 = vunpack.c.l.b16 %v6175
          %v6706 = vunpack.c.h.b16 %v6175
          %v6707 = vunpack.c.l.b16 %v6176
          %v6708 = vunpack.c.l.b16 %v6177
          %v6709 = vunpack.c.h.b16 %v6177
          %v6710 = vunpack.c.l.b16 %v6178
          %v6711 = vunpack.c.l.b16 %v6179
          %v6712 = vunpack.c.h.b16 %v6179
          %v6713 = vunpack.c.l.b16 %v6180
          %v6714 = vunpack.c.l.b16 %v6181
          %v6715 = vunpack.c.h.b16 %v6181
          %v6716 = vunpack.c.l.b16 %v6182
          %v6717 = vunpack.c.l.b16 %v6183
          %v6718 = vunpack.c.h.b16 %v6183
          %v6719 = vunpack.c.l.b16 %v6184
          %v6720 = vunpack.c.l.b16 %v6185
          %v6721 = vunpack.c.h.b16 %v6185
          %v6722 = vunpack.c.l.b16 %v6186
          %v6723 = vunpack.c.l.b16 %v6187
          %v6724 = vunpack.c.h.b16 %v6187
          %v6725 = vunpack.c.l.b16 %v6188
          %v6726 = vunpack.c.l.b16 %v6189
          %v6727 = vunpack.c.h.b16 %v6189
          %v6728 = vunpack.c.l.b16 %v6190
          %v6729 = vunpack.c.l.b16 %v6191
          %v6730 = vunpack.c.h.b16 %v6191
          %v6731 = vunpack.c.l.b16 %v6192
          %v6732 = vunpack.c.l.b16 %v6193
          %v6733 = vunpack.c.h.b16 %v6193
          %v6734 = vunpack.c.l.b16 %v6194
          %v6735 = vunpack.c.l.b16 %v6195
          %v6736 = vunpack.c.h.b16 %v6195
          %v6737 = vunpack.c.l.b16 %v6196
          %v6738 = vunpack.c.l.b16 %v6197
          %v6739 = vunpack.c.h.b16 %v6197
          %v6740 = vunpack.c.l.b16 %v6198
          %v6741 = vunpack.c.l.b16 %v6199
          %v6742 = vunpack.c.h.b16 %v6199
          %v6743 = vunpack.c.l.b16 %v6200
          %v6744 = vunpack.c.l.b16 %v6201
          %v6745 = vunpack.c.h.b16 %v6201
          %v6746 = vunpack.c.l.b16 %v6202
          %v6747 = vunpack.c.l.b16 %v6203
          %v6748 = vunpack.c.h.b16 %v6203
          %v6749 = vunpack.c.l.b16 %v6204
          %v6750 = vunpack.c.l.b16 %v6205
          %v6751 = vunpack.c.h.b16 %v6205
          %v6752 = vunpack.c.l.b16 %v6206
          %v6753 = vunpack.c.l.b16 %v6207
          %v6754 = vunpack.c.h.b16 %v6207
          %v6755 = vunpack.c.l.b16 %v6208
          %v6756 = vunpack.c.l.b16 %v6209
          %v6757 = vunpack.c.h.b16 %v6209
          %v6758 = vunpack.c.l.b16 %v6210
          %v6759 = vunpack.c.l.b16 %v6211
          %v6760 = vunpack.c.h.b16 %v6211
          %v6761 = vunpack.c.l.b16 %v6212
          %v6762 = vunpack.c.l.b16 %v6213
          %v6763 = vunpack.c.h.b16 %v6213
          %v6764 = vunpack.c.l.b16 %v6214
          %v6765 = vunpack.c.l.b16 %v6215
          %v6766 = vunpack.c.h.b16 %v6215
          %v6767 = vunpack.c.l.b16 %v6216
          %v6768 = vunpack.c.l.b16 %v6217
          %v6769 = vunpack.c.h.b16 %v6217
          %v6770 = vunpack.c.l.b16 %v6218
          %v6771 = vunpack.c.l.b16 %v6219
          %v6772 = vunpack.c.h.b16 %v6219
          %v6773 = vunpack.c.l.b16 %v6220
          %v6774 = vunpack.c.l.b16 %v6221
          %v6775 = vunpack.c.h.b16 %v6221
          %v6776 = vunpack.c.l.b16 %v6222
          %v6777 = vunpack.c.l.b16 %v6223
          %v6778 = vunpack.c.h.b16 %v6223
          %v6779 = vunpack.c.l.b16 %v6224
          %v6780 = vunpack.c.l.b16 %v6225
          %v6781 = vunpack.c.h.b16 %v6225
          %v6782 = vunpack.c.l.b16 %v6226
          %v6783 = vunpack.c.l.b16 %v6227
          %v6784 = vunpack.c.h.b16 %v6227
          %v6785 = vunpack.c.l.b16 %v6228
          %v6786 = vunpack.c.l.b16 %v6229
          %v6787 = vunpack.c.h.b16 %v6229
          %v6788 = vunpack.c.l.b16 %v6230
          %v6789 = vunpack.c.l.b16 %v6231
          %v6790 = vunpack.c.h.b16 %v6231
          %v6791 = vunpack.c.l.b16 %v6232
          %v6792 = vunpack.c.l.b16 %v6233
          %v6793 = vunpack.c.h.b16 %v6233
          %v6794 = vunpack.c.l.b16 %v6234
          %v6795 = vunpack.c.l.b16 %v6235
          %v6796 = vunpack.c.h.b16 %v6235
          %v6797 = vunpack.c.l.b16 %v6236
          %v6798 = vunpack.c.l.b16 %v6237
          %v6799 = vunpack.c.h.b16 %v6237
          %v6800 = vunpack.c.l.b16 %v6238
          %v6801 = vunpack.c.l.b16 %v6239
          %v6802 = vunpack.c.h.b16 %v6239
          %v6803 = vunpack.c.l.b16 %v6240
          %v6804 = vunpack.c.l.b16 %v6241
          %v6805 = vunpack.c.h.b16 %v6241
          %v6806 = vunpack.c.l.b16 %v6242
          %v6807 = vunpack.c.l.b16 %v6243
          %v6808 = vunpack.c.h.b16 %v6243
          %v6809 = vunpack.c.l.b16 %v6244
          %v6810 = vunpack.c.l.b16 %v6245
          %v6811 = vunpack.c.h.b16 %v6245
          %v6812 = vunpack.c.l.b16 %v6246
          %v6813 = vunpack.c.l.b16 %v6247
          %v6814 = vunpack.c.h.b16 %v6247
          %v6815 = vunpack.c.l.b16 %v6248
          %v6816 = vunpack.c.l.b16 %v6249
          %v6817 = vunpack.c.h.b16 %v6249
          %v6818 = vunpack.c.l.b16 %v6250
          %v6819 = vunpack.c.l.b16 %v6251
          %v6820 = vunpack.c.h.b16 %v6251
          %v6821 = vunpack.c.l.b16 %v6252
          %v6822 = vunpack.c.l.b16 %v6253
          %v6823 = vunpack.c.h.b16 %v6253
          %v6824 = vunpack.c.l.b16 %v6254
          %v6825 = vunpack.c.l.b16 %v6255
          %v6826 = vunpack.c.h.b16 %v6255
          %v6827 = vunpack.c.l.b16 %v6256
          %v6828 = vunpack.c.l.b16 %v6257
          %v6829 = vunpack.c.h.b16 %v6257
          %v6830 = vunpack.c.l.b16 %v6258
          %v6831 = vunpack.c.l.b16 %v6259
          %v6832 = vunpack.c.h.b16 %v6259
          %v6833 = vunpack.c.l.b16 %v6260
          %v6834 = vunpack.c.l.b16 %v6261
          %v6835 = vunpack.c.h.b16 %v6261
          %v6836 = vunpack.c.l.b16 %v6262
          %v6837 = vunpack.c.l.b16 %v6263
          %v6838 = vunpack.c.h.b16 %v6263
          %v6839 = vunpack.c.l.b16 %v6264
          %v6840 = vunpack.c.l.b16 %v6265
          %v6841 = vunpack.c.h.b16 %v6265
          %v6842 = vunpack.c.l.b16 %v6266
          %v6843 = vunpack.c.l.b16 %v6267
          %v6844 = vunpack.c.h.b16 %v6267
          %v6845 = vunpack.c.l.b16 %v6268
          %v6846 = vunpack.c.l.b16 %v6269
          %v6847 = vunpack.c.h.b16 %v6269
          %v6848 = vunpack.c.l.b16 %v6270
          %v6849 = vunpack.c.l.b16 %v6271
          %v6850 = vunpack.c.h.b16 %v6271
          %v6851 = vunpack.c.l.b16 %v6272
          %v6852 = vunpack.c.l.b16 %v6273
          %v6853 = vunpack.c.h.b16 %v6273
          %v6854 = vunpack.c.l.b16 %v6274
          %v6855 = vunpack.c.l.b16 %v6275
          %v6856 = vunpack.c.h.b16 %v6275
          %v6857 = vunpack.c.l.b16 %v6276
          %v6858 = vunpack.c.l.b16 %v6277
          %v6859 = vunpack.c.h.b16 %v6277
          %v6860 = vunpack.c.l.b16 %v6278
          %v6861 = vunpack.c.l.b16 %v6279
          %v6862 = vunpack.c.h.b16 %v6279
          %v6863 = vunpack.c.l.b16 %v6280
          %v6864 = vunpack.c.l.b16 %v6281
          %v6865 = vunpack.c.h.b16 %v6281
          %v6866 = vunpack.c.l.b16 %v6282
          %v6867 = vunpack.c.l.b16 %v6283
          %v6868 = vunpack.c.h.b16 %v6283
          %v6869 = vunpack.c.l.b16 %v6284
          %v6870 = vunpack.c.l.b16 %v6285
          %v6871 = vunpack.c.h.b16 %v6285
          %v6872 = vunpack.c.l.b16 %v6286
          %v6873 = vunpack.c.l.b16 %v6287
          %v6874 = vunpack.c.h.b16 %v6287
          %v6875 = vunpack.c.l.b16 %v6288
          %v6876 = vunpack.c.l.b16 %v6289
          %v6877 = vunpack.c.h.b16 %v6289
          %v6878 = vunpack.c.l.b16 %v6290
          %v6879 = vunpack.c.l.b16 %v6291
          %v6880 = vunpack.c.h.b16 %v6291
          %v6881 = vunpack.c.l.b16 %v6292
          %v6882 = vunpack.c.l.b16 %v6293
          %v6883 = vunpack.c.h.b16 %v6293
          %v6884 = vunpack.c.l.b16 %v6294
          %v6885 = vunpack.c.l.b16 %v6295
          %v6886 = vunpack.c.h.b16 %v6295
          %v6887 = vunpack.c.l.b16 %v6296
          %v6888 = vunpack.c.l.b16 %v6297
          %v6889 = vunpack.c.h.b16 %v6297
          %v6890 = vunpack.c.l.b16 %v6298
          %v6891 = vunpack.c.l.b16 %v6299
          %v6892 = vunpack.c.h.b16 %v6299
          %v6893 = vunpack.c.l.b16 %v6300
          %v6894 = vunpack.c.l.b16 %v6301
          %v6895 = vunpack.c.h.b16 %v6301
          %v6896 = vunpack.c.l.b16 %v6302
          %v6897 = vunpack.c.l.b16 %v6303
          %v6898 = vunpack.c.h.b16 %v6303
          %v6899 = vunpack.c.l.b16 %v6304
          %v6900 = vunpack.c.l.b16 %v6305
          %v6901 = vunpack.c.h.b16 %v6305
          %v6902 = vunpack.c.l.b16 %v6306
          %v6903 = vunpack.c.l.b16 %v6307
          %v6904 = vunpack.c.h.b16 %v6307
          %v6905 = vunpack.c.l.b16 %v6308
          %v6906 = vunpack.c.l.b16 %v6309
          %v6907 = vunpack.c.h.b16 %v6309
          %v6908 = vunpack.c.l.b16 %v6310
          %v6909 = vunpack.c.l.b16 %v6311
          %v6910 = vunpack.c.h.b16 %v6311
          %v6911 = vunpack.c.l.b16 %v6312
          %v6912 = vunpack.c.l.b16 %v6313
          %v6913 = vunpack.c.h.b16 %v6313
          %v6914 = vunpack.c.l.b16 %v6314
          %v6915 = vunpack.c.l.b16 %v6315
          %v6916 = vunpack.c.h.b16 %v6315
          %v6917 = vunpack.c.l.b16 %v6316
          %v6918 = vunpack.c.l.b16 %v6317
          %v6919 = vunpack.c.h.b16 %v6317
          %v6920 = vunpack.c.l.b16 %v6318
          %v6921 = vunpack.c.l.b16 %v6319
          %v6922 = vunpack.c.h.b16 %v6319
          %v6923 = vunpack.c.l.b16 %v6320
          %v6924 = vunpack.c.l.b16 %v6321
          %v6925 = vunpack.c.h.b16 %v6321
          %v6926 = vunpack.c.l.b16 %v6322
          %v6927 = vunpack.c.l.b16 %v6323
          %v6928 = vunpack.c.h.b16 %v6323
          %v6929 = vunpack.c.l.b16 %v6324
          %v6930 = vunpack.c.l.b16 %v6325
          %v6931 = vunpack.c.h.b16 %v6325
          %v6932 = vunpack.c.l.b16 %v6326
          %v6933 = vunpack.c.l.b16 %v6327
          %v6934 = vunpack.c.h.b16 %v6327
          %v6935 = vunpack.c.l.b16 %v6328
          %v6936 = vunpack.c.l.b16 %v6329
          %v6937 = vunpack.c.h.b16 %v6329
          %v6938 = vunpack.c.l.b16 %v6330
          %v6939 = vunpack.c.l.b16 %v6331
          %v6940 = vunpack.c.h.b16 %v6331
          %v6941 = vunpack.c.l.b16 %v6332
          %v6942 = vunpack.c.l.b16 %v6333
          %v6943 = vunpack.c.h.b16 %v6333
          %v6944 = vunpack.c.l.b16 %v6334
          %v6945 = vunpack.c.l.b16 %v6335
          %v6946 = vunpack.c.h.b16 %v6335
          %v6947 = vunpack.c.l.b16 %v6336
          %v6948 = vunpack.c.l.b16 %v6337
          %v6949 = vunpack.c.h.b16 %v6337
          %v6950 = vunpack.c.l.b16 %v6338
          %v6951 = vunpack.c.l.b16 %v6339
          %v6952 = vunpack.c.h.b16 %v6339
          %v6953 = vunpack.c.l.b16 %v6340
          %v6954 = vunpack.c.l.b16 %v6341
          %v6955 = vunpack.c.h.b16 %v6341
          %v6956 = vunpack.c.l.b16 %v6342
          %v6957 = vunpack.c.l.b16 %v6343
          %v6958 = vunpack.c.h.b16 %v6343
          %v6959 = vunpack.c.l.b16 %v6344
          %v6960 = vunpack.c.l.b16 %v6345
          %v6961 = vunpack.c.h.b16 %v6345
          %v6962 = vunpack.c.l.b16 %v6346
          %v6963 = vunpack.c.l.b16 %v6347
          %v6964 = vunpack.c.h.b16 %v6347
          %v6965 = vunpack.c.l.b16 %v6348
          %v6966 = vunpack.c.l.b16 %v6349
          %v6967 = vunpack.c.h.b16 %v6349
          %v6968 = vunpack.c.l.b16 %v6350
          %v6969 = vunpack.c.l.b16 %v6351
          %v6970 = vunpack.c.h.b16 %v6351
          %v6971 = vunpack.c.l.b16 %v6352
          %v6972 = vunpack.c.l.b16 %v6353
          %v6973 = vunpack.c.h.b16 %v6353
          %v6974 = vunpack.c.l.b16 %v6354
          %v6975 = vunpack.c.l.b16 %v6355
          %v6976 = vunpack.c.h.b16 %v6355
          %v6977 = vunpack.c.l.b16 %v6356
          %v6978 = vunpack.c.l.b16 %v6357
          %v6979 = vunpack.c.h.b16 %v6357
          %v6980 = vunpack.c.l.b16 %v6358
          %v6981 = vunpack.c.l.b16 %v6359
          %v6982 = vunpack.c.h.b16 %v6359
          %v6983 = vunpack.c.l.b16 %v6360
          %v6984 = vunpack.c.l.b16 %v6361
          %v6985 = vunpack.c.h.b16 %v6361
          %v6986 = vunpack.c.l.b16 %v6362
          %v6987 = vunpack.c.l.b16 %v6363
          %v6988 = vunpack.c.h.b16 %v6363
          %v6989 = vunpack.c.l.b16 %v6364
          %v6990 = vunpack.c.l.b16 %v6365
          %v6991 = vunpack.c.h.b16 %v6365
          %v6992 = vunpack.c.l.b16 %v6366
          %v6993 = vunpack.c.l.b16 %v6367
          %v6994 = vunpack.c.h.b16 %v6367
          %v6995 = vunpack.c.l.b16 %v6368
          %v6996 = vunpack.c.l.b16 %v6369
          %v6997 = vunpack.c.h.b16 %v6369
          %v6998 = vunpack.c.l.b16 %v6370
          %v6999 = vunpack.c.l.b16 %v6371
          %v7000 = vunpack.c.h.b16 %v6371
          %v7001 = vunpack.c.l.b16 %v6372
          %v7002 = vunpack.c.l.b16 %v6373
          %v7003 = vunpack.c.h.b16 %v6373
          %v7004 = vunpack.c.l.b16 %v6374
          %v7005 = vunpack.c.l.b16 %v6375
          %v7006 = vunpack.c.h.b16 %v6375
          %v7007 = vunpack.c.l.b16 %v6376
          %v7008 = vunpack.c.l.b16 %v6377
          %v7009 = vunpack.c.h.b16 %v6377
          %v7010 = vunpack.c.l.b16 %v6378
          %v7011 = vunpack.c.l.b16 %v6379
          %v7012 = vunpack.c.h.b16 %v6379
          %v7013 = vunpack.c.l.b16 %v6380
          %v7014 = vunpack.c.l.b16 %v6381
          %v7015 = vunpack.c.h.b16 %v6381
          %v7016 = vunpack.c.l.b16 %v6382
          %v7017 = vunpack.c.l.b16 %v6383
          %v7018 = vunpack.c.h.b16 %v6383
          %v7019 = vunpack.c.l.b16 %v6384
          %v7020 = vunpack.c.l.b16 %v6385
          %v7021 = vunpack.c.h.b16 %v6385
          %v7022 = vunpack.c.l.b16 %v6386
          %v7023 = vunpack.c.l.b16 %v6387
          %v7024 = vunpack.c.h.b16 %v6387
          %v7025 = vunpack.c.l.b16 %v6388
          %v7026 = vunpack.c.l.b16 %v6389
          %v7027 = vunpack.c.h.b16 %v6389
          %v7028 = vunpack.c.l.b16 %v6390
          %v7029 = vunpack.c.l.b16 %v6391
          %v7030 = vunpack.c.h.b16 %v6391
          %v7031 = vunpack.c.l.b16 %v6392
          %v7032 = vunpack.c.l.b16 %v6393
          %v7033 = vunpack.c.h.b16 %v6393
          %v7034 = vunpack.c.l.b16 %v6394
          %v7035 = vunpack.c.l.b16 %v6395
          %v7036 = vunpack.c.h.b16 %v6395
          %v7037 = vunpack.c.l.b16 %v6396
          %v7038 = vunpack.c.l.b16 %v6397
          %v7039 = vunpack.c.h.b16 %v6397
          %v7040 = vunpack.c.l.b16 %v6398
          %v7041 = vunpack.c.l.b16 %v6399
          %v7042 = vunpack.c.h.b16 %v6399
          %v7043 = vunpack.c.l.b16 %v6400
          %v7044 = vunpack.c.l.b16 %v6401
          %v7045 = vunpack.c.h.b16 %v6401
          %v7046 = vunpack.c.l.b16 %v6402
          %v7047 = vunpack.c.l.b16 %v6403
          %v7048 = vunpack.c.h.b16 %v6403
          %v7049 = vunpack.c.l.b16 %v6404
          %v7050 = vunpack.c.l.b16 %v6405
          %v7051 = vunpack.c.h.b16 %v6405
          %v7052 = vunpack.c.l.b16 %v6406
          %v7053 = vunpack.c.l.b16 %v6407
          %v7054 = vunpack.c.h.b16 %v6407
          %v7055 = vunpack.c.l.b16 %v6408
          %v7056 = vunpack.c.l.b16 %v6409
          %v7057 = vunpack.c.h.b16 %v6409
          %v7058 = vunpack.c.l.b16 %v6410
          %v7059 = vunpack.c.l.b16 %v6411
          %v7060 = vunpack.c.h.b16 %v6411
          %v7061 = vunpack.c.l.b16 %v6412
          %v7062 = vunpack.c.l.b16 %v6413
          %v7063 = vunpack.c.h.b16 %v6413
          %v7064 = vunpack.c.l.b16 %v6414
          %v7065 = vunpack.c.l.b16 %v6415
          %v7066 = vunpack.c.h.b16 %v6415
          %v7067 = vunpack.c.l.b16 %v6416
          %v7068 = vunpack.c.l.b16 %v6417
          %v7069 = vunpack.c.h.b16 %v6417
          %v7070 = vunpack.c.l.b16 %v6418
          %v7071 = vunpack.c.l.b16 %v6419
          %v7072 = vunpack.c.h.b16 %v6419
          %v7073 = vunpack.c.l.b16 %v6420
          %v7074 = vunpack.c.l.b16 %v6421
          %v7075 = vunpack.c.h.b16 %v6421
          %v7076 = vunpack.c.l.b16 %v6422
          %v7077 = vunpack.c.l.b16 %v6423
          %v7078 = vunpack.c.h.b16 %v6423
          %v7079 = vunpack.c.l.b16 %v6424
          %v7080 = vunpack.c.l.b16 %v6425
          %v7081 = vunpack.c.h.b16 %v6425
          %v7082 = vunpack.c.l.b16 %v6426
          %v7083 = vunpack.c.l.b16 %v6427
          %v7084 = vunpack.c.h.b16 %v6427
          %v7085 = vunpack.c.l.b16 %v6428
          %v7086 = vpack.c.b16 %v6705, %v6702
          %v7087 = vpack.c.b16 %v6706, %v6703
          %v7088 = vpack.c.b16 %v6707, %v6704
          %v7089 = vpack.c.b16 %v6711, %v6708
          %v7090 = vpack.c.b16 %v6712, %v6709
          %v7091 = vpack.c.b16 %v6713, %v6710
          %v7092 = vpack.c.b16 %v6717, %v6714
          %v7093 = vpack.c.b16 %v6718, %v6715
          %v7094 = vpack.c.b16 %v6719, %v6716
          %v7095 = vpack.c.b16 %v6723, %v6720
          %v7096 = vpack.c.b16 %v6724, %v6721
          %v7097 = vpack.c.b16 %v6725, %v6722
          %v7098 = vpack.c.b16 %v6729, %v6726
          %v7099 = vpack.c.b16 %v6730, %v6727
          %v7100 = vpack.c.b16 %v6731, %v6728
          %v7101 = vpack.c.b16 %v6735, %v6732
          %v7102 = vpack.c.b16 %v6736, %v6733
          %v7103 = vpack.c.b16 %v6737, %v6734
          %v7104 = vpack.c.b16 %v6741, %v6738
          %v7105 = vpack.c.b16 %v6742, %v6739
          %v7106 = vpack.c.b16 %v6743, %v6740
          %v7107 = vpack.c.b16 %v6747, %v6744
          %v7108 = vpack.c.b16 %v6748, %v6745
          %v7109 = vpack.c.b16 %v6749, %v6746
          %v7110 = vpack.c.b16 %v6753, %v6750
          %v7111 = vpack.c.b16 %v6754, %v6751
          %v7112 = vpack.c.b16 %v6755, %v6752
          %v7113 = vpack.c.b16 %v6759, %v6756
          %v7114 = vpack.c.b16 %v6760, %v6757
          %v7115 = vpack.c.b16 %v6761, %v6758
          %v7116 = vpack.c.b16 %v6765, %v6762
          %v7117 = vpack.c.b16 %v6766, %v6763
          %v7118 = vpack.c.b16 %v6767, %v6764
          %v7119 = vpack.c.b16 %v6771, %v6768
          %v7120 = vpack.c.b16 %v6772, %v6769
          %v7121 = vpack.c.b16 %v6773, %v6770
          %v7122 = vpack.c.b16 %v6777, %v6774
          %v7123 = vpack.c.b16 %v6778, %v6775
          %v7124 = vpack.c.b16 %v6779, %v6776
          %v7125 = vpack.c.b16 %v6783, %v6780
          %v7126 = vpack.c.b16 %v6784, %v6781
          %v7127 = vpack.c.b16 %v6785, %v6782
          %v7128 = vpack.c.b16 %v6789, %v6786
          %v7129 = vpack.c.b16 %v6790, %v6787
          %v7130 = vpack.c.b16 %v6791, %v6788
          %v7131 = vpack.c.b16 %v6795, %v6792
          %v7132 = vpack.c.b16 %v6796, %v6793
          %v7133 = vpack.c.b16 %v6797, %v6794
          %v7134 = vpack.c.b16 %v6801, %v6798
          %v7135 = vpack.c.b16 %v6802, %v6799
          %v7136 = vpack.c.b16 %v6803, %v6800
          %v7137 = vpack.c.b16 %v6807, %v6804
          %v7138 = vpack.c.b16 %v6808, %v6805
          %v7139 = vpack.c.b16 %v6809, %v6806
          %v7140 = vpack.c.b16 %v6813, %v6810
          %v7141 = vpack.c.b16 %v6814, %v6811
          %v7142 = vpack.c.b16 %v6815, %v6812
          %v7143 = vpack.c.b16 %v6819, %v6816
          %v7144 = vpack.c.b16 %v6820, %v6817
          %v7145 = vpack.c.b16 %v6821, %v6818
          %v7146 = vpack.c.b16 %v6825, %v6822
          %v7147 = vpack.c.b16 %v6826, %v6823
          %v7148 = vpack.c.b16 %v6827, %v6824
          %v7149 = vpack.c.b16 %v6831, %v6828
          %v7150 = vpack.c.b16 %v6832, %v6829
          %v7151 = vpack.c.b16 %v6833, %v6830
          %v7152 = vpack.c.b16 %v6837, %v6834
          %v7153 = vpack.c.b16 %v6838, %v6835
          %v7154 = vpack.c.b16 %v6839, %v6836
          %v7155 = vpack.c.b16 %v6843, %v6840
          %v7156 = vpack.c.b16 %v6844, %v6841
          %v7157 = vpack.c.b16 %v6845, %v6842
          %v7158 = vpack.c.b16 %v6849, %v6846
          %v7159 = vpack.c.b16 %v6850, %v6847
          %v7160 = vpack.c.b16 %v6851, %v6848
          %v7161 = vpack.c.b16 %v6855, %v6852
          %v7162 = vpack.c.b16 %v6856, %v6853
          %v7163 = vpack.c.b16 %v6857, %v6854
          %v7164 = vpack.c.b16 %v6861, %v6858
          %v7165 = vpack.c.b16 %v6862, %v6859
          %v7166 = vpack.c.b16 %v6863, %v6860
          %v7167 = vpack.c.b16 %v6867, %v6864
          %v7168 = vpack.c.b16 %v6868, %v6865
          %v7169 = vpack.c.b16 %v6869, %v6866
          %v7170 = vpack.c.b16 %v6873, %v6870
          %v7171 = vpack.c.b16 %v6874, %v6871
          %v7172 = vpack.c.b16 %v6875, %v6872
          %v7173 = vpack.c.b16 %v6879, %v6876
          %v7174 = vpack.c.b16 %v6880, %v6877
          %v7175 = vpack.c.b16 %v6881, %v6878
          %v7176 = vpack.c.b16 %v6885, %v6882
          %v7177 = vpack.c.b16 %v6886, %v6883
          %v7178 = vpack.c.b16 %v6887, %v6884
          %v7179 = vpack.c.b16 %v6891, %v6888
          %v7180 = vpack.c.b16 %v6892, %v6889
          %v7181 = vpack.c.b16 %v6893, %v6890
          %v7182 = vpack.c.b16 %v6897, %v6894
          %v7183 = vpack.c.b16 %v6898, %v6895
          %v7184 = vpack.c.b16 %v6899, %v6896
          %v7185 = vpack.c.b16 %v6903, %v6900
          %v7186 = vpack.c.b16 %v6904, %v6901
          %v7187 = vpack.c.b16 %v6905, %v6902
          %v7188 = vpack.c.b16 %v6909, %v6906
          %v7189 = vpack.c.b16 %v6910, %v6907
          %v7190 = vpack.c.b16 %v6911, %v6908
          %v7191 = vpack.c.b16 %v6915, %v6912
          %v7192 = vpack.c.b16 %v6916, %v6913
          %v7193 = vpack.c.b16 %v6917, %v6914
          %v7194 = vpack.c.b16 %v6921, %v6918
          %v7195 = vpack.c.b16 %v6922, %v6919
          %v7196 = vpack.c.b16 %v6923, %v6920
          %v7197 = vpack.c.b16 %v6927, %v6924
          %v7198 = vpack.c.b16 %v6928, %v6925
          %v7199 = vpack.c.b16 %v6929, %v6926
          %v7200 = vpack.c.b16 %v6933, %v6930
          %v7201 = vpack.c.b16 %v6934, %v6931
          %v7202 = vpack.c.b16 %v6935, %v6932
          %v7203 = vpack.c.b16 %v6939, %v6936
          %v7204 = vpack.c.b16 %v6940, %v6937
          %v7205 = vpack.c.b16 %v6941, %v6938
          %v7206 = vpack.c.b16 %v6945, %v6942
          %v7207 = vpack.c.b16 %v6946, %v6943
          %v7208 = vpack.c.b16 %v6947, %v6944
          %v7209 = vpack.c.b16 %v6951, %v6948
          %v7210 = vpack.c.b16 %v6952, %v6949
          %v7211 = vpack.c.b16 %v6953, %v6950
          %v7212 = vpack.c.b16 %v6957, %v6954
          %v7213 = vpack.c.b16 %v6958, %v6955
          %v7214 = vpack.c.b16 %v6959, %v6956
          %v7215 = vpack.c.b16 %v6963, %v6960
          %v7216 = vpack.c.b16 %v6964, %v6961
          %v7217 = vpack.c.b16 %v6965, %v6962
          %v7218 = vpack.c.b16 %v6969, %v6966
          %v7219 = vpack.c.b16 %v6970, %v6967
          %v7220 = vpack.c.b16 %v6971, %v6968
          %v7221 = vpack.c.b16 %v6975, %v6972
          %v7222 = vpack.c.b16 %v6976, %v6973
          %v7223 = vpack.c.b16 %v6977, %v6974
          %v7224 = vpack.c.b16 %v6981, %v6978
          %v7225 = vpack.c.b16 %v6982, %v6979
          %v7226 = vpack.c.b16 %v6983, %v6980
          %v7227 = vpack.c.b16 %v6987, %v6984
          %v7228 = vpack.c.b16 %v6988, %v6985
          %v7229 = vpack.c.b16 %v6989, %v6986
          %v7230 = vpack.c.b16 %v6993, %v6990
          %v7231 = vpack.c.b16 %v6994, %v6991
          %v7232 = vpack.c.b16 %v6995, %v6992
          %v7233 = vpack.c.b16 %v6999, %v6996
          %v7234 = vpack.c.b16 %v7000, %v6997
          %v7235 = vpack.c.b16 %v7001, %v6998
          %v7236 = vpack.c.b16 %v7005, %v7002
          %v7237 = vpack.c.b16 %v7006, %v7003
          %v7238 = vpack.c.b16 %v7007, %v7004
          %v7239 = vpack.c.b16 %v7011, %v7008
          %v7240 = vpack.c.b16 %v7012, %v7009
          %v7241 = vpack.c.b16 %v7013, %v7010
          %v7242 = vpack.c.b16 %v7017, %v7014
          %v7243 = vpack.c.b16 %v7018, %v7015
          %v7244 = vpack.c.b16 %v7019, %v7016
          %v7245 = vpack.c.b16 %v7023, %v7020
          %v7246 = vpack.c.b16 %v7024, %v7021
          %v7247 = vpack.c.b16 %v7025, %v7022
          %v7248 = vpack.c.b16 %v7029, %v7026
          %v7249 = vpack.c.b16 %v7030, %v7027
          %v7250 = vpack.c.b16 %v7031, %v7028
          %v7251 = vpack.c.b16 %v7035, %v7032
          %v7252 = vpack.c.b16 %v7036, %v7033
          %v7253 = vpack.c.b16 %v7037, %v7034
          %v7254 = vpack.c.b16 %v7041, %v7038
          %v7255 = vpack.c.b16 %v7042, %v7039
          %v7256 = vpack.c.b16 %v7043, %v7040
          %v7257 = vpack.c.b16 %v7047, %v7044
          %v7258 = vpack.c.b16 %v7048, %v7045
          %v7259 = vpack.c.b16 %v7049, %v7046
          %v7260 = vpack.c.b16 %v7053, %v7050
          %v7261 = vpack.c.b16 %v7054, %v7051
          %v7262 = vpack.c.b16 %v7055, %v7052
          %v7263 = vpack.c.b16 %v7059, %v7056
          %v7264 = vpack.c.b16 %v7060, %v7057
          %v7265 = vpack.c.b16 %v7061, %v7058
          %v7266 = vpack.c.b16 %v7065, %v7062
          %v7267 = vpack.c.b16 %v7066, %v7063
          %v7268 = vpack.c.b16 %v7067, %v7064
          %v7269 = vpack.c.b16 %v7071, %v7068
          %v7270 = vpack.c.b16 %v7072, %v7069
          %v7271 = vpack.c.b16 %v7073, %v7070
          %v7272 = vpack.c.b16 %v7077, %v7074
          %v7273 = vpack.c.b16 %v7078, %v7075
          %v7274 = vpack.c.b16 %v7079, %v7076
          %v7275 = vpack.c.b16 %v7083, %v7080
          %v7276 = vpack.c.b16 %v7084, %v7081
          %v7277 = vpack.c.b16 %v7085, %v7082
          %7470 = vmatprep.subr.bf16.mxu0 %v7108
          %7471 = vmatpush1.bf16.msra.mxu0 %v7107
          %7472 = vmatprep.subr.bf16.mxu0 %v7105
          %7473 = vmatpush1.bf16.msra.mxu0 %v7104
          %7474 = vmatprep.subr.bf16.mxu0 %v7102
          %7475 = vmatpush1.bf16.msra.mxu0 %v7101
          %7476 = vmatprep.subr.bf16.mxu0 %v7099
          %7477 = vmatpush1.bf16.msra.mxu0 %v7098
          %7478 = vmatprep.subr.bf16.mxu0 %v7096
          %7479 = vmatpush1.bf16.msra.mxu0 %v7095
          %7480 = vmatprep.subr.bf16.mxu0 %v7093
          %7481 = vmatpush1.bf16.msra.mxu0 %v7092
          %7482 = vmatprep.subr.bf16.mxu0 %v7090
          %7483 = vmatpush1.bf16.msra.mxu0 %v7089
          %7484 = vmatprep.subr.bf16.mxu0 %v7087
          %7485 = vmatpush1.bf16.msra.mxu0 %v7086
          %7486 = vmatprep.subr.bf16.mxu0 %v7132
          %7487 = vmatpush2.bf16.msra.mxu0 %v7131
          %7488 = vmatprep.subr.bf16.mxu0 %v7129
          %7489 = vmatpush2.bf16.msra.mxu0 %v7128
          %7490 = vmatprep.subr.bf16.mxu0 %v7126
          %7491 = vmatpush2.bf16.msra.mxu0 %v7125
          %7492 = vmatprep.subr.bf16.mxu0 %v7123
          %7493 = vmatpush2.bf16.msra.mxu0 %v7122
          %7494 = vmatprep.subr.bf16.mxu0 %v7120
          %7495 = vmatpush2.bf16.msra.mxu0 %v7119
          %7496 = vmatprep.subr.bf16.mxu0 %v7117
          %7497 = vmatpush2.bf16.msra.mxu0 %v7116
          %7498 = vmatprep.subr.bf16.mxu0 %v7114
          %7499 = vmatpush2.bf16.msra.mxu0 %v7113
          %7500 = vmatprep.subr.bf16.mxu0 %v7111
          %7501 = vmatpush2.bf16.msra.mxu0 %v7110
          %7502 = vmatprep.mubr.bf16.mxu0 %v6166
          %7503 = vmatmul.mubr.bf16.gmra.mxu0 %v6165
          %v7504 = vpop.f32.mrf.mxu0
          %v7505 = vadd.f32 %v6434, %v7504
          %v7506 = vpop.f32.mrf.mxu0
          %v7507 = vadd.f32 %v6438, %v7506
          %v7508 = vpop.f32.mrf.mxu0
          %v7509 = vpop.f32.mrf.mxu0
          %7510 = vdwg.mxu0
          %7511 = vmatprep.subr.bf16.mxu0 %v7156
          %7512 = vmatpush1.bf16.msra.mxu0 %v7155
          %7513 = vmatprep.subr.bf16.mxu0 %v7153
          %7514 = vmatpush1.bf16.msra.mxu0 %v7152
          %7515 = vmatprep.subr.bf16.mxu0 %v7150
          %7516 = vmatpush1.bf16.msra.mxu0 %v7149
          %7517 = vmatprep.subr.bf16.mxu0 %v7147
          %7518 = vmatpush1.bf16.msra.mxu0 %v7146
          %7519 = vmatprep.subr.bf16.mxu0 %v7144
          %7520 = vmatpush1.bf16.msra.mxu0 %v7143
          %7521 = vmatprep.subr.bf16.mxu0 %v7141
          %7522 = vmatpush1.bf16.msra.mxu0 %v7140
          %7523 = vmatprep.subr.bf16.mxu0 %v7138
          %7524 = vmatpush1.bf16.msra.mxu0 %v7137
          %7525 = vmatprep.subr.bf16.mxu0 %v7135
          %7526 = vmatpush1.bf16.msra.mxu0 %v7134
          %7527 = vmatprep.subr.bf16.mxu0 %v7180
          %7528 = vmatpush2.bf16.msra.mxu0 %v7179
          %7529 = vmatprep.subr.bf16.mxu0 %v7177
          %7530 = vmatpush2.bf16.msra.mxu0 %v7176
          %7531 = vmatprep.subr.bf16.mxu0 %v7174
          %7532 = vmatpush2.bf16.msra.mxu0 %v7173
          %7533 = vmatprep.subr.bf16.mxu0 %v7171
          %7534 = vmatpush2.bf16.msra.mxu0 %v7170
          %7535 = vmatprep.subr.bf16.mxu0 %v7168
          %7536 = vmatpush2.bf16.msra.mxu0 %v7167
          %7537 = vmatprep.subr.bf16.mxu0 %v7165
          %7538 = vmatpush2.bf16.msra.mxu0 %v7164
          %7539 = vmatprep.subr.bf16.mxu0 %v7162
          %7540 = vmatpush2.bf16.msra.mxu0 %v7161
          %7541 = vmatprep.subr.bf16.mxu0 %v7159
          %7542 = vmatpush2.bf16.msra.mxu0 %v7158
          %7543 = vmatprep.mubr.bf16.mxu0 %v6168
          %7544 = vmatmul.mubr.bf16.gmra.mxu0 %v6167
          %v7545 = vpop.f32.mrf.mxu0
          %v7546 = vadd.f32 %v7505, %v7545
          %v7547 = vpop.f32.mrf.mxu0
          %v7548 = vadd.f32 %v7507, %v7547
          %v7549 = vpop.f32.mrf.mxu0
          %v7550 = vpop.f32.mrf.mxu0
          %7551 = vdwg.mxu0
          %7552 = vmatprep.subr.bf16.mxu0 %v7204
          %7553 = vmatpush1.bf16.msra.mxu0 %v7203
          %7554 = vmatprep.subr.bf16.mxu0 %v7201
          %7555 = vmatpush1.bf16.msra.mxu0 %v7200
          %7556 = vmatprep.subr.bf16.mxu0 %v7198
          %7557 = vmatpush1.bf16.msra.mxu0 %v7197
          %7558 = vmatprep.subr.bf16.mxu0 %v7195
          %7559 = vmatpush1.bf16.msra.mxu0 %v7194
          %7560 = vmatprep.subr.bf16.mxu0 %v7192
          %7561 = vmatpush1.bf16.msra.mxu0 %v7191
          %7562 = vmatprep.subr.bf16.mxu0 %v7189
          %7563 = vmatpush1.bf16.msra.mxu0 %v7188
          %7564 = vmatprep.subr.bf16.mxu0 %v7186
          %7565 = vmatpush1.bf16.msra.mxu0 %v7185
          %7566 = vmatprep.subr.bf16.mxu0 %v7183
          %7567 = vmatpush1.bf16.msra.mxu0 %v7182
          %7568 = vmatprep.subr.bf16.mxu0 %v7228
          %7569 = vmatpush2.bf16.msra.mxu0 %v7227
          %7570 = vmatprep.subr.bf16.mxu0 %v7225
          %7571 = vmatpush2.bf16.msra.mxu0 %v7224
          %7572 = vmatprep.subr.bf16.mxu0 %v7222
          %7573 = vmatpush2.bf16.msra.mxu0 %v7221
          %7574 = vmatprep.subr.bf16.mxu0 %v7219
          %7575 = vmatpush2.bf16.msra.mxu0 %v7218
          %7576 = vmatprep.subr.bf16.mxu0 %v7216
          %7577 = vmatpush2.bf16.msra.mxu0 %v7215
          %7578 = vmatprep.subr.bf16.mxu0 %v7213
          %7579 = vmatpush2.bf16.msra.mxu0 %v7212
          %7580 = vmatprep.subr.bf16.mxu0 %v7210
          %7581 = vmatpush2.bf16.msra.mxu0 %v7209
          %7582 = vmatprep.subr.bf16.mxu0 %v7207
          %7583 = vmatpush2.bf16.msra.mxu0 %v7206
          %7584 = vmatprep.mubr.bf16.mxu0 %v6170
          %7585 = vmatmul.mubr.bf16.gmra.mxu0 %v6169
          %v7586 = vpop.f32.mrf.mxu0
          %v7587 = vadd.f32 %v7546, %v7586
          %v7588 = vpop.f32.mrf.mxu0
          %v7589 = vadd.f32 %v7548, %v7588
          %v7590 = vpop.f32.mrf.mxu0
          %v7591 = vpop.f32.mrf.mxu0
          %7592 = vdwg.mxu0
          %7593 = vmatprep.subr.bf16.mxu0 %v7252
          %7594 = vmatpush1.bf16.msra.mxu0 %v7251
          %7595 = vmatprep.subr.bf16.mxu0 %v7249
          %7596 = vmatpush1.bf16.msra.mxu0 %v7248
          %7597 = vmatprep.subr.bf16.mxu0 %v7246
          %7598 = vmatpush1.bf16.msra.mxu0 %v7245
          %7599 = vmatprep.subr.bf16.mxu0 %v7243
          %7600 = vmatpush1.bf16.msra.mxu0 %v7242
          %7601 = vmatprep.subr.bf16.mxu0 %v7240
          %7602 = vmatpush1.bf16.msra.mxu0 %v7239
          %7603 = vmatprep.subr.bf16.mxu0 %v7237
          %7604 = vmatpush1.bf16.msra.mxu0 %v7236
          %7605 = vmatprep.subr.bf16.mxu0 %v7234
          %7606 = vmatpush1.bf16.msra.mxu0 %v7233
          %7607 = vmatprep.subr.bf16.mxu0 %v7231
          %7608 = vmatpush1.bf16.msra.mxu0 %v7230
          %7609 = vmatprep.subr.bf16.mxu0 %v7276
          %7610 = vmatpush2.bf16.msra.mxu0 %v7275
          %7611 = vmatprep.subr.bf16.mxu0 %v7273
          %7612 = vmatpush2.bf16.msra.mxu0 %v7272
          %7613 = vmatprep.subr.bf16.mxu0 %v7270
          %7614 = vmatpush2.bf16.msra.mxu0 %v7269
          %7615 = vmatprep.subr.bf16.mxu0 %v7267
          %7616 = vmatpush2.bf16.msra.mxu0 %v7266
          %7617 = vmatprep.subr.bf16.mxu0 %v7264
          %7618 = vmatpush2.bf16.msra.mxu0 %v7263
          %7619 = vmatprep.subr.bf16.mxu0 %v7261
          %7620 = vmatpush2.bf16.msra.mxu0 %v7260
          %7621 = vmatprep.subr.bf16.mxu0 %v7258
          %7622 = vmatpush2.bf16.msra.mxu0 %v7257
          %7623 = vmatprep.subr.bf16.mxu0 %v7255
          %7624 = vmatpush2.bf16.msra.mxu0 %v7254
          %7625 = vmatprep.mubr.bf16.mxu0 %v6172
          %7626 = vmatmul.mubr.bf16.gmra.mxu0 %v6171
          %v7627 = vpop.f32.mrf.mxu0
          %v7628 = vadd.f32 %v7587, %v7627
          %v7629 = vpop.f32.mrf.mxu0
          %v7630 = vadd.f32 %v7589, %v7629
          %v7631 = vpop.f32.mrf.mxu0
          %v7632 = vpop.f32.mrf.mxu0
          %7633 = vdwg.mxu0
          %7634 = vmatprep.subr.bf16.mxu0 0
          %7635 = vmatpush1.bf16.msra.mxu0 %v7109
          %7636 = vmatprep.subr.bf16.mxu0 0
          %7637 = vmatpush1.bf16.msra.mxu0 %v7106
          %7638 = vmatprep.subr.bf16.mxu0 0
          %7639 = vmatpush1.bf16.msra.mxu0 %v7103
          %7640 = vmatprep.subr.bf16.mxu0 0
          %7641 = vmatpush1.bf16.msra.mxu0 %v7100
          %7642 = vmatprep.subr.bf16.mxu0 0
          %7643 = vmatpush1.bf16.msra.mxu0 %v7097
          %7644 = vmatprep.subr.bf16.mxu0 0
          %7645 = vmatpush1.bf16.msra.mxu0 %v7094
          %7646 = vmatprep.subr.bf16.mxu0 0
          %7647 = vmatpush1.bf16.msra.mxu0 %v7091
          %7648 = vmatprep.subr.bf16.mxu0 0
          %7649 = vmatpush1.bf16.msra.mxu0 %v7088
          %7650 = vmatprep.subr.bf16.mxu0 0
          %7651 = vmatpush2.bf16.msra.mxu0 %v7133
          %7652 = vmatprep.subr.bf16.mxu0 0
          %7653 = vmatpush2.bf16.msra.mxu0 %v7130
          %7654 = vmatprep.subr.bf16.mxu0 0
          %7655 = vmatpush2.bf16.msra.mxu0 %v7127
          %7656 = vmatprep.subr.bf16.mxu0 0
          %7657 = vmatpush2.bf16.msra.mxu0 %v7124
          %7658 = vmatprep.subr.bf16.mxu0 0
          %7659 = vmatpush2.bf16.msra.mxu0 %v7121
          %7660 = vmatprep.subr.bf16.mxu0 0
          %7661 = vmatpush2.bf16.msra.mxu0 %v7118
          %7662 = vmatprep.subr.bf16.mxu0 0
          %7663 = vmatpush2.bf16.msra.mxu0 %v7115
          %7664 = vmatprep.subr.bf16.mxu0 0
          %7665 = vmatpush2.bf16.msra.mxu0 %v7112
          %7666 = vmatprep.mubr.bf16.mxu0 %v6166
          %7667 = vmatmul.mubr.bf16.gmra.mxu0 %v6165
          %v7668 = vpop.f32.mrf.mxu0
          %v7669 = vadd.f32 %v6442, %v7668
          %v7670 = vpop.f32.mrf.mxu0
          %v7671 = vpop.f32.mrf.mxu0
          %v7672 = vpop.f32.mrf.mxu0
          %7673 = vdwg.mxu0
          %7674 = vmatprep.subr.bf16.mxu0 0
          %7675 = vmatpush1.bf16.msra.mxu0 %v7157
          %7676 = vmatprep.subr.bf16.mxu0 0
          %7677 = vmatpush1.bf16.msra.mxu0 %v7154
          %7678 = vmatprep.subr.bf16.mxu0 0
          %7679 = vmatpush1.bf16.msra.mxu0 %v7151
          %7680 = vmatprep.subr.bf16.mxu0 0
          %7681 = vmatpush1.bf16.msra.mxu0 %v7148
          %7682 = vmatprep.subr.bf16.mxu0 0
          %7683 = vmatpush1.bf16.msra.mxu0 %v7145
          %7684 = vmatprep.subr.bf16.mxu0 0
          %7685 = vmatpush1.bf16.msra.mxu0 %v7142
          %7686 = vmatprep.subr.bf16.mxu0 0
          %7687 = vmatpush1.bf16.msra.mxu0 %v7139
          %7688 = vmatprep.subr.bf16.mxu0 0
          %7689 = vmatpush1.bf16.msra.mxu0 %v7136
          %7690 = vmatprep.subr.bf16.mxu0 0
          %7691 = vmatpush2.bf16.msra.mxu0 %v7181
          %7692 = vmatprep.subr.bf16.mxu0 0
          %7693 = vmatpush2.bf16.msra.mxu0 %v7178
          %7694 = vmatprep.subr.bf16.mxu0 0
          %7695 = vmatpush2.bf16.msra.mxu0 %v7175
          %7696 = vmatprep.subr.bf16.mxu0 0
          %7697 = vmatpush2.bf16.msra.mxu0 %v7172
          %7698 = vmatprep.subr.bf16.mxu0 0
          %7699 = vmatpush2.bf16.msra.mxu0 %v7169
          %7700 = vmatprep.subr.bf16.mxu0 0
          %7701 = vmatpush2.bf16.msra.mxu0 %v7166
          %7702 = vmatprep.subr.bf16.mxu0 0
          %7703 = vmatpush2.bf16.msra.mxu0 %v7163
          %7704 = vmatprep.subr.bf16.mxu0 0
          %7705 = vmatpush2.bf16.msra.mxu0 %v7160
          %7706 = vmatprep.mubr.bf16.mxu0 %v6168
          %7707 = vmatmul.mubr.bf16.gmra.mxu0 %v6167
          %v7708 = vpop.f32.mrf.mxu0
          %v7709 = vadd.f32 %v7669, %v7708
          %v7710 = vpop.f32.mrf.mxu0
          %v7711 = vpop.f32.mrf.mxu0
          %v7712 = vpop.f32.mrf.mxu0
          %7713 = vdwg.mxu0
          %7714 = vmatprep.subr.bf16.mxu0 0
          %7715 = vmatpush1.bf16.msra.mxu0 %v7205
          %7716 = vmatprep.subr.bf16.mxu0 0
          %7717 = vmatpush1.bf16.msra.mxu0 %v7202
          %7718 = vmatprep.subr.bf16.mxu0 0
          %7719 = vmatpush1.bf16.msra.mxu0 %v7199
          %7720 = vmatprep.subr.bf16.mxu0 0
          %7721 = vmatpush1.bf16.msra.mxu0 %v7196
          %7722 = vmatprep.subr.bf16.mxu0 0
          %7723 = vmatpush1.bf16.msra.mxu0 %v7193
          %7724 = vmatprep.subr.bf16.mxu0 0
          %7725 = vmatpush1.bf16.msra.mxu0 %v7190
          %7726 = vmatprep.subr.bf16.mxu0 0
          %7727 = vmatpush1.bf16.msra.mxu0 %v7187
          %7728 = vmatprep.subr.bf16.mxu0 0
          %7729 = vmatpush1.bf16.msra.mxu0 %v7184
          %7730 = vmatprep.subr.bf16.mxu0 0
          %7731 = vmatpush2.bf16.msra.mxu0 %v7229
          %7732 = vmatprep.subr.bf16.mxu0 0
          %7733 = vmatpush2.bf16.msra.mxu0 %v7226
          %7734 = vmatprep.subr.bf16.mxu0 0
          %7735 = vmatpush2.bf16.msra.mxu0 %v7223
          %7736 = vmatprep.subr.bf16.mxu0 0
          %7737 = vmatpush2.bf16.msra.mxu0 %v7220
          %7738 = vmatprep.subr.bf16.mxu0 0
          %7739 = vmatpush2.bf16.msra.mxu0 %v7217
          %7740 = vmatprep.subr.bf16.mxu0 0
          %7741 = vmatpush2.bf16.msra.mxu0 %v7214
          %7742 = vmatprep.subr.bf16.mxu0 0
          %7743 = vmatpush2.bf16.msra.mxu0 %v7211
          %7744 = vmatprep.subr.bf16.mxu0 0
          %7745 = vmatpush2.bf16.msra.mxu0 %v7208
          %7746 = vmatprep.mubr.bf16.mxu0 %v6170
          %7747 = vmatmul.mubr.bf16.gmra.mxu0 %v6169
          %v7748 = vpop.f32.mrf.mxu0
          %v7749 = vadd.f32 %v7709, %v7748
          %v7750 = vpop.f32.mrf.mxu0
          %v7751 = vpop.f32.mrf.mxu0
          %v7752 = vpop.f32.mrf.mxu0
          %7753 = vdwg.mxu0
          %7754 = vmatprep.subr.bf16.mxu0 0
          %7755 = vmatpush1.bf16.msra.mxu0 %v7253
          %7756 = vmatprep.subr.bf16.mxu0 0
          %7757 = vmatpush1.bf16.msra.mxu0 %v7250
          %7758 = vmatprep.subr.bf16.mxu0 0
          %7759 = vmatpush1.bf16.msra.mxu0 %v7247
          %7760 = vmatprep.subr.bf16.mxu0 0
          %7761 = vmatpush1.bf16.msra.mxu0 %v7244
          %7762 = vmatprep.subr.bf16.mxu0 0
          %7763 = vmatpush1.bf16.msra.mxu0 %v7241
          %7764 = vmatprep.subr.bf16.mxu0 0
          %7765 = vmatpush1.bf16.msra.mxu0 %v7238
          %7766 = vmatprep.subr.bf16.mxu0 0
          %7767 = vmatpush1.bf16.msra.mxu0 %v7235
          %7768 = vmatprep.subr.bf16.mxu0 0
          %7769 = vmatpush1.bf16.msra.mxu0 %v7232
          %7770 = vmatprep.subr.bf16.mxu0 0
          %7771 = vmatpush2.bf16.msra.mxu0 %v7277
          %7772 = vmatprep.subr.bf16.mxu0 0
          %7773 = vmatpush2.bf16.msra.mxu0 %v7274
          %7774 = vmatprep.subr.bf16.mxu0 0
          %7775 = vmatpush2.bf16.msra.mxu0 %v7271
          %7776 = vmatprep.subr.bf16.mxu0 0
          %7777 = vmatpush2.bf16.msra.mxu0 %v7268
          %7778 = vmatprep.subr.bf16.mxu0 0
          %7779 = vmatpush2.bf16.msra.mxu0 %v7265
          %7780 = vmatprep.subr.bf16.mxu0 0
          %7781 = vmatpush2.bf16.msra.mxu0 %v7262
          %7782 = vmatprep.subr.bf16.mxu0 0
          %7783 = vmatpush2.bf16.msra.mxu0 %v7259
          %7784 = vmatprep.subr.bf16.mxu0 0
          %7785 = vmatpush2.bf16.msra.mxu0 %v7256
          %7786 = vmatprep.mubr.bf16.mxu0 %v6172
          %7787 = vmatmul.mubr.bf16.gmra.mxu0 %v6171
          %v7788 = vpop.f32.mrf.mxu0
          %v7789 = vadd.f32 %v7749, %v7788
          %v7790 = vpop.f32.mrf.mxu0
          %v7791 = vpop.f32.mrf.mxu0
          %v7792 = vpop.f32.mrf.mxu0
          %7793 = vdwg.mxu0
          %7794 = vst [vmem:[#allocation15] sm:$0xff] %v7628
          %7795 = vst [vmem:[#allocation15 + $0x8] sm:$0xff] %v7630
          %7796 = vst [vmem:[#allocation15 + $0x10] sm:$0xff] %v7789
        $region84: #{tpu_custom_call.1} parent=47 // pred_fallthru
          _
        // Predicated region
        $region85: #{tpu_custom_call.1} parent=47 // pred_check
          %p7797 = pneg %p197
        $region86: #{tpu_custom_call.1} parent=47 // pred_check_branch
          %7799 = sbr.rel (%p7797) target = $region88
        $region87: #{tpu_custom_call.1} parent=47 // pred_region
          %s7801 = ssub.s32 384, 384
          %7802 = vsyncadd [#allocation5], %s7801
          %s7804 = sshll.u32 [#allocation15], 4
          %s7805 = int_to_ptr.vmem [resolvable:$true] %s7804
          %7807 = dma.vmem_to_hbm [thread:$0]  %s7805, 384, %s7, [#allocation5]
        $region88: #{tpu_custom_call.1} parent=47 // pred_fallthru
          _
        // Predicated region
        $region89: #{tpu_custom_call.1} parent=47 // pred_check
          %p7808 = pneg %p197
        $region90: #{tpu_custom_call.1} parent=47 // pred_check_branch
          %7810 = sbr.rel (%p7808) target = $region92
        $region91: #{tpu_custom_call.1} parent=47 // pred_region
          %7811 = dma.done [#allocation5], 384
        $region92: #{tpu_custom_call.1} parent=47 // pred_fallthru
          _
      $region48: #{tpu_custom_call.1} parent=5 // pred_fallthru
        _
      %p7812 = scmp.le.s32.totalorder 2, %s22
      // Predicated region
      $region93: #{tpu_custom_call.1} parent=5 // pred_check
        %p7813 = pneg %p7812
      $region94: #{tpu_custom_call.1} parent=5 // pred_check_branch
        %7815 = sbr.rel (%p7813) target = $region96
      $region95: #{tpu_custom_call.1} parent=5 // pred_region
        %s7816 = ssub.s32 %s22, 2
      $region96: #{tpu_custom_call.1} parent=5 // pred_fallthru
        _
    $region6: #{tpu_custom_call.1} parent=1 // loop_footer
      %s26 = sadd.s32 1, %s22
    $region7: #{tpu_custom_call.1} parent=1 // loop_footer_branch
      %21 = sbr.rel target = $region3
    $region8: #{tpu_custom_call.1} parent=1 // loop_exit
      _
    %7817 = vsyncpa [#allocation4], 1
    %s7818 = scalar_lea.sflag [#allocation4], 1
    %7819 = vsyncpa %s7818, 1
    %7820 = vsyncpa [#allocation7], 1
    %s7821 = scalar_lea.sflag [#allocation7], 1
    %7822 = vsyncpa %s7821, 1
    %7823 = vsyncpa [#allocation10], 1
    %7824 = vsyncpa [#allocation13], 1
    %7825 = vsyncpa [#allocation5], 1
    %s7826 = scalar_lea.sflag [#allocation5], 1
    %7827 = vsyncpa %s7826, 1

</llo_original>
